<compile_context>
chip_gen: v5e
topology: v5e:2x2
jax: 0.10.0
libtpu: 0.0.40
codegen_flags: <defaults>
</compile_context>

<pallas_src>
import functools
import numpy as np

import jax
import jax.numpy as jnp
from jax.experimental import pallas as pl
from jax.experimental.pallas import tpu as pltpu


# ----------------------------------------------------------------------------
# Fused 3x3-conv Pallas kernel: lane-dense (Cout, HW) layout,
# in-register halo, optional fused bias + InstanceNorm + ReLU.
# ----------------------------------------------------------------------------
def _make_conv3x3_kernel(cins, cout, H, W, *, norm_relu):
    HW = H * W
    n_in = len(cins)

    def kernel(*refs):
        x_refs = refs[:n_in]                  # each (Cin_a, HW)
        w_refs = refs[n_in:2 * n_in]          # each (9, Cout, Cin_a) bf16
        p_ref = refs[2 * n_in]                # (Cout, 3) f32: [bias, gamma, beta]
        o_ref = refs[2 * n_in + 1]            # (Cout, HW)

        # Wrap masks from an in-kernel iota (no HBM traffic, no (HW,1) tiles).
        pos = jax.lax.broadcasted_iota(jnp.int32, (1, HW), 1)
        colw = pos % W
        m_left = colw > 0                     # valid for the dx == -1 taps
        m_right = colw < (W - 1)              # valid for the dx == +1 taps

        acc = jnp.zeros((cout, HW), jnp.float32)
        for a in range(n_in):
            cin = cins[a]
            xa = x_refs[a][...]
            # Cast the whole slab ONCE (not per tap). Cin==1 stays f32 and
            # uses a VPU broadcast-FMA path (no degenerate K=1 MXU matmul).
            xa = xa.astype(jnp.float32 if cin == 1 else jnp.bfloat16)
            # In-register halo along the flattened spatial (lane) axis:
            # xp[j] = 0 for j < W+1 or j >= W+1+HW, else xa[j-(W+1)].
            zpad = jnp.zeros((cin, W + 1), xa.dtype)
            xp = jnp.concatenate([zpad, xa, zpad], axis=1)   # (Cin, HW+2W+2)
            wv = w_refs[a][...]                               # (9, Cout, Cin)
            for ky in range(3):
                for kx in range(3):
                    start = ky * W + kx
                    if ky == 1 and kx == 1:
                        tap = xa
                    else:
                        tap = xp[:, start:start + HW]         # static lane slice
                    if kx == 0:
                        tap = jnp.where(m_left, tap, jnp.zeros_like(tap))
                    elif kx == 2:
                        tap = jnp.where(m_right, tap, jnp.zeros_like(tap))
                    wt = wv[ky * 3 + kx]                      # (Cout, Cin)
                    if cin == 1:
                        acc = acc + wt.astype(jnp.float32) * tap
                    else:
                        acc = acc + jnp.dot(wt, tap,
                                            preferred_element_type=jnp.float32)

        pv = p_ref[...]                                       # (Cout, 3)
        y = acc + pv[:, 0:1]                                  # conv bias
        if norm_relu:
            # InstanceNorm (eps=1e-5, biased var) per channel over HW lanes.
            mean = jnp.mean(y, axis=1, keepdims=True)
            cen = y - mean
            var = jnp.mean(cen * cen, axis=1, keepdims=True)
            y = cen * jax.lax.rsqrt(var + 1e-5)
            y = y * pv[:, 1:2] + pv[:, 2:3]
            y = jnp.maximum(y, 0.0)
        o_ref[...] = y.astype(o_ref.dtype)

    return kernel


def conv3x3(inputs, weights, affine, *, norm_relu=True, out_dtype=jnp.bfloat16):
    """3x3 'same' conv over one or two channel-stacked inputs (fused concat),
    optionally fused with bias + InstanceNorm + ReLU.

    inputs  : tuple of (B, C_i, H, W) activations (any float dtype).
    weights : tuple; each (9, Cout, C_i) bf16 (shared) or (B, 9, Cout, C_i)
              bf16 (per-sample DWP filters); K ordering is tap-major.
    affine  : (Cout, 3) f32 with columns [bias, gamma, beta].
    """
    B, _, H, W = inputs[0].shape
    HW = H * W
    cins = tuple(int(a.shape[1]) for a in inputs)
    cout = int(affine.shape[0])

    flat = [a.reshape(B, c, HW) for a, c in zip(inputs, cins)]

    in_specs = [pl.BlockSpec((None, c, HW), lambda b: (b, 0, 0)) for c in cins]
    for wgt, c in zip(weights, cins):
        if wgt.ndim == 4:                                   # per-sample weights
            in_specs.append(pl.BlockSpec((None, 9, cout, c),
                                         lambda b: (b, 0, 0, 0)))
        else:                                               # shared weights
            in_specs.append(pl.BlockSpec((9, cout, c), lambda b: (0, 0, 0)))
    in_specs.append(pl.BlockSpec((cout, 3), lambda b: (0, 0)))

    kernel = _make_conv3x3_kernel(cins, cout, H, W, norm_relu=norm_relu)

    out = pl.pallas_call(
        kernel,
        grid=(B,),
        in_specs=in_specs,
        out_specs=pl.BlockSpec((None, cout, HW), lambda b: (b, 0, 0)),
        out_shape=jax.ShapeDtypeStruct((B, cout, HW), out_dtype),
        compiler_params=pltpu.CompilerParams(
            dimension_semantics=("parallel",),
            vmem_limit_bytes=48 * 1024 * 1024,
        ),
    )(*flat, *weights, affine)
    return out.reshape(B, cout, H, W)


# ----------------------------------------------------------------------------
# Small ops kept in plain jnp inside the single jit (fused by XLA)
# ----------------------------------------------------------------------------
def maxpool2(x):                                     # (B, C, H, W) -> (B, C, H/2, W/2)
    B, C, H, W = x.shape
    return jnp.max(x.reshape(B, C, H // 2, 2, W // 2, 2), axis=(3, 5))


@functools.lru_cache(maxsize=None)
def _upsample_matrix_np(n):
    """(2n, n) bilinear 2x interpolation matrix (PyTorch align_corners=False)."""
    U = np.zeros((2 * n, n), dtype=np.float32)
    for i in range(2 * n):
        src = max((i + 0.5) * 0.5 - 0.5, 0.0)
        i0 = min(int(np.floor(src)), n - 1)
        i1 = min(i0 + 1, n - 1)
        f = src - i0
        U[i, i0] += 1.0 - f
        U[i, i1] += f
    return U


def upsample2x(x):                                   # (B, C, H, W) -> (B, C, 2H, 2W) bf16
    B, C, H, W = x.shape
    UH = jnp.asarray(_upsample_matrix_np(H))
    UW = jnp.asarray(_upsample_matrix_np(W))
    y = jnp.einsum('ph,bchw->bcpw', UH, x.astype(jnp.float32))
    y = jnp.einsum('qw,bcpw->bcpq', UW, y)
    return y.astype(jnp.bfloat16)


def dwp_mlp(g, p):                                   # (B, cv) -> (B, out_dim)
    h = jnp.maximum(g @ p['w1'] + p['b1'], 0.0)
    h = jnp.maximum(h @ p['w2'] + p['b2'], 0.0)
    return h @ p['w3'] + p['b3']


def _repack_dwp(filt, c):
    """(B, c*c*9) DWP filter vector -> (B, 9, Cout=c, Cin=c) bf16 tap-major layout."""
    B = filt.shape[0]
    w = filt.reshape(B, c, c, 3, 3)                  # (B, cout, cin, ky, kx)
    w = jnp.transpose(w, (0, 3, 4, 1, 2))            # (B, ky, kx, cout, cin)
    return w.reshape(B, 9, c, c).astype(jnp.bfloat16)


def head_and_residual(x, p, res):
    """conv2: three 1x1 convs over channels + residual add (NCHW, f32)."""
    y = jnp.einsum('bchw,cd->bdhw', x.astype(jnp.float32), p['w1']) + p['b1'][None, :, None, None]
    y = jnp.einsum('bchw,cd->bdhw', y, p['w2']) + p['b2'][None, :, None, None]
    y = jnp.einsum('bchw,cd->bdhw', y, p['w3']) + p['b3'][None, :, None, None]
    return y + res                                   # NOTE: requires out_chans == in_chans (==1 here)


def data_consistency(pred, k, mask):
    """torch.rfft(..,2,True,False) / mask merge / torch.ifft(..,2,True) / real part."""
    # TODO(synk): FFT/IFFT stay in plain JAX (no Pallas equivalent).
    kp = jnp.fft.fft2(pred, norm="ortho")
    kr = mask * k[..., 0] + (1.0 - mask) * jnp.real(kp).astype(jnp.float32)
    ki = mask * k[..., 1] + (1.0 - mask) * jnp.imag(kp).astype(jnp.float32)
    img = jnp.fft.ifft2(jax.lax.complex(kr, ki), norm="ortho")
    return jnp.real(img).astype(jnp.float32)


# ----------------------------------------------------------------------------
# Parameters (deterministic synthetic init; weights pre-packed at init)
# ----------------------------------------------------------------------------
def init_params(key, in_chans, out_chans, chans, num_pool_layers, cv):
    keys = iter(jax.random.split(key, 128))

    def nrm(shape, scale=0.1):
        return jax.random.normal(next(keys), shape, dtype=jnp.float32) * scale

    def pack3x3(w):                                  # (Cout, Cin, 3, 3) -> (9, Cout, Cin) bf16
        cout, cin = w.shape[0], w.shape[1]
        return jnp.transpose(w, (2, 3, 0, 1)).reshape(9, cout, cin).astype(jnp.bfloat16)

    def affine(cout, bias=None, gamma=None, beta=None):
        b = jnp.zeros((cout,), jnp.float32) if bias is None else bias
        g = jnp.ones((cout,), jnp.float32) if gamma is None else gamma
        bt = jnp.zeros((cout,), jnp.float32) if beta is None else beta
        return jnp.stack([b, g, bt], axis=1)         # (Cout, 3)

    def cblock(cin, cout):                           # ConvBlock: conv(bias)+IN+ReLU
        return {'w': pack3x3(nrm((cout, cin, 3, 3))), 'p': affine(cout, bias=nrm((cout,)))}

    def cblock_split(c_half, cout):                  # up ConvBlock over the fused concat
        w = nrm((cout, 2 * c_half, 3, 3))
        return {'wA': pack3x3(w[:, :c_half]),        # channels of the upsampled features
                'wB': pack3x3(w[:, c_half:]),        # channels of the DWP-filtered skip
                'p': affine(cout, bias=nrm((cout,)))}

    def mlp(out_dim):
        return {'w1': nrm((cv, 8)), 'b1': nrm((8,)),
                'w2': nrm((8, 8)), 'b2': nrm((8,)),
                'w3': nrm((8, out_dim)), 'b3': nrm((out_dim,))}

    params = {}
    down = [cblock(in_chans, chans)]
    dwp = [mlp(chans * chans * 9)]
    dwp_ch = [chans]
    ch = chans
    for _ in range(num_pool_layers - 1):
        down.append(cblock(ch, ch * 2))
        dwp.append(mlp((ch * 2) * (ch * 2) * 9))
        dwp_ch.append(ch * 2)
        ch *= 2
    params['down'], params['dwp'] = down, dwp
    params['dwp_latent'] = mlp(ch * ch * 9)
    params['latent_p'] = affine(ch)                  # bias=0, gamma=1, beta=0 (affine init)
    params['enc_p'] = [affine(c) for c in dwp_ch]    # encf convs: bias=None, no norm

    up = []
    for _ in range(num_pool_layers - 1):
        up.append(cblock_split(ch, ch // 2))
        ch //= 2
    up.append(cblock_split(ch, ch))
    params['up'] = up
    params['head'] = {'w1': nrm((ch, ch // 2)), 'b1': nrm((ch // 2,)),
                      'w2': nrm((ch // 2, out_chans)), 'b2': nrm((out_chans,)),
                      'w3': nrm((out_chans, out_chans)), 'b3': nrm((out_chans,))}
    return params


# ----------------------------------------------------------------------------
# Forward pass (whole batch, single trace; batch handled by the Pallas grid)
# ----------------------------------------------------------------------------
def forward(params, x, k, gamma_val, mask):
    x_f32 = x.astype(jnp.float32)                    # residual / DC path stays f32
    out = x.astype(jnp.bfloat16)                     # activation path in bf16
    stack = []
    for lp in params['down']:
        out = conv3x3((out,), (lp['w'],), lp['p'], norm_relu=True)   # ConvBlock (Dropout=identity)
        stack.append(out)
        out = maxpool2(out)

    # DWP hyper-networks (batched over B, plain jnp; repack is tiny & fused).
    filterbank = []
    for dp, dl in zip(params['dwp'], params['down']):
        c = dl['w'].shape[1]                          # cout == cin == c at every DWP level
        filterbank.append(_repack_dwp(dwp_mlp(gamma_val, dp), c))

    c_lat = params['down'][-1]['w'].shape[1]
    latent_w = _repack_dwp(dwp_mlp(gamma_val, params['dwp_latent']), c_lat)
    out = conv3x3((out,), (latent_w,), params['latent_p'], norm_relu=True)

    enc_ps = list(params['enc_p'])
    ups = params['up']
    for i, lp in enumerate(ups):
        up = upsample2x(out)
        enc = stack.pop()
        encf = conv3x3((enc,), (filterbank.pop(),), enc_ps.pop(),
                       norm_relu=False)                              # F.conv2d, bias=None
        last = (i == len(ups) - 1)
        out = conv3x3((up, encf), (lp['wA'], lp['wB']), lp['p'],     # fused skip-concat
                      norm_relu=True,
                      out_dtype=jnp.float32 if last else jnp.bfloat16)

    y = head_and_residual(out, params['head'], x_f32)                # (B, out_chans, H, W)
    pred = y[:, 0]                                                   # predicted_img[:, 0]
    dc = data_consistency(pred, k, mask)                             # (B, H, W)
    return dc[:, None, :, :]                                         # (B, 1, H, W)


# ----------------------------------------------------------------------------
if __name__ == "__main__":
    B, in_chans, out_chans, chans, num_pool_layers, cv = 2, 1, 1, 4, 2, 8
    H = W = 16

    key = jax.random.PRNGKey(0)
    kp_, kx, kk, kg, km = jax.random.split(key, 5)

    params = init_params(kp_, in_chans, out_chans, chans, num_pool_layers, cv)
    x = jax.random.normal(kx, (B, in_chans, H, W), dtype=jnp.float32)       # NCHW input
    k = jax.random.normal(kk, (B, H, W, 2), dtype=jnp.float32)              # k-space (re, im)
    gamma_val = jax.random.normal(kg, (B, cv), dtype=jnp.float32)           # context vectors
    mask = (jax.random.uniform(km, (B, H, W)) < 0.4).astype(jnp.float32)    # undersampling mask

    fwd = jax.jit(forward)                                                  # ONE jit for everything
    out = jax.block_until_ready(fwd(params, x, k, gamma_val, mask))
    assert out.shape == (B, out_chans, H, W) and out.dtype == jnp.float32
    print("KERNEL_OK")
</pallas_src>

<mosaic_0001>
module attributes {stable_mosaic.version = 11 : i64} {
  func.func @kernel(%arg0: i32, %arg1: memref<1x1x256xbf16, #tpu.memory_space<vmem>>, %arg2: memref<9x4x1xbf16, #tpu.memory_space<vmem>>, %arg3: memref<4x3xf32, #tpu.memory_space<vmem>>, %arg4: memref<1x4x256xbf16, #tpu.memory_space<vmem>>) attributes {dimension_semantics = [#tpu.dimension_semantics<parallel>], iteration_bounds = array<i64: 2>, scalar_prefetch = 0 : i64, scratch_operands = 0 : i64, tpu.core_type = #tpu.core_type<tc>, window_params = [{transform_indices = @transform_0, window_bounds = array<i64: 1, 1, 256>}, {pipeline_mode = #tpu.pipeline_mode<synchronous>, transform_indices = @transform_1, window_bounds = array<i64: 9, 4, 1>}, {pipeline_mode = #tpu.pipeline_mode<synchronous>, transform_indices = @transform_2, window_bounds = array<i64: 4, 3>}, {transform_indices = @transform_3, window_bounds = array<i64: 1, 4, 256>}]} {
    %0 = tpu.iota {dimensions = array<i32: 1>} : vector<1x256xi32>
    %c16_i32 = arith.constant 16 : i32
    %c0_i32 = arith.constant 0 : i32
    %1 = arith.cmpi eq, %c16_i32, %c0_i32 : i32
    %c1_i32 = arith.constant 1 : i32
    %2 = arith.select %1, %c1_i32, %c16_i32 : i32
    %3 = vector.broadcast %2 : i32 to vector<1x256xi32>
    %4 = arith.remsi %0, %3 : vector<1x256xi32>
    %c0_i32_0 = arith.constant 0 : i32
    %5 = vector.broadcast %c0_i32_0 : i32 to vector<1x256xi32>
    %6 = arith.cmpi ne, %4, %5 : vector<1x256xi32>
    %c0_i32_1 = arith.constant 0 : i32
    %7 = vector.broadcast %c0_i32_1 : i32 to vector<1x256xi32>
    %8 = arith.cmpi slt, %4, %7 : vector<1x256xi32>
    %c0_i32_2 = arith.constant 0 : i32
    %9 = arith.cmpi slt, %2, %c0_i32_2 : i32
    %10 = vector.broadcast %9 : i1 to vector<1x256xi1>
    %11 = vector.broadcast %10 : vector<1x256xi1> to vector<1x256xi1>
    %12 = arith.xori %8, %11 : vector<1x256xi1>
    %13 = arith.andi %12, %6 : vector<1x256xi1>
    %14 = vector.broadcast %2 : i32 to vector<1x256xi32>
    %15 = arith.addi %4, %14 : vector<1x256xi32>
    %16 = arith.select %13, %15, %4 : vector<1x256xi1>, vector<1x256xi32>
    %c0_i32_3 = arith.constant 0 : i32
    %17 = vector.broadcast %c0_i32_3 : i32 to vector<1x256xi32>
    %18 = arith.cmpi sgt, %16, %17 : vector<1x256xi32>
    %c15_i32 = arith.constant 15 : i32
    %19 = vector.broadcast %c15_i32 : i32 to vector<1x256xi32>
    %20 = arith.cmpi slt, %16, %19 : vector<1x256xi32>
    %cst = arith.constant 0.000000e+00 : f32
    %21 = vector.broadcast %cst : f32 to vector<4x256xf32>
    %c0 = arith.constant 0 : index
    %c0_4 = arith.constant 0 : index
    %c0_5 = arith.constant 0 : index
    %22 = vector.load %arg1[%c0, %c0_4, %c0_5] : memref<1x1x256xbf16, #tpu.memory_space<vmem>>, vector<1x1x256xbf16>
    %23 = vector.shape_cast %22 : vector<1x1x256xbf16> to vector<1x256xbf16>
    %24 = arith.extf %23 : vector<1x256xbf16> to vector<1x256xf32>
    %cst_6 = arith.constant 0.000000e+00 : f32
    %25 = vector.broadcast %cst_6 : f32 to vector<1x17xf32>
    %26 = tpu.concatenate %25, %24, %25 in 1 : vector<1x17xf32>, vector<1x256xf32>, vector<1x17xf32> -> vector<1x290xf32>
    %c0_7 = arith.constant 0 : index
    %c0_8 = arith.constant 0 : index
    %c0_9 = arith.constant 0 : index
    %27 = vector.load %arg2[%c0_7, %c0_8, %c0_9] : memref<9x4x1xbf16, #tpu.memory_space<vmem>>, vector<9x4x1xbf16>
    %28 = vector.extract_strided_slice %26 {offsets = [0, 0], sizes = [1, 256], strides = [1, 1]} : vector<1x290xf32> to vector<1x256xf32>
    %cst_10 = arith.constant 0.000000e+00 : f32
    %29 = vector.broadcast %cst_10 : f32 to vector<1x256xf32>
    %30 = arith.select %18, %28, %29 : vector<1x256xi1>, vector<1x256xf32>
    %31 = vector.extract_strided_slice %27 {offsets = [0, 0, 0], sizes = [1, 4, 1], strides = [1, 1, 1]} : vector<9x4x1xbf16> to vector<1x4x1xbf16>
    %32 = vector.shape_cast %31 : vector<1x4x1xbf16> to vector<4x1xbf16>
    %33 = arith.extf %32 : vector<4x1xbf16> to vector<4x1xf32>
    %34 = vector.broadcast %33 : vector<4x1xf32> to vector<4x256xf32>
    %35 = vector.broadcast %30 : vector<1x256xf32> to vector<4x256xf32>
    %36 = arith.mulf %34, %35 : vector<4x256xf32>
    %37 = arith.addf %21, %36 : vector<4x256xf32>
    %38 = vector.extract_strided_slice %26 {offsets = [0, 1], sizes = [1, 256], strides = [1, 1]} : vector<1x290xf32> to vector<1x256xf32>
    %39 = vector.extract_strided_slice %27 {offsets = [1, 0, 0], sizes = [1, 4, 1], strides = [1, 1, 1]} : vector<9x4x1xbf16> to vector<1x4x1xbf16>
    %40 = vector.shape_cast %39 : vector<1x4x1xbf16> to vector<4x1xbf16>
    %41 = arith.extf %40 : vector<4x1xbf16> to vector<4x1xf32>
    %42 = vector.broadcast %41 : vector<4x1xf32> to vector<4x256xf32>
    %43 = vector.broadcast %38 : vector<1x256xf32> to vector<4x256xf32>
    %44 = arith.mulf %42, %43 : vector<4x256xf32>
    %45 = arith.addf %37, %44 : vector<4x256xf32>
    %46 = vector.extract_strided_slice %26 {offsets = [0, 2], sizes = [1, 256], strides = [1, 1]} : vector<1x290xf32> to vector<1x256xf32>
    %cst_11 = arith.constant 0.000000e+00 : f32
    %47 = vector.broadcast %cst_11 : f32 to vector<1x256xf32>
    %48 = arith.select %20, %46, %47 : vector<1x256xi1>, vector<1x256xf32>
    %49 = vector.extract_strided_slice %27 {offsets = [2, 0, 0], sizes = [1, 4, 1], strides = [1, 1, 1]} : vector<9x4x1xbf16> to vector<1x4x1xbf16>
    %50 = vector.shape_cast %49 : vector<1x4x1xbf16> to vector<4x1xbf16>
    %51 = arith.extf %50 : vector<4x1xbf16> to vector<4x1xf32>
    %52 = vector.broadcast %51 : vector<4x1xf32> to vector<4x256xf32>
    %53 = vector.broadcast %48 : vector<1x256xf32> to vector<4x256xf32>
    %54 = arith.mulf %52, %53 : vector<4x256xf32>
    %55 = arith.addf %45, %54 : vector<4x256xf32>
    %56 = vector.extract_strided_slice %26 {offsets = [0, 16], sizes = [1, 256], strides = [1, 1]} : vector<1x290xf32> to vector<1x256xf32>
    %cst_12 = arith.constant 0.000000e+00 : f32
    %57 = vector.broadcast %cst_12 : f32 to vector<1x256xf32>
    %58 = arith.select %18, %56, %57 : vector<1x256xi1>, vector<1x256xf32>
    %59 = vector.extract_strided_slice %27 {offsets = [3, 0, 0], sizes = [1, 4, 1], strides = [1, 1, 1]} : vector<9x4x1xbf16> to vector<1x4x1xbf16>
    %60 = vector.shape_cast %59 : vector<1x4x1xbf16> to vector<4x1xbf16>
    %61 = arith.extf %60 : vector<4x1xbf16> to vector<4x1xf32>
    %62 = vector.broadcast %61 : vector<4x1xf32> to vector<4x256xf32>
    %63 = vector.broadcast %58 : vector<1x256xf32> to vector<4x256xf32>
    %64 = arith.mulf %62, %63 : vector<4x256xf32>
    %65 = arith.addf %55, %64 : vector<4x256xf32>
    %66 = vector.extract_strided_slice %27 {offsets = [4, 0, 0], sizes = [1, 4, 1], strides = [1, 1, 1]} : vector<9x4x1xbf16> to vector<1x4x1xbf16>
    %67 = vector.shape_cast %66 : vector<1x4x1xbf16> to vector<4x1xbf16>
    %68 = arith.extf %67 : vector<4x1xbf16> to vector<4x1xf32>
    %69 = vector.broadcast %68 : vector<4x1xf32> to vector<4x256xf32>
    %70 = vector.broadcast %24 : vector<1x256xf32> to vector<4x256xf32>
    %71 = arith.mulf %69, %70 : vector<4x256xf32>
    %72 = arith.addf %65, %71 : vector<4x256xf32>
    %73 = vector.extract_strided_slice %26 {offsets = [0, 18], sizes = [1, 256], strides = [1, 1]} : vector<1x290xf32> to vector<1x256xf32>
    %cst_13 = arith.constant 0.000000e+00 : f32
    %74 = vector.broadcast %cst_13 : f32 to vector<1x256xf32>
    %75 = arith.select %20, %73, %74 : vector<1x256xi1>, vector<1x256xf32>
    %76 = vector.extract_strided_slice %27 {offsets = [5, 0, 0], sizes = [1, 4, 1], strides = [1, 1, 1]} : vector<9x4x1xbf16> to vector<1x4x1xbf16>
    %77 = vector.shape_cast %76 : vector<1x4x1xbf16> to vector<4x1xbf16>
    %78 = arith.extf %77 : vector<4x1xbf16> to vector<4x1xf32>
    %79 = vector.broadcast %78 : vector<4x1xf32> to vector<4x256xf32>
    %80 = vector.broadcast %75 : vector<1x256xf32> to vector<4x256xf32>
    %81 = arith.mulf %79, %80 : vector<4x256xf32>
    %82 = arith.addf %72, %81 : vector<4x256xf32>
    %83 = vector.extract_strided_slice %26 {offsets = [0, 32], sizes = [1, 256], strides = [1, 1]} : vector<1x290xf32> to vector<1x256xf32>
    %cst_14 = arith.constant 0.000000e+00 : f32
    %84 = vector.broadcast %cst_14 : f32 to vector<1x256xf32>
    %85 = arith.select %18, %83, %84 : vector<1x256xi1>, vector<1x256xf32>
    %86 = vector.extract_strided_slice %27 {offsets = [6, 0, 0], sizes = [1, 4, 1], strides = [1, 1, 1]} : vector<9x4x1xbf16> to vector<1x4x1xbf16>
    %87 = vector.shape_cast %86 : vector<1x4x1xbf16> to vector<4x1xbf16>
    %88 = arith.extf %87 : vector<4x1xbf16> to vector<4x1xf32>
    %89 = vector.broadcast %88 : vector<4x1xf32> to vector<4x256xf32>
    %90 = vector.broadcast %85 : vector<1x256xf32> to vector<4x256xf32>
    %91 = arith.mulf %89, %90 : vector<4x256xf32>
    %92 = arith.addf %82, %91 : vector<4x256xf32>
    %93 = vector.extract_strided_slice %26 {offsets = [0, 33], sizes = [1, 256], strides = [1, 1]} : vector<1x290xf32> to vector<1x256xf32>
    %94 = vector.extract_strided_slice %27 {offsets = [7, 0, 0], sizes = [1, 4, 1], strides = [1, 1, 1]} : vector<9x4x1xbf16> to vector<1x4x1xbf16>
    %95 = vector.shape_cast %94 : vector<1x4x1xbf16> to vector<4x1xbf16>
    %96 = arith.extf %95 : vector<4x1xbf16> to vector<4x1xf32>
    %97 = vector.broadcast %96 : vector<4x1xf32> to vector<4x256xf32>
    %98 = vector.broadcast %93 : vector<1x256xf32> to vector<4x256xf32>
    %99 = arith.mulf %97, %98 : vector<4x256xf32>
    %100 = arith.addf %92, %99 : vector<4x256xf32>
    %101 = vector.extract_strided_slice %26 {offsets = [0, 34], sizes = [1, 256], strides = [1, 1]} : vector<1x290xf32> to vector<1x256xf32>
    %cst_15 = arith.constant 0.000000e+00 : f32
    %102 = vector.broadcast %cst_15 : f32 to vector<1x256xf32>
    %103 = arith.select %20, %101, %102 : vector<1x256xi1>, vector<1x256xf32>
    %104 = vector.extract_strided_slice %27 {offsets = [8, 0, 0], sizes = [1, 4, 1], strides = [1, 1, 1]} : vector<9x4x1xbf16> to vector<1x4x1xbf16>
    %105 = vector.shape_cast %104 : vector<1x4x1xbf16> to vector<4x1xbf16>
    %106 = arith.extf %105 : vector<4x1xbf16> to vector<4x1xf32>
    %107 = vector.broadcast %106 : vector<4x1xf32> to vector<4x256xf32>
    %108 = vector.broadcast %103 : vector<1x256xf32> to vector<4x256xf32>
    %109 = arith.mulf %107, %108 : vector<4x256xf32>
    %110 = arith.addf %100, %109 : vector<4x256xf32>
    %c0_16 = arith.constant 0 : index
    %c0_17 = arith.constant 0 : index
    %111 = vector.load %arg3[%c0_16, %c0_17] : memref<4x3xf32, #tpu.memory_space<vmem>>, vector<4x3xf32>
    %112 = vector.extract_strided_slice %111 {offsets = [0, 0], sizes = [4, 1], strides = [1, 1]} : vector<4x3xf32> to vector<4x1xf32>
    %113 = vector.broadcast %112 : vector<4x1xf32> to vector<4x256xf32>
    %114 = arith.addf %110, %113 : vector<4x256xf32>
    %cst_18 = arith.constant dense<0.000000e+00> : vector<4xf32>
    %115 = vector.multi_reduction <add>, %114, %cst_18 [1] : vector<4x256xf32> to vector<4xf32>
    %116 = vector.shape_cast %115 : vector<4xf32> to vector<4x1xf32>
    %cst_19 = arith.constant 2.560000e+02 : f32
    %117 = vector.broadcast %cst_19 : f32 to vector<4x1xf32>
    %118 = arith.divf %116, %117 : vector<4x1xf32>
    %119 = vector.broadcast %118 : vector<4x1xf32> to vector<4x256xf32>
    %120 = arith.subf %114, %119 : vector<4x256xf32>
    %121 = arith.mulf %120, %120 : vector<4x256xf32>
    %cst_20 = arith.constant dense<0.000000e+00> : vector<4xf32>
    %122 = vector.multi_reduction <add>, %121, %cst_20 [1] : vector<4x256xf32> to vector<4xf32>
    %123 = vector.shape_cast %122 : vector<4xf32> to vector<4x1xf32>
    %cst_21 = arith.constant 2.560000e+02 : f32
    %124 = vector.broadcast %cst_21 : f32 to vector<4x1xf32>
    %125 = arith.divf %123, %124 : vector<4x1xf32>
    %cst_22 = arith.constant 9.99999974E-6 : f32
    %126 = vector.broadcast %cst_22 : f32 to vector<4x1xf32>
    %127 = arith.addf %125, %126 : vector<4x1xf32>
    %128 = math.rsqrt %127 : vector<4x1xf32>
    %129 = vector.broadcast %128 : vector<4x1xf32> to vector<4x256xf32>
    %130 = arith.mulf %120, %129 : vector<4x256xf32>
    %131 = vector.extract_strided_slice %111 {offsets = [0, 1], sizes = [4, 1], strides = [1, 1]} : vector<4x3xf32> to vector<4x1xf32>
    %132 = vector.broadcast %131 : vector<4x1xf32> to vector<4x256xf32>
    %133 = arith.mulf %130, %132 : vector<4x256xf32>
    %134 = vector.extract_strided_slice %111 {offsets = [0, 2], sizes = [4, 1], strides = [1, 1]} : vector<4x3xf32> to vector<4x1xf32>
    %135 = vector.broadcast %134 : vector<4x1xf32> to vector<4x256xf32>
    %136 = arith.addf %133, %135 : vector<4x256xf32>
    %cst_23 = arith.constant 0.000000e+00 : f32
    %137 = vector.broadcast %cst_23 : f32 to vector<4x256xf32>
    %138 = arith.maximumf %136, %137 : vector<4x256xf32>
    %139 = arith.truncf %138 : vector<4x256xf32> to vector<4x256xbf16>
    %c0_24 = arith.constant 0 : index
    %c0_25 = arith.constant 0 : index
    %c0_26 = arith.constant 0 : index
    %140 = vector.load %arg4[%c0_24, %c0_25, %c0_26] : memref<1x4x256xbf16, #tpu.memory_space<vmem>>, vector<1x4x256xbf16>
    %141 = vector.shape_cast %140 : vector<1x4x256xbf16> to vector<4x256xbf16>
    %142 = vector.shape_cast %139 : vector<4x256xbf16> to vector<1x4x256xbf16>
    tpu.vector_store %arg4[%c0_24, %c0_25, %c0_26], %142 {strides = array<i32>} : memref<1x4x256xbf16, #tpu.memory_space<vmem>>, vector<1x4x256xbf16>,
    return
  }
  func.func @transform_0(%arg0: i32) -> (i32, i32, i32) {
    %c0_i32 = arith.constant 0 : i32
    %c0_i32_0 = arith.constant 0 : i32
    %c0_i32_1 = arith.constant 0 : i32
    return %arg0, %c0_i32, %c0_i32_0 : i32, i32, i32
  }
  func.func @transform_1(%arg0: i32) -> (i32, i32, i32) {
    %c0_i32 = arith.constant 0 : i32
    %c0_i32_0 = arith.constant 0 : i32
    %c0_i32_1 = arith.constant 0 : i32
    %c0_i32_2 = arith.constant 0 : i32
    return %c0_i32, %c0_i32_0, %c0_i32_1 : i32, i32, i32
  }
  func.func @transform_2(%arg0: i32) -> (i32, i32) {
    %c0_i32 = arith.constant 0 : i32
    %c0_i32_0 = arith.constant 0 : i32
    %c0_i32_1 = arith.constant 0 : i32
    return %c0_i32, %c0_i32_0 : i32, i32
  }
  func.func @transform_3(%arg0: i32) -> (i32, i32, i32) {
    %c0_i32 = arith.constant 0 : i32
    %c0_i32_0 = arith.constant 0 : i32
    %c0_i32_1 = arith.constant 0 : i32
    return %arg0, %c0_i32, %c0_i32_0 : i32, i32, i32
  }
}

module attributes {stable_mosaic.version = 11 : i64} {
  func.func @kernel(%arg0: i32, %arg1: memref<1x4x64xbf16, #tpu.memory_space<vmem>>, %arg2: memref<9x8x4xbf16, #tpu.memory_space<vmem>>, %arg3: memref<8x3xf32, #tpu.memory_space<vmem>>, %arg4: memref<1x8x64xbf16, #tpu.memory_space<vmem>>) attributes {dimension_semantics = [#tpu.dimension_semantics<parallel>], iteration_bounds = array<i64: 2>, scalar_prefetch = 0 : i64, scratch_operands = 0 : i64, tpu.core_type = #tpu.core_type<tc>, window_params = [{transform_indices = @transform_0, window_bounds = array<i64: 1, 4, 64>}, {pipeline_mode = #tpu.pipeline_mode<synchronous>, transform_indices = @transform_1, window_bounds = array<i64: 9, 8, 4>}, {pipeline_mode = #tpu.pipeline_mode<synchronous>, transform_indices = @transform_2, window_bounds = array<i64: 8, 3>}, {transform_indices = @transform_3, window_bounds = array<i64: 1, 8, 64>}]} {
    %0 = tpu.iota {dimensions = array<i32: 1>} : vector<1x64xi32>
    %c8_i32 = arith.constant 8 : i32
    %c0_i32 = arith.constant 0 : i32
    %1 = arith.cmpi eq, %c8_i32, %c0_i32 : i32
    %c1_i32 = arith.constant 1 : i32
    %2 = arith.select %1, %c1_i32, %c8_i32 : i32
    %3 = vector.broadcast %2 : i32 to vector<1x64xi32>
    %4 = arith.remsi %0, %3 : vector<1x64xi32>
    %c0_i32_0 = arith.constant 0 : i32
    %5 = vector.broadcast %c0_i32_0 : i32 to vector<1x64xi32>
    %6 = arith.cmpi ne, %4, %5 : vector<1x64xi32>
    %c0_i32_1 = arith.constant 0 : i32
    %7 = vector.broadcast %c0_i32_1 : i32 to vector<1x64xi32>
    %8 = arith.cmpi slt, %4, %7 : vector<1x64xi32>
    %c0_i32_2 = arith.constant 0 : i32
    %9 = arith.cmpi slt, %2, %c0_i32_2 : i32
    %10 = vector.broadcast %9 : i1 to vector<1x64xi1>
    %11 = vector.broadcast %10 : vector<1x64xi1> to vector<1x64xi1>
    %12 = arith.xori %8, %11 : vector<1x64xi1>
    %13 = arith.andi %12, %6 : vector<1x64xi1>
    %14 = vector.broadcast %2 : i32 to vector<1x64xi32>
    %15 = arith.addi %4, %14 : vector<1x64xi32>
    %16 = arith.select %13, %15, %4 : vector<1x64xi1>, vector<1x64xi32>
    %c0_i32_3 = arith.constant 0 : i32
    %17 = vector.broadcast %c0_i32_3 : i32 to vector<1x64xi32>
    %18 = arith.cmpi sgt, %16, %17 : vector<1x64xi32>
    %c7_i32 = arith.constant 7 : i32
    %19 = vector.broadcast %c7_i32 : i32 to vector<1x64xi32>
    %20 = arith.cmpi slt, %16, %19 : vector<1x64xi32>
    %cst = arith.constant 0.000000e+00 : f32
    %21 = vector.broadcast %cst : f32 to vector<8x64xf32>
    %c0 = arith.constant 0 : index
    %c0_4 = arith.constant 0 : index
    %c0_5 = arith.constant 0 : index
    %22 = vector.load %arg1[%c0, %c0_4, %c0_5] : memref<1x4x64xbf16, #tpu.memory_space<vmem>>, vector<1x4x64xbf16>
    %23 = vector.shape_cast %22 : vector<1x4x64xbf16> to vector<4x64xbf16>
    %cst_6 = arith.constant 0.000000e+00 : bf16
    %24 = vector.broadcast %cst_6 : bf16 to vector<4x9xbf16>
    %25 = tpu.concatenate %24, %23, %24 in 1 : vector<4x9xbf16>, vector<4x64xbf16>, vector<4x9xbf16> -> vector<4x82xbf16>
    %c0_7 = arith.constant 0 : index
    %c0_8 = arith.constant 0 : index
    %c0_9 = arith.constant 0 : index
    %26 = vector.load %arg2[%c0_7, %c0_8, %c0_9] : memref<9x8x4xbf16, #tpu.memory_space<vmem>>, vector<9x8x4xbf16>
    %27 = vector.extract_strided_slice %25 {offsets = [0, 0], sizes = [4, 64], strides = [1, 1]} : vector<4x82xbf16> to vector<4x64xbf16>
    %cst_10 = arith.constant 0.000000e+00 : bf16
    %28 = vector.broadcast %cst_10 : bf16 to vector<4x64xbf16>
    %29 = vector.shape_cast %18 : vector<1x64xi1> to vector<1x64xi1>
    %30 = vector.broadcast %29 : vector<1x64xi1> to vector<4x64xi1>
    %31 = arith.select %30, %27, %28 : vector<4x64xi1>, vector<4x64xbf16>
    %32 = vector.extract_strided_slice %26 {offsets = [0, 0, 0], sizes = [1, 8, 4], strides = [1, 1, 1]} : vector<9x8x4xbf16> to vector<1x8x4xbf16>
    %33 = vector.shape_cast %32 : vector<1x8x4xbf16> to vector<8x4xbf16>
    %cst_11 = arith.constant dense<0.000000e+00> : vector<8x64xf32>
    %34 = tpu.matmul %33, %31, %cst_11 {dimension_numbers = #tpu.dot_dimension_numbers<[1], [0], [0], [1], [0, 0, 1, 1], [], []>} : vector<8x4xbf16>, vector<4x64xbf16>, vector<8x64xf32> -> vector<8x64xf32>
    %35 = arith.addf %21, %34 : vector<8x64xf32>
    %36 = vector.extract_strided_slice %25 {offsets = [0, 1], sizes = [4, 64], strides = [1, 1]} : vector<4x82xbf16> to vector<4x64xbf16>
    %37 = vector.extract_strided_slice %26 {offsets = [1, 0, 0], sizes = [1, 8, 4], strides = [1, 1, 1]} : vector<9x8x4xbf16> to vector<1x8x4xbf16>
    %38 = vector.shape_cast %37 : vector<1x8x4xbf16> to vector<8x4xbf16>
    %cst_12 = arith.constant dense<0.000000e+00> : vector<8x64xf32>
    %39 = tpu.matmul %38, %36, %cst_12 {dimension_numbers = #tpu.dot_dimension_numbers<[1], [0], [0], [1], [0, 0, 1, 1], [], []>} : vector<8x4xbf16>, vector<4x64xbf16>, vector<8x64xf32> -> vector<8x64xf32>
    %40 = arith.addf %35, %39 : vector<8x64xf32>
    %41 = vector.extract_strided_slice %25 {offsets = [0, 2], sizes = [4, 64], strides = [1, 1]} : vector<4x82xbf16> to vector<4x64xbf16>
    %cst_13 = arith.constant 0.000000e+00 : bf16
    %42 = vector.broadcast %cst_13 : bf16 to vector<4x64xbf16>
    %43 = vector.shape_cast %20 : vector<1x64xi1> to vector<1x64xi1>
    %44 = vector.broadcast %43 : vector<1x64xi1> to vector<4x64xi1>
    %45 = arith.select %44, %41, %42 : vector<4x64xi1>, vector<4x64xbf16>
    %46 = vector.extract_strided_slice %26 {offsets = [2, 0, 0], sizes = [1, 8, 4], strides = [1, 1, 1]} : vector<9x8x4xbf16> to vector<1x8x4xbf16>
    %47 = vector.shape_cast %46 : vector<1x8x4xbf16> to vector<8x4xbf16>
    %cst_14 = arith.constant dense<0.000000e+00> : vector<8x64xf32>
    %48 = tpu.matmul %47, %45, %cst_14 {dimension_numbers = #tpu.dot_dimension_numbers<[1], [0], [0], [1], [0, 0, 1, 1], [], []>} : vector<8x4xbf16>, vector<4x64xbf16>, vector<8x64xf32> -> vector<8x64xf32>
    %49 = arith.addf %40, %48 : vector<8x64xf32>
    %50 = vector.extract_strided_slice %25 {offsets = [0, 8], sizes = [4, 64], strides = [1, 1]} : vector<4x82xbf16> to vector<4x64xbf16>
    %cst_15 = arith.constant 0.000000e+00 : bf16
    %51 = vector.broadcast %cst_15 : bf16 to vector<4x64xbf16>
    %52 = vector.shape_cast %18 : vector<1x64xi1> to vector<1x64xi1>
    %53 = vector.broadcast %52 : vector<1x64xi1> to vector<4x64xi1>
    %54 = arith.select %53, %50, %51 : vector<4x64xi1>, vector<4x64xbf16>
    %55 = vector.extract_strided_slice %26 {offsets = [3, 0, 0], sizes = [1, 8, 4], strides = [1, 1, 1]} : vector<9x8x4xbf16> to vector<1x8x4xbf16>
    %56 = vector.shape_cast %55 : vector<1x8x4xbf16> to vector<8x4xbf16>
    %cst_16 = arith.constant dense<0.000000e+00> : vector<8x64xf32>
    %57 = tpu.matmul %56, %54, %cst_16 {dimension_numbers = #tpu.dot_dimension_numbers<[1], [0], [0], [1], [0, 0, 1, 1], [], []>} : vector<8x4xbf16>, vector<4x64xbf16>, vector<8x64xf32> -> vector<8x64xf32>
    %58 = arith.addf %49, %57 : vector<8x64xf32>
    %59 = vector.extract_strided_slice %26 {offsets = [4, 0, 0], sizes = [1, 8, 4], strides = [1, 1, 1]} : vector<9x8x4xbf16> to vector<1x8x4xbf16>
    %60 = vector.shape_cast %59 : vector<1x8x4xbf16> to vector<8x4xbf16>
    %cst_17 = arith.constant dense<0.000000e+00> : vector<8x64xf32>
    %61 = tpu.matmul %60, %23, %cst_17 {dimension_numbers = #tpu.dot_dimension_numbers<[1], [0], [0], [1], [0, 0, 1, 1], [], []>} : vector<8x4xbf16>, vector<4x64xbf16>, vector<8x64xf32> -> vector<8x64xf32>
    %62 = arith.addf %58, %61 : vector<8x64xf32>
    %63 = vector.extract_strided_slice %25 {offsets = [0, 10], sizes = [4, 64], strides = [1, 1]} : vector<4x82xbf16> to vector<4x64xbf16>
    %cst_18 = arith.constant 0.000000e+00 : bf16
    %64 = vector.broadcast %cst_18 : bf16 to vector<4x64xbf16>
    %65 = vector.shape_cast %20 : vector<1x64xi1> to vector<1x64xi1>
    %66 = vector.broadcast %65 : vector<1x64xi1> to vector<4x64xi1>
    %67 = arith.select %66, %63, %64 : vector<4x64xi1>, vector<4x64xbf16>
    %68 = vector.extract_strided_slice %26 {offsets = [5, 0, 0], sizes = [1, 8, 4], strides = [1, 1, 1]} : vector<9x8x4xbf16> to vector<1x8x4xbf16>
    %69 = vector.shape_cast %68 : vector<1x8x4xbf16> to vector<8x4xbf16>
    %cst_19 = arith.constant dense<0.000000e+00> : vector<8x64xf32>
    %70 = tpu.matmul %69, %67, %cst_19 {dimension_numbers = #tpu.dot_dimension_numbers<[1], [0], [0], [1], [0, 0, 1, 1], [], []>} : vector<8x4xbf16>, vector<4x64xbf16>, vector<8x64xf32> -> vector<8x64xf32>
    %71 = arith.addf %62, %70 : vector<8x64xf32>
    %72 = vector.extract_strided_slice %25 {offsets = [0, 16], sizes = [4, 64], strides = [1, 1]} : vector<4x82xbf16> to vector<4x64xbf16>
    %cst_20 = arith.constant 0.000000e+00 : bf16
    %73 = vector.broadcast %cst_20 : bf16 to vector<4x64xbf16>
    %74 = vector.shape_cast %18 : vector<1x64xi1> to vector<1x64xi1>
    %75 = vector.broadcast %74 : vector<1x64xi1> to vector<4x64xi1>
    %76 = arith.select %75, %72, %73 : vector<4x64xi1>, vector<4x64xbf16>
    %77 = vector.extract_strided_slice %26 {offsets = [6, 0, 0], sizes = [1, 8, 4], strides = [1, 1, 1]} : vector<9x8x4xbf16> to vector<1x8x4xbf16>
    %78 = vector.shape_cast %77 : vector<1x8x4xbf16> to vector<8x4xbf16>
    %cst_21 = arith.constant dense<0.000000e+00> : vector<8x64xf32>
    %79 = tpu.matmul %78, %76, %cst_21 {dimension_numbers = #tpu.dot_dimension_numbers<[1], [0], [0], [1], [0, 0, 1, 1], [], []>} : vector<8x4xbf16>, vector<4x64xbf16>, vector<8x64xf32> -> vector<8x64xf32>
    %80 = arith.addf %71, %79 : vector<8x64xf32>
    %81 = vector.extract_strided_slice %25 {offsets = [0, 17], sizes = [4, 64], strides = [1, 1]} : vector<4x82xbf16> to vector<4x64xbf16>
    %82 = vector.extract_strided_slice %26 {offsets = [7, 0, 0], sizes = [1, 8, 4], strides = [1, 1, 1]} : vector<9x8x4xbf16> to vector<1x8x4xbf16>
    %83 = vector.shape_cast %82 : vector<1x8x4xbf16> to vector<8x4xbf16>
    %cst_22 = arith.constant dense<0.000000e+00> : vector<8x64xf32>
    %84 = tpu.matmul %83, %81, %cst_22 {dimension_numbers = #tpu.dot_dimension_numbers<[1], [0], [0], [1], [0, 0, 1, 1], [], []>} : vector<8x4xbf16>, vector<4x64xbf16>, vector<8x64xf32> -> vector<8x64xf32>
    %85 = arith.addf %80, %84 : vector<8x64xf32>
    %86 = vector.extract_strided_slice %25 {offsets = [0, 18], sizes = [4, 64], strides = [1, 1]} : vector<4x82xbf16> to vector<4x64xbf16>
    %cst_23 = arith.constant 0.000000e+00 : bf16
    %87 = vector.broadcast %cst_23 : bf16 to vector<4x64xbf16>
    %88 = vector.shape_cast %20 : vector<1x64xi1> to vector<1x64xi1>
    %89 = vector.broadcast %88 : vector<1x64xi1> to vector<4x64xi1>
    %90 = arith.select %89, %86, %87 : vector<4x64xi1>, vector<4x64xbf16>
    %91 = vector.extract_strided_slice %26 {offsets = [8, 0, 0], sizes = [1, 8, 4], strides = [1, 1, 1]} : vector<9x8x4xbf16> to vector<1x8x4xbf16>
    %92 = vector.shape_cast %91 : vector<1x8x4xbf16> to vector<8x4xbf16>
    %cst_24 = arith.constant dense<0.000000e+00> : vector<8x64xf32>
    %93 = tpu.matmul %92, %90, %cst_24 {dimension_numbers = #tpu.dot_dimension_numbers<[1], [0], [0], [1], [0, 0, 1, 1], [], []>} : vector<8x4xbf16>, vector<4x64xbf16>, vector<8x64xf32> -> vector<8x64xf32>
    %94 = arith.addf %85, %93 : vector<8x64xf32>
    %c0_25 = arith.constant 0 : index
    %c0_26 = arith.constant 0 : index
    %95 = vector.load %arg3[%c0_25, %c0_26] : memref<8x3xf32, #tpu.memory_space<vmem>>, vector<8x3xf32>
    %96 = vector.extract_strided_slice %95 {offsets = [0, 0], sizes = [8, 1], strides = [1, 1]} : vector<8x3xf32> to vector<8x1xf32>
    %97 = vector.broadcast %96 : vector<8x1xf32> to vector<8x64xf32>
    %98 = arith.addf %94, %97 : vector<8x64xf32>
    %cst_27 = arith.constant dense<0.000000e+00> : vector<8xf32>
    %99 = vector.multi_reduction <add>, %98, %cst_27 [1] : vector<8x64xf32> to vector<8xf32>
    %100 = vector.shape_cast %99 : vector<8xf32> to vector<8x1xf32>
    %cst_28 = arith.constant 6.400000e+01 : f32
    %101 = vector.broadcast %cst_28 : f32 to vector<8x1xf32>
    %102 = arith.divf %100, %101 : vector<8x1xf32>
    %103 = vector.broadcast %102 : vector<8x1xf32> to vector<8x64xf32>
    %104 = arith.subf %98, %103 : vector<8x64xf32>
    %105 = arith.mulf %104, %104 : vector<8x64xf32>
    %cst_29 = arith.constant dense<0.000000e+00> : vector<8xf32>
    %106 = vector.multi_reduction <add>, %105, %cst_29 [1] : vector<8x64xf32> to vector<8xf32>
    %107 = vector.shape_cast %106 : vector<8xf32> to vector<8x1xf32>
    %cst_30 = arith.constant 6.400000e+01 : f32
    %108 = vector.broadcast %cst_30 : f32 to vector<8x1xf32>
    %109 = arith.divf %107, %108 : vector<8x1xf32>
    %cst_31 = arith.constant 9.99999974E-6 : f32
    %110 = vector.broadcast %cst_31 : f32 to vector<8x1xf32>
    %111 = arith.addf %109, %110 : vector<8x1xf32>
    %112 = math.rsqrt %111 : vector<8x1xf32>
    %113 = vector.broadcast %112 : vector<8x1xf32> to vector<8x64xf32>
    %114 = arith.mulf %104, %113 : vector<8x64xf32>
    %115 = vector.extract_strided_slice %95 {offsets = [0, 1], sizes = [8, 1], strides = [1, 1]} : vector<8x3xf32> to vector<8x1xf32>
    %116 = vector.broadcast %115 : vector<8x1xf32> to vector<8x64xf32>
    %117 = arith.mulf %114, %116 : vector<8x64xf32>
    %118 = vector.extract_strided_slice %95 {offsets = [0, 2], sizes = [8, 1], strides = [1, 1]} : vector<8x3xf32> to vector<8x1xf32>
    %119 = vector.broadcast %118 : vector<8x1xf32> to vector<8x64xf32>
    %120 = arith.addf %117, %119 : vector<8x64xf32>
    %cst_32 = arith.constant 0.000000e+00 : f32
    %121 = vector.broadcast %cst_32 : f32 to vector<8x64xf32>
    %122 = arith.maximumf %120, %121 : vector<8x64xf32>
    %123 = arith.truncf %122 : vector<8x64xf32> to vector<8x64xbf16>
    %c0_33 = arith.constant 0 : index
    %c0_34 = arith.constant 0 : index
    %c0_35 = arith.constant 0 : index
    %124 = vector.load %arg4[%c0_33, %c0_34, %c0_35] : memref<1x8x64xbf16, #tpu.memory_space<vmem>>, vector<1x8x64xbf16>
    %125 = vector.shape_cast %124 : vector<1x8x64xbf16> to vector<8x64xbf16>
    %126 = vector.shape_cast %123 : vector<8x64xbf16> to vector<1x8x64xbf16>
    tpu.vector_store %arg4[%c0_33, %c0_34, %c0_35], %126 {strides = array<i32>} : memref<1x8x64xbf16, #tpu.memory_space<vmem>>, vector<1x8x64xbf16>,
    return
  }
  func.func @transform_0(%arg0: i32) -> (i32, i32, i32) {
    %c0_i32 = arith.constant 0 : i32
    %c0_i32_0 = arith.constant 0 : i32
    %c0_i32_1 = arith.constant 0 : i32
    return %arg0, %c0_i32, %c0_i32_0 : i32, i32, i32
  }
  func.func @transform_1(%arg0: i32) -> (i32, i32, i32) {
    %c0_i32 = arith.constant 0 : i32
    %c0_i32_0 = arith.constant 0 : i32
    %c0_i32_1 = arith.constant 0 : i32
    %c0_i32_2 = arith.constant 0 : i32
    return %c0_i32, %c0_i32_0, %c0_i32_1 : i32, i32, i32
  }
  func.func @transform_2(%arg0: i32) -> (i32, i32) {
    %c0_i32 = arith.constant 0 : i32
    %c0_i32_0 = arith.constant 0 : i32
    %c0_i32_1 = arith.constant 0 : i32
    return %c0_i32, %c0_i32_0 : i32, i32
  }
  func.func @transform_3(%arg0: i32) -> (i32, i32, i32) {
    %c0_i32 = arith.constant 0 : i32
    %c0_i32_0 = arith.constant 0 : i32
    %c0_i32_1 = arith.constant 0 : i32
    return %arg0, %c0_i32, %c0_i32_0 : i32, i32, i32
  }
}

module attributes {stable_mosaic.version = 11 : i64} {
  func.func @kernel(%arg0: i32, %arg1: memref<1x8x16xbf16, #tpu.memory_space<vmem>>, %arg2: memref<1x9x8x8xbf16, #tpu.memory_space<vmem>>, %arg3: memref<8x3xf32, #tpu.memory_space<vmem>>, %arg4: memref<1x8x16xbf16, #tpu.memory_space<vmem>>) attributes {dimension_semantics = [#tpu.dimension_semantics<parallel>], iteration_bounds = array<i64: 2>, scalar_prefetch = 0 : i64, scratch_operands = 0 : i64, tpu.core_type = #tpu.core_type<tc>, window_params = [{transform_indices = @transform_0, window_bounds = array<i64: 1, 8, 16>}, {transform_indices = @transform_1, window_bounds = array<i64: 1, 9, 8, 8>}, {pipeline_mode = #tpu.pipeline_mode<synchronous>, transform_indices = @transform_2, window_bounds = array<i64: 8, 3>}, {transform_indices = @transform_3, window_bounds = array<i64: 1, 8, 16>}]} {
    %0 = tpu.iota {dimensions = array<i32: 1>} : vector<1x16xi32>
    %c4_i32 = arith.constant 4 : i32
    %c0_i32 = arith.constant 0 : i32
    %1 = arith.cmpi eq, %c4_i32, %c0_i32 : i32
    %c1_i32 = arith.constant 1 : i32
    %2 = arith.select %1, %c1_i32, %c4_i32 : i32
    %3 = vector.broadcast %2 : i32 to vector<1x16xi32>
    %4 = arith.remsi %0, %3 : vector<1x16xi32>
    %c0_i32_0 = arith.constant 0 : i32
    %5 = vector.broadcast %c0_i32_0 : i32 to vector<1x16xi32>
    %6 = arith.cmpi ne, %4, %5 : vector<1x16xi32>
    %c0_i32_1 = arith.constant 0 : i32
    %7 = vector.broadcast %c0_i32_1 : i32 to vector<1x16xi32>
    %8 = arith.cmpi slt, %4, %7 : vector<1x16xi32>
    %c0_i32_2 = arith.constant 0 : i32
    %9 = arith.cmpi slt, %2, %c0_i32_2 : i32
    %10 = vector.broadcast %9 : i1 to vector<1x16xi1>
    %11 = vector.broadcast %10 : vector<1x16xi1> to vector<1x16xi1>
    %12 = arith.xori %8, %11 : vector<1x16xi1>
    %13 = arith.andi %12, %6 : vector<1x16xi1>
    %14 = vector.broadcast %2 : i32 to vector<1x16xi32>
    %15 = arith.addi %4, %14 : vector<1x16xi32>
    %16 = arith.select %13, %15, %4 : vector<1x16xi1>, vector<1x16xi32>
    %c0_i32_3 = arith.constant 0 : i32
    %17 = vector.broadcast %c0_i32_3 : i32 to vector<1x16xi32>
    %18 = arith.cmpi sgt, %16, %17 : vector<1x16xi32>
    %c3_i32 = arith.constant 3 : i32
    %19 = vector.broadcast %c3_i32 : i32 to vector<1x16xi32>
    %20 = arith.cmpi slt, %16, %19 : vector<1x16xi32>
    %cst = arith.constant 0.000000e+00 : f32
    %21 = vector.broadcast %cst : f32 to vector<8x16xf32>
    %c0 = arith.constant 0 : index
    %c0_4 = arith.constant 0 : index
    %c0_5 = arith.constant 0 : index
    %22 = vector.load %arg1[%c0, %c0_4, %c0_5] : memref<1x8x16xbf16, #tpu.memory_space<vmem>>, vector<1x8x16xbf16>
    %23 = vector.shape_cast %22 : vector<1x8x16xbf16> to vector<8x16xbf16>
    %cst_6 = arith.constant 0.000000e+00 : bf16
    %24 = vector.broadcast %cst_6 : bf16 to vector<8x5xbf16>
    %25 = tpu.concatenate %24, %23, %24 in 1 : vector<8x5xbf16>, vector<8x16xbf16>, vector<8x5xbf16> -> vector<8x26xbf16>
    %c0_7 = arith.constant 0 : index
    %c0_8 = arith.constant 0 : index
    %c0_9 = arith.constant 0 : index
    %c0_10 = arith.constant 0 : index
    %26 = vector.load %arg2[%c0_7, %c0_8, %c0_9, %c0_10] : memref<1x9x8x8xbf16, #tpu.memory_space<vmem>>, vector<1x9x8x8xbf16>
    %27 = vector.shape_cast %26 : vector<1x9x8x8xbf16> to vector<9x8x8xbf16>
    %28 = vector.extract_strided_slice %25 {offsets = [0, 0], sizes = [8, 16], strides = [1, 1]} : vector<8x26xbf16> to vector<8x16xbf16>
    %cst_11 = arith.constant 0.000000e+00 : bf16
    %29 = vector.broadcast %cst_11 : bf16 to vector<8x16xbf16>
    %30 = vector.shape_cast %18 : vector<1x16xi1> to vector<1x16xi1>
    %31 = vector.broadcast %30 : vector<1x16xi1> to vector<8x16xi1>
    %32 = arith.select %31, %28, %29 : vector<8x16xi1>, vector<8x16xbf16>
    %33 = vector.extract_strided_slice %27 {offsets = [0, 0, 0], sizes = [1, 8, 8], strides = [1, 1, 1]} : vector<9x8x8xbf16> to vector<1x8x8xbf16>
    %34 = vector.shape_cast %33 : vector<1x8x8xbf16> to vector<8x8xbf16>
    %cst_12 = arith.constant dense<0.000000e+00> : vector<8x16xf32>
    %35 = tpu.matmul %34, %32, %cst_12 {dimension_numbers = #tpu.dot_dimension_numbers<[1], [0], [0], [1], [0, 0, 1, 1], [], []>} : vector<8x8xbf16>, vector<8x16xbf16>, vector<8x16xf32> -> vector<8x16xf32>
    %36 = arith.addf %21, %35 : vector<8x16xf32>
    %37 = vector.extract_strided_slice %25 {offsets = [0, 1], sizes = [8, 16], strides = [1, 1]} : vector<8x26xbf16> to vector<8x16xbf16>
    %38 = vector.extract_strided_slice %27 {offsets = [1, 0, 0], sizes = [1, 8, 8], strides = [1, 1, 1]} : vector<9x8x8xbf16> to vector<1x8x8xbf16>
    %39 = vector.shape_cast %38 : vector<1x8x8xbf16> to vector<8x8xbf16>
    %cst_13 = arith.constant dense<0.000000e+00> : vector<8x16xf32>
    %40 = tpu.matmul %39, %37, %cst_13 {dimension_numbers = #tpu.dot_dimension_numbers<[1], [0], [0], [1], [0, 0, 1, 1], [], []>} : vector<8x8xbf16>, vector<8x16xbf16>, vector<8x16xf32> -> vector<8x16xf32>
    %41 = arith.addf %36, %40 : vector<8x16xf32>
    %42 = vector.extract_strided_slice %25 {offsets = [0, 2], sizes = [8, 16], strides = [1, 1]} : vector<8x26xbf16> to vector<8x16xbf16>
    %cst_14 = arith.constant 0.000000e+00 : bf16
    %43 = vector.broadcast %cst_14 : bf16 to vector<8x16xbf16>
    %44 = vector.shape_cast %20 : vector<1x16xi1> to vector<1x16xi1>
    %45 = vector.broadcast %44 : vector<1x16xi1> to vector<8x16xi1>
    %46 = arith.select %45, %42, %43 : vector<8x16xi1>, vector<8x16xbf16>
    %47 = vector.extract_strided_slice %27 {offsets = [2, 0, 0], sizes = [1, 8, 8], strides = [1, 1, 1]} : vector<9x8x8xbf16> to vector<1x8x8xbf16>
    %48 = vector.shape_cast %47 : vector<1x8x8xbf16> to vector<8x8xbf16>
    %cst_15 = arith.constant dense<0.000000e+00> : vector<8x16xf32>
    %49 = tpu.matmul %48, %46, %cst_15 {dimension_numbers = #tpu.dot_dimension_numbers<[1], [0], [0], [1], [0, 0, 1, 1], [], []>} : vector<8x8xbf16>, vector<8x16xbf16>, vector<8x16xf32> -> vector<8x16xf32>
    %50 = arith.addf %41, %49 : vector<8x16xf32>
    %51 = vector.extract_strided_slice %25 {offsets = [0, 4], sizes = [8, 16], strides = [1, 1]} : vector<8x26xbf16> to vector<8x16xbf16>
    %cst_16 = arith.constant 0.000000e+00 : bf16
    %52 = vector.broadcast %cst_16 : bf16 to vector<8x16xbf16>
    %53 = vector.shape_cast %18 : vector<1x16xi1> to vector<1x16xi1>
    %54 = vector.broadcast %53 : vector<1x16xi1> to vector<8x16xi1>
    %55 = arith.select %54, %51, %52 : vector<8x16xi1>, vector<8x16xbf16>
    %56 = vector.extract_strided_slice %27 {offsets = [3, 0, 0], sizes = [1, 8, 8], strides = [1, 1, 1]} : vector<9x8x8xbf16> to vector<1x8x8xbf16>
    %57 = vector.shape_cast %56 : vector<1x8x8xbf16> to vector<8x8xbf16>
    %cst_17 = arith.constant dense<0.000000e+00> : vector<8x16xf32>
    %58 = tpu.matmul %57, %55, %cst_17 {dimension_numbers = #tpu.dot_dimension_numbers<[1], [0], [0], [1], [0, 0, 1, 1], [], []>} : vector<8x8xbf16>, vector<8x16xbf16>, vector<8x16xf32> -> vector<8x16xf32>
    %59 = arith.addf %50, %58 : vector<8x16xf32>
    %60 = vector.extract_strided_slice %27 {offsets = [4, 0, 0], sizes = [1, 8, 8], strides = [1, 1, 1]} : vector<9x8x8xbf16> to vector<1x8x8xbf16>
    %61 = vector.shape_cast %60 : vector<1x8x8xbf16> to vector<8x8xbf16>
    %cst_18 = arith.constant dense<0.000000e+00> : vector<8x16xf32>
    %62 = tpu.matmul %61, %23, %cst_18 {dimension_numbers = #tpu.dot_dimension_numbers<[1], [0], [0], [1], [0, 0, 1, 1], [], []>} : vector<8x8xbf16>, vector<8x16xbf16>, vector<8x16xf32> -> vector<8x16xf32>
    %63 = arith.addf %59, %62 : vector<8x16xf32>
    %64 = vector.extract_strided_slice %25 {offsets = [0, 6], sizes = [8, 16], strides = [1, 1]} : vector<8x26xbf16> to vector<8x16xbf16>
    %cst_19 = arith.constant 0.000000e+00 : bf16
    %65 = vector.broadcast %cst_19 : bf16 to vector<8x16xbf16>
    %66 = vector.shape_cast %20 : vector<1x16xi1> to vector<1x16xi1>
    %67 = vector.broadcast %66 : vector<1x16xi1> to vector<8x16xi1>
    %68 = arith.select %67, %64, %65 : vector<8x16xi1>, vector<8x16xbf16>
    %69 = vector.extract_strided_slice %27 {offsets = [5, 0, 0], sizes = [1, 8, 8], strides = [1, 1, 1]} : vector<9x8x8xbf16> to vector<1x8x8xbf16>
    %70 = vector.shape_cast %69 : vector<1x8x8xbf16> to vector<8x8xbf16>
    %cst_20 = arith.constant dense<0.000000e+00> : vector<8x16xf32>
    %71 = tpu.matmul %70, %68, %cst_20 {dimension_numbers = #tpu.dot_dimension_numbers<[1], [0], [0], [1], [0, 0, 1, 1], [], []>} : vector<8x8xbf16>, vector<8x16xbf16>, vector<8x16xf32> -> vector<8x16xf32>
    %72 = arith.addf %63, %71 : vector<8x16xf32>
    %73 = vector.extract_strided_slice %25 {offsets = [0, 8], sizes = [8, 16], strides = [1, 1]} : vector<8x26xbf16> to vector<8x16xbf16>
    %cst_21 = arith.constant 0.000000e+00 : bf16
    %74 = vector.broadcast %cst_21 : bf16 to vector<8x16xbf16>
    %75 = vector.shape_cast %18 : vector<1x16xi1> to vector<1x16xi1>
    %76 = vector.broadcast %75 : vector<1x16xi1> to vector<8x16xi1>
    %77 = arith.select %76, %73, %74 : vector<8x16xi1>, vector<8x16xbf16>
    %78 = vector.extract_strided_slice %27 {offsets = [6, 0, 0], sizes = [1, 8, 8], strides = [1, 1, 1]} : vector<9x8x8xbf16> to vector<1x8x8xbf16>
    %79 = vector.shape_cast %78 : vector<1x8x8xbf16> to vector<8x8xbf16>
    %cst_22 = arith.constant dense<0.000000e+00> : vector<8x16xf32>
    %80 = tpu.matmul %79, %77, %cst_22 {dimension_numbers = #tpu.dot_dimension_numbers<[1], [0], [0], [1], [0, 0, 1, 1], [], []>} : vector<8x8xbf16>, vector<8x16xbf16>, vector<8x16xf32> -> vector<8x16xf32>
    %81 = arith.addf %72, %80 : vector<8x16xf32>
    %82 = vector.extract_strided_slice %25 {offsets = [0, 9], sizes = [8, 16], strides = [1, 1]} : vector<8x26xbf16> to vector<8x16xbf16>
    %83 = vector.extract_strided_slice %27 {offsets = [7, 0, 0], sizes = [1, 8, 8], strides = [1, 1, 1]} : vector<9x8x8xbf16> to vector<1x8x8xbf16>
    %84 = vector.shape_cast %83 : vector<1x8x8xbf16> to vector<8x8xbf16>
    %cst_23 = arith.constant dense<0.000000e+00> : vector<8x16xf32>
    %85 = tpu.matmul %84, %82, %cst_23 {dimension_numbers = #tpu.dot_dimension_numbers<[1], [0], [0], [1], [0, 0, 1, 1], [], []>} : vector<8x8xbf16>, vector<8x16xbf16>, vector<8x16xf32> -> vector<8x16xf32>
    %86 = arith.addf %81, %85 : vector<8x16xf32>
    %87 = vector.extract_strided_slice %25 {offsets = [0, 10], sizes = [8, 16], strides = [1, 1]} : vector<8x26xbf16> to vector<8x16xbf16>
    %cst_24 = arith.constant 0.000000e+00 : bf16
    %88 = vector.broadcast %cst_24 : bf16 to vector<8x16xbf16>
    %89 = vector.shape_cast %20 : vector<1x16xi1> to vector<1x16xi1>
    %90 = vector.broadcast %89 : vector<1x16xi1> to vector<8x16xi1>
    %91 = arith.select %90, %87, %88 : vector<8x16xi1>, vector<8x16xbf16>
    %92 = vector.extract_strided_slice %27 {offsets = [8, 0, 0], sizes = [1, 8, 8], strides = [1, 1, 1]} : vector<9x8x8xbf16> to vector<1x8x8xbf16>
    %93 = vector.shape_cast %92 : vector<1x8x8xbf16> to vector<8x8xbf16>
    %cst_25 = arith.constant dense<0.000000e+00> : vector<8x16xf32>
    %94 = tpu.matmul %93, %91, %cst_25 {dimension_numbers = #tpu.dot_dimension_numbers<[1], [0], [0], [1], [0, 0, 1, 1], [], []>} : vector<8x8xbf16>, vector<8x16xbf16>, vector<8x16xf32> -> vector<8x16xf32>
    %95 = arith.addf %86, %94 : vector<8x16xf32>
    %c0_26 = arith.constant 0 : index
    %c0_27 = arith.constant 0 : index
    %96 = vector.load %arg3[%c0_26, %c0_27] : memref<8x3xf32, #tpu.memory_space<vmem>>, vector<8x3xf32>
    %97 = vector.extract_strided_slice %96 {offsets = [0, 0], sizes = [8, 1], strides = [1, 1]} : vector<8x3xf32> to vector<8x1xf32>
    %98 = vector.broadcast %97 : vector<8x1xf32> to vector<8x16xf32>
    %99 = arith.addf %95, %98 : vector<8x16xf32>
    %cst_28 = arith.constant dense<0.000000e+00> : vector<8xf32>
    %100 = vector.multi_reduction <add>, %99, %cst_28 [1] : vector<8x16xf32> to vector<8xf32>
    %101 = vector.shape_cast %100 : vector<8xf32> to vector<8x1xf32>
    %cst_29 = arith.constant 1.600000e+01 : f32
    %102 = vector.broadcast %cst_29 : f32 to vector<8x1xf32>
    %103 = arith.divf %101, %102 : vector<8x1xf32>
    %104 = vector.broadcast %103 : vector<8x1xf32> to vector<8x16xf32>
    %105 = arith.subf %99, %104 : vector<8x16xf32>
    %106 = arith.mulf %105, %105 : vector<8x16xf32>
    %cst_30 = arith.constant dense<0.000000e+00> : vector<8xf32>
    %107 = vector.multi_reduction <add>, %106, %cst_30 [1] : vector<8x16xf32> to vector<8xf32>
    %108 = vector.shape_cast %107 : vector<8xf32> to vector<8x1xf32>
    %cst_31 = arith.constant 1.600000e+01 : f32
    %109 = vector.broadcast %cst_31 : f32 to vector<8x1xf32>
    %110 = arith.divf %108, %109 : vector<8x1xf32>
    %cst_32 = arith.constant 9.99999974E-6 : f32
    %111 = vector.broadcast %cst_32 : f32 to vector<8x1xf32>
    %112 = arith.addf %110, %111 : vector<8x1xf32>
    %113 = math.rsqrt %112 : vector<8x1xf32>
    %114 = vector.broadcast %113 : vector<8x1xf32> to vector<8x16xf32>
    %115 = arith.mulf %105, %114 : vector<8x16xf32>
    %116 = vector.extract_strided_slice %96 {offsets = [0, 1], sizes = [8, 1], strides = [1, 1]} : vector<8x3xf32> to vector<8x1xf32>
    %117 = vector.broadcast %116 : vector<8x1xf32> to vector<8x16xf32>
    %118 = arith.mulf %115, %117 : vector<8x16xf32>
    %119 = vector.extract_strided_slice %96 {offsets = [0, 2], sizes = [8, 1], strides = [1, 1]} : vector<8x3xf32> to vector<8x1xf32>
    %120 = vector.broadcast %119 : vector<8x1xf32> to vector<8x16xf32>
    %121 = arith.addf %118, %120 : vector<8x16xf32>
    %cst_33 = arith.constant 0.000000e+00 : f32
    %122 = vector.broadcast %cst_33 : f32 to vector<8x16xf32>
    %123 = arith.maximumf %121, %122 : vector<8x16xf32>
    %124 = arith.truncf %123 : vector<8x16xf32> to vector<8x16xbf16>
    %c0_34 = arith.constant 0 : index
    %c0_35 = arith.constant 0 : index
    %c0_36 = arith.constant 0 : index
    %125 = vector.load %arg4[%c0_34, %c0_35, %c0_36] : memref<1x8x16xbf16, #tpu.memory_space<vmem>>, vector<1x8x16xbf16>
    %126 = vector.shape_cast %125 : vector<1x8x16xbf16> to vector<8x16xbf16>
    %127 = vector.shape_cast %124 : vector<8x16xbf16> to vector<1x8x16xbf16>
    tpu.vector_store %arg4[%c0_34, %c0_35, %c0_36], %127 {strides = array<i32>} : memref<1x8x16xbf16, #tpu.memory_space<vmem>>, vector<1x8x16xbf16>,
    return
  }
  func.func @transform_0(%arg0: i32) -> (i32, i32, i32) {
    %c0_i32 = arith.constant 0 : i32
    %c0_i32_0 = arith.constant 0 : i32
    %c0_i32_1 = arith.constant 0 : i32
    return %arg0, %c0_i32, %c0_i32_0 : i32, i32, i32
  }
  func.func @transform_1(%arg0: i32) -> (i32, i32, i32, i32) {
    %c0_i32 = arith.constant 0 : i32
    %c0_i32_0 = arith.constant 0 : i32
    %c0_i32_1 = arith.constant 0 : i32
    %c0_i32_2 = arith.constant 0 : i32
    return %arg0, %c0_i32, %c0_i32_0, %c0_i32_1 : i32, i32, i32, i32
  }
  func.func @transform_2(%arg0: i32) -> (i32, i32) {
    %c0_i32 = arith.constant 0 : i32
    %c0_i32_0 = arith.constant 0 : i32
    %c0_i32_1 = arith.constant 0 : i32
    return %c0_i32, %c0_i32_0 : i32, i32
  }
  func.func @transform_3(%arg0: i32) -> (i32, i32, i32) {
    %c0_i32 = arith.constant 0 : i32
    %c0_i32_0 = arith.constant 0 : i32
    %c0_i32_1 = arith.constant 0 : i32
    return %arg0, %c0_i32, %c0_i32_0 : i32, i32, i32
  }
}

module attributes {stable_mosaic.version = 11 : i64} {
  func.func @kernel(%arg0: i32, %arg1: memref<1x8x64xbf16, #tpu.memory_space<vmem>>, %arg2: memref<1x9x8x8xbf16, #tpu.memory_space<vmem>>, %arg3: memref<8x3xf32, #tpu.memory_space<vmem>>, %arg4: memref<1x8x64xbf16, #tpu.memory_space<vmem>>) attributes {dimension_semantics = [#tpu.dimension_semantics<parallel>], iteration_bounds = array<i64: 2>, scalar_prefetch = 0 : i64, scratch_operands = 0 : i64, tpu.core_type = #tpu.core_type<tc>, window_params = [{transform_indices = @transform_0, window_bounds = array<i64: 1, 8, 64>}, {transform_indices = @transform_1, window_bounds = array<i64: 1, 9, 8, 8>}, {pipeline_mode = #tpu.pipeline_mode<synchronous>, transform_indices = @transform_2, window_bounds = array<i64: 8, 3>}, {transform_indices = @transform_3, window_bounds = array<i64: 1, 8, 64>}]} {
    %0 = tpu.iota {dimensions = array<i32: 1>} : vector<1x64xi32>
    %c8_i32 = arith.constant 8 : i32
    %c0_i32 = arith.constant 0 : i32
    %1 = arith.cmpi eq, %c8_i32, %c0_i32 : i32
    %c1_i32 = arith.constant 1 : i32
    %2 = arith.select %1, %c1_i32, %c8_i32 : i32
    %3 = vector.broadcast %2 : i32 to vector<1x64xi32>
    %4 = arith.remsi %0, %3 : vector<1x64xi32>
    %c0_i32_0 = arith.constant 0 : i32
    %5 = vector.broadcast %c0_i32_0 : i32 to vector<1x64xi32>
    %6 = arith.cmpi ne, %4, %5 : vector<1x64xi32>
    %c0_i32_1 = arith.constant 0 : i32
    %7 = vector.broadcast %c0_i32_1 : i32 to vector<1x64xi32>
    %8 = arith.cmpi slt, %4, %7 : vector<1x64xi32>
    %c0_i32_2 = arith.constant 0 : i32
    %9 = arith.cmpi slt, %2, %c0_i32_2 : i32
    %10 = vector.broadcast %9 : i1 to vector<1x64xi1>
    %11 = vector.broadcast %10 : vector<1x64xi1> to vector<1x64xi1>
    %12 = arith.xori %8, %11 : vector<1x64xi1>
    %13 = arith.andi %12, %6 : vector<1x64xi1>
    %14 = vector.broadcast %2 : i32 to vector<1x64xi32>
    %15 = arith.addi %4, %14 : vector<1x64xi32>
    %16 = arith.select %13, %15, %4 : vector<1x64xi1>, vector<1x64xi32>
    %c0_i32_3 = arith.constant 0 : i32
    %17 = vector.broadcast %c0_i32_3 : i32 to vector<1x64xi32>
    %18 = arith.cmpi sgt, %16, %17 : vector<1x64xi32>
    %c7_i32 = arith.constant 7 : i32
    %19 = vector.broadcast %c7_i32 : i32 to vector<1x64xi32>
    %20 = arith.cmpi slt, %16, %19 : vector<1x64xi32>
    %cst = arith.constant 0.000000e+00 : f32
    %21 = vector.broadcast %cst : f32 to vector<8x64xf32>
    %c0 = arith.constant 0 : index
    %c0_4 = arith.constant 0 : index
    %c0_5 = arith.constant 0 : index
    %22 = vector.load %arg1[%c0, %c0_4, %c0_5] : memref<1x8x64xbf16, #tpu.memory_space<vmem>>, vector<1x8x64xbf16>
    %23 = vector.shape_cast %22 : vector<1x8x64xbf16> to vector<8x64xbf16>
    %cst_6 = arith.constant 0.000000e+00 : bf16
    %24 = vector.broadcast %cst_6 : bf16 to vector<8x9xbf16>
    %25 = tpu.concatenate %24, %23, %24 in 1 : vector<8x9xbf16>, vector<8x64xbf16>, vector<8x9xbf16> -> vector<8x82xbf16>
    %c0_7 = arith.constant 0 : index
    %c0_8 = arith.constant 0 : index
    %c0_9 = arith.constant 0 : index
    %c0_10 = arith.constant 0 : index
    %26 = vector.load %arg2[%c0_7, %c0_8, %c0_9, %c0_10] : memref<1x9x8x8xbf16, #tpu.memory_space<vmem>>, vector<1x9x8x8xbf16>
    %27 = vector.shape_cast %26 : vector<1x9x8x8xbf16> to vector<9x8x8xbf16>
    %28 = vector.extract_strided_slice %25 {offsets = [0, 0], sizes = [8, 64], strides = [1, 1]} : vector<8x82xbf16> to vector<8x64xbf16>
    %cst_11 = arith.constant 0.000000e+00 : bf16
    %29 = vector.broadcast %cst_11 : bf16 to vector<8x64xbf16>
    %30 = vector.shape_cast %18 : vector<1x64xi1> to vector<1x64xi1>
    %31 = vector.broadcast %30 : vector<1x64xi1> to vector<8x64xi1>
    %32 = arith.select %31, %28, %29 : vector<8x64xi1>, vector<8x64xbf16>
    %33 = vector.extract_strided_slice %27 {offsets = [0, 0, 0], sizes = [1, 8, 8], strides = [1, 1, 1]} : vector<9x8x8xbf16> to vector<1x8x8xbf16>
    %34 = vector.shape_cast %33 : vector<1x8x8xbf16> to vector<8x8xbf16>
    %cst_12 = arith.constant dense<0.000000e+00> : vector<8x64xf32>
    %35 = tpu.matmul %34, %32, %cst_12 {dimension_numbers = #tpu.dot_dimension_numbers<[1], [0], [0], [1], [0, 0, 1, 1], [], []>} : vector<8x8xbf16>, vector<8x64xbf16>, vector<8x64xf32> -> vector<8x64xf32>
    %36 = arith.addf %21, %35 : vector<8x64xf32>
    %37 = vector.extract_strided_slice %25 {offsets = [0, 1], sizes = [8, 64], strides = [1, 1]} : vector<8x82xbf16> to vector<8x64xbf16>
    %38 = vector.extract_strided_slice %27 {offsets = [1, 0, 0], sizes = [1, 8, 8], strides = [1, 1, 1]} : vector<9x8x8xbf16> to vector<1x8x8xbf16>
    %39 = vector.shape_cast %38 : vector<1x8x8xbf16> to vector<8x8xbf16>
    %cst_13 = arith.constant dense<0.000000e+00> : vector<8x64xf32>
    %40 = tpu.matmul %39, %37, %cst_13 {dimension_numbers = #tpu.dot_dimension_numbers<[1], [0], [0], [1], [0, 0, 1, 1], [], []>} : vector<8x8xbf16>, vector<8x64xbf16>, vector<8x64xf32> -> vector<8x64xf32>
    %41 = arith.addf %36, %40 : vector<8x64xf32>
    %42 = vector.extract_strided_slice %25 {offsets = [0, 2], sizes = [8, 64], strides = [1, 1]} : vector<8x82xbf16> to vector<8x64xbf16>
    %cst_14 = arith.constant 0.000000e+00 : bf16
    %43 = vector.broadcast %cst_14 : bf16 to vector<8x64xbf16>
    %44 = vector.shape_cast %20 : vector<1x64xi1> to vector<1x64xi1>
    %45 = vector.broadcast %44 : vector<1x64xi1> to vector<8x64xi1>
    %46 = arith.select %45, %42, %43 : vector<8x64xi1>, vector<8x64xbf16>
    %47 = vector.extract_strided_slice %27 {offsets = [2, 0, 0], sizes = [1, 8, 8], strides = [1, 1, 1]} : vector<9x8x8xbf16> to vector<1x8x8xbf16>
    %48 = vector.shape_cast %47 : vector<1x8x8xbf16> to vector<8x8xbf16>
    %cst_15 = arith.constant dense<0.000000e+00> : vector<8x64xf32>
    %49 = tpu.matmul %48, %46, %cst_15 {dimension_numbers = #tpu.dot_dimension_numbers<[1], [0], [0], [1], [0, 0, 1, 1], [], []>} : vector<8x8xbf16>, vector<8x64xbf16>, vector<8x64xf32> -> vector<8x64xf32>
    %50 = arith.addf %41, %49 : vector<8x64xf32>
    %51 = vector.extract_strided_slice %25 {offsets = [0, 8], sizes = [8, 64], strides = [1, 1]} : vector<8x82xbf16> to vector<8x64xbf16>
    %cst_16 = arith.constant 0.000000e+00 : bf16
    %52 = vector.broadcast %cst_16 : bf16 to vector<8x64xbf16>
    %53 = vector.shape_cast %18 : vector<1x64xi1> to vector<1x64xi1>
    %54 = vector.broadcast %53 : vector<1x64xi1> to vector<8x64xi1>
    %55 = arith.select %54, %51, %52 : vector<8x64xi1>, vector<8x64xbf16>
    %56 = vector.extract_strided_slice %27 {offsets = [3, 0, 0], sizes = [1, 8, 8], strides = [1, 1, 1]} : vector<9x8x8xbf16> to vector<1x8x8xbf16>
    %57 = vector.shape_cast %56 : vector<1x8x8xbf16> to vector<8x8xbf16>
    %cst_17 = arith.constant dense<0.000000e+00> : vector<8x64xf32>
    %58 = tpu.matmul %57, %55, %cst_17 {dimension_numbers = #tpu.dot_dimension_numbers<[1], [0], [0], [1], [0, 0, 1, 1], [], []>} : vector<8x8xbf16>, vector<8x64xbf16>, vector<8x64xf32> -> vector<8x64xf32>
    %59 = arith.addf %50, %58 : vector<8x64xf32>
    %60 = vector.extract_strided_slice %27 {offsets = [4, 0, 0], sizes = [1, 8, 8], strides = [1, 1, 1]} : vector<9x8x8xbf16> to vector<1x8x8xbf16>
    %61 = vector.shape_cast %60 : vector<1x8x8xbf16> to vector<8x8xbf16>
    %cst_18 = arith.constant dense<0.000000e+00> : vector<8x64xf32>
    %62 = tpu.matmul %61, %23, %cst_18 {dimension_numbers = #tpu.dot_dimension_numbers<[1], [0], [0], [1], [0, 0, 1, 1], [], []>} : vector<8x8xbf16>, vector<8x64xbf16>, vector<8x64xf32> -> vector<8x64xf32>
    %63 = arith.addf %59, %62 : vector<8x64xf32>
    %64 = vector.extract_strided_slice %25 {offsets = [0, 10], sizes = [8, 64], strides = [1, 1]} : vector<8x82xbf16> to vector<8x64xbf16>
    %cst_19 = arith.constant 0.000000e+00 : bf16
    %65 = vector.broadcast %cst_19 : bf16 to vector<8x64xbf16>
    %66 = vector.shape_cast %20 : vector<1x64xi1> to vector<1x64xi1>
    %67 = vector.broadcast %66 : vector<1x64xi1> to vector<8x64xi1>
    %68 = arith.select %67, %64, %65 : vector<8x64xi1>, vector<8x64xbf16>
    %69 = vector.extract_strided_slice %27 {offsets = [5, 0, 0], sizes = [1, 8, 8], strides = [1, 1, 1]} : vector<9x8x8xbf16> to vector<1x8x8xbf16>
    %70 = vector.shape_cast %69 : vector<1x8x8xbf16> to vector<8x8xbf16>
    %cst_20 = arith.constant dense<0.000000e+00> : vector<8x64xf32>
    %71 = tpu.matmul %70, %68, %cst_20 {dimension_numbers = #tpu.dot_dimension_numbers<[1], [0], [0], [1], [0, 0, 1, 1], [], []>} : vector<8x8xbf16>, vector<8x64xbf16>, vector<8x64xf32> -> vector<8x64xf32>
    %72 = arith.addf %63, %71 : vector<8x64xf32>
    %73 = vector.extract_strided_slice %25 {offsets = [0, 16], sizes = [8, 64], strides = [1, 1]} : vector<8x82xbf16> to vector<8x64xbf16>
    %cst_21 = arith.constant 0.000000e+00 : bf16
    %74 = vector.broadcast %cst_21 : bf16 to vector<8x64xbf16>
    %75 = vector.shape_cast %18 : vector<1x64xi1> to vector<1x64xi1>
    %76 = vector.broadcast %75 : vector<1x64xi1> to vector<8x64xi1>
    %77 = arith.select %76, %73, %74 : vector<8x64xi1>, vector<8x64xbf16>
    %78 = vector.extract_strided_slice %27 {offsets = [6, 0, 0], sizes = [1, 8, 8], strides = [1, 1, 1]} : vector<9x8x8xbf16> to vector<1x8x8xbf16>
    %79 = vector.shape_cast %78 : vector<1x8x8xbf16> to vector<8x8xbf16>
    %cst_22 = arith.constant dense<0.000000e+00> : vector<8x64xf32>
    %80 = tpu.matmul %79, %77, %cst_22 {dimension_numbers = #tpu.dot_dimension_numbers<[1], [0], [0], [1], [0, 0, 1, 1], [], []>} : vector<8x8xbf16>, vector<8x64xbf16>, vector<8x64xf32> -> vector<8x64xf32>
    %81 = arith.addf %72, %80 : vector<8x64xf32>
    %82 = vector.extract_strided_slice %25 {offsets = [0, 17], sizes = [8, 64], strides = [1, 1]} : vector<8x82xbf16> to vector<8x64xbf16>
    %83 = vector.extract_strided_slice %27 {offsets = [7, 0, 0], sizes = [1, 8, 8], strides = [1, 1, 1]} : vector<9x8x8xbf16> to vector<1x8x8xbf16>
    %84 = vector.shape_cast %83 : vector<1x8x8xbf16> to vector<8x8xbf16>
    %cst_23 = arith.constant dense<0.000000e+00> : vector<8x64xf32>
    %85 = tpu.matmul %84, %82, %cst_23 {dimension_numbers = #tpu.dot_dimension_numbers<[1], [0], [0], [1], [0, 0, 1, 1], [], []>} : vector<8x8xbf16>, vector<8x64xbf16>, vector<8x64xf32> -> vector<8x64xf32>
    %86 = arith.addf %81, %85 : vector<8x64xf32>
    %87 = vector.extract_strided_slice %25 {offsets = [0, 18], sizes = [8, 64], strides = [1, 1]} : vector<8x82xbf16> to vector<8x64xbf16>
    %cst_24 = arith.constant 0.000000e+00 : bf16
    %88 = vector.broadcast %cst_24 : bf16 to vector<8x64xbf16>
    %89 = vector.shape_cast %20 : vector<1x64xi1> to vector<1x64xi1>
    %90 = vector.broadcast %89 : vector<1x64xi1> to vector<8x64xi1>
    %91 = arith.select %90, %87, %88 : vector<8x64xi1>, vector<8x64xbf16>
    %92 = vector.extract_strided_slice %27 {offsets = [8, 0, 0], sizes = [1, 8, 8], strides = [1, 1, 1]} : vector<9x8x8xbf16> to vector<1x8x8xbf16>
    %93 = vector.shape_cast %92 : vector<1x8x8xbf16> to vector<8x8xbf16>
    %cst_25 = arith.constant dense<0.000000e+00> : vector<8x64xf32>
    %94 = tpu.matmul %93, %91, %cst_25 {dimension_numbers = #tpu.dot_dimension_numbers<[1], [0], [0], [1], [0, 0, 1, 1], [], []>} : vector<8x8xbf16>, vector<8x64xbf16>, vector<8x64xf32> -> vector<8x64xf32>
    %95 = arith.addf %86, %94 : vector<8x64xf32>
    %c0_26 = arith.constant 0 : index
    %c0_27 = arith.constant 0 : index
    %96 = vector.load %arg3[%c0_26, %c0_27] : memref<8x3xf32, #tpu.memory_space<vmem>>, vector<8x3xf32>
    %97 = vector.extract_strided_slice %96 {offsets = [0, 0], sizes = [8, 1], strides = [1, 1]} : vector<8x3xf32> to vector<8x1xf32>
    %98 = vector.broadcast %97 : vector<8x1xf32> to vector<8x64xf32>
    %99 = arith.addf %95, %98 : vector<8x64xf32>
    %100 = arith.truncf %99 : vector<8x64xf32> to vector<8x64xbf16>
    %c0_28 = arith.constant 0 : index
    %c0_29 = arith.constant 0 : index
    %c0_30 = arith.constant 0 : index
    %101 = vector.load %arg4[%c0_28, %c0_29, %c0_30] : memref<1x8x64xbf16, #tpu.memory_space<vmem>>, vector<1x8x64xbf16>
    %102 = vector.shape_cast %101 : vector<1x8x64xbf16> to vector<8x64xbf16>
    %103 = vector.shape_cast %100 : vector<8x64xbf16> to vector<1x8x64xbf16>
    tpu.vector_store %arg4[%c0_28, %c0_29, %c0_30], %103 {strides = array<i32>} : memref<1x8x64xbf16, #tpu.memory_space<vmem>>, vector<1x8x64xbf16>,
    return
  }
  func.func @transform_0(%arg0: i32) -> (i32, i32, i32) {
    %c0_i32 = arith.constant 0 : i32
    %c0_i32_0 = arith.constant 0 : i32
    %c0_i32_1 = arith.constant 0 : i32
    return %arg0, %c0_i32, %c0_i32_0 : i32, i32, i32
  }
  func.func @transform_1(%arg0: i32) -> (i32, i32, i32, i32) {
    %c0_i32 = arith.constant 0 : i32
    %c0_i32_0 = arith.constant 0 : i32
    %c0_i32_1 = arith.constant 0 : i32
    %c0_i32_2 = arith.constant 0 : i32
    return %arg0, %c0_i32, %c0_i32_0, %c0_i32_1 : i32, i32, i32, i32
  }
  func.func @transform_2(%arg0: i32) -> (i32, i32) {
    %c0_i32 = arith.constant 0 : i32
    %c0_i32_0 = arith.constant 0 : i32
    %c0_i32_1 = arith.constant 0 : i32
    return %c0_i32, %c0_i32_0 : i32, i32
  }
  func.func @transform_3(%arg0: i32) -> (i32, i32, i32) {
    %c0_i32 = arith.constant 0 : i32
    %c0_i32_0 = arith.constant 0 : i32
    %c0_i32_1 = arith.constant 0 : i32
    return %arg0, %c0_i32, %c0_i32_0 : i32, i32, i32
  }
}

module attributes {stable_mosaic.version = 11 : i64} {
  func.func @kernel(%arg0: i32, %arg1: memref<1x8x64xbf16, #tpu.memory_space<vmem>>, %arg2: memref<1x8x64xbf16, #tpu.memory_space<vmem>>, %arg3: memref<9x4x8xbf16, #tpu.memory_space<vmem>>, %arg4: memref<9x4x8xbf16, #tpu.memory_space<vmem>>, %arg5: memref<4x3xf32, #tpu.memory_space<vmem>>, %arg6: memref<1x4x64xbf16, #tpu.memory_space<vmem>>) attributes {dimension_semantics = [#tpu.dimension_semantics<parallel>], iteration_bounds = array<i64: 2>, scalar_prefetch = 0 : i64, scratch_operands = 0 : i64, tpu.core_type = #tpu.core_type<tc>, window_params = [{transform_indices = @transform_0, window_bounds = array<i64: 1, 8, 64>}, {transform_indices = @transform_1, window_bounds = array<i64: 1, 8, 64>}, {pipeline_mode = #tpu.pipeline_mode<synchronous>, transform_indices = @transform_2, window_bounds = array<i64: 9, 4, 8>}, {pipeline_mode = #tpu.pipeline_mode<synchronous>, transform_indices = @transform_3, window_bounds = array<i64: 9, 4, 8>}, {pipeline_mode = #tpu.pipeline_mode<synchronous>, transform_indices = @transform_4, window_bounds = array<i64: 4, 3>}, {transform_indices = @transform_5, window_bounds = array<i64: 1, 4, 64>}]} {
    %0 = tpu.iota {dimensions = array<i32: 1>} : vector<1x64xi32>
    %c8_i32 = arith.constant 8 : i32
    %c0_i32 = arith.constant 0 : i32
    %1 = arith.cmpi eq, %c8_i32, %c0_i32 : i32
    %c1_i32 = arith.constant 1 : i32
    %2 = arith.select %1, %c1_i32, %c8_i32 : i32
    %3 = vector.broadcast %2 : i32 to vector<1x64xi32>
    %4 = arith.remsi %0, %3 : vector<1x64xi32>
    %c0_i32_0 = arith.constant 0 : i32
    %5 = vector.broadcast %c0_i32_0 : i32 to vector<1x64xi32>
    %6 = arith.cmpi ne, %4, %5 : vector<1x64xi32>
    %c0_i32_1 = arith.constant 0 : i32
    %7 = vector.broadcast %c0_i32_1 : i32 to vector<1x64xi32>
    %8 = arith.cmpi slt, %4, %7 : vector<1x64xi32>
    %c0_i32_2 = arith.constant 0 : i32
    %9 = arith.cmpi slt, %2, %c0_i32_2 : i32
    %10 = vector.broadcast %9 : i1 to vector<1x64xi1>
    %11 = vector.broadcast %10 : vector<1x64xi1> to vector<1x64xi1>
    %12 = arith.xori %8, %11 : vector<1x64xi1>
    %13 = arith.andi %12, %6 : vector<1x64xi1>
    %14 = vector.broadcast %2 : i32 to vector<1x64xi32>
    %15 = arith.addi %4, %14 : vector<1x64xi32>
    %16 = arith.select %13, %15, %4 : vector<1x64xi1>, vector<1x64xi32>
    %c0_i32_3 = arith.constant 0 : i32
    %17 = vector.broadcast %c0_i32_3 : i32 to vector<1x64xi32>
    %18 = arith.cmpi sgt, %16, %17 : vector<1x64xi32>
    %c7_i32 = arith.constant 7 : i32
    %19 = vector.broadcast %c7_i32 : i32 to vector<1x64xi32>
    %20 = arith.cmpi slt, %16, %19 : vector<1x64xi32>
    %cst = arith.constant 0.000000e+00 : f32
    %21 = vector.broadcast %cst : f32 to vector<4x64xf32>
    %c0 = arith.constant 0 : index
    %c0_4 = arith.constant 0 : index
    %c0_5 = arith.constant 0 : index
    %22 = vector.load %arg1[%c0, %c0_4, %c0_5] : memref<1x8x64xbf16, #tpu.memory_space<vmem>>, vector<1x8x64xbf16>
    %23 = vector.shape_cast %22 : vector<1x8x64xbf16> to vector<8x64xbf16>
    %cst_6 = arith.constant 0.000000e+00 : bf16
    %24 = vector.broadcast %cst_6 : bf16 to vector<8x9xbf16>
    %25 = tpu.concatenate %24, %23, %24 in 1 : vector<8x9xbf16>, vector<8x64xbf16>, vector<8x9xbf16> -> vector<8x82xbf16>
    %c0_7 = arith.constant 0 : index
    %c0_8 = arith.constant 0 : index
    %c0_9 = arith.constant 0 : index
    %26 = vector.load %arg3[%c0_7, %c0_8, %c0_9] : memref<9x4x8xbf16, #tpu.memory_space<vmem>>, vector<9x4x8xbf16>
    %27 = vector.extract_strided_slice %25 {offsets = [0, 0], sizes = [8, 64], strides = [1, 1]} : vector<8x82xbf16> to vector<8x64xbf16>
    %cst_10 = arith.constant 0.000000e+00 : bf16
    %28 = vector.broadcast %cst_10 : bf16 to vector<8x64xbf16>
    %29 = vector.shape_cast %18 : vector<1x64xi1> to vector<1x64xi1>
    %30 = vector.broadcast %29 : vector<1x64xi1> to vector<8x64xi1>
    %31 = arith.select %30, %27, %28 : vector<8x64xi1>, vector<8x64xbf16>
    %32 = vector.extract_strided_slice %26 {offsets = [0, 0, 0], sizes = [1, 4, 8], strides = [1, 1, 1]} : vector<9x4x8xbf16> to vector<1x4x8xbf16>
    %33 = vector.shape_cast %32 : vector<1x4x8xbf16> to vector<4x8xbf16>
    %cst_11 = arith.constant dense<0.000000e+00> : vector<4x64xf32>
    %34 = tpu.matmul %33, %31, %cst_11 {dimension_numbers = #tpu.dot_dimension_numbers<[1], [0], [0], [1], [0, 0, 1, 1], [], []>} : vector<4x8xbf16>, vector<8x64xbf16>, vector<4x64xf32> -> vector<4x64xf32>
    %35 = arith.addf %21, %34 : vector<4x64xf32>
    %36 = vector.extract_strided_slice %25 {offsets = [0, 1], sizes = [8, 64], strides = [1, 1]} : vector<8x82xbf16> to vector<8x64xbf16>
    %37 = vector.extract_strided_slice %26 {offsets = [1, 0, 0], sizes = [1, 4, 8], strides = [1, 1, 1]} : vector<9x4x8xbf16> to vector<1x4x8xbf16>
    %38 = vector.shape_cast %37 : vector<1x4x8xbf16> to vector<4x8xbf16>
    %cst_12 = arith.constant dense<0.000000e+00> : vector<4x64xf32>
    %39 = tpu.matmul %38, %36, %cst_12 {dimension_numbers = #tpu.dot_dimension_numbers<[1], [0], [0], [1], [0, 0, 1, 1], [], []>} : vector<4x8xbf16>, vector<8x64xbf16>, vector<4x64xf32> -> vector<4x64xf32>
    %40 = arith.addf %35, %39 : vector<4x64xf32>
    %41 = vector.extract_strided_slice %25 {offsets = [0, 2], sizes = [8, 64], strides = [1, 1]} : vector<8x82xbf16> to vector<8x64xbf16>
    %cst_13 = arith.constant 0.000000e+00 : bf16
    %42 = vector.broadcast %cst_13 : bf16 to vector<8x64xbf16>
    %43 = vector.shape_cast %20 : vector<1x64xi1> to vector<1x64xi1>
    %44 = vector.broadcast %43 : vector<1x64xi1> to vector<8x64xi1>
    %45 = arith.select %44, %41, %42 : vector<8x64xi1>, vector<8x64xbf16>
    %46 = vector.extract_strided_slice %26 {offsets = [2, 0, 0], sizes = [1, 4, 8], strides = [1, 1, 1]} : vector<9x4x8xbf16> to vector<1x4x8xbf16>
    %47 = vector.shape_cast %46 : vector<1x4x8xbf16> to vector<4x8xbf16>
    %cst_14 = arith.constant dense<0.000000e+00> : vector<4x64xf32>
    %48 = tpu.matmul %47, %45, %cst_14 {dimension_numbers = #tpu.dot_dimension_numbers<[1], [0], [0], [1], [0, 0, 1, 1], [], []>} : vector<4x8xbf16>, vector<8x64xbf16>, vector<4x64xf32> -> vector<4x64xf32>
    %49 = arith.addf %40, %48 : vector<4x64xf32>
    %50 = vector.extract_strided_slice %25 {offsets = [0, 8], sizes = [8, 64], strides = [1, 1]} : vector<8x82xbf16> to vector<8x64xbf16>
    %cst_15 = arith.constant 0.000000e+00 : bf16
    %51 = vector.broadcast %cst_15 : bf16 to vector<8x64xbf16>
    %52 = vector.shape_cast %18 : vector<1x64xi1> to vector<1x64xi1>
    %53 = vector.broadcast %52 : vector<1x64xi1> to vector<8x64xi1>
    %54 = arith.select %53, %50, %51 : vector<8x64xi1>, vector<8x64xbf16>
    %55 = vector.extract_strided_slice %26 {offsets = [3, 0, 0], sizes = [1, 4, 8], strides = [1, 1, 1]} : vector<9x4x8xbf16> to vector<1x4x8xbf16>
    %56 = vector.shape_cast %55 : vector<1x4x8xbf16> to vector<4x8xbf16>
    %cst_16 = arith.constant dense<0.000000e+00> : vector<4x64xf32>
    %57 = tpu.matmul %56, %54, %cst_16 {dimension_numbers = #tpu.dot_dimension_numbers<[1], [0], [0], [1], [0, 0, 1, 1], [], []>} : vector<4x8xbf16>, vector<8x64xbf16>, vector<4x64xf32> -> vector<4x64xf32>
    %58 = arith.addf %49, %57 : vector<4x64xf32>
    %59 = vector.extract_strided_slice %26 {offsets = [4, 0, 0], sizes = [1, 4, 8], strides = [1, 1, 1]} : vector<9x4x8xbf16> to vector<1x4x8xbf16>
    %60 = vector.shape_cast %59 : vector<1x4x8xbf16> to vector<4x8xbf16>
    %cst_17 = arith.constant dense<0.000000e+00> : vector<4x64xf32>
    %61 = tpu.matmul %60, %23, %cst_17 {dimension_numbers = #tpu.dot_dimension_numbers<[1], [0], [0], [1], [0, 0, 1, 1], [], []>} : vector<4x8xbf16>, vector<8x64xbf16>, vector<4x64xf32> -> vector<4x64xf32>
    %62 = arith.addf %58, %61 : vector<4x64xf32>
    %63 = vector.extract_strided_slice %25 {offsets = [0, 10], sizes = [8, 64], strides = [1, 1]} : vector<8x82xbf16> to vector<8x64xbf16>
    %cst_18 = arith.constant 0.000000e+00 : bf16
    %64 = vector.broadcast %cst_18 : bf16 to vector<8x64xbf16>
    %65 = vector.shape_cast %20 : vector<1x64xi1> to vector<1x64xi1>
    %66 = vector.broadcast %65 : vector<1x64xi1> to vector<8x64xi1>
    %67 = arith.select %66, %63, %64 : vector<8x64xi1>, vector<8x64xbf16>
    %68 = vector.extract_strided_slice %26 {offsets = [5, 0, 0], sizes = [1, 4, 8], strides = [1, 1, 1]} : vector<9x4x8xbf16> to vector<1x4x8xbf16>
    %69 = vector.shape_cast %68 : vector<1x4x8xbf16> to vector<4x8xbf16>
    %cst_19 = arith.constant dense<0.000000e+00> : vector<4x64xf32>
    %70 = tpu.matmul %69, %67, %cst_19 {dimension_numbers = #tpu.dot_dimension_numbers<[1], [0], [0], [1], [0, 0, 1, 1], [], []>} : vector<4x8xbf16>, vector<8x64xbf16>, vector<4x64xf32> -> vector<4x64xf32>
    %71 = arith.addf %62, %70 : vector<4x64xf32>
    %72 = vector.extract_strided_slice %25 {offsets = [0, 16], sizes = [8, 64], strides = [1, 1]} : vector<8x82xbf16> to vector<8x64xbf16>
    %cst_20 = arith.constant 0.000000e+00 : bf16
    %73 = vector.broadcast %cst_20 : bf16 to vector<8x64xbf16>
    %74 = vector.shape_cast %18 : vector<1x64xi1> to vector<1x64xi1>
    %75 = vector.broadcast %74 : vector<1x64xi1> to vector<8x64xi1>
    %76 = arith.select %75, %72, %73 : vector<8x64xi1>, vector<8x64xbf16>
    %77 = vector.extract_strided_slice %26 {offsets = [6, 0, 0], sizes = [1, 4, 8], strides = [1, 1, 1]} : vector<9x4x8xbf16> to vector<1x4x8xbf16>
    %78 = vector.shape_cast %77 : vector<1x4x8xbf16> to vector<4x8xbf16>
    %cst_21 = arith.constant dense<0.000000e+00> : vector<4x64xf32>
    %79 = tpu.matmul %78, %76, %cst_21 {dimension_numbers = #tpu.dot_dimension_numbers<[1], [0], [0], [1], [0, 0, 1, 1], [], []>} : vector<4x8xbf16>, vector<8x64xbf16>, vector<4x64xf32> -> vector<4x64xf32>
    %80 = arith.addf %71, %79 : vector<4x64xf32>
    %81 = vector.extract_strided_slice %25 {offsets = [0, 17], sizes = [8, 64], strides = [1, 1]} : vector<8x82xbf16> to vector<8x64xbf16>
    %82 = vector.extract_strided_slice %26 {offsets = [7, 0, 0], sizes = [1, 4, 8], strides = [1, 1, 1]} : vector<9x4x8xbf16> to vector<1x4x8xbf16>
    %83 = vector.shape_cast %82 : vector<1x4x8xbf16> to vector<4x8xbf16>
    %cst_22 = arith.constant dense<0.000000e+00> : vector<4x64xf32>
    %84 = tpu.matmul %83, %81, %cst_22 {dimension_numbers = #tpu.dot_dimension_numbers<[1], [0], [0], [1], [0, 0, 1, 1], [], []>} : vector<4x8xbf16>, vector<8x64xbf16>, vector<4x64xf32> -> vector<4x64xf32>
    %85 = arith.addf %80, %84 : vector<4x64xf32>
    %86 = vector.extract_strided_slice %25 {offsets = [0, 18], sizes = [8, 64], strides = [1, 1]} : vector<8x82xbf16> to vector<8x64xbf16>
    %cst_23 = arith.constant 0.000000e+00 : bf16
    %87 = vector.broadcast %cst_23 : bf16 to vector<8x64xbf16>
    %88 = vector.shape_cast %20 : vector<1x64xi1> to vector<1x64xi1>
    %89 = vector.broadcast %88 : vector<1x64xi1> to vector<8x64xi1>
    %90 = arith.select %89, %86, %87 : vector<8x64xi1>, vector<8x64xbf16>
    %91 = vector.extract_strided_slice %26 {offsets = [8, 0, 0], sizes = [1, 4, 8], strides = [1, 1, 1]} : vector<9x4x8xbf16> to vector<1x4x8xbf16>
    %92 = vector.shape_cast %91 : vector<1x4x8xbf16> to vector<4x8xbf16>
    %cst_24 = arith.constant dense<0.000000e+00> : vector<4x64xf32>
    %93 = tpu.matmul %92, %90, %cst_24 {dimension_numbers = #tpu.dot_dimension_numbers<[1], [0], [0], [1], [0, 0, 1, 1], [], []>} : vector<4x8xbf16>, vector<8x64xbf16>, vector<4x64xf32> -> vector<4x64xf32>
    %94 = arith.addf %85, %93 : vector<4x64xf32>
    %c0_25 = arith.constant 0 : index
    %c0_26 = arith.constant 0 : index
    %c0_27 = arith.constant 0 : index
    %95 = vector.load %arg2[%c0_25, %c0_26, %c0_27] : memref<1x8x64xbf16, #tpu.memory_space<vmem>>, vector<1x8x64xbf16>
    %96 = vector.shape_cast %95 : vector<1x8x64xbf16> to vector<8x64xbf16>
    %cst_28 = arith.constant 0.000000e+00 : bf16
    %97 = vector.broadcast %cst_28 : bf16 to vector<8x9xbf16>
    %98 = tpu.concatenate %97, %96, %97 in 1 : vector<8x9xbf16>, vector<8x64xbf16>, vector<8x9xbf16> -> vector<8x82xbf16>
    %c0_29 = arith.constant 0 : index
    %c0_30 = arith.constant 0 : index
    %c0_31 = arith.constant 0 : index
    %99 = vector.load %arg4[%c0_29, %c0_30, %c0_31] : memref<9x4x8xbf16, #tpu.memory_space<vmem>>, vector<9x4x8xbf16>
    %100 = vector.extract_strided_slice %98 {offsets = [0, 0], sizes = [8, 64], strides = [1, 1]} : vector<8x82xbf16> to vector<8x64xbf16>
    %cst_32 = arith.constant 0.000000e+00 : bf16
    %101 = vector.broadcast %cst_32 : bf16 to vector<8x64xbf16>
    %102 = vector.shape_cast %18 : vector<1x64xi1> to vector<1x64xi1>
    %103 = vector.broadcast %102 : vector<1x64xi1> to vector<8x64xi1>
    %104 = arith.select %103, %100, %101 : vector<8x64xi1>, vector<8x64xbf16>
    %105 = vector.extract_strided_slice %99 {offsets = [0, 0, 0], sizes = [1, 4, 8], strides = [1, 1, 1]} : vector<9x4x8xbf16> to vector<1x4x8xbf16>
    %106 = vector.shape_cast %105 : vector<1x4x8xbf16> to vector<4x8xbf16>
    %cst_33 = arith.constant dense<0.000000e+00> : vector<4x64xf32>
    %107 = tpu.matmul %106, %104, %cst_33 {dimension_numbers = #tpu.dot_dimension_numbers<[1], [0], [0], [1], [0, 0, 1, 1], [], []>} : vector<4x8xbf16>, vector<8x64xbf16>, vector<4x64xf32> -> vector<4x64xf32>
    %108 = arith.addf %94, %107 : vector<4x64xf32>
    %109 = vector.extract_strided_slice %98 {offsets = [0, 1], sizes = [8, 64], strides = [1, 1]} : vector<8x82xbf16> to vector<8x64xbf16>
    %110 = vector.extract_strided_slice %99 {offsets = [1, 0, 0], sizes = [1, 4, 8], strides = [1, 1, 1]} : vector<9x4x8xbf16> to vector<1x4x8xbf16>
    %111 = vector.shape_cast %110 : vector<1x4x8xbf16> to vector<4x8xbf16>
    %cst_34 = arith.constant dense<0.000000e+00> : vector<4x64xf32>
    %112 = tpu.matmul %111, %109, %cst_34 {dimension_numbers = #tpu.dot_dimension_numbers<[1], [0], [0], [1], [0, 0, 1, 1], [], []>} : vector<4x8xbf16>, vector<8x64xbf16>, vector<4x64xf32> -> vector<4x64xf32>
    %113 = arith.addf %108, %112 : vector<4x64xf32>
    %114 = vector.extract_strided_slice %98 {offsets = [0, 2], sizes = [8, 64], strides = [1, 1]} : vector<8x82xbf16> to vector<8x64xbf16>
    %cst_35 = arith.constant 0.000000e+00 : bf16
    %115 = vector.broadcast %cst_35 : bf16 to vector<8x64xbf16>
    %116 = vector.shape_cast %20 : vector<1x64xi1> to vector<1x64xi1>
    %117 = vector.broadcast %116 : vector<1x64xi1> to vector<8x64xi1>
    %118 = arith.select %117, %114, %115 : vector<8x64xi1>, vector<8x64xbf16>
    %119 = vector.extract_strided_slice %99 {offsets = [2, 0, 0], sizes = [1, 4, 8], strides = [1, 1, 1]} : vector<9x4x8xbf16> to vector<1x4x8xbf16>
    %120 = vector.shape_cast %119 : vector<1x4x8xbf16> to vector<4x8xbf16>
    %cst_36 = arith.constant dense<0.000000e+00> : vector<4x64xf32>
    %121 = tpu.matmul %120, %118, %cst_36 {dimension_numbers = #tpu.dot_dimension_numbers<[1], [0], [0], [1], [0, 0, 1, 1], [], []>} : vector<4x8xbf16>, vector<8x64xbf16>, vector<4x64xf32> -> vector<4x64xf32>
    %122 = arith.addf %113, %121 : vector<4x64xf32>
    %123 = vector.extract_strided_slice %98 {offsets = [0, 8], sizes = [8, 64], strides = [1, 1]} : vector<8x82xbf16> to vector<8x64xbf16>
    %cst_37 = arith.constant 0.000000e+00 : bf16
    %124 = vector.broadcast %cst_37 : bf16 to vector<8x64xbf16>
    %125 = vector.shape_cast %18 : vector<1x64xi1> to vector<1x64xi1>
    %126 = vector.broadcast %125 : vector<1x64xi1> to vector<8x64xi1>
    %127 = arith.select %126, %123, %124 : vector<8x64xi1>, vector<8x64xbf16>
    %128 = vector.extract_strided_slice %99 {offsets = [3, 0, 0], sizes = [1, 4, 8], strides = [1, 1, 1]} : vector<9x4x8xbf16> to vector<1x4x8xbf16>
    %129 = vector.shape_cast %128 : vector<1x4x8xbf16> to vector<4x8xbf16>
    %cst_38 = arith.constant dense<0.000000e+00> : vector<4x64xf32>
    %130 = tpu.matmul %129, %127, %cst_38 {dimension_numbers = #tpu.dot_dimension_numbers<[1], [0], [0], [1], [0, 0, 1, 1], [], []>} : vector<4x8xbf16>, vector<8x64xbf16>, vector<4x64xf32> -> vector<4x64xf32>
    %131 = arith.addf %122, %130 : vector<4x64xf32>
    %132 = vector.extract_strided_slice %99 {offsets = [4, 0, 0], sizes = [1, 4, 8], strides = [1, 1, 1]} : vector<9x4x8xbf16> to vector<1x4x8xbf16>
    %133 = vector.shape_cast %132 : vector<1x4x8xbf16> to vector<4x8xbf16>
    %cst_39 = arith.constant dense<0.000000e+00> : vector<4x64xf32>
    %134 = tpu.matmul %133, %96, %cst_39 {dimension_numbers = #tpu.dot_dimension_numbers<[1], [0], [0], [1], [0, 0, 1, 1], [], []>} : vector<4x8xbf16>, vector<8x64xbf16>, vector<4x64xf32> -> vector<4x64xf32>
    %135 = arith.addf %131, %134 : vector<4x64xf32>
    %136 = vector.extract_strided_slice %98 {offsets = [0, 10], sizes = [8, 64], strides = [1, 1]} : vector<8x82xbf16> to vector<8x64xbf16>
    %cst_40 = arith.constant 0.000000e+00 : bf16
    %137 = vector.broadcast %cst_40 : bf16 to vector<8x64xbf16>
    %138 = vector.shape_cast %20 : vector<1x64xi1> to vector<1x64xi1>
    %139 = vector.broadcast %138 : vector<1x64xi1> to vector<8x64xi1>
    %140 = arith.select %139, %136, %137 : vector<8x64xi1>, vector<8x64xbf16>
    %141 = vector.extract_strided_slice %99 {offsets = [5, 0, 0], sizes = [1, 4, 8], strides = [1, 1, 1]} : vector<9x4x8xbf16> to vector<1x4x8xbf16>
    %142 = vector.shape_cast %141 : vector<1x4x8xbf16> to vector<4x8xbf16>
    %cst_41 = arith.constant dense<0.000000e+00> : vector<4x64xf32>
    %143 = tpu.matmul %142, %140, %cst_41 {dimension_numbers = #tpu.dot_dimension_numbers<[1], [0], [0], [1], [0, 0, 1, 1], [], []>} : vector<4x8xbf16>, vector<8x64xbf16>, vector<4x64xf32> -> vector<4x64xf32>
    %144 = arith.addf %135, %143 : vector<4x64xf32>
    %145 = vector.extract_strided_slice %98 {offsets = [0, 16], sizes = [8, 64], strides = [1, 1]} : vector<8x82xbf16> to vector<8x64xbf16>
    %cst_42 = arith.constant 0.000000e+00 : bf16
    %146 = vector.broadcast %cst_42 : bf16 to vector<8x64xbf16>
    %147 = vector.shape_cast %18 : vector<1x64xi1> to vector<1x64xi1>
    %148 = vector.broadcast %147 : vector<1x64xi1> to vector<8x64xi1>
    %149 = arith.select %148, %145, %146 : vector<8x64xi1>, vector<8x64xbf16>
    %150 = vector.extract_strided_slice %99 {offsets = [6, 0, 0], sizes = [1, 4, 8], strides = [1, 1, 1]} : vector<9x4x8xbf16> to vector<1x4x8xbf16>
    %151 = vector.shape_cast %150 : vector<1x4x8xbf16> to vector<4x8xbf16>
    %cst_43 = arith.constant dense<0.000000e+00> : vector<4x64xf32>
    %152 = tpu.matmul %151, %149, %cst_43 {dimension_numbers = #tpu.dot_dimension_numbers<[1], [0], [0], [1], [0, 0, 1, 1], [], []>} : vector<4x8xbf16>, vector<8x64xbf16>, vector<4x64xf32> -> vector<4x64xf32>
    %153 = arith.addf %144, %152 : vector<4x64xf32>
    %154 = vector.extract_strided_slice %98 {offsets = [0, 17], sizes = [8, 64], strides = [1, 1]} : vector<8x82xbf16> to vector<8x64xbf16>
    %155 = vector.extract_strided_slice %99 {offsets = [7, 0, 0], sizes = [1, 4, 8], strides = [1, 1, 1]} : vector<9x4x8xbf16> to vector<1x4x8xbf16>
    %156 = vector.shape_cast %155 : vector<1x4x8xbf16> to vector<4x8xbf16>
    %cst_44 = arith.constant dense<0.000000e+00> : vector<4x64xf32>
    %157 = tpu.matmul %156, %154, %cst_44 {dimension_numbers = #tpu.dot_dimension_numbers<[1], [0], [0], [1], [0, 0, 1, 1], [], []>} : vector<4x8xbf16>, vector<8x64xbf16>, vector<4x64xf32> -> vector<4x64xf32>
    %158 = arith.addf %153, %157 : vector<4x64xf32>
    %159 = vector.extract_strided_slice %98 {offsets = [0, 18], sizes = [8, 64], strides = [1, 1]} : vector<8x82xbf16> to vector<8x64xbf16>
    %cst_45 = arith.constant 0.000000e+00 : bf16
    %160 = vector.broadcast %cst_45 : bf16 to vector<8x64xbf16>
    %161 = vector.shape_cast %20 : vector<1x64xi1> to vector<1x64xi1>
    %162 = vector.broadcast %161 : vector<1x64xi1> to vector<8x64xi1>
    %163 = arith.select %162, %159, %160 : vector<8x64xi1>, vector<8x64xbf16>
    %164 = vector.extract_strided_slice %99 {offsets = [8, 0, 0], sizes = [1, 4, 8], strides = [1, 1, 1]} : vector<9x4x8xbf16> to vector<1x4x8xbf16>
    %165 = vector.shape_cast %164 : vector<1x4x8xbf16> to vector<4x8xbf16>
    %cst_46 = arith.constant dense<0.000000e+00> : vector<4x64xf32>
    %166 = tpu.matmul %165, %163, %cst_46 {dimension_numbers = #tpu.dot_dimension_numbers<[1], [0], [0], [1], [0, 0, 1, 1], [], []>} : vector<4x8xbf16>, vector<8x64xbf16>, vector<4x64xf32> -> vector<4x64xf32>
    %167 = arith.addf %158, %166 : vector<4x64xf32>
    %c0_47 = arith.constant 0 : index
    %c0_48 = arith.constant 0 : index
    %168 = vector.load %arg5[%c0_47, %c0_48] : memref<4x3xf32, #tpu.memory_space<vmem>>, vector<4x3xf32>
    %169 = vector.extract_strided_slice %168 {offsets = [0, 0], sizes = [4, 1], strides = [1, 1]} : vector<4x3xf32> to vector<4x1xf32>
    %170 = vector.broadcast %169 : vector<4x1xf32> to vector<4x64xf32>
    %171 = arith.addf %167, %170 : vector<4x64xf32>
    %cst_49 = arith.constant dense<0.000000e+00> : vector<4xf32>
    %172 = vector.multi_reduction <add>, %171, %cst_49 [1] : vector<4x64xf32> to vector<4xf32>
    %173 = vector.shape_cast %172 : vector<4xf32> to vector<4x1xf32>
    %cst_50 = arith.constant 6.400000e+01 : f32
    %174 = vector.broadcast %cst_50 : f32 to vector<4x1xf32>
    %175 = arith.divf %173, %174 : vector<4x1xf32>
    %176 = vector.broadcast %175 : vector<4x1xf32> to vector<4x64xf32>
    %177 = arith.subf %171, %176 : vector<4x64xf32>
    %178 = arith.mulf %177, %177 : vector<4x64xf32>
    %cst_51 = arith.constant dense<0.000000e+00> : vector<4xf32>
    %179 = vector.multi_reduction <add>, %178, %cst_51 [1] : vector<4x64xf32> to vector<4xf32>
    %180 = vector.shape_cast %179 : vector<4xf32> to vector<4x1xf32>
    %cst_52 = arith.constant 6.400000e+01 : f32
    %181 = vector.broadcast %cst_52 : f32 to vector<4x1xf32>
    %182 = arith.divf %180, %181 : vector<4x1xf32>
    %cst_53 = arith.constant 9.99999974E-6 : f32
    %183 = vector.broadcast %cst_53 : f32 to vector<4x1xf32>
    %184 = arith.addf %182, %183 : vector<4x1xf32>
    %185 = math.rsqrt %184 : vector<4x1xf32>
    %186 = vector.broadcast %185 : vector<4x1xf32> to vector<4x64xf32>
    %187 = arith.mulf %177, %186 : vector<4x64xf32>
    %188 = vector.extract_strided_slice %168 {offsets = [0, 1], sizes = [4, 1], strides = [1, 1]} : vector<4x3xf32> to vector<4x1xf32>
    %189 = vector.broadcast %188 : vector<4x1xf32> to vector<4x64xf32>
    %190 = arith.mulf %187, %189 : vector<4x64xf32>
    %191 = vector.extract_strided_slice %168 {offsets = [0, 2], sizes = [4, 1], strides = [1, 1]} : vector<4x3xf32> to vector<4x1xf32>
    %192 = vector.broadcast %191 : vector<4x1xf32> to vector<4x64xf32>
    %193 = arith.addf %190, %192 : vector<4x64xf32>
    %cst_54 = arith.constant 0.000000e+00 : f32
    %194 = vector.broadcast %cst_54 : f32 to vector<4x64xf32>
    %195 = arith.maximumf %193, %194 : vector<4x64xf32>
    %196 = arith.truncf %195 : vector<4x64xf32> to vector<4x64xbf16>
    %c0_55 = arith.constant 0 : index
    %c0_56 = arith.constant 0 : index
    %c0_57 = arith.constant 0 : index
    %197 = vector.load %arg6[%c0_55, %c0_56, %c0_57] : memref<1x4x64xbf16, #tpu.memory_space<vmem>>, vector<1x4x64xbf16>
    %198 = vector.shape_cast %197 : vector<1x4x64xbf16> to vector<4x64xbf16>
    %199 = vector.shape_cast %196 : vector<4x64xbf16> to vector<1x4x64xbf16>
    tpu.vector_store %arg6[%c0_55, %c0_56, %c0_57], %199 {strides = array<i32>} : memref<1x4x64xbf16, #tpu.memory_space<vmem>>, vector<1x4x64xbf16>,
    return
  }
  func.func @transform_0(%arg0: i32) -> (i32, i32, i32) {
    %c0_i32 = arith.constant 0 : i32
    %c0_i32_0 = arith.constant 0 : i32
    %c0_i32_1 = arith.constant 0 : i32
    return %arg0, %c0_i32, %c0_i32_0 : i32, i32, i32
  }
  func.func @transform_1(%arg0: i32) -> (i32, i32, i32) {
    %c0_i32 = arith.constant 0 : i32
    %c0_i32_0 = arith.constant 0 : i32
    %c0_i32_1 = arith.constant 0 : i32
    return %arg0, %c0_i32, %c0_i32_0 : i32, i32, i32
  }
  func.func @transform_2(%arg0: i32) -> (i32, i32, i32) {
    %c0_i32 = arith.constant 0 : i32
    %c0_i32_0 = arith.constant 0 : i32
    %c0_i32_1 = arith.constant 0 : i32
    %c0_i32_2 = arith.constant 0 : i32
    return %c0_i32, %c0_i32_0, %c0_i32_1 : i32, i32, i32
  }
  func.func @transform_3(%arg0: i32) -> (i32, i32, i32) {
    %c0_i32 = arith.constant 0 : i32
    %c0_i32_0 = arith.constant 0 : i32
    %c0_i32_1 = arith.constant 0 : i32
    %c0_i32_2 = arith.constant 0 : i32
    return %c0_i32, %c0_i32_0, %c0_i32_1 : i32, i32, i32
  }
  func.func @transform_4(%arg0: i32) -> (i32, i32) {
    %c0_i32 = arith.constant 0 : i32
    %c0_i32_0 = arith.constant 0 : i32
    %c0_i32_1 = arith.constant 0 : i32
    return %c0_i32, %c0_i32_0 : i32, i32
  }
  func.func @transform_5(%arg0: i32) -> (i32, i32, i32) {
    %c0_i32 = arith.constant 0 : i32
    %c0_i32_0 = arith.constant 0 : i32
    %c0_i32_1 = arith.constant 0 : i32
    return %arg0, %c0_i32, %c0_i32_0 : i32, i32, i32
  }
}

module attributes {stable_mosaic.version = 11 : i64} {
  func.func @kernel(%arg0: i32, %arg1: memref<1x4x256xbf16, #tpu.memory_space<vmem>>, %arg2: memref<1x9x4x4xbf16, #tpu.memory_space<vmem>>, %arg3: memref<4x3xf32, #tpu.memory_space<vmem>>, %arg4: memref<1x4x256xbf16, #tpu.memory_space<vmem>>) attributes {dimension_semantics = [#tpu.dimension_semantics<parallel>], iteration_bounds = array<i64: 2>, scalar_prefetch = 0 : i64, scratch_operands = 0 : i64, tpu.core_type = #tpu.core_type<tc>, window_params = [{transform_indices = @transform_0, window_bounds = array<i64: 1, 4, 256>}, {transform_indices = @transform_1, window_bounds = array<i64: 1, 9, 4, 4>}, {pipeline_mode = #tpu.pipeline_mode<synchronous>, transform_indices = @transform_2, window_bounds = array<i64: 4, 3>}, {transform_indices = @transform_3, window_bounds = array<i64: 1, 4, 256>}]} {
    %0 = tpu.iota {dimensions = array<i32: 1>} : vector<1x256xi32>
    %c16_i32 = arith.constant 16 : i32
    %c0_i32 = arith.constant 0 : i32
    %1 = arith.cmpi eq, %c16_i32, %c0_i32 : i32
    %c1_i32 = arith.constant 1 : i32
    %2 = arith.select %1, %c1_i32, %c16_i32 : i32
    %3 = vector.broadcast %2 : i32 to vector<1x256xi32>
    %4 = arith.remsi %0, %3 : vector<1x256xi32>
    %c0_i32_0 = arith.constant 0 : i32
    %5 = vector.broadcast %c0_i32_0 : i32 to vector<1x256xi32>
    %6 = arith.cmpi ne, %4, %5 : vector<1x256xi32>
    %c0_i32_1 = arith.constant 0 : i32
    %7 = vector.broadcast %c0_i32_1 : i32 to vector<1x256xi32>
    %8 = arith.cmpi slt, %4, %7 : vector<1x256xi32>
    %c0_i32_2 = arith.constant 0 : i32
    %9 = arith.cmpi slt, %2, %c0_i32_2 : i32
    %10 = vector.broadcast %9 : i1 to vector<1x256xi1>
    %11 = vector.broadcast %10 : vector<1x256xi1> to vector<1x256xi1>
    %12 = arith.xori %8, %11 : vector<1x256xi1>
    %13 = arith.andi %12, %6 : vector<1x256xi1>
    %14 = vector.broadcast %2 : i32 to vector<1x256xi32>
    %15 = arith.addi %4, %14 : vector<1x256xi32>
    %16 = arith.select %13, %15, %4 : vector<1x256xi1>, vector<1x256xi32>
    %c0_i32_3 = arith.constant 0 : i32
    %17 = vector.broadcast %c0_i32_3 : i32 to vector<1x256xi32>
    %18 = arith.cmpi sgt, %16, %17 : vector<1x256xi32>
    %c15_i32 = arith.constant 15 : i32
    %19 = vector.broadcast %c15_i32 : i32 to vector<1x256xi32>
    %20 = arith.cmpi slt, %16, %19 : vector<1x256xi32>
    %cst = arith.constant 0.000000e+00 : f32
    %21 = vector.broadcast %cst : f32 to vector<4x256xf32>
    %c0 = arith.constant 0 : index
    %c0_4 = arith.constant 0 : index
    %c0_5 = arith.constant 0 : index
    %22 = vector.load %arg1[%c0, %c0_4, %c0_5] : memref<1x4x256xbf16, #tpu.memory_space<vmem>>, vector<1x4x256xbf16>
    %23 = vector.shape_cast %22 : vector<1x4x256xbf16> to vector<4x256xbf16>
    %cst_6 = arith.constant 0.000000e+00 : bf16
    %24 = vector.broadcast %cst_6 : bf16 to vector<4x17xbf16>
    %25 = tpu.concatenate %24, %23, %24 in 1 : vector<4x17xbf16>, vector<4x256xbf16>, vector<4x17xbf16> -> vector<4x290xbf16>
    %c0_7 = arith.constant 0 : index
    %c0_8 = arith.constant 0 : index
    %c0_9 = arith.constant 0 : index
    %c0_10 = arith.constant 0 : index
    %26 = vector.load %arg2[%c0_7, %c0_8, %c0_9, %c0_10] : memref<1x9x4x4xbf16, #tpu.memory_space<vmem>>, vector<1x9x4x4xbf16>
    %27 = vector.shape_cast %26 : vector<1x9x4x4xbf16> to vector<9x4x4xbf16>
    %28 = vector.extract_strided_slice %25 {offsets = [0, 0], sizes = [4, 256], strides = [1, 1]} : vector<4x290xbf16> to vector<4x256xbf16>
    %cst_11 = arith.constant 0.000000e+00 : bf16
    %29 = vector.broadcast %cst_11 : bf16 to vector<4x256xbf16>
    %30 = vector.shape_cast %18 : vector<1x256xi1> to vector<1x256xi1>
    %31 = vector.broadcast %30 : vector<1x256xi1> to vector<4x256xi1>
    %32 = arith.select %31, %28, %29 : vector<4x256xi1>, vector<4x256xbf16>
    %33 = vector.extract_strided_slice %27 {offsets = [0, 0, 0], sizes = [1, 4, 4], strides = [1, 1, 1]} : vector<9x4x4xbf16> to vector<1x4x4xbf16>
    %34 = vector.shape_cast %33 : vector<1x4x4xbf16> to vector<4x4xbf16>
    %cst_12 = arith.constant dense<0.000000e+00> : vector<4x256xf32>
    %35 = tpu.matmul %34, %32, %cst_12 {dimension_numbers = #tpu.dot_dimension_numbers<[1], [0], [0], [1], [0, 0, 1, 1], [], []>} : vector<4x4xbf16>, vector<4x256xbf16>, vector<4x256xf32> -> vector<4x256xf32>
    %36 = arith.addf %21, %35 : vector<4x256xf32>
    %37 = vector.extract_strided_slice %25 {offsets = [0, 1], sizes = [4, 256], strides = [1, 1]} : vector<4x290xbf16> to vector<4x256xbf16>
    %38 = vector.extract_strided_slice %27 {offsets = [1, 0, 0], sizes = [1, 4, 4], strides = [1, 1, 1]} : vector<9x4x4xbf16> to vector<1x4x4xbf16>
    %39 = vector.shape_cast %38 : vector<1x4x4xbf16> to vector<4x4xbf16>
    %cst_13 = arith.constant dense<0.000000e+00> : vector<4x256xf32>
    %40 = tpu.matmul %39, %37, %cst_13 {dimension_numbers = #tpu.dot_dimension_numbers<[1], [0], [0], [1], [0, 0, 1, 1], [], []>} : vector<4x4xbf16>, vector<4x256xbf16>, vector<4x256xf32> -> vector<4x256xf32>
    %41 = arith.addf %36, %40 : vector<4x256xf32>
    %42 = vector.extract_strided_slice %25 {offsets = [0, 2], sizes = [4, 256], strides = [1, 1]} : vector<4x290xbf16> to vector<4x256xbf16>
    %cst_14 = arith.constant 0.000000e+00 : bf16
    %43 = vector.broadcast %cst_14 : bf16 to vector<4x256xbf16>
    %44 = vector.shape_cast %20 : vector<1x256xi1> to vector<1x256xi1>
    %45 = vector.broadcast %44 : vector<1x256xi1> to vector<4x256xi1>
    %46 = arith.select %45, %42, %43 : vector<4x256xi1>, vector<4x256xbf16>
    %47 = vector.extract_strided_slice %27 {offsets = [2, 0, 0], sizes = [1, 4, 4], strides = [1, 1, 1]} : vector<9x4x4xbf16> to vector<1x4x4xbf16>
    %48 = vector.shape_cast %47 : vector<1x4x4xbf16> to vector<4x4xbf16>
    %cst_15 = arith.constant dense<0.000000e+00> : vector<4x256xf32>
    %49 = tpu.matmul %48, %46, %cst_15 {dimension_numbers = #tpu.dot_dimension_numbers<[1], [0], [0], [1], [0, 0, 1, 1], [], []>} : vector<4x4xbf16>, vector<4x256xbf16>, vector<4x256xf32> -> vector<4x256xf32>
    %50 = arith.addf %41, %49 : vector<4x256xf32>
    %51 = vector.extract_strided_slice %25 {offsets = [0, 16], sizes = [4, 256], strides = [1, 1]} : vector<4x290xbf16> to vector<4x256xbf16>
    %cst_16 = arith.constant 0.000000e+00 : bf16
    %52 = vector.broadcast %cst_16 : bf16 to vector<4x256xbf16>
    %53 = vector.shape_cast %18 : vector<1x256xi1> to vector<1x256xi1>
    %54 = vector.broadcast %53 : vector<1x256xi1> to vector<4x256xi1>
    %55 = arith.select %54, %51, %52 : vector<4x256xi1>, vector<4x256xbf16>
    %56 = vector.extract_strided_slice %27 {offsets = [3, 0, 0], sizes = [1, 4, 4], strides = [1, 1, 1]} : vector<9x4x4xbf16> to vector<1x4x4xbf16>
    %57 = vector.shape_cast %56 : vector<1x4x4xbf16> to vector<4x4xbf16>
    %cst_17 = arith.constant dense<0.000000e+00> : vector<4x256xf32>
    %58 = tpu.matmul %57, %55, %cst_17 {dimension_numbers = #tpu.dot_dimension_numbers<[1], [0], [0], [1], [0, 0, 1, 1], [], []>} : vector<4x4xbf16>, vector<4x256xbf16>, vector<4x256xf32> -> vector<4x256xf32>
    %59 = arith.addf %50, %58 : vector<4x256xf32>
    %60 = vector.extract_strided_slice %27 {offsets = [4, 0, 0], sizes = [1, 4, 4], strides = [1, 1, 1]} : vector<9x4x4xbf16> to vector<1x4x4xbf16>
    %61 = vector.shape_cast %60 : vector<1x4x4xbf16> to vector<4x4xbf16>
    %cst_18 = arith.constant dense<0.000000e+00> : vector<4x256xf32>
    %62 = tpu.matmul %61, %23, %cst_18 {dimension_numbers = #tpu.dot_dimension_numbers<[1], [0], [0], [1], [0, 0, 1, 1], [], []>} : vector<4x4xbf16>, vector<4x256xbf16>, vector<4x256xf32> -> vector<4x256xf32>
    %63 = arith.addf %59, %62 : vector<4x256xf32>
    %64 = vector.extract_strided_slice %25 {offsets = [0, 18], sizes = [4, 256], strides = [1, 1]} : vector<4x290xbf16> to vector<4x256xbf16>
    %cst_19 = arith.constant 0.000000e+00 : bf16
    %65 = vector.broadcast %cst_19 : bf16 to vector<4x256xbf16>
    %66 = vector.shape_cast %20 : vector<1x256xi1> to vector<1x256xi1>
    %67 = vector.broadcast %66 : vector<1x256xi1> to vector<4x256xi1>
    %68 = arith.select %67, %64, %65 : vector<4x256xi1>, vector<4x256xbf16>
    %69 = vector.extract_strided_slice %27 {offsets = [5, 0, 0], sizes = [1, 4, 4], strides = [1, 1, 1]} : vector<9x4x4xbf16> to vector<1x4x4xbf16>
    %70 = vector.shape_cast %69 : vector<1x4x4xbf16> to vector<4x4xbf16>
    %cst_20 = arith.constant dense<0.000000e+00> : vector<4x256xf32>
    %71 = tpu.matmul %70, %68, %cst_20 {dimension_numbers = #tpu.dot_dimension_numbers<[1], [0], [0], [1], [0, 0, 1, 1], [], []>} : vector<4x4xbf16>, vector<4x256xbf16>, vector<4x256xf32> -> vector<4x256xf32>
    %72 = arith.addf %63, %71 : vector<4x256xf32>
    %73 = vector.extract_strided_slice %25 {offsets = [0, 32], sizes = [4, 256], strides = [1, 1]} : vector<4x290xbf16> to vector<4x256xbf16>
    %cst_21 = arith.constant 0.000000e+00 : bf16
    %74 = vector.broadcast %cst_21 : bf16 to vector<4x256xbf16>
    %75 = vector.shape_cast %18 : vector<1x256xi1> to vector<1x256xi1>
    %76 = vector.broadcast %75 : vector<1x256xi1> to vector<4x256xi1>
    %77 = arith.select %76, %73, %74 : vector<4x256xi1>, vector<4x256xbf16>
    %78 = vector.extract_strided_slice %27 {offsets = [6, 0, 0], sizes = [1, 4, 4], strides = [1, 1, 1]} : vector<9x4x4xbf16> to vector<1x4x4xbf16>
    %79 = vector.shape_cast %78 : vector<1x4x4xbf16> to vector<4x4xbf16>
    %cst_22 = arith.constant dense<0.000000e+00> : vector<4x256xf32>
    %80 = tpu.matmul %79, %77, %cst_22 {dimension_numbers = #tpu.dot_dimension_numbers<[1], [0], [0], [1], [0, 0, 1, 1], [], []>} : vector<4x4xbf16>, vector<4x256xbf16>, vector<4x256xf32> -> vector<4x256xf32>
    %81 = arith.addf %72, %80 : vector<4x256xf32>
    %82 = vector.extract_strided_slice %25 {offsets = [0, 33], sizes = [4, 256], strides = [1, 1]} : vector<4x290xbf16> to vector<4x256xbf16>
    %83 = vector.extract_strided_slice %27 {offsets = [7, 0, 0], sizes = [1, 4, 4], strides = [1, 1, 1]} : vector<9x4x4xbf16> to vector<1x4x4xbf16>
    %84 = vector.shape_cast %83 : vector<1x4x4xbf16> to vector<4x4xbf16>
    %cst_23 = arith.constant dense<0.000000e+00> : vector<4x256xf32>
    %85 = tpu.matmul %84, %82, %cst_23 {dimension_numbers = #tpu.dot_dimension_numbers<[1], [0], [0], [1], [0, 0, 1, 1], [], []>} : vector<4x4xbf16>, vector<4x256xbf16>, vector<4x256xf32> -> vector<4x256xf32>
    %86 = arith.addf %81, %85 : vector<4x256xf32>
    %87 = vector.extract_strided_slice %25 {offsets = [0, 34], sizes = [4, 256], strides = [1, 1]} : vector<4x290xbf16> to vector<4x256xbf16>
    %cst_24 = arith.constant 0.000000e+00 : bf16
    %88 = vector.broadcast %cst_24 : bf16 to vector<4x256xbf16>
    %89 = vector.shape_cast %20 : vector<1x256xi1> to vector<1x256xi1>
    %90 = vector.broadcast %89 : vector<1x256xi1> to vector<4x256xi1>
    %91 = arith.select %90, %87, %88 : vector<4x256xi1>, vector<4x256xbf16>
    %92 = vector.extract_strided_slice %27 {offsets = [8, 0, 0], sizes = [1, 4, 4], strides = [1, 1, 1]} : vector<9x4x4xbf16> to vector<1x4x4xbf16>
    %93 = vector.shape_cast %92 : vector<1x4x4xbf16> to vector<4x4xbf16>
    %cst_25 = arith.constant dense<0.000000e+00> : vector<4x256xf32>
    %94 = tpu.matmul %93, %91, %cst_25 {dimension_numbers = #tpu.dot_dimension_numbers<[1], [0], [0], [1], [0, 0, 1, 1], [], []>} : vector<4x4xbf16>, vector<4x256xbf16>, vector<4x256xf32> -> vector<4x256xf32>
    %95 = arith.addf %86, %94 : vector<4x256xf32>
    %c0_26 = arith.constant 0 : index
    %c0_27 = arith.constant 0 : index
    %96 = vector.load %arg3[%c0_26, %c0_27] : memref<4x3xf32, #tpu.memory_space<vmem>>, vector<4x3xf32>
    %97 = vector.extract_strided_slice %96 {offsets = [0, 0], sizes = [4, 1], strides = [1, 1]} : vector<4x3xf32> to vector<4x1xf32>
    %98 = vector.broadcast %97 : vector<4x1xf32> to vector<4x256xf32>
    %99 = arith.addf %95, %98 : vector<4x256xf32>
    %100 = arith.truncf %99 : vector<4x256xf32> to vector<4x256xbf16>
    %c0_28 = arith.constant 0 : index
    %c0_29 = arith.constant 0 : index
    %c0_30 = arith.constant 0 : index
    %101 = vector.load %arg4[%c0_28, %c0_29, %c0_30] : memref<1x4x256xbf16, #tpu.memory_space<vmem>>, vector<1x4x256xbf16>
    %102 = vector.shape_cast %101 : vector<1x4x256xbf16> to vector<4x256xbf16>
    %103 = vector.shape_cast %100 : vector<4x256xbf16> to vector<1x4x256xbf16>
    tpu.vector_store %arg4[%c0_28, %c0_29, %c0_30], %103 {strides = array<i32>} : memref<1x4x256xbf16, #tpu.memory_space<vmem>>, vector<1x4x256xbf16>,
    return
  }
  func.func @transform_0(%arg0: i32) -> (i32, i32, i32) {
    %c0_i32 = arith.constant 0 : i32
    %c0_i32_0 = arith.constant 0 : i32
    %c0_i32_1 = arith.constant 0 : i32
    return %arg0, %c0_i32, %c0_i32_0 : i32, i32, i32
  }
  func.func @transform_1(%arg0: i32) -> (i32, i32, i32, i32) {
    %c0_i32 = arith.constant 0 : i32
    %c0_i32_0 = arith.constant 0 : i32
    %c0_i32_1 = arith.constant 0 : i32
    %c0_i32_2 = arith.constant 0 : i32
    return %arg0, %c0_i32, %c0_i32_0, %c0_i32_1 : i32, i32, i32, i32
  }
  func.func @transform_2(%arg0: i32) -> (i32, i32) {
    %c0_i32 = arith.constant 0 : i32
    %c0_i32_0 = arith.constant 0 : i32
    %c0_i32_1 = arith.constant 0 : i32
    return %c0_i32, %c0_i32_0 : i32, i32
  }
  func.func @transform_3(%arg0: i32) -> (i32, i32, i32) {
    %c0_i32 = arith.constant 0 : i32
    %c0_i32_0 = arith.constant 0 : i32
    %c0_i32_1 = arith.constant 0 : i32
    return %arg0, %c0_i32, %c0_i32_0 : i32, i32, i32
  }
}

module attributes {stable_mosaic.version = 11 : i64} {
  func.func @kernel(%arg0: i32, %arg1: memref<1x4x256xbf16, #tpu.memory_space<vmem>>, %arg2: memref<1x4x256xbf16, #tpu.memory_space<vmem>>, %arg3: memref<9x4x4xbf16, #tpu.memory_space<vmem>>, %arg4: memref<9x4x4xbf16, #tpu.memory_space<vmem>>, %arg5: memref<4x3xf32, #tpu.memory_space<vmem>>, %arg6: memref<1x4x256xf32, #tpu.memory_space<vmem>>) attributes {dimension_semantics = [#tpu.dimension_semantics<parallel>], iteration_bounds = array<i64: 2>, scalar_prefetch = 0 : i64, scratch_operands = 0 : i64, tpu.core_type = #tpu.core_type<tc>, window_params = [{transform_indices = @transform_0, window_bounds = array<i64: 1, 4, 256>}, {transform_indices = @transform_1, window_bounds = array<i64: 1, 4, 256>}, {pipeline_mode = #tpu.pipeline_mode<synchronous>, transform_indices = @transform_2, window_bounds = array<i64: 9, 4, 4>}, {pipeline_mode = #tpu.pipeline_mode<synchronous>, transform_indices = @transform_3, window_bounds = array<i64: 9, 4, 4>}, {pipeline_mode = #tpu.pipeline_mode<synchronous>, transform_indices = @transform_4, window_bounds = array<i64: 4, 3>}, {transform_indices = @transform_5, window_bounds = array<i64: 1, 4, 256>}]} {
    %0 = tpu.iota {dimensions = array<i32: 1>} : vector<1x256xi32>
    %c16_i32 = arith.constant 16 : i32
    %c0_i32 = arith.constant 0 : i32
    %1 = arith.cmpi eq, %c16_i32, %c0_i32 : i32
    %c1_i32 = arith.constant 1 : i32
    %2 = arith.select %1, %c1_i32, %c16_i32 : i32
    %3 = vector.broadcast %2 : i32 to vector<1x256xi32>
    %4 = arith.remsi %0, %3 : vector<1x256xi32>
    %c0_i32_0 = arith.constant 0 : i32
    %5 = vector.broadcast %c0_i32_0 : i32 to vector<1x256xi32>
    %6 = arith.cmpi ne, %4, %5 : vector<1x256xi32>
    %c0_i32_1 = arith.constant 0 : i32
    %7 = vector.broadcast %c0_i32_1 : i32 to vector<1x256xi32>
    %8 = arith.cmpi slt, %4, %7 : vector<1x256xi32>
    %c0_i32_2 = arith.constant 0 : i32
    %9 = arith.cmpi slt, %2, %c0_i32_2 : i32
    %10 = vector.broadcast %9 : i1 to vector<1x256xi1>
    %11 = vector.broadcast %10 : vector<1x256xi1> to vector<1x256xi1>
    %12 = arith.xori %8, %11 : vector<1x256xi1>
    %13 = arith.andi %12, %6 : vector<1x256xi1>
    %14 = vector.broadcast %2 : i32 to vector<1x256xi32>
    %15 = arith.addi %4, %14 : vector<1x256xi32>
    %16 = arith.select %13, %15, %4 : vector<1x256xi1>, vector<1x256xi32>
    %c0_i32_3 = arith.constant 0 : i32
    %17 = vector.broadcast %c0_i32_3 : i32 to vector<1x256xi32>
    %18 = arith.cmpi sgt, %16, %17 : vector<1x256xi32>
    %c15_i32 = arith.constant 15 : i32
    %19 = vector.broadcast %c15_i32 : i32 to vector<1x256xi32>
    %20 = arith.cmpi slt, %16, %19 : vector<1x256xi32>
    %cst = arith.constant 0.000000e+00 : f32
    %21 = vector.broadcast %cst : f32 to vector<4x256xf32>
    %c0 = arith.constant 0 : index
    %c0_4 = arith.constant 0 : index
    %c0_5 = arith.constant 0 : index
    %22 = vector.load %arg1[%c0, %c0_4, %c0_5] : memref<1x4x256xbf16, #tpu.memory_space<vmem>>, vector<1x4x256xbf16>
    %23 = vector.shape_cast %22 : vector<1x4x256xbf16> to vector<4x256xbf16>
    %cst_6 = arith.constant 0.000000e+00 : bf16
    %24 = vector.broadcast %cst_6 : bf16 to vector<4x17xbf16>
    %25 = tpu.concatenate %24, %23, %24 in 1 : vector<4x17xbf16>, vector<4x256xbf16>, vector<4x17xbf16> -> vector<4x290xbf16>
    %c0_7 = arith.constant 0 : index
    %c0_8 = arith.constant 0 : index
    %c0_9 = arith.constant 0 : index
    %26 = vector.load %arg3[%c0_7, %c0_8, %c0_9] : memref<9x4x4xbf16, #tpu.memory_space<vmem>>, vector<9x4x4xbf16>
    %27 = vector.extract_strided_slice %25 {offsets = [0, 0], sizes = [4, 256], strides = [1, 1]} : vector<4x290xbf16> to vector<4x256xbf16>
    %cst_10 = arith.constant 0.000000e+00 : bf16
    %28 = vector.broadcast %cst_10 : bf16 to vector<4x256xbf16>
    %29 = vector.shape_cast %18 : vector<1x256xi1> to vector<1x256xi1>
    %30 = vector.broadcast %29 : vector<1x256xi1> to vector<4x256xi1>
    %31 = arith.select %30, %27, %28 : vector<4x256xi1>, vector<4x256xbf16>
    %32 = vector.extract_strided_slice %26 {offsets = [0, 0, 0], sizes = [1, 4, 4], strides = [1, 1, 1]} : vector<9x4x4xbf16> to vector<1x4x4xbf16>
    %33 = vector.shape_cast %32 : vector<1x4x4xbf16> to vector<4x4xbf16>
    %cst_11 = arith.constant dense<0.000000e+00> : vector<4x256xf32>
    %34 = tpu.matmul %33, %31, %cst_11 {dimension_numbers = #tpu.dot_dimension_numbers<[1], [0], [0], [1], [0, 0, 1, 1], [], []>} : vector<4x4xbf16>, vector<4x256xbf16>, vector<4x256xf32> -> vector<4x256xf32>
    %35 = arith.addf %21, %34 : vector<4x256xf32>
    %36 = vector.extract_strided_slice %25 {offsets = [0, 1], sizes = [4, 256], strides = [1, 1]} : vector<4x290xbf16> to vector<4x256xbf16>
    %37 = vector.extract_strided_slice %26 {offsets = [1, 0, 0], sizes = [1, 4, 4], strides = [1, 1, 1]} : vector<9x4x4xbf16> to vector<1x4x4xbf16>
    %38 = vector.shape_cast %37 : vector<1x4x4xbf16> to vector<4x4xbf16>
    %cst_12 = arith.constant dense<0.000000e+00> : vector<4x256xf32>
    %39 = tpu.matmul %38, %36, %cst_12 {dimension_numbers = #tpu.dot_dimension_numbers<[1], [0], [0], [1], [0, 0, 1, 1], [], []>} : vector<4x4xbf16>, vector<4x256xbf16>, vector<4x256xf32> -> vector<4x256xf32>
    %40 = arith.addf %35, %39 : vector<4x256xf32>
    %41 = vector.extract_strided_slice %25 {offsets = [0, 2], sizes = [4, 256], strides = [1, 1]} : vector<4x290xbf16> to vector<4x256xbf16>
    %cst_13 = arith.constant 0.000000e+00 : bf16
    %42 = vector.broadcast %cst_13 : bf16 to vector<4x256xbf16>
    %43 = vector.shape_cast %20 : vector<1x256xi1> to vector<1x256xi1>
    %44 = vector.broadcast %43 : vector<1x256xi1> to vector<4x256xi1>
    %45 = arith.select %44, %41, %42 : vector<4x256xi1>, vector<4x256xbf16>
    %46 = vector.extract_strided_slice %26 {offsets = [2, 0, 0], sizes = [1, 4, 4], strides = [1, 1, 1]} : vector<9x4x4xbf16> to vector<1x4x4xbf16>
    %47 = vector.shape_cast %46 : vector<1x4x4xbf16> to vector<4x4xbf16>
    %cst_14 = arith.constant dense<0.000000e+00> : vector<4x256xf32>
    %48 = tpu.matmul %47, %45, %cst_14 {dimension_numbers = #tpu.dot_dimension_numbers<[1], [0], [0], [1], [0, 0, 1, 1], [], []>} : vector<4x4xbf16>, vector<4x256xbf16>, vector<4x256xf32> -> vector<4x256xf32>
    %49 = arith.addf %40, %48 : vector<4x256xf32>
    %50 = vector.extract_strided_slice %25 {offsets = [0, 16], sizes = [4, 256], strides = [1, 1]} : vector<4x290xbf16> to vector<4x256xbf16>
    %cst_15 = arith.constant 0.000000e+00 : bf16
    %51 = vector.broadcast %cst_15 : bf16 to vector<4x256xbf16>
    %52 = vector.shape_cast %18 : vector<1x256xi1> to vector<1x256xi1>
    %53 = vector.broadcast %52 : vector<1x256xi1> to vector<4x256xi1>
    %54 = arith.select %53, %50, %51 : vector<4x256xi1>, vector<4x256xbf16>
    %55 = vector.extract_strided_slice %26 {offsets = [3, 0, 0], sizes = [1, 4, 4], strides = [1, 1, 1]} : vector<9x4x4xbf16> to vector<1x4x4xbf16>
    %56 = vector.shape_cast %55 : vector<1x4x4xbf16> to vector<4x4xbf16>
    %cst_16 = arith.constant dense<0.000000e+00> : vector<4x256xf32>
    %57 = tpu.matmul %56, %54, %cst_16 {dimension_numbers = #tpu.dot_dimension_numbers<[1], [0], [0], [1], [0, 0, 1, 1], [], []>} : vector<4x4xbf16>, vector<4x256xbf16>, vector<4x256xf32> -> vector<4x256xf32>
    %58 = arith.addf %49, %57 : vector<4x256xf32>
    %59 = vector.extract_strided_slice %26 {offsets = [4, 0, 0], sizes = [1, 4, 4], strides = [1, 1, 1]} : vector<9x4x4xbf16> to vector<1x4x4xbf16>
    %60 = vector.shape_cast %59 : vector<1x4x4xbf16> to vector<4x4xbf16>
    %cst_17 = arith.constant dense<0.000000e+00> : vector<4x256xf32>
    %61 = tpu.matmul %60, %23, %cst_17 {dimension_numbers = #tpu.dot_dimension_numbers<[1], [0], [0], [1], [0, 0, 1, 1], [], []>} : vector<4x4xbf16>, vector<4x256xbf16>, vector<4x256xf32> -> vector<4x256xf32>
    %62 = arith.addf %58, %61 : vector<4x256xf32>
    %63 = vector.extract_strided_slice %25 {offsets = [0, 18], sizes = [4, 256], strides = [1, 1]} : vector<4x290xbf16> to vector<4x256xbf16>
    %cst_18 = arith.constant 0.000000e+00 : bf16
    %64 = vector.broadcast %cst_18 : bf16 to vector<4x256xbf16>
    %65 = vector.shape_cast %20 : vector<1x256xi1> to vector<1x256xi1>
    %66 = vector.broadcast %65 : vector<1x256xi1> to vector<4x256xi1>
    %67 = arith.select %66, %63, %64 : vector<4x256xi1>, vector<4x256xbf16>
    %68 = vector.extract_strided_slice %26 {offsets = [5, 0, 0], sizes = [1, 4, 4], strides = [1, 1, 1]} : vector<9x4x4xbf16> to vector<1x4x4xbf16>
    %69 = vector.shape_cast %68 : vector<1x4x4xbf16> to vector<4x4xbf16>
    %cst_19 = arith.constant dense<0.000000e+00> : vector<4x256xf32>
    %70 = tpu.matmul %69, %67, %cst_19 {dimension_numbers = #tpu.dot_dimension_numbers<[1], [0], [0], [1], [0, 0, 1, 1], [], []>} : vector<4x4xbf16>, vector<4x256xbf16>, vector<4x256xf32> -> vector<4x256xf32>
    %71 = arith.addf %62, %70 : vector<4x256xf32>
    %72 = vector.extract_strided_slice %25 {offsets = [0, 32], sizes = [4, 256], strides = [1, 1]} : vector<4x290xbf16> to vector<4x256xbf16>
    %cst_20 = arith.constant 0.000000e+00 : bf16
    %73 = vector.broadcast %cst_20 : bf16 to vector<4x256xbf16>
    %74 = vector.shape_cast %18 : vector<1x256xi1> to vector<1x256xi1>
    %75 = vector.broadcast %74 : vector<1x256xi1> to vector<4x256xi1>
    %76 = arith.select %75, %72, %73 : vector<4x256xi1>, vector<4x256xbf16>
    %77 = vector.extract_strided_slice %26 {offsets = [6, 0, 0], sizes = [1, 4, 4], strides = [1, 1, 1]} : vector<9x4x4xbf16> to vector<1x4x4xbf16>
    %78 = vector.shape_cast %77 : vector<1x4x4xbf16> to vector<4x4xbf16>
    %cst_21 = arith.constant dense<0.000000e+00> : vector<4x256xf32>
    %79 = tpu.matmul %78, %76, %cst_21 {dimension_numbers = #tpu.dot_dimension_numbers<[1], [0], [0], [1], [0, 0, 1, 1], [], []>} : vector<4x4xbf16>, vector<4x256xbf16>, vector<4x256xf32> -> vector<4x256xf32>
    %80 = arith.addf %71, %79 : vector<4x256xf32>
    %81 = vector.extract_strided_slice %25 {offsets = [0, 33], sizes = [4, 256], strides = [1, 1]} : vector<4x290xbf16> to vector<4x256xbf16>
    %82 = vector.extract_strided_slice %26 {offsets = [7, 0, 0], sizes = [1, 4, 4], strides = [1, 1, 1]} : vector<9x4x4xbf16> to vector<1x4x4xbf16>
    %83 = vector.shape_cast %82 : vector<1x4x4xbf16> to vector<4x4xbf16>
    %cst_22 = arith.constant dense<0.000000e+00> : vector<4x256xf32>
    %84 = tpu.matmul %83, %81, %cst_22 {dimension_numbers = #tpu.dot_dimension_numbers<[1], [0], [0], [1], [0, 0, 1, 1], [], []>} : vector<4x4xbf16>, vector<4x256xbf16>, vector<4x256xf32> -> vector<4x256xf32>
    %85 = arith.addf %80, %84 : vector<4x256xf32>
    %86 = vector.extract_strided_slice %25 {offsets = [0, 34], sizes = [4, 256], strides = [1, 1]} : vector<4x290xbf16> to vector<4x256xbf16>
    %cst_23 = arith.constant 0.000000e+00 : bf16
    %87 = vector.broadcast %cst_23 : bf16 to vector<4x256xbf16>
    %88 = vector.shape_cast %20 : vector<1x256xi1> to vector<1x256xi1>
    %89 = vector.broadcast %88 : vector<1x256xi1> to vector<4x256xi1>
    %90 = arith.select %89, %86, %87 : vector<4x256xi1>, vector<4x256xbf16>
    %91 = vector.extract_strided_slice %26 {offsets = [8, 0, 0], sizes = [1, 4, 4], strides = [1, 1, 1]} : vector<9x4x4xbf16> to vector<1x4x4xbf16>
    %92 = vector.shape_cast %91 : vector<1x4x4xbf16> to vector<4x4xbf16>
    %cst_24 = arith.constant dense<0.000000e+00> : vector<4x256xf32>
    %93 = tpu.matmul %92, %90, %cst_24 {dimension_numbers = #tpu.dot_dimension_numbers<[1], [0], [0], [1], [0, 0, 1, 1], [], []>} : vector<4x4xbf16>, vector<4x256xbf16>, vector<4x256xf32> -> vector<4x256xf32>
    %94 = arith.addf %85, %93 : vector<4x256xf32>
    %c0_25 = arith.constant 0 : index
    %c0_26 = arith.constant 0 : index
    %c0_27 = arith.constant 0 : index
    %95 = vector.load %arg2[%c0_25, %c0_26, %c0_27] : memref<1x4x256xbf16, #tpu.memory_space<vmem>>, vector<1x4x256xbf16>
    %96 = vector.shape_cast %95 : vector<1x4x256xbf16> to vector<4x256xbf16>
    %cst_28 = arith.constant 0.000000e+00 : bf16
    %97 = vector.broadcast %cst_28 : bf16 to vector<4x17xbf16>
    %98 = tpu.concatenate %97, %96, %97 in 1 : vector<4x17xbf16>, vector<4x256xbf16>, vector<4x17xbf16> -> vector<4x290xbf16>
    %c0_29 = arith.constant 0 : index
    %c0_30 = arith.constant 0 : index
    %c0_31 = arith.constant 0 : index
    %99 = vector.load %arg4[%c0_29, %c0_30, %c0_31] : memref<9x4x4xbf16, #tpu.memory_space<vmem>>, vector<9x4x4xbf16>
    %100 = vector.extract_strided_slice %98 {offsets = [0, 0], sizes = [4, 256], strides = [1, 1]} : vector<4x290xbf16> to vector<4x256xbf16>
    %cst_32 = arith.constant 0.000000e+00 : bf16
    %101 = vector.broadcast %cst_32 : bf16 to vector<4x256xbf16>
    %102 = vector.shape_cast %18 : vector<1x256xi1> to vector<1x256xi1>
    %103 = vector.broadcast %102 : vector<1x256xi1> to vector<4x256xi1>
    %104 = arith.select %103, %100, %101 : vector<4x256xi1>, vector<4x256xbf16>
    %105 = vector.extract_strided_slice %99 {offsets = [0, 0, 0], sizes = [1, 4, 4], strides = [1, 1, 1]} : vector<9x4x4xbf16> to vector<1x4x4xbf16>
    %106 = vector.shape_cast %105 : vector<1x4x4xbf16> to vector<4x4xbf16>
    %cst_33 = arith.constant dense<0.000000e+00> : vector<4x256xf32>
    %107 = tpu.matmul %106, %104, %cst_33 {dimension_numbers = #tpu.dot_dimension_numbers<[1], [0], [0], [1], [0, 0, 1, 1], [], []>} : vector<4x4xbf16>, vector<4x256xbf16>, vector<4x256xf32> -> vector<4x256xf32>
    %108 = arith.addf %94, %107 : vector<4x256xf32>
    %109 = vector.extract_strided_slice %98 {offsets = [0, 1], sizes = [4, 256], strides = [1, 1]} : vector<4x290xbf16> to vector<4x256xbf16>
    %110 = vector.extract_strided_slice %99 {offsets = [1, 0, 0], sizes = [1, 4, 4], strides = [1, 1, 1]} : vector<9x4x4xbf16> to vector<1x4x4xbf16>
    %111 = vector.shape_cast %110 : vector<1x4x4xbf16> to vector<4x4xbf16>
    %cst_34 = arith.constant dense<0.000000e+00> : vector<4x256xf32>
    %112 = tpu.matmul %111, %109, %cst_34 {dimension_numbers = #tpu.dot_dimension_numbers<[1], [0], [0], [1], [0, 0, 1, 1], [], []>} : vector<4x4xbf16>, vector<4x256xbf16>, vector<4x256xf32> -> vector<4x256xf32>
    %113 = arith.addf %108, %112 : vector<4x256xf32>
    %114 = vector.extract_strided_slice %98 {offsets = [0, 2], sizes = [4, 256], strides = [1, 1]} : vector<4x290xbf16> to vector<4x256xbf16>
    %cst_35 = arith.constant 0.000000e+00 : bf16
    %115 = vector.broadcast %cst_35 : bf16 to vector<4x256xbf16>
    %116 = vector.shape_cast %20 : vector<1x256xi1> to vector<1x256xi1>
    %117 = vector.broadcast %116 : vector<1x256xi1> to vector<4x256xi1>
    %118 = arith.select %117, %114, %115 : vector<4x256xi1>, vector<4x256xbf16>
    %119 = vector.extract_strided_slice %99 {offsets = [2, 0, 0], sizes = [1, 4, 4], strides = [1, 1, 1]} : vector<9x4x4xbf16> to vector<1x4x4xbf16>
    %120 = vector.shape_cast %119 : vector<1x4x4xbf16> to vector<4x4xbf16>
    %cst_36 = arith.constant dense<0.000000e+00> : vector<4x256xf32>
    %121 = tpu.matmul %120, %118, %cst_36 {dimension_numbers = #tpu.dot_dimension_numbers<[1], [0], [0], [1], [0, 0, 1, 1], [], []>} : vector<4x4xbf16>, vector<4x256xbf16>, vector<4x256xf32> -> vector<4x256xf32>
    %122 = arith.addf %113, %121 : vector<4x256xf32>
    %123 = vector.extract_strided_slice %98 {offsets = [0, 16], sizes = [4, 256], strides = [1, 1]} : vector<4x290xbf16> to vector<4x256xbf16>
    %cst_37 = arith.constant 0.000000e+00 : bf16
    %124 = vector.broadcast %cst_37 : bf16 to vector<4x256xbf16>
    %125 = vector.shape_cast %18 : vector<1x256xi1> to vector<1x256xi1>
    %126 = vector.broadcast %125 : vector<1x256xi1> to vector<4x256xi1>
    %127 = arith.select %126, %123, %124 : vector<4x256xi1>, vector<4x256xbf16>
    %128 = vector.extract_strided_slice %99 {offsets = [3, 0, 0], sizes = [1, 4, 4], strides = [1, 1, 1]} : vector<9x4x4xbf16> to vector<1x4x4xbf16>
    %129 = vector.shape_cast %128 : vector<1x4x4xbf16> to vector<4x4xbf16>
    %cst_38 = arith.constant dense<0.000000e+00> : vector<4x256xf32>
    %130 = tpu.matmul %129, %127, %cst_38 {dimension_numbers = #tpu.dot_dimension_numbers<[1], [0], [0], [1], [0, 0, 1, 1], [], []>} : vector<4x4xbf16>, vector<4x256xbf16>, vector<4x256xf32> -> vector<4x256xf32>
    %131 = arith.addf %122, %130 : vector<4x256xf32>
    %132 = vector.extract_strided_slice %99 {offsets = [4, 0, 0], sizes = [1, 4, 4], strides = [1, 1, 1]} : vector<9x4x4xbf16> to vector<1x4x4xbf16>
    %133 = vector.shape_cast %132 : vector<1x4x4xbf16> to vector<4x4xbf16>
    %cst_39 = arith.constant dense<0.000000e+00> : vector<4x256xf32>
    %134 = tpu.matmul %133, %96, %cst_39 {dimension_numbers = #tpu.dot_dimension_numbers<[1], [0], [0], [1], [0, 0, 1, 1], [], []>} : vector<4x4xbf16>, vector<4x256xbf16>, vector<4x256xf32> -> vector<4x256xf32>
    %135 = arith.addf %131, %134 : vector<4x256xf32>
    %136 = vector.extract_strided_slice %98 {offsets = [0, 18], sizes = [4, 256], strides = [1, 1]} : vector<4x290xbf16> to vector<4x256xbf16>
    %cst_40 = arith.constant 0.000000e+00 : bf16
    %137 = vector.broadcast %cst_40 : bf16 to vector<4x256xbf16>
    %138 = vector.shape_cast %20 : vector<1x256xi1> to vector<1x256xi1>
    %139 = vector.broadcast %138 : vector<1x256xi1> to vector<4x256xi1>
    %140 = arith.select %139, %136, %137 : vector<4x256xi1>, vector<4x256xbf16>
    %141 = vector.extract_strided_slice %99 {offsets = [5, 0, 0], sizes = [1, 4, 4], strides = [1, 1, 1]} : vector<9x4x4xbf16> to vector<1x4x4xbf16>
    %142 = vector.shape_cast %141 : vector<1x4x4xbf16> to vector<4x4xbf16>
    %cst_41 = arith.constant dense<0.000000e+00> : vector<4x256xf32>
    %143 = tpu.matmul %142, %140, %cst_41 {dimension_numbers = #tpu.dot_dimension_numbers<[1], [0], [0], [1], [0, 0, 1, 1], [], []>} : vector<4x4xbf16>, vector<4x256xbf16>, vector<4x256xf32> -> vector<4x256xf32>
    %144 = arith.addf %135, %143 : vector<4x256xf32>
    %145 = vector.extract_strided_slice %98 {offsets = [0, 32], sizes = [4, 256], strides = [1, 1]} : vector<4x290xbf16> to vector<4x256xbf16>
    %cst_42 = arith.constant 0.000000e+00 : bf16
    %146 = vector.broadcast %cst_42 : bf16 to vector<4x256xbf16>
    %147 = vector.shape_cast %18 : vector<1x256xi1> to vector<1x256xi1>
    %148 = vector.broadcast %147 : vector<1x256xi1> to vector<4x256xi1>
    %149 = arith.select %148, %145, %146 : vector<4x256xi1>, vector<4x256xbf16>
    %150 = vector.extract_strided_slice %99 {offsets = [6, 0, 0], sizes = [1, 4, 4], strides = [1, 1, 1]} : vector<9x4x4xbf16> to vector<1x4x4xbf16>
    %151 = vector.shape_cast %150 : vector<1x4x4xbf16> to vector<4x4xbf16>
    %cst_43 = arith.constant dense<0.000000e+00> : vector<4x256xf32>
    %152 = tpu.matmul %151, %149, %cst_43 {dimension_numbers = #tpu.dot_dimension_numbers<[1], [0], [0], [1], [0, 0, 1, 1], [], []>} : vector<4x4xbf16>, vector<4x256xbf16>, vector<4x256xf32> -> vector<4x256xf32>
    %153 = arith.addf %144, %152 : vector<4x256xf32>
    %154 = vector.extract_strided_slice %98 {offsets = [0, 33], sizes = [4, 256], strides = [1, 1]} : vector<4x290xbf16> to vector<4x256xbf16>
    %155 = vector.extract_strided_slice %99 {offsets = [7, 0, 0], sizes = [1, 4, 4], strides = [1, 1, 1]} : vector<9x4x4xbf16> to vector<1x4x4xbf16>
    %156 = vector.shape_cast %155 : vector<1x4x4xbf16> to vector<4x4xbf16>
    %cst_44 = arith.constant dense<0.000000e+00> : vector<4x256xf32>
    %157 = tpu.matmul %156, %154, %cst_44 {dimension_numbers = #tpu.dot_dimension_numbers<[1], [0], [0], [1], [0, 0, 1, 1], [], []>} : vector<4x4xbf16>, vector<4x256xbf16>, vector<4x256xf32> -> vector<4x256xf32>
    %158 = arith.addf %153, %157 : vector<4x256xf32>
    %159 = vector.extract_strided_slice %98 {offsets = [0, 34], sizes = [4, 256], strides = [1, 1]} : vector<4x290xbf16> to vector<4x256xbf16>
    %cst_45 = arith.constant 0.000000e+00 : bf16
    %160 = vector.broadcast %cst_45 : bf16 to vector<4x256xbf16>
    %161 = vector.shape_cast %20 : vector<1x256xi1> to vector<1x256xi1>
    %162 = vector.broadcast %161 : vector<1x256xi1> to vector<4x256xi1>
    %163 = arith.select %162, %159, %160 : vector<4x256xi1>, vector<4x256xbf16>
    %164 = vector.extract_strided_slice %99 {offsets = [8, 0, 0], sizes = [1, 4, 4], strides = [1, 1, 1]} : vector<9x4x4xbf16> to vector<1x4x4xbf16>
    %165 = vector.shape_cast %164 : vector<1x4x4xbf16> to vector<4x4xbf16>
    %cst_46 = arith.constant dense<0.000000e+00> : vector<4x256xf32>
    %166 = tpu.matmul %165, %163, %cst_46 {dimension_numbers = #tpu.dot_dimension_numbers<[1], [0], [0], [1], [0, 0, 1, 1], [], []>} : vector<4x4xbf16>, vector<4x256xbf16>, vector<4x256xf32> -> vector<4x256xf32>
    %167 = arith.addf %158, %166 : vector<4x256xf32>
    %c0_47 = arith.constant 0 : index
    %c0_48 = arith.constant 0 : index
    %168 = vector.load %arg5[%c0_47, %c0_48] : memref<4x3xf32, #tpu.memory_space<vmem>>, vector<4x3xf32>
    %169 = vector.extract_strided_slice %168 {offsets = [0, 0], sizes = [4, 1], strides = [1, 1]} : vector<4x3xf32> to vector<4x1xf32>
    %170 = vector.broadcast %169 : vector<4x1xf32> to vector<4x256xf32>
    %171 = arith.addf %167, %170 : vector<4x256xf32>
    %cst_49 = arith.constant dense<0.000000e+00> : vector<4xf32>
    %172 = vector.multi_reduction <add>, %171, %cst_49 [1] : vector<4x256xf32> to vector<4xf32>
    %173 = vector.shape_cast %172 : vector<4xf32> to vector<4x1xf32>
    %cst_50 = arith.constant 2.560000e+02 : f32
    %174 = vector.broadcast %cst_50 : f32 to vector<4x1xf32>
    %175 = arith.divf %173, %174 : vector<4x1xf32>
    %176 = vector.broadcast %175 : vector<4x1xf32> to vector<4x256xf32>
    %177 = arith.subf %171, %176 : vector<4x256xf32>
    %178 = arith.mulf %177, %177 : vector<4x256xf32>
    %cst_51 = arith.constant dense<0.000000e+00> : vector<4xf32>
    %179 = vector.multi_reduction <add>, %178, %cst_51 [1] : vector<4x256xf32> to vector<4xf32>
    %180 = vector.shape_cast %179 : vector<4xf32> to vector<4x1xf32>
    %cst_52 = arith.constant 2.560000e+02 : f32
    %181 = vector.broadcast %cst_52 : f32 to vector<4x1xf32>
    %182 = arith.divf %180, %181 : vector<4x1xf32>
    %cst_53 = arith.constant 9.99999974E-6 : f32
    %183 = vector.broadcast %cst_53 : f32 to vector<4x1xf32>
    %184 = arith.addf %182, %183 : vector<4x1xf32>
    %185 = math.rsqrt %184 : vector<4x1xf32>
    %186 = vector.broadcast %185 : vector<4x1xf32> to vector<4x256xf32>
    %187 = arith.mulf %177, %186 : vector<4x256xf32>
    %188 = vector.extract_strided_slice %168 {offsets = [0, 1], sizes = [4, 1], strides = [1, 1]} : vector<4x3xf32> to vector<4x1xf32>
    %189 = vector.broadcast %188 : vector<4x1xf32> to vector<4x256xf32>
    %190 = arith.mulf %187, %189 : vector<4x256xf32>
    %191 = vector.extract_strided_slice %168 {offsets = [0, 2], sizes = [4, 1], strides = [1, 1]} : vector<4x3xf32> to vector<4x1xf32>
    %192 = vector.broadcast %191 : vector<4x1xf32> to vector<4x256xf32>
    %193 = arith.addf %190, %192 : vector<4x256xf32>
    %cst_54 = arith.constant 0.000000e+00 : f32
    %194 = vector.broadcast %cst_54 : f32 to vector<4x256xf32>
    %195 = arith.maximumf %193, %194 : vector<4x256xf32>
    %c0_55 = arith.constant 0 : index
    %c0_56 = arith.constant 0 : index
    %c0_57 = arith.constant 0 : index
    %196 = vector.load %arg6[%c0_55, %c0_56, %c0_57] : memref<1x4x256xf32, #tpu.memory_space<vmem>>, vector<1x4x256xf32>
    %197 = vector.shape_cast %196 : vector<1x4x256xf32> to vector<4x256xf32>
    %198 = vector.shape_cast %195 : vector<4x256xf32> to vector<1x4x256xf32>
    tpu.vector_store %arg6[%c0_55, %c0_56, %c0_57], %198 {strides = array<i32>} : memref<1x4x256xf32, #tpu.memory_space<vmem>>, vector<1x4x256xf32>,
    return
  }
  func.func @transform_0(%arg0: i32) -> (i32, i32, i32) {
    %c0_i32 = arith.constant 0 : i32
    %c0_i32_0 = arith.constant 0 : i32
    %c0_i32_1 = arith.constant 0 : i32
    return %arg0, %c0_i32, %c0_i32_0 : i32, i32, i32
  }
  func.func @transform_1(%arg0: i32) -> (i32, i32, i32) {
    %c0_i32 = arith.constant 0 : i32
    %c0_i32_0 = arith.constant 0 : i32
    %c0_i32_1 = arith.constant 0 : i32
    return %arg0, %c0_i32, %c0_i32_0 : i32, i32, i32
  }
  func.func @transform_2(%arg0: i32) -> (i32, i32, i32) {
    %c0_i32 = arith.constant 0 : i32
    %c0_i32_0 = arith.constant 0 : i32
    %c0_i32_1 = arith.constant 0 : i32
    %c0_i32_2 = arith.constant 0 : i32
    return %c0_i32, %c0_i32_0, %c0_i32_1 : i32, i32, i32
  }
  func.func @transform_3(%arg0: i32) -> (i32, i32, i32) {
    %c0_i32 = arith.constant 0 : i32
    %c0_i32_0 = arith.constant 0 : i32
    %c0_i32_1 = arith.constant 0 : i32
    %c0_i32_2 = arith.constant 0 : i32
    return %c0_i32, %c0_i32_0, %c0_i32_1 : i32, i32, i32
  }
  func.func @transform_4(%arg0: i32) -> (i32, i32) {
    %c0_i32 = arith.constant 0 : i32
    %c0_i32_0 = arith.constant 0 : i32
    %c0_i32_1 = arith.constant 0 : i32
    return %c0_i32, %c0_i32_0 : i32, i32
  }
  func.func @transform_5(%arg0: i32) -> (i32, i32, i32) {
    %c0_i32 = arith.constant 0 : i32
    %c0_i32_0 = arith.constant 0 : i32
    %c0_i32_1 = arith.constant 0 : i32
    return %arg0, %c0_i32, %c0_i32_0 : i32, i32, i32
  }
}

</mosaic_0001>

<llo_original>
// kernel: forward.7
$region0: #{forward.7}
  #allocation0 [shape = 'u32[]', space=smem, size = 0x4, offset = 0x4, fixed_abs, tag = 'smem constant byte address 0x4 - core index']
  #allocation1 [shape = 'u32[72,128]{1,0:T(1,128)}', space=vmem, size = 0x9000, scoped, tag = 'internal scratch']
  %s0 = inlined_call_operand.vmem [shape: bf16[2,1,256], index: 0, kind: input, shape index: {}]
  %s1 = inlined_call_operand.vmem [shape: bf16[9,4,1], index: 1, kind: input, shape index: {}]
  %s2 = inlined_call_operand.vmem [shape: f32[4,3], index: 2, kind: input, shape index: {}]
  %s3 = inlined_call_operand.vmem [shape: bf16[2,4,256], index: 3, kind: output, shape index: {}]
  %s4 = sld [smem:[#allocation0]]
  $region45: #{forward.7} parent=0
    _
  %s6 = ssub.s32 1, %s4
  %s7 = scalar_select 0, %s6, %s4
  loop: start=0, step=1, limit=4
  $region2: #{forward.7} parent=0 // loop_pre_header
    _
  $region3: #{forward.7} parent=0 // loop_header
    %s9 = sphi 0, %s13
    %p10 = scmp.ge.s32.totalorder %s9, 4
    %s19 = sphi 0, %s21
    %s22 = sphi 0, %s19
    %s23 = sphi 0, %s22
    %s39 = sphi 0, %s23
    %s43 = sphi 0, %s43
    %s45 = sphi 0, %s43
    %s46 = sphi 0, %s45
    %s60 = sphi 0, %s46
    %s64 = sphi 0, %s64
    %s66 = sphi 0, %s64
    %s67 = sphi 0, %s66
    %s81 = sphi 0, %s67
    %s87 = sphi 0, %s89
    %s90 = sphi 0, %s87
    %s91 = sphi 0, %s90
    %s107 = sphi 0, %s91
  $region4: #{forward.7} parent=0 // loop_header_branch
    %12 = sbr.rel (%p10) target = $region8
  $region5: #{forward.7} parent=0 // loop_body
    %s14 = ssub.s32 %s9, 1
    %s15 = ssub.s32 %s9, 2
    %s16 = sadd.s32 %s9, 1
    %s17 = ssub.s32 %s9, %s16
    %p18 = scmp.eq.s32.totalorder %s17, 0
    %s20 = sadd.s32 %s19, 1
    %s21 = scalar_select %p18, %s19, %s20
    %p24 = pneg %p18
    %p25 = scmp.eq.s32.totalorder %s9, 1
    %p26 = por %p24, %p25
    %p27 = scmp.ne.s32.totalorder %s19, %s22
    %p28 = scmp.eq.s32.totalorder %s9, 0
    %p29 = por %p27, %p28
    %p30 = scmp.ne.s32.totalorder %s19, %s22
    %p31 = scmp.eq.s32.totalorder %s14, 1
    %p32 = por %p30, %p31
    %p33 = scmp.ne.s32.totalorder %s22, %s23
    %p34 = scmp.eq.s32.totalorder %s14, 0
    %p35 = por %p33, %p34
    %p36 = scmp.ne.s32.totalorder %s22, %s23
    %p37 = scmp.eq.s32.totalorder %s15, 1
    %p38 = por %p36, %p37
    %p40 = scmp.ne.s32.totalorder %s23, %s39
    %p41 = scmp.eq.s32.totalorder %s15, 0
    %p42 = por %p40, %p41
    %s44 = sadd.s32 %s43, 1
    %p47 = scmp.eq.s32.totalorder %s9, 1
    %p48 = scmp.ne.s32.totalorder %s43, %s45
    %p49 = scmp.eq.s32.totalorder %s9, 0
    %p50 = por %p48, %p49
    %p51 = scmp.ne.s32.totalorder %s43, %s45
    %p52 = scmp.eq.s32.totalorder %s14, 1
    %p53 = por %p51, %p52
    %p54 = scmp.ne.s32.totalorder %s45, %s46
    %p55 = scmp.eq.s32.totalorder %s14, 0
    %p56 = por %p54, %p55
    %p57 = scmp.ne.s32.totalorder %s45, %s46
    %p58 = scmp.eq.s32.totalorder %s15, 1
    %p59 = por %p57, %p58
    %p61 = scmp.ne.s32.totalorder %s46, %s60
    %p62 = scmp.eq.s32.totalorder %s15, 0
    %p63 = por %p61, %p62
    %s65 = sadd.s32 %s64, 1
    %p68 = scmp.eq.s32.totalorder %s9, 1
    %p69 = scmp.ne.s32.totalorder %s64, %s66
    %p70 = scmp.eq.s32.totalorder %s9, 0
    %p71 = por %p69, %p70
    %p72 = scmp.ne.s32.totalorder %s64, %s66
    %p73 = scmp.eq.s32.totalorder %s14, 1
    %p74 = por %p72, %p73
    %p75 = scmp.ne.s32.totalorder %s66, %s67
    %p76 = scmp.eq.s32.totalorder %s14, 0
    %p77 = por %p75, %p76
    %p78 = scmp.ne.s32.totalorder %s66, %s67
    %p79 = scmp.eq.s32.totalorder %s15, 1
    %p80 = por %p78, %p79
    %p82 = scmp.ne.s32.totalorder %s67, %s81
    %p83 = scmp.eq.s32.totalorder %s15, 0
    %p84 = por %p82, %p83
    %s85 = ssub.s32 %s9, %s16
    %p86 = scmp.eq.s32.totalorder %s85, 0
    %s88 = sadd.s32 %s87, 1
    %s89 = scalar_select %p86, %s87, %s88
    %p92 = pneg %p86
    %p93 = scmp.eq.s32.totalorder %s9, 1
    %p94 = por %p92, %p93
    %p95 = scmp.ne.s32.totalorder %s87, %s90
    %p96 = scmp.eq.s32.totalorder %s9, 0
    %p97 = por %p95, %p96
    %p98 = scmp.ne.s32.totalorder %s87, %s90
    %p99 = scmp.eq.s32.totalorder %s14, 1
    %p100 = por %p98, %p99
    %p101 = scmp.ne.s32.totalorder %s90, %s91
    %p102 = scmp.eq.s32.totalorder %s14, 0
    %p103 = por %p101, %p102
    %p104 = scmp.ne.s32.totalorder %s90, %s91
    %p105 = scmp.eq.s32.totalorder %s15, 1
    %p106 = por %p104, %p105
    %p108 = scmp.ne.s32.totalorder %s91, %s107
    %p109 = scmp.eq.s32.totalorder %s15, 0
    %p110 = por %p108, %p109
    %p111 = scmp.le.s32.totalorder 1, %s9
    %p112 = scmp.lt.s32.totalorder %s9, 3
    %p113 = pnand %p111, %p112
    %p114 = pneg %p113
    // Predicated region
    $region9: #{forward.7} parent=5 // pred_check
      _
    $region10: #{forward.7} parent=5 // pred_check_branch
      %116 = sbr.rel (%p113) target = $region12
    $region11: #{forward.7} parent=5 // pred_region
      %s117 = ssub.s32 %s9, 1
      // Predicated region
      $region13: #{forward.7} parent=11 // pred_check
        %p118 = pneg %p56
      $region14: #{forward.7} parent=11 // pred_check_branch
        %120 = sbr.rel (%p118) target = $region16
      $region15: #{forward.7} parent=11 // pred_region
        _
      $region16: #{forward.7} parent=11 // pred_fallthru
        _
      // Predicated region
      $region17: #{forward.7} parent=11 // pred_check
        %p121 = pneg %p77
      $region18: #{forward.7} parent=11 // pred_check_branch
        %123 = sbr.rel (%p121) target = $region20
      $region19: #{forward.7} parent=11 // pred_region
        _
      $region20: #{forward.7} parent=11 // pred_fallthru
        _
    $region12: #{forward.7} parent=5 // pred_fallthru
      _
    %p124 = scmp.lt.s32.totalorder %s9, 2
    // Predicated region
    $region21: #{forward.7} parent=5 // pred_check
      %p125 = pneg %p124
    $region22: #{forward.7} parent=5 // pred_check_branch
      %127 = sbr.rel (%p125) target = $region24
    $region23: #{forward.7} parent=5 // pred_region
      // Predicated region
      $region25: #{forward.7} parent=23 // pred_check
        %p128 = pneg %p29
      $region26: #{forward.7} parent=23 // pred_check_branch
        %130 = sbr.rel (%p128) target = $region28
      $region27: #{forward.7} parent=23 // pred_region
        %p131 = scmp.lt.s32.totalorder %s9, 1
        %s132 = scalar_select %p131, %s9, 1
        %s133 = smul.addr %s132, 2
        %s134 = scalar_lea.vmem %s0, %s133
      $region28: #{forward.7} parent=23 // pred_fallthru
        _
    $region24: #{forward.7} parent=5 // pred_fallthru
      _
    %p135 = scmp.le.s32.totalorder 1, %s9
    %p136 = scmp.lt.s32.totalorder %s9, 3
    %p137 = pnand %p135, %p136
    %p138 = pneg %p137
    // Predicated region
    $region29: #{forward.7} parent=5 // pred_check
      _
    $region30: #{forward.7} parent=5 // pred_check_branch
      %140 = sbr.rel (%p137) target = $region32
    $region31: #{forward.7} parent=5 // pred_region
      %s141 = ssub.s32 %s9, 1
      %p142 = scmp.lt.s32.totalorder %s14, 1
      %s143 = scalar_select %p142, %s14, 1
      %s144 = smul.addr %s143, 2
      %s145 = scalar_lea.vmem %s0, %s144
      %p146 = pneg %p35
      %p147 = pneg %p32
      %p148 = pneg %p56
      %p149 = pneg %p53
      %p150 = pneg %p77
      %p151 = pneg %p74
      %p152 = pneg %p103
      %p153 = pneg %p100
      %p154 = scmp.lt.s32.totalorder %s14, 1
      %s155 = scalar_select %p154, %s14, 1
      %s156 = smul.addr %s155, 2
      %s157 = smul.addr %s156, 2
      %s158 = scalar_lea.vmem %s3, %s157
      %p159 = scmp.lt.s32.totalorder %s14, 1
      %s160 = scalar_select %p159, %s14, 1
      %s161 = smul.addr %s160, 2
      %s162 = scalar_lea.vmem %s0, %s161
      %p163 = scmp.lt.s32.totalorder %s14, 1
      %s164 = scalar_select %p163, %s14, 1
      %s165 = smul.addr %s164, 2
      %s166 = smul.addr %s165, 2
      %s167 = scalar_lea.vmem %s3, %s166
      %v168 = vlaneseq
      %v169 = vand.u32 %v168, 127
      %v170 = vadd.s32 %v169, 128
      %vm171 = vcmp.lt.s32.totalorder %v169, 0
      %v172 = vsub.s32 0, %v169
      %v173 = vsel %vm171, %v172, %v169
      %v174 = vshrl.u32 %v173, 4
      %v175 = vand.u32 %v173, 15
      %v176 = vsub.s32 0, %v175
      %v177 = vsel %vm171, %v176, %v175
      %vm178 = vcmp.lt.s32.totalorder %v170, 0
      %v179 = vsub.s32 0, %v170
      %v180 = vsel %vm178, %v179, %v170
      %v181 = vshrl.u32 %v180, 4
      %v182 = vand.u32 %v180, 15
      %v183 = vsub.s32 0, %v182
      %v184 = vsel %vm178, %v183, %v182
      %vm185 = vcmp.ne.s32.totalorder %v177, 0
      %vm186 = vcmp.ne.s32.totalorder %v184, 0
      %vm187 = vcmp.lt.s32.totalorder %v177, 0
      %vm188 = vcmp.lt.s32.totalorder %v184, 0
      %vm189 = vmand %vm187, %vm185
      %vm190 = vmand %vm188, %vm186
      %v191 = vadd.s32 %v177, 16
      %v192 = vadd.s32 %v184, 16
      %v193 = vsel %vm189, %v191, %v177
      %v194 = vsel %vm190, %v192, %v184
      %vm195 = vcmp.gt.s32.totalorder %v193, 0
      %vm196 = vcmp.gt.s32.totalorder %v194, 0
      %vm197 = vcmp.lt.s32.totalorder %v193, 15
      %vm198 = vcmp.lt.s32.totalorder %v194, 15
      %v199 = vld [vmem:[%s162] sm:$0x3]
      %v200 = vunpack.c.l.bf16 %v199
      %v202 = vperm.slane %v200, 0
      %v203 = vperm.slane %v200, 2
      %204 = vrot.lane.b32.xlu0 %v202, 17
      %v205 = vpop.permute.xlu0 %204
      %206 = vrot.lane.b32.xlu0 %v203, 17
      %v207 = vpop.permute.xlu0 %206
      %vm208 = vcmask 138240
      %v209 = vsel %vm208, %v205, %v207
      %v213 = vsel %vm208, 0.0, %v205
      %v214 = vsel %vm208, %v207, 0.0
      %v215 = vld [vmem:[%s1] sm:$0x3]
      %v216 = vld [vmem:[%s1 + $0x2] sm:$0x3]
      %v217 = vld [vmem:[%s1 + $0x4] sm:$0x3]
      %v218 = vld [vmem:[%s1 + $0x6] sm:$0x3]
      %v219 = vld [vmem:[%s1 + $0x8] sm:$0x3]
      %v220 = vld [vmem:[%s1 + $0xa] sm:$0x3]
      %v221 = vld [vmem:[%s1 + $0xc] sm:$0x3]
      %v222 = vld [vmem:[%s1 + $0xe] sm:$0x3]
      %v223 = vld [vmem:[%s1 + $0x10] sm:$0x3]
      %v224 = vsel %vm195, %v213, 0.0
      %v225 = vsel %vm196, %v209, 0.0
      %v226 = vunpack.c.l.bf16 %v215
      %228 = vset.pattern.permute.xlu0 0
      %229 = vperm.xlu0 %228, %v226
      %v230 = vpop.permute.xlu0 %229
      %v233 = vunpack.c.l.s4 839922192
      %v234 = vunpack.c.0.s8 %v233
      %v235 = vperm.slane %v230, %v234
      %v236 = vperm.slane %v224, 0
      %v237 = vperm.slane %v225, 0
      %v240 = vrot.slane %v237, 4
      %vm241 = vcmask 1043456
      %v242 = vsel %vm241, %v236, %v240
      %v244 = vmul.f32 %v235, %v242
      %v245 = vadd.f32 %v244, 0.0
      %v246 = vunpack.c.l.bf16 %v216
      %248 = vset.pattern.permute.xlu0 0
      %249 = vperm.xlu0 %248, %v246
      %v250 = vpop.permute.xlu0 %249
      %v253 = vunpack.c.l.s4 839922192
      %v254 = vunpack.c.0.s8 %v253
      %v255 = vperm.slane %v250, %v254
      %v256 = vperm.slane %v213, 0
      %v257 = vperm.slane %v209, 0
      %v258 = vperm.slane %v214, 0
      %v262 = vrot.slane %v257, 4
      %v263 = vsel %vm241, %v256, %v262
      %264 = vrot.lane.b32.xlu0 %v263, 127
      %v265 = vpop.permute.xlu0 %264
      %266 = vrot.lane.b32.xlu0 %v258, 127
      %v267 = vpop.permute.xlu0 %266
      %v268 = vrot.slane %v265, 4
      %v269 = vrot.slane %v267, 4
      %v270 = vsel %vm241, %v268, %v269
      %vm271 = vcmask 1039360
      %v272 = vsel %vm271, %v265, %v270
      %v274 = vmul.f32 %v255, %v272
      %v275 = vadd.f32 %v245, %v274
      %278 = vrot.lane.b32.xlu0 %v213, 126
      %v279 = vpop.permute.xlu0 %278
      %280 = vrot.lane.b32.xlu0 %v209, 126
      %v281 = vpop.permute.xlu0 %280
      %282 = vrot.lane.b32.xlu0 %v214, 126
      %v283 = vpop.permute.xlu0 %282
      %vm284 = vcmask 1031168
      %v285 = vsel %vm284, %v279, %v281
      %v286 = vsel %vm284, %v281, %v283
      %v289 = vsel %vm197, %v285, 0.0
      %v290 = vsel %vm198, %v286, 0.0
      %v291 = vunpack.c.l.bf16 %v217
      %293 = vset.pattern.permute.xlu0 0
      %294 = vperm.xlu0 %293, %v291
      %v295 = vpop.permute.xlu0 %294
      %v298 = vunpack.c.l.s4 839922192
      %v299 = vunpack.c.0.s8 %v298
      %v300 = vperm.slane %v295, %v299
      %v301 = vperm.slane %v289, 0
      %v302 = vperm.slane %v290, 0
      %v305 = vrot.slane %v302, 4
      %v306 = vsel %vm241, %v301, %v305
      %v308 = vmul.f32 %v300, %v306
      %v309 = vadd.f32 %v275, %v308
      %310 = vrot.lane.b32.xlu0 %v213, 112
      %v311 = vpop.permute.xlu0 %310
      %312 = vrot.lane.b32.xlu0 %v209, 112
      %v313 = vpop.permute.xlu0 %312
      %314 = vrot.lane.b32.xlu0 %v214, 112
      %v315 = vpop.permute.xlu0 %314
      %vm316 = vcmask 916480
      %v317 = vsel %vm316, %v311, %v313
      %v318 = vsel %vm316, %v313, %v315
      %v321 = vsel %vm195, %v317, 0.0
      %v322 = vsel %vm196, %v318, 0.0
      %v323 = vunpack.c.l.bf16 %v218
      %325 = vset.pattern.permute.xlu0 0
      %326 = vperm.xlu0 %325, %v323
      %v327 = vpop.permute.xlu0 %326
      %v330 = vunpack.c.l.s4 839922192
      %v331 = vunpack.c.0.s8 %v330
      %v332 = vperm.slane %v327, %v331
      %v333 = vperm.slane %v321, 0
      %v334 = vperm.slane %v322, 0
      %v337 = vrot.slane %v334, 4
      %v338 = vsel %vm241, %v333, %v337
      %v340 = vmul.f32 %v332, %v338
      %v341 = vadd.f32 %v309, %v340
      %v342 = vunpack.c.l.bf16 %v219
      %344 = vset.pattern.permute.xlu0 0
      %345 = vperm.xlu0 %344, %v342
      %v346 = vpop.permute.xlu0 %345
      %v349 = vunpack.c.l.s4 839922192
      %v350 = vunpack.c.0.s8 %v349
      %v351 = vperm.slane %v346, %v350
      %v354 = vperm.slane %v202, 0
      %v355 = vperm.slane %v203, 0
      %v358 = vrot.slane %v355, 4
      %v359 = vsel %vm241, %v354, %v358
      %v361 = vmul.f32 %v351, %v359
      %v362 = vadd.f32 %v341, %v361
      %363 = vrot.lane.b32.xlu0 %v213, 110
      %v364 = vpop.permute.xlu0 %363
      %365 = vrot.lane.b32.xlu0 %v209, 110
      %v366 = vpop.permute.xlu0 %365
      %367 = vrot.lane.b32.xlu0 %v214, 110
      %v368 = vpop.permute.xlu0 %367
      %vm369 = vcmask 900096
      %v370 = vsel %vm369, %v364, %v366
      %v371 = vsel %vm369, %v366, %v368
      %v374 = vsel %vm197, %v370, 0.0
      %v375 = vsel %vm198, %v371, 0.0
      %v376 = vunpack.c.l.bf16 %v220
      %378 = vset.pattern.permute.xlu0 0
      %379 = vperm.xlu0 %378, %v376
      %v380 = vpop.permute.xlu0 %379
      %v383 = vunpack.c.l.s4 839922192
      %v384 = vunpack.c.0.s8 %v383
      %v385 = vperm.slane %v380, %v384
      %v386 = vperm.slane %v374, 0
      %v387 = vperm.slane %v375, 0
      %v390 = vrot.slane %v387, 4
      %v391 = vsel %vm241, %v386, %v390
      %v393 = vmul.f32 %v385, %v391
      %v394 = vadd.f32 %v362, %v393
      %395 = vrot.lane.b32.xlu0 %v213, 96
      %v396 = vpop.permute.xlu0 %395
      %397 = vrot.lane.b32.xlu0 %v209, 96
      %v398 = vpop.permute.xlu0 %397
      %399 = vrot.lane.b32.xlu0 %v214, 96
      %v400 = vpop.permute.xlu0 %399
      %vm401 = vcmask 785408
      %v402 = vsel %vm401, %v396, %v398
      %v403 = vsel %vm401, %v398, %v400
      %v406 = vsel %vm195, %v402, 0.0
      %v407 = vsel %vm196, %v403, 0.0
      %v408 = vunpack.c.l.bf16 %v221
      %410 = vset.pattern.permute.xlu0 0
      %411 = vperm.xlu0 %410, %v408
      %v412 = vpop.permute.xlu0 %411
      %v415 = vunpack.c.l.s4 839922192
      %v416 = vunpack.c.0.s8 %v415
      %v417 = vperm.slane %v412, %v416
      %v418 = vperm.slane %v406, 0
      %v419 = vperm.slane %v407, 0
      %v422 = vrot.slane %v419, 4
      %v423 = vsel %vm241, %v418, %v422
      %v425 = vmul.f32 %v417, %v423
      %v426 = vadd.f32 %v394, %v425
      %v427 = vunpack.c.l.bf16 %v222
      %429 = vset.pattern.permute.xlu0 0
      %430 = vperm.xlu0 %429, %v427
      %v431 = vpop.permute.xlu0 %430
      %v434 = vunpack.c.l.s4 839922192
      %v435 = vunpack.c.0.s8 %v434
      %v436 = vperm.slane %v431, %v435
      %437 = vrot.lane.b32.xlu0 %v263, 95
      %v438 = vpop.permute.xlu0 %437
      %439 = vrot.lane.b32.xlu0 %v258, 95
      %v440 = vpop.permute.xlu0 %439
      %v441 = vrot.slane %v438, 4
      %v442 = vrot.slane %v440, 4
      %v443 = vsel %vm241, %v441, %v442
      %vm444 = vcmask 777216
      %v445 = vsel %vm444, %v438, %v443
      %v447 = vmul.f32 %v436, %v445
      %v448 = vadd.f32 %v426, %v447
      %449 = vrot.lane.b32.xlu0 %v213, 94
      %v450 = vpop.permute.xlu0 %449
      %451 = vrot.lane.b32.xlu0 %v209, 94
      %v452 = vpop.permute.xlu0 %451
      %453 = vrot.lane.b32.xlu0 %v214, 94
      %v454 = vpop.permute.xlu0 %453
      %vm455 = vcmask 769024
      %v456 = vsel %vm455, %v450, %v452
      %v457 = vsel %vm455, %v452, %v454
      %v460 = vsel %vm197, %v456, 0.0
      %v461 = vsel %vm198, %v457, 0.0
      %v462 = vunpack.c.l.bf16 %v223
      %464 = vset.pattern.permute.xlu0 0
      %465 = vperm.xlu0 %464, %v462
      %v466 = vpop.permute.xlu0 %465
      %v469 = vunpack.c.l.s4 839922192
      %v470 = vunpack.c.0.s8 %v469
      %v471 = vperm.slane %v466, %v470
      %v472 = vperm.slane %v460, 0
      %v473 = vperm.slane %v461, 0
      %v476 = vrot.slane %v473, 4
      %v477 = vsel %vm241, %v472, %v476
      %v479 = vmul.f32 %v471, %v477
      %v480 = vadd.f32 %v448, %v479
      %v481 = vld [vmem:[%s2] sm:$0xf]
      %483 = vset.pattern.permute.xlu0 0
      %484 = vperm.xlu0 %483, %v481
      %v485 = vpop.permute.xlu0 %484
      %v487 = vunpack.c.l.s4 839922192
      %v488 = vunpack.c.0.s8 %v487
      %v489 = vperm.slane %v485, %v488
      %v491 = vadd.f32 %v480, %v489
      %493 = vst [vmem:[#allocation1] ss:$2 sm:$0xff] %v491
      %v494 = vld.sshfl [vmem:[#allocation1] sm:$0xff pattern:$0x75316420]
      %v495 = vld.sshfl [vmem:[#allocation1 + $0x8] sm:$0xff pattern:$0x75316420]
      %v498 = vsel %vm241, %v494, 0.0
      %v499 = vsel %vm241, %v495, 0.0
      %v500 = vadd.f32 %v498, %v499
      %501 = vadd.xlane.f32.xlu0 %v500
      %v502 = vpop.xlane.xlu0 %501
      %v503 = vrcp.pop 256.0
      %v504 = vmul.f32 256.0, %v503
      %v505 = vsub.f32 1.0, %v504
      %v506 = vmul.f32 %v503, %v505
      %v507 = vadd.f32 %v503, %v506
      %vm508 = vweird.f32 %v503
      %v509 = vsel %vm508, %v503, %v507
      %v510 = vmul.f32 %v502, %v509
      %v513 = vunpack.c.l.s4 839922192
      %v514 = vunpack.c.0.s8 %v513
      %v515 = vperm.slane %v510, %v514
      %v517 = vsub.f32 %v491, %v515
      %v518 = vmul.f32 %v517, %v517
      %520 = vst [vmem:[#allocation1] ss:$2 sm:$0xff] %v518
      %v521 = vld.sshfl [vmem:[#allocation1] sm:$0xff pattern:$0x75316420]
      %v522 = vld.sshfl [vmem:[#allocation1 + $0x8] sm:$0xff pattern:$0x75316420]
      %v525 = vsel %vm241, %v521, 0.0
      %v526 = vsel %vm241, %v522, 0.0
      %v527 = vadd.f32 %v525, %v526
      %528 = vadd.xlane.f32.xlu0 %v527
      %v529 = vpop.xlane.xlu0 %528
      %v530 = vmul.f32 %v529, %v509
      %v531 = vadd.f32 %v530, 1e-05
      %v532 = vrsqrt.pop %v531
      %v533 = vmul.f32 %v532, %v531
      %v534 = vmul.f32 %v533, %v532
      %v535 = vmul.f32 0.5, %v534
      %v536 = vsub.f32 1.5, %v535
      %v537 = vmul.f32 %v532, %v536
      %vm538 = vweird.f32 %v531
      %vm539 = vweird.f32 %v532
      %vm540 = vmor %vm538, %vm539
      %v541 = vsel %vm540, %v532, %v537
      %v544 = vunpack.c.l.s4 839922192
      %v545 = vunpack.c.0.s8 %v544
      %v546 = vperm.slane %v541, %v545
      %v548 = vmul.f32 %v517, %v546
      %549 = vset.pattern.permute.xlu0 1
      %550 = vperm.xlu0 %549, %v481
      %v551 = vpop.permute.xlu0 %550
      %v553 = vunpack.c.l.s4 839922192
      %v554 = vunpack.c.0.s8 %v553
      %v555 = vperm.slane %v551, %v554
      %v557 = vmul.f32 %v548, %v555
      %558 = vset.pattern.permute.xlu0 2
      %559 = vperm.xlu0 %558, %v481
      %v560 = vpop.permute.xlu0 %559
      %v562 = vunpack.c.l.s4 839922192
      %v563 = vunpack.c.0.s8 %v562
      %v564 = vperm.slane %v560, %v563
      %v566 = vadd.f32 %v557, %v564
      %v567 = vmax.f32 %v566, 0.0
      %569 = vst [vmem:[#allocation1] ss:$2 sm:$0xff] %v567
      %v570 = vld.sshfl [vmem:[#allocation1] sm:$0xff pattern:$0x75316420]
      %v571 = vld.sshfl [vmem:[#allocation1 + $0x8] sm:$0xff pattern:$0x75316420]
      %v574 = vpack.c.bf16 %v571, %v570
      %v576 = vrot.slane %v574, 2
      %vm577 = vcmask 1041408
      %v580 = vsel %vm577, %v574, %v576
      %582 = vst [vmem:[%s167] sm:$0xf] %v580
      %p583 = scmp.lt.s32.totalorder %s14, 1
      %s584 = scalar_select %p583, %s14, 1
      %s585 = smul.addr %s584, 2
      %s586 = smul.addr %s585, 2
      %s587 = scalar_lea.vmem %s3, %s586
      // Predicated region
      $region33: #{forward.7} parent=31 // pred_check
        %p588 = pneg %p100
      $region34: #{forward.7} parent=31 // pred_check_branch
        %590 = sbr.rel (%p588) target = $region36
      $region35: #{forward.7} parent=31 // pred_region
        _
      $region36: #{forward.7} parent=31 // pred_fallthru
        _
    $region32: #{forward.7} parent=5 // pred_fallthru
      _
    %p591 = scmp.le.s32.totalorder 2, %s9
    // Predicated region
    $region37: #{forward.7} parent=5 // pred_check
      %p592 = pneg %p591
    $region38: #{forward.7} parent=5 // pred_check_branch
      %594 = sbr.rel (%p592) target = $region40
    $region39: #{forward.7} parent=5 // pred_region
      %s595 = ssub.s32 %s9, 2
      // Predicated region
      $region41: #{forward.7} parent=39 // pred_check
        %p596 = pneg %p106
      $region42: #{forward.7} parent=39 // pred_check_branch
        %598 = sbr.rel (%p596) target = $region44
      $region43: #{forward.7} parent=39 // pred_region
        %p599 = scmp.lt.s32.totalorder %s15, 1
        %s600 = scalar_select %p599, %s15, 1
        %s601 = smul.addr %s600, 2
        %s602 = smul.addr %s601, 2
        %s603 = scalar_lea.vmem %s3, %s602
      $region44: #{forward.7} parent=39 // pred_fallthru
        _
    $region40: #{forward.7} parent=5 // pred_fallthru
      _
  $region6: #{forward.7} parent=0 // loop_footer
    %s13 = sadd.s32 1, %s9
  $region7: #{forward.7} parent=0 // loop_footer_branch
    %8 = sbr.rel target = $region3
  $region8: #{forward.7} parent=0 // loop_exit
    _

// kernel: forward.8
$region0: #{forward.8}
  #allocation0 [shape = 'u32[]', space=smem, size = 0x4, offset = 0x4, fixed_abs, tag = 'smem constant byte address 0x4 - core index']
  #allocation1 [shape = 'u32[72,128]{1,0:T(1,128)}', space=vmem, size = 0x9000, scoped, tag = 'internal scratch']
  %s0 = inlined_call_operand.vmem [shape: bf16[2,4,64], index: 0, kind: input, shape index: {}]
  %s1 = inlined_call_operand.vmem [shape: bf16[9,8,4], index: 1, kind: input, shape index: {}]
  %s2 = inlined_call_operand.vmem [shape: f32[8,3], index: 2, kind: input, shape index: {}]
  %s3 = inlined_call_operand.vmem [shape: bf16[2,8,64], index: 3, kind: output, shape index: {}]
  %s4 = sld [smem:[#allocation0]]
  $region45: #{forward.8} parent=0
    _
  %s6 = ssub.s32 1, %s4
  %s7 = scalar_select 0, %s6, %s4
  loop: start=0, step=1, limit=4
  $region2: #{forward.8} parent=0 // loop_pre_header
    _
  $region3: #{forward.8} parent=0 // loop_header
    %s9 = sphi 0, %s13
    %p10 = scmp.ge.s32.totalorder %s9, 4
    %s19 = sphi 0, %s21
    %s22 = sphi 0, %s19
    %s23 = sphi 0, %s22
    %s39 = sphi 0, %s23
    %s43 = sphi 0, %s43
    %s45 = sphi 0, %s43
    %s46 = sphi 0, %s45
    %s60 = sphi 0, %s46
    %s64 = sphi 0, %s64
    %s66 = sphi 0, %s64
    %s67 = sphi 0, %s66
    %s81 = sphi 0, %s67
    %s87 = sphi 0, %s89
    %s90 = sphi 0, %s87
    %s91 = sphi 0, %s90
    %s107 = sphi 0, %s91
  $region4: #{forward.8} parent=0 // loop_header_branch
    %12 = sbr.rel (%p10) target = $region8
  $region5: #{forward.8} parent=0 // loop_body
    %s14 = ssub.s32 %s9, 1
    %s15 = ssub.s32 %s9, 2
    %s16 = sadd.s32 %s9, 1
    %s17 = ssub.s32 %s9, %s16
    %p18 = scmp.eq.s32.totalorder %s17, 0
    %s20 = sadd.s32 %s19, 1
    %s21 = scalar_select %p18, %s19, %s20
    %p24 = pneg %p18
    %p25 = scmp.eq.s32.totalorder %s9, 1
    %p26 = por %p24, %p25
    %p27 = scmp.ne.s32.totalorder %s19, %s22
    %p28 = scmp.eq.s32.totalorder %s9, 0
    %p29 = por %p27, %p28
    %p30 = scmp.ne.s32.totalorder %s19, %s22
    %p31 = scmp.eq.s32.totalorder %s14, 1
    %p32 = por %p30, %p31
    %p33 = scmp.ne.s32.totalorder %s22, %s23
    %p34 = scmp.eq.s32.totalorder %s14, 0
    %p35 = por %p33, %p34
    %p36 = scmp.ne.s32.totalorder %s22, %s23
    %p37 = scmp.eq.s32.totalorder %s15, 1
    %p38 = por %p36, %p37
    %p40 = scmp.ne.s32.totalorder %s23, %s39
    %p41 = scmp.eq.s32.totalorder %s15, 0
    %p42 = por %p40, %p41
    %s44 = sadd.s32 %s43, 1
    %p47 = scmp.eq.s32.totalorder %s9, 1
    %p48 = scmp.ne.s32.totalorder %s43, %s45
    %p49 = scmp.eq.s32.totalorder %s9, 0
    %p50 = por %p48, %p49
    %p51 = scmp.ne.s32.totalorder %s43, %s45
    %p52 = scmp.eq.s32.totalorder %s14, 1
    %p53 = por %p51, %p52
    %p54 = scmp.ne.s32.totalorder %s45, %s46
    %p55 = scmp.eq.s32.totalorder %s14, 0
    %p56 = por %p54, %p55
    %p57 = scmp.ne.s32.totalorder %s45, %s46
    %p58 = scmp.eq.s32.totalorder %s15, 1
    %p59 = por %p57, %p58
    %p61 = scmp.ne.s32.totalorder %s46, %s60
    %p62 = scmp.eq.s32.totalorder %s15, 0
    %p63 = por %p61, %p62
    %s65 = sadd.s32 %s64, 1
    %p68 = scmp.eq.s32.totalorder %s9, 1
    %p69 = scmp.ne.s32.totalorder %s64, %s66
    %p70 = scmp.eq.s32.totalorder %s9, 0
    %p71 = por %p69, %p70
    %p72 = scmp.ne.s32.totalorder %s64, %s66
    %p73 = scmp.eq.s32.totalorder %s14, 1
    %p74 = por %p72, %p73
    %p75 = scmp.ne.s32.totalorder %s66, %s67
    %p76 = scmp.eq.s32.totalorder %s14, 0
    %p77 = por %p75, %p76
    %p78 = scmp.ne.s32.totalorder %s66, %s67
    %p79 = scmp.eq.s32.totalorder %s15, 1
    %p80 = por %p78, %p79
    %p82 = scmp.ne.s32.totalorder %s67, %s81
    %p83 = scmp.eq.s32.totalorder %s15, 0
    %p84 = por %p82, %p83
    %s85 = ssub.s32 %s9, %s16
    %p86 = scmp.eq.s32.totalorder %s85, 0
    %s88 = sadd.s32 %s87, 1
    %s89 = scalar_select %p86, %s87, %s88
    %p92 = pneg %p86
    %p93 = scmp.eq.s32.totalorder %s9, 1
    %p94 = por %p92, %p93
    %p95 = scmp.ne.s32.totalorder %s87, %s90
    %p96 = scmp.eq.s32.totalorder %s9, 0
    %p97 = por %p95, %p96
    %p98 = scmp.ne.s32.totalorder %s87, %s90
    %p99 = scmp.eq.s32.totalorder %s14, 1
    %p100 = por %p98, %p99
    %p101 = scmp.ne.s32.totalorder %s90, %s91
    %p102 = scmp.eq.s32.totalorder %s14, 0
    %p103 = por %p101, %p102
    %p104 = scmp.ne.s32.totalorder %s90, %s91
    %p105 = scmp.eq.s32.totalorder %s15, 1
    %p106 = por %p104, %p105
    %p108 = scmp.ne.s32.totalorder %s91, %s107
    %p109 = scmp.eq.s32.totalorder %s15, 0
    %p110 = por %p108, %p109
    %p111 = scmp.le.s32.totalorder 1, %s9
    %p112 = scmp.lt.s32.totalorder %s9, 3
    %p113 = pnand %p111, %p112
    %p114 = pneg %p113
    // Predicated region
    $region9: #{forward.8} parent=5 // pred_check
      _
    $region10: #{forward.8} parent=5 // pred_check_branch
      %116 = sbr.rel (%p113) target = $region12
    $region11: #{forward.8} parent=5 // pred_region
      %s117 = ssub.s32 %s9, 1
      // Predicated region
      $region13: #{forward.8} parent=11 // pred_check
        %p118 = pneg %p56
      $region14: #{forward.8} parent=11 // pred_check_branch
        %120 = sbr.rel (%p118) target = $region16
      $region15: #{forward.8} parent=11 // pred_region
        _
      $region16: #{forward.8} parent=11 // pred_fallthru
        _
      // Predicated region
      $region17: #{forward.8} parent=11 // pred_check
        %p121 = pneg %p77
      $region18: #{forward.8} parent=11 // pred_check_branch
        %123 = sbr.rel (%p121) target = $region20
      $region19: #{forward.8} parent=11 // pred_region
        _
      $region20: #{forward.8} parent=11 // pred_fallthru
        _
    $region12: #{forward.8} parent=5 // pred_fallthru
      _
    %p124 = scmp.lt.s32.totalorder %s9, 2
    // Predicated region
    $region21: #{forward.8} parent=5 // pred_check
      %p125 = pneg %p124
    $region22: #{forward.8} parent=5 // pred_check_branch
      %127 = sbr.rel (%p125) target = $region24
    $region23: #{forward.8} parent=5 // pred_region
      // Predicated region
      $region25: #{forward.8} parent=23 // pred_check
        %p128 = pneg %p29
      $region26: #{forward.8} parent=23 // pred_check_branch
        %130 = sbr.rel (%p128) target = $region28
      $region27: #{forward.8} parent=23 // pred_region
        %p131 = scmp.lt.s32.totalorder %s9, 1
        %s132 = scalar_select %p131, %s9, 1
        %s133 = smul.addr %s132, 2
        %s134 = scalar_lea.vmem %s0, %s133
      $region28: #{forward.8} parent=23 // pred_fallthru
        _
    $region24: #{forward.8} parent=5 // pred_fallthru
      _
    %p135 = scmp.le.s32.totalorder 1, %s9
    %p136 = scmp.lt.s32.totalorder %s9, 3
    %p137 = pnand %p135, %p136
    %p138 = pneg %p137
    // Predicated region
    $region29: #{forward.8} parent=5 // pred_check
      _
    $region30: #{forward.8} parent=5 // pred_check_branch
      %140 = sbr.rel (%p137) target = $region32
    $region31: #{forward.8} parent=5 // pred_region
      %s141 = ssub.s32 %s9, 1
      %p142 = scmp.lt.s32.totalorder %s14, 1
      %s143 = scalar_select %p142, %s14, 1
      %s144 = smul.addr %s143, 2
      %s145 = scalar_lea.vmem %s0, %s144
      %p146 = pneg %p35
      %p147 = pneg %p32
      %p148 = pneg %p56
      %p149 = pneg %p53
      %p150 = pneg %p77
      %p151 = pneg %p74
      %p152 = pneg %p103
      %p153 = pneg %p100
      %p154 = scmp.lt.s32.totalorder %s14, 1
      %s155 = scalar_select %p154, %s14, 1
      %s156 = smul.addr %s155, 4
      %s157 = scalar_lea.vmem %s3, %s156
      %p158 = scmp.lt.s32.totalorder %s14, 1
      %s159 = scalar_select %p158, %s14, 1
      %s160 = smul.addr %s159, 2
      %s161 = scalar_lea.vmem %s0, %s160
      %p162 = scmp.lt.s32.totalorder %s14, 1
      %s163 = scalar_select %p162, %s14, 1
      %s164 = smul.addr %s163, 4
      %s165 = scalar_lea.vmem %s3, %s164
      %v169 = vlaneseq
      %v170 = vand.u32 %v169, 127
      %vm171 = vcmp.lt.s32.totalorder %v170, 0
      %v172 = vsub.s32 0, %v170
      %v173 = vsel %vm171, %v172, %v170
      %v174 = vshrl.u32 %v173, 3
      %v175 = vand.u32 %v173, 7
      %v176 = vsub.s32 0, %v175
      %v177 = vsel %vm171, %v176, %v175
      %vm178 = vcmp.ne.s32.totalorder %v177, 0
      %vm179 = vcmp.lt.s32.totalorder %v177, 0
      %vm180 = vmand %vm179, %vm178
      %v181 = vadd.s32 %v177, 8
      %v182 = vsel %vm180, %v181, %v177
      %vm183 = vcmp.gt.s32.totalorder %v182, 0
      %vm184 = vcmp.lt.s32.totalorder %v182, 7
      %v185 = vld [vmem:[%s161] sm:$0x3]
      %187 = vst [vmem:[#allocation1] ss:$4 sm:$0xff] %v185
      %v188 = vld.sshfl [vmem:[#allocation1] sm:$0xff pattern:$0x73625140]
      %190 = vrot.lane.b32.xlu0 %v188, 9
      %v191 = vpop.permute.xlu0 %190
      %vm192 = vcmask 72704
      %v195 = vsel %vm192, 0, %v191
      %vm196 = vcmask 596992
      %v197 = vsel %vm196, %v195, 0
      %v199 = vld [vmem:[%s1] sm:$0xf]
      %v200 = vld [vmem:[%s1 + $0x4] sm:$0xf]
      %v201 = vld [vmem:[%s1 + $0x8] sm:$0xf]
      %v202 = vld [vmem:[%s1 + $0xc] sm:$0xf]
      %v203 = vld [vmem:[%s1 + $0x10] sm:$0xf]
      %v204 = vld [vmem:[%s1 + $0x14] sm:$0xf]
      %v205 = vld [vmem:[%s1 + $0x18] sm:$0xf]
      %v206 = vld [vmem:[%s1 + $0x1c] sm:$0xf]
      %v207 = vld [vmem:[%s1 + $0x20] sm:$0xf]
      %v208 = vsel %vm183, 1, 0
      %vm209 = vcmp.eq.s32.totalorder %v208, 1
      %vm210 = vmpackc.low %vm209, %vm209
      %v211 = vsel %vm210, %v197, 0
      %213 = vrot.lane.b32.xlu0 %v197, 127
      %v214 = vpop.permute.xlu0 %213
      %vm215 = vcmask 31744
      %v217 = vsel %vm215, %v200, 0
      %vm219 = vcmask 1041408
      %v221 = vsel %vm219, %v214, 0
      %223 = vmatpush.bf16.msra.mxu0 0
      %224 = vmatpush.bf16.msra.mxu0 0
      %225 = vmatpush.bf16.msra.mxu0 0
      %226 = vmatpush.bf16.msra.mxu0 0
      %227 = vmatpush.bf16.msra.mxu0 0
      %228 = vmatpush.bf16.msra.mxu0 0
      %229 = vmatpush.bf16.msra.mxu0 0
      %230 = vmatpush.bf16.msra.mxu0 %v221
      %231 = vmatmul.bf16.gmra.mxu0 %v217
      %v232 = vpop.f32.mrf.mxu0
      %v233 = vadd.f32 0.0, %v232
      %v234 = vpop.f32.mrf.mxu0
      %235 = vdwg.mxu0
      %v237 = vsel %vm215, %v199, 0
      %v240 = vsel %vm219, %v211, 0
      %242 = vmatpush.bf16.msra.mxu0 0
      %243 = vmatpush.bf16.msra.mxu0 0
      %244 = vmatpush.bf16.msra.mxu0 0
      %245 = vmatpush.bf16.msra.mxu0 0
      %246 = vmatpush.bf16.msra.mxu0 0
      %247 = vmatpush.bf16.msra.mxu0 0
      %248 = vmatpush.bf16.msra.mxu0 0
      %249 = vmatpush.bf16.msra.mxu0 %v240
      %250 = vmatmul.bf16.gmra.mxu0 %v237
      %v251 = vpop.f32.mrf.mxu0
      %v252 = vadd.f32 %v233, %v251
      %v253 = vpop.f32.mrf.mxu0
      %254 = vdwg.mxu0
      %v255 = vsel %vm184, 1, 0
      %vm256 = vcmp.eq.s32.totalorder %v255, 1
      %vm257 = vmpackc.low %vm256, %vm256
      %v258 = vsel %vm257, 65537, 0
      %v259 = vperm.slane %v258, 0
      %260 = vrot.lane.b32.xlu0 %v259, 2
      %v261 = vpop.permute.xlu0 %260
      %v262 = vunpack.c.l.b16 %v261
      %v263 = vunpack.c.h.b16 %v261
      %v264 = vunpack.c.l.b16 0
      %v265 = vunpack.c.h.b16 0
      %vm266 = vcmp.ne.s32.totalorder %v262, %v264
      %vm267 = vcmp.ne.s32.totalorder %v263, %v265
      %vm268 = vmpackc.low %vm267, %vm266
      %v269 = vsel %vm268, %v197, 0
      %271 = vrot.lane.b32.xlu0 %v269, 126
      %v272 = vpop.permute.xlu0 %271
      %v274 = vsel %vm215, %v201, 0
      %v277 = vsel %vm219, %v272, 0
      %279 = vmatpush.bf16.msra.mxu0 0
      %280 = vmatpush.bf16.msra.mxu0 0
      %281 = vmatpush.bf16.msra.mxu0 0
      %282 = vmatpush.bf16.msra.mxu0 0
      %283 = vmatpush.bf16.msra.mxu0 0
      %284 = vmatpush.bf16.msra.mxu0 0
      %285 = vmatpush.bf16.msra.mxu0 0
      %286 = vmatpush.bf16.msra.mxu0 %v277
      %287 = vmatmul.bf16.gmra.mxu0 %v274
      %v288 = vpop.f32.mrf.mxu0
      %v289 = vadd.f32 0.0, %v288
      %v290 = vpop.f32.mrf.mxu0
      %291 = vdwg.mxu0
      %v292 = vadd.f32 %v252, %v289
      %v293 = vsel %vm210, 65537, 0
      %v294 = vperm.slane %v293, 0
      %295 = vrot.lane.b32.xlu0 %v294, 8
      %v296 = vpop.permute.xlu0 %295
      %v297 = vunpack.c.l.b16 %v296
      %v298 = vunpack.c.h.b16 %v296
      %v299 = vunpack.c.l.b16 0
      %v300 = vunpack.c.h.b16 0
      %vm301 = vcmp.ne.s32.totalorder %v297, %v299
      %vm302 = vcmp.ne.s32.totalorder %v298, %v300
      %vm303 = vmpackc.low %vm302, %vm301
      %v304 = vsel %vm303, %v197, 0
      %306 = vrot.lane.b32.xlu0 %v304, 120
      %v307 = vpop.permute.xlu0 %306
      %v309 = vsel %vm215, %v202, 0
      %v312 = vsel %vm219, %v307, 0
      %314 = vmatpush.bf16.msra.mxu0 0
      %315 = vmatpush.bf16.msra.mxu0 0
      %316 = vmatpush.bf16.msra.mxu0 0
      %317 = vmatpush.bf16.msra.mxu0 0
      %318 = vmatpush.bf16.msra.mxu0 0
      %319 = vmatpush.bf16.msra.mxu0 0
      %320 = vmatpush.bf16.msra.mxu0 0
      %321 = vmatpush.bf16.msra.mxu0 %v312
      %322 = vmatmul.bf16.gmra.mxu0 %v309
      %v323 = vpop.f32.mrf.mxu0
      %v324 = vadd.f32 0.0, %v323
      %v325 = vpop.f32.mrf.mxu0
      %326 = vdwg.mxu0
      %v327 = vadd.f32 %v292, %v324
      %v329 = vsel %vm215, %v203, 0
      %v331 = vsel %vm219, %v185, 0
      %333 = vmatpush.bf16.msra.mxu0 0
      %334 = vmatpush.bf16.msra.mxu0 0
      %335 = vmatpush.bf16.msra.mxu0 0
      %336 = vmatpush.bf16.msra.mxu0 0
      %337 = vmatpush.bf16.msra.mxu0 0
      %338 = vmatpush.bf16.msra.mxu0 0
      %339 = vmatpush.bf16.msra.mxu0 0
      %340 = vmatpush.bf16.msra.mxu0 %v331
      %341 = vmatmul.bf16.gmra.mxu0 %v329
      %v342 = vpop.f32.mrf.mxu0
      %v343 = vadd.f32 0.0, %v342
      %v344 = vpop.f32.mrf.mxu0
      %345 = vdwg.mxu0
      %v346 = vadd.f32 %v327, %v343
      %347 = vrot.lane.b32.xlu0 %v259, 10
      %v348 = vpop.permute.xlu0 %347
      %v349 = vunpack.c.l.b16 %v348
      %v350 = vunpack.c.h.b16 %v348
      %v351 = vunpack.c.l.b16 0
      %v352 = vunpack.c.h.b16 0
      %vm353 = vcmp.ne.s32.totalorder %v349, %v351
      %vm354 = vcmp.ne.s32.totalorder %v350, %v352
      %vm355 = vmpackc.low %vm354, %vm353
      %v356 = vsel %vm355, %v197, 0
      %358 = vrot.lane.b32.xlu0 %v356, 118
      %v359 = vpop.permute.xlu0 %358
      %v361 = vsel %vm215, %v204, 0
      %v364 = vsel %vm219, %v359, 0
      %366 = vmatpush.bf16.msra.mxu0 0
      %367 = vmatpush.bf16.msra.mxu0 0
      %368 = vmatpush.bf16.msra.mxu0 0
      %369 = vmatpush.bf16.msra.mxu0 0
      %370 = vmatpush.bf16.msra.mxu0 0
      %371 = vmatpush.bf16.msra.mxu0 0
      %372 = vmatpush.bf16.msra.mxu0 0
      %373 = vmatpush.bf16.msra.mxu0 %v364
      %374 = vmatmul.bf16.gmra.mxu0 %v361
      %v375 = vpop.f32.mrf.mxu0
      %v376 = vadd.f32 0.0, %v375
      %v377 = vpop.f32.mrf.mxu0
      %378 = vdwg.mxu0
      %v379 = vadd.f32 %v346, %v376
      %380 = vrot.lane.b32.xlu0 %v294, 16
      %v381 = vpop.permute.xlu0 %380
      %v382 = vunpack.c.l.b16 %v381
      %v383 = vunpack.c.h.b16 %v381
      %v384 = vunpack.c.l.b16 0
      %v385 = vunpack.c.h.b16 0
      %vm386 = vcmp.ne.s32.totalorder %v382, %v384
      %vm387 = vcmp.ne.s32.totalorder %v383, %v385
      %vm388 = vmpackc.low %vm387, %vm386
      %v389 = vsel %vm388, %v197, 0
      %391 = vrot.lane.b32.xlu0 %v389, 112
      %v392 = vpop.permute.xlu0 %391
      %v394 = vsel %vm215, %v205, 0
      %v397 = vsel %vm219, %v392, 0
      %399 = vmatpush.bf16.msra.mxu0 0
      %400 = vmatpush.bf16.msra.mxu0 0
      %401 = vmatpush.bf16.msra.mxu0 0
      %402 = vmatpush.bf16.msra.mxu0 0
      %403 = vmatpush.bf16.msra.mxu0 0
      %404 = vmatpush.bf16.msra.mxu0 0
      %405 = vmatpush.bf16.msra.mxu0 0
      %406 = vmatpush.bf16.msra.mxu0 %v397
      %407 = vmatmul.bf16.gmra.mxu0 %v394
      %v408 = vpop.f32.mrf.mxu0
      %v409 = vadd.f32 0.0, %v408
      %v410 = vpop.f32.mrf.mxu0
      %411 = vdwg.mxu0
      %v412 = vadd.f32 %v379, %v409
      %413 = vrot.lane.b32.xlu0 %v197, 111
      %v414 = vpop.permute.xlu0 %413
      %v416 = vsel %vm215, %v206, 0
      %v419 = vsel %vm219, %v414, 0
      %421 = vmatpush.bf16.msra.mxu0 0
      %422 = vmatpush.bf16.msra.mxu0 0
      %423 = vmatpush.bf16.msra.mxu0 0
      %424 = vmatpush.bf16.msra.mxu0 0
      %425 = vmatpush.bf16.msra.mxu0 0
      %426 = vmatpush.bf16.msra.mxu0 0
      %427 = vmatpush.bf16.msra.mxu0 0
      %428 = vmatpush.bf16.msra.mxu0 %v419
      %429 = vmatmul.bf16.gmra.mxu0 %v416
      %v430 = vpop.f32.mrf.mxu0
      %v431 = vadd.f32 0.0, %v430
      %v432 = vpop.f32.mrf.mxu0
      %433 = vdwg.mxu0
      %v434 = vadd.f32 %v412, %v431
      %435 = vrot.lane.b32.xlu0 %v259, 18
      %v436 = vpop.permute.xlu0 %435
      %v437 = vunpack.c.l.b16 %v436
      %v438 = vunpack.c.h.b16 %v436
      %v439 = vunpack.c.l.b16 0
      %v440 = vunpack.c.h.b16 0
      %vm441 = vcmp.ne.s32.totalorder %v437, %v439
      %vm442 = vcmp.ne.s32.totalorder %v438, %v440
      %vm443 = vmpackc.low %vm442, %vm441
      %v444 = vsel %vm443, %v197, 0
      %446 = vrot.lane.b32.xlu0 %v444, 110
      %v447 = vpop.permute.xlu0 %446
      %v449 = vsel %vm215, %v207, 0
      %v452 = vsel %vm219, %v447, 0
      %454 = vmatpush.bf16.msra.mxu0 0
      %455 = vmatpush.bf16.msra.mxu0 0
      %456 = vmatpush.bf16.msra.mxu0 0
      %457 = vmatpush.bf16.msra.mxu0 0
      %458 = vmatpush.bf16.msra.mxu0 0
      %459 = vmatpush.bf16.msra.mxu0 0
      %460 = vmatpush.bf16.msra.mxu0 0
      %461 = vmatpush.bf16.msra.mxu0 %v452
      %462 = vmatmul.bf16.gmra.mxu0 %v449
      %v463 = vpop.f32.mrf.mxu0
      %v464 = vadd.f32 0.0, %v463
      %v465 = vpop.f32.mrf.mxu0
      %466 = vdwg.mxu0
      %v467 = vadd.f32 %v434, %v464
      %v468 = vld [vmem:[%s2] sm:$0xff]
      %470 = vset.pattern.permute.xlu0 0
      %471 = vperm.xlu0 %470, %v468
      %v472 = vpop.permute.xlu0 %471
      %v474 = vadd.f32 %v467, %v472
      %vm475 = vcmask 523264
      %v476 = vsel %vm475, %v474, 0.0
      %477 = vadd.xlane.f32.xlu0 %v476
      %v478 = vpop.xlane.xlu0 %477
      %v479 = vrcp.pop 64.0
      %v480 = vmul.f32 64.0, %v479
      %v481 = vsub.f32 1.0, %v480
      %v482 = vmul.f32 %v479, %v481
      %v483 = vadd.f32 %v479, %v482
      %vm484 = vweird.f32 %v479
      %v485 = vsel %vm484, %v479, %v483
      %v486 = vmul.f32 %v478, %v485
      %v487 = vsub.f32 %v474, %v486
      %v488 = vmul.f32 %v487, %v487
      %v489 = vsel %vm475, %v488, 0.0
      %490 = vadd.xlane.f32.xlu0 %v489
      %v491 = vpop.xlane.xlu0 %490
      %v492 = vmul.f32 %v491, %v485
      %v493 = vadd.f32 %v492, 1e-05
      %v494 = vrsqrt.pop %v493
      %v495 = vmul.f32 %v494, %v493
      %v496 = vmul.f32 %v495, %v494
      %v497 = vmul.f32 0.5, %v496
      %v498 = vsub.f32 1.5, %v497
      %v499 = vmul.f32 %v494, %v498
      %vm500 = vweird.f32 %v493
      %vm501 = vweird.f32 %v494
      %vm502 = vmor %vm500, %vm501
      %v503 = vsel %vm502, %v494, %v499
      %v504 = vmul.f32 %v487, %v503
      %505 = vset.pattern.permute.xlu0 1
      %506 = vperm.xlu0 %505, %v468
      %v507 = vpop.permute.xlu0 %506
      %v509 = vmul.f32 %v504, %v507
      %510 = vset.pattern.permute.xlu0 2
      %511 = vperm.xlu0 %510, %v468
      %v512 = vpop.permute.xlu0 %511
      %v514 = vadd.f32 %v509, %v512
      %v515 = vmax.f32 %v514, 0.0
      %v516 = vpack.c.bf16 %v515, %v515
      %vm517 = vcmask 519168
      %518 = vst.msk [vmem:[%s165] sm:$0xf] %vm517, %v516
      %p519 = scmp.lt.s32.totalorder %s14, 1
      %s520 = scalar_select %p519, %s14, 1
      %s521 = smul.addr %s520, 4
      %s522 = scalar_lea.vmem %s3, %s521
      // Predicated region
      $region33: #{forward.8} parent=31 // pred_check
        %p523 = pneg %p100
      $region34: #{forward.8} parent=31 // pred_check_branch
        %525 = sbr.rel (%p523) target = $region36
      $region35: #{forward.8} parent=31 // pred_region
        _
      $region36: #{forward.8} parent=31 // pred_fallthru
        _
    $region32: #{forward.8} parent=5 // pred_fallthru
      _
    %p526 = scmp.le.s32.totalorder 2, %s9
    // Predicated region
    $region37: #{forward.8} parent=5 // pred_check
      %p527 = pneg %p526
    $region38: #{forward.8} parent=5 // pred_check_branch
      %529 = sbr.rel (%p527) target = $region40
    $region39: #{forward.8} parent=5 // pred_region
      %s530 = ssub.s32 %s9, 2
      // Predicated region
      $region41: #{forward.8} parent=39 // pred_check
        %p531 = pneg %p106
      $region42: #{forward.8} parent=39 // pred_check_branch
        %533 = sbr.rel (%p531) target = $region44
      $region43: #{forward.8} parent=39 // pred_region
        %p534 = scmp.lt.s32.totalorder %s15, 1
        %s535 = scalar_select %p534, %s15, 1
        %s536 = smul.addr %s535, 4
        %s537 = scalar_lea.vmem %s3, %s536
      $region44: #{forward.8} parent=39 // pred_fallthru
        _
    $region40: #{forward.8} parent=5 // pred_fallthru
      _
  $region6: #{forward.8} parent=0 // loop_footer
    %s13 = sadd.s32 1, %s9
  $region7: #{forward.8} parent=0 // loop_footer_branch
    %8 = sbr.rel target = $region3
  $region8: #{forward.8} parent=0 // loop_exit
    _

// kernel: forward.9
$region0: #{forward.9}
  #allocation0 [shape = 'u32[]', space=smem, size = 0x4, offset = 0x4, fixed_abs, tag = 'smem constant byte address 0x4 - core index']
  #allocation1 [shape = 'u32[72,128]{1,0:T(1,128)}', space=vmem, size = 0x9000, scoped, tag = 'internal scratch']
  %s0 = inlined_call_operand.vmem [shape: bf16[2,8,16], index: 0, kind: input, shape index: {}]
  %s1 = inlined_call_operand.vmem [shape: bf16[2,9,8,8], index: 1, kind: input, shape index: {}]
  %s2 = inlined_call_operand.vmem [shape: f32[8,3], index: 2, kind: input, shape index: {}]
  %s3 = inlined_call_operand.vmem [shape: bf16[2,8,16], index: 3, kind: output, shape index: {}]
  %s4 = sld [smem:[#allocation0]]
  $region45: #{forward.9} parent=0
    _
  %s6 = ssub.s32 1, %s4
  %s7 = scalar_select 0, %s6, %s4
  loop: start=0, step=1, limit=4
  $region2: #{forward.9} parent=0 // loop_pre_header
    _
  $region3: #{forward.9} parent=0 // loop_header
    %s9 = sphi 0, %s13
    %p10 = scmp.ge.s32.totalorder %s9, 4
    %s19 = sphi 0, %s21
    %s22 = sphi 0, %s19
    %s23 = sphi 0, %s22
    %s39 = sphi 0, %s23
    %s45 = sphi 0, %s47
    %s48 = sphi 0, %s45
    %s49 = sphi 0, %s48
    %s65 = sphi 0, %s49
    %s69 = sphi 0, %s69
    %s71 = sphi 0, %s69
    %s72 = sphi 0, %s71
    %s86 = sphi 0, %s72
    %s92 = sphi 0, %s94
    %s95 = sphi 0, %s92
    %s96 = sphi 0, %s95
    %s112 = sphi 0, %s96
  $region4: #{forward.9} parent=0 // loop_header_branch
    %12 = sbr.rel (%p10) target = $region8
  $region5: #{forward.9} parent=0 // loop_body
    %s14 = ssub.s32 %s9, 1
    %s15 = ssub.s32 %s9, 2
    %s16 = sadd.s32 %s9, 1
    %s17 = ssub.s32 %s9, %s16
    %p18 = scmp.eq.s32.totalorder %s17, 0
    %s20 = sadd.s32 %s19, 1
    %s21 = scalar_select %p18, %s19, %s20
    %p24 = pneg %p18
    %p25 = scmp.eq.s32.totalorder %s9, 1
    %p26 = por %p24, %p25
    %p27 = scmp.ne.s32.totalorder %s19, %s22
    %p28 = scmp.eq.s32.totalorder %s9, 0
    %p29 = por %p27, %p28
    %p30 = scmp.ne.s32.totalorder %s19, %s22
    %p31 = scmp.eq.s32.totalorder %s14, 1
    %p32 = por %p30, %p31
    %p33 = scmp.ne.s32.totalorder %s22, %s23
    %p34 = scmp.eq.s32.totalorder %s14, 0
    %p35 = por %p33, %p34
    %p36 = scmp.ne.s32.totalorder %s22, %s23
    %p37 = scmp.eq.s32.totalorder %s15, 1
    %p38 = por %p36, %p37
    %p40 = scmp.ne.s32.totalorder %s23, %s39
    %p41 = scmp.eq.s32.totalorder %s15, 0
    %p42 = por %p40, %p41
    %s43 = ssub.s32 %s9, %s16
    %p44 = scmp.eq.s32.totalorder %s43, 0
    %s46 = sadd.s32 %s45, 1
    %s47 = scalar_select %p44, %s45, %s46
    %p50 = pneg %p44
    %p51 = scmp.eq.s32.totalorder %s9, 1
    %p52 = por %p50, %p51
    %p53 = scmp.ne.s32.totalorder %s45, %s48
    %p54 = scmp.eq.s32.totalorder %s9, 0
    %p55 = por %p53, %p54
    %p56 = scmp.ne.s32.totalorder %s45, %s48
    %p57 = scmp.eq.s32.totalorder %s14, 1
    %p58 = por %p56, %p57
    %p59 = scmp.ne.s32.totalorder %s48, %s49
    %p60 = scmp.eq.s32.totalorder %s14, 0
    %p61 = por %p59, %p60
    %p62 = scmp.ne.s32.totalorder %s48, %s49
    %p63 = scmp.eq.s32.totalorder %s15, 1
    %p64 = por %p62, %p63
    %p66 = scmp.ne.s32.totalorder %s49, %s65
    %p67 = scmp.eq.s32.totalorder %s15, 0
    %p68 = por %p66, %p67
    %s70 = sadd.s32 %s69, 1
    %p73 = scmp.eq.s32.totalorder %s9, 1
    %p74 = scmp.ne.s32.totalorder %s69, %s71
    %p75 = scmp.eq.s32.totalorder %s9, 0
    %p76 = por %p74, %p75
    %p77 = scmp.ne.s32.totalorder %s69, %s71
    %p78 = scmp.eq.s32.totalorder %s14, 1
    %p79 = por %p77, %p78
    %p80 = scmp.ne.s32.totalorder %s71, %s72
    %p81 = scmp.eq.s32.totalorder %s14, 0
    %p82 = por %p80, %p81
    %p83 = scmp.ne.s32.totalorder %s71, %s72
    %p84 = scmp.eq.s32.totalorder %s15, 1
    %p85 = por %p83, %p84
    %p87 = scmp.ne.s32.totalorder %s72, %s86
    %p88 = scmp.eq.s32.totalorder %s15, 0
    %p89 = por %p87, %p88
    %s90 = ssub.s32 %s9, %s16
    %p91 = scmp.eq.s32.totalorder %s90, 0
    %s93 = sadd.s32 %s92, 1
    %s94 = scalar_select %p91, %s92, %s93
    %p97 = pneg %p91
    %p98 = scmp.eq.s32.totalorder %s9, 1
    %p99 = por %p97, %p98
    %p100 = scmp.ne.s32.totalorder %s92, %s95
    %p101 = scmp.eq.s32.totalorder %s9, 0
    %p102 = por %p100, %p101
    %p103 = scmp.ne.s32.totalorder %s92, %s95
    %p104 = scmp.eq.s32.totalorder %s14, 1
    %p105 = por %p103, %p104
    %p106 = scmp.ne.s32.totalorder %s95, %s96
    %p107 = scmp.eq.s32.totalorder %s14, 0
    %p108 = por %p106, %p107
    %p109 = scmp.ne.s32.totalorder %s95, %s96
    %p110 = scmp.eq.s32.totalorder %s15, 1
    %p111 = por %p109, %p110
    %p113 = scmp.ne.s32.totalorder %s96, %s112
    %p114 = scmp.eq.s32.totalorder %s15, 0
    %p115 = por %p113, %p114
    %p116 = scmp.le.s32.totalorder 1, %s9
    %p117 = scmp.lt.s32.totalorder %s9, 3
    %p118 = pnand %p116, %p117
    %p119 = pneg %p118
    // Predicated region
    $region9: #{forward.9} parent=5 // pred_check
      _
    $region10: #{forward.9} parent=5 // pred_check_branch
      %121 = sbr.rel (%p118) target = $region12
    $region11: #{forward.9} parent=5 // pred_region
      %s122 = ssub.s32 %s9, 1
      // Predicated region
      $region13: #{forward.9} parent=11 // pred_check
        %p123 = pneg %p82
      $region14: #{forward.9} parent=11 // pred_check_branch
        %125 = sbr.rel (%p123) target = $region16
      $region15: #{forward.9} parent=11 // pred_region
        _
      $region16: #{forward.9} parent=11 // pred_fallthru
        _
    $region12: #{forward.9} parent=5 // pred_fallthru
      _
    %p126 = scmp.lt.s32.totalorder %s9, 2
    // Predicated region
    $region17: #{forward.9} parent=5 // pred_check
      %p127 = pneg %p126
    $region18: #{forward.9} parent=5 // pred_check_branch
      %129 = sbr.rel (%p127) target = $region20
    $region19: #{forward.9} parent=5 // pred_region
      // Predicated region
      $region21: #{forward.9} parent=19 // pred_check
        %p130 = pneg %p29
      $region22: #{forward.9} parent=19 // pred_check_branch
        %132 = sbr.rel (%p130) target = $region24
      $region23: #{forward.9} parent=19 // pred_region
        %p133 = scmp.lt.s32.totalorder %s9, 1
        %s134 = scalar_select %p133, %s9, 1
        %s135 = smul.addr %s134, 4
        %s136 = scalar_lea.vmem %s0, %s135
      $region24: #{forward.9} parent=19 // pred_fallthru
        _
      // Predicated region
      $region25: #{forward.9} parent=19 // pred_check
        %p137 = pneg %p55
      $region26: #{forward.9} parent=19 // pred_check_branch
        %139 = sbr.rel (%p137) target = $region28
      $region27: #{forward.9} parent=19 // pred_region
        %p140 = scmp.lt.s32.totalorder %s9, 1
        %s141 = scalar_select %p140, %s9, 1
        %s142 = smul.addr %s141, 9
        %s143 = smul.addr %s142, 4
        %s144 = scalar_lea.vmem %s1, %s143
      $region28: #{forward.9} parent=19 // pred_fallthru
        _
    $region20: #{forward.9} parent=5 // pred_fallthru
      _
    %p145 = scmp.le.s32.totalorder 1, %s9
    %p146 = scmp.lt.s32.totalorder %s9, 3
    %p147 = pnand %p145, %p146
    %p148 = pneg %p147
    // Predicated region
    $region29: #{forward.9} parent=5 // pred_check
      _
    $region30: #{forward.9} parent=5 // pred_check_branch
      %150 = sbr.rel (%p147) target = $region32
    $region31: #{forward.9} parent=5 // pred_region
      %s151 = ssub.s32 %s9, 1
      %p152 = scmp.lt.s32.totalorder %s14, 1
      %s153 = scalar_select %p152, %s14, 1
      %s154 = smul.addr %s153, 4
      %s155 = scalar_lea.vmem %s0, %s154
      %p156 = pneg %p35
      %p157 = pneg %p32
      %p158 = scmp.lt.s32.totalorder %s14, 1
      %s159 = scalar_select %p158, %s14, 1
      %s160 = smul.addr %s159, 9
      %s161 = smul.addr %s160, 4
      %s162 = scalar_lea.vmem %s1, %s161
      %p163 = pneg %p61
      %p164 = pneg %p58
      %p165 = pneg %p82
      %p166 = pneg %p79
      %p167 = pneg %p108
      %p168 = pneg %p105
      %p169 = scmp.lt.s32.totalorder %s14, 1
      %s170 = scalar_select %p169, %s14, 1
      %s171 = smul.addr %s170, 4
      %s172 = scalar_lea.vmem %s3, %s171
      %p173 = scmp.lt.s32.totalorder %s14, 1
      %s174 = scalar_select %p173, %s14, 1
      %s175 = smul.addr %s174, 4
      %s176 = scalar_lea.vmem %s0, %s175
      %p177 = scmp.lt.s32.totalorder %s14, 1
      %s178 = scalar_select %p177, %s14, 1
      %s179 = smul.addr %s178, 9
      %s180 = smul.addr %s179, 4
      %s181 = scalar_lea.vmem %s1, %s180
      %p182 = scmp.lt.s32.totalorder %s14, 1
      %s183 = scalar_select %p182, %s14, 1
      %s184 = smul.addr %s183, 4
      %s185 = scalar_lea.vmem %s3, %s184
      %v189 = vlaneseq
      %v190 = vand.u32 %v189, 127
      %vm191 = vcmp.lt.s32.totalorder %v190, 0
      %v192 = vsub.s32 0, %v190
      %v193 = vsel %vm191, %v192, %v190
      %v194 = vshrl.u32 %v193, 2
      %v195 = vand.u32 %v193, 3
      %v196 = vsub.s32 0, %v195
      %v197 = vsel %vm191, %v196, %v195
      %vm198 = vcmp.ne.s32.totalorder %v197, 0
      %vm199 = vcmp.lt.s32.totalorder %v197, 0
      %vm200 = vmand %vm199, %vm198
      %v201 = vadd.s32 %v197, 4
      %v202 = vsel %vm200, %v201, %v197
      %vm203 = vcmp.gt.s32.totalorder %v202, 0
      %vm204 = vcmp.lt.s32.totalorder %v202, 3
      %v205 = vld [vmem:[%s176] sm:$0xf]
      %v207 = vunpack.c.l.b16 %v205
      %v208 = vpack.c.b16 %v207, %v207
      %209 = vrot.lane.b32.xlu0 %v208, 5
      %v210 = vpop.permute.xlu0 %209
      %vm211 = vcmask 39936
      %v214 = vsel %vm211, 0, %v210
      %vm215 = vcmask 171008
      %v216 = vsel %vm215, %v214, 0
      %v218 = vld [vmem:[%s181] sm:$0xf]
      %v219 = vld [vmem:[%s181 + $0x4] sm:$0xf]
      %v220 = vld [vmem:[%s181 + $0x8] sm:$0xf]
      %v221 = vld [vmem:[%s181 + $0xc] sm:$0xf]
      %v222 = vld [vmem:[%s181 + $0x10] sm:$0xf]
      %v223 = vld [vmem:[%s181 + $0x14] sm:$0xf]
      %v224 = vld [vmem:[%s181 + $0x18] sm:$0xf]
      %v225 = vld [vmem:[%s181 + $0x1c] sm:$0xf]
      %v226 = vld [vmem:[%s181 + $0x20] sm:$0xf]
      %v227 = vsel %vm203, 1, 0
      %vm228 = vcmp.eq.s32.totalorder %v227, 1
      %vm229 = vmpackc.low %vm228, %vm228
      %v230 = vsel %vm229, %v216, 0
      %232 = vrot.lane.b32.xlu0 %v216, 127
      %v233 = vpop.permute.xlu0 %232
      %vm234 = vcmask 64512
      %v236 = vsel %vm234, %v219, 0
      %vm238 = vcmask 1043456
      %v240 = vsel %vm238, %v233, 0
      %242 = vmatpush.bf16.msra.mxu0 0
      %243 = vmatpush.bf16.msra.mxu0 0
      %244 = vmatpush.bf16.msra.mxu0 0
      %245 = vmatpush.bf16.msra.mxu0 0
      %246 = vmatpush.bf16.msra.mxu0 0
      %247 = vmatpush.bf16.msra.mxu0 0
      %248 = vmatpush.bf16.msra.mxu0 0
      %249 = vmatpush.bf16.msra.mxu0 %v240
      %250 = vmatmul.bf16.gmra.mxu0 %v236
      %v251 = vpop.f32.mrf.mxu0
      %v252 = vadd.f32 0.0, %v251
      %v253 = vpop.f32.mrf.mxu0
      %254 = vdwg.mxu0
      %v256 = vsel %vm234, %v218, 0
      %v259 = vsel %vm238, %v230, 0
      %261 = vmatpush.bf16.msra.mxu0 0
      %262 = vmatpush.bf16.msra.mxu0 0
      %263 = vmatpush.bf16.msra.mxu0 0
      %264 = vmatpush.bf16.msra.mxu0 0
      %265 = vmatpush.bf16.msra.mxu0 0
      %266 = vmatpush.bf16.msra.mxu0 0
      %267 = vmatpush.bf16.msra.mxu0 0
      %268 = vmatpush.bf16.msra.mxu0 %v259
      %269 = vmatmul.bf16.gmra.mxu0 %v256
      %v270 = vpop.f32.mrf.mxu0
      %v271 = vadd.f32 %v252, %v270
      %v272 = vpop.f32.mrf.mxu0
      %273 = vdwg.mxu0
      %v274 = vsel %vm204, 1, 0
      %vm275 = vcmp.eq.s32.totalorder %v274, 1
      %vm276 = vmpackc.low %vm275, %vm275
      %v277 = vsel %vm276, 65537, 0
      %v278 = vperm.slane %v277, 0
      %279 = vrot.lane.b32.xlu0 %v278, 2
      %v280 = vpop.permute.xlu0 %279
      %v281 = vunpack.c.l.b16 %v280
      %v282 = vunpack.c.h.b16 %v280
      %v283 = vunpack.c.l.b16 0
      %v284 = vunpack.c.h.b16 0
      %vm285 = vcmp.ne.s32.totalorder %v281, %v283
      %vm286 = vcmp.ne.s32.totalorder %v282, %v284
      %vm287 = vmpackc.low %vm286, %vm285
      %v288 = vsel %vm287, %v216, 0
      %290 = vrot.lane.b32.xlu0 %v288, 126
      %v291 = vpop.permute.xlu0 %290
      %v293 = vsel %vm234, %v220, 0
      %v296 = vsel %vm238, %v291, 0
      %298 = vmatpush.bf16.msra.mxu0 0
      %299 = vmatpush.bf16.msra.mxu0 0
      %300 = vmatpush.bf16.msra.mxu0 0
      %301 = vmatpush.bf16.msra.mxu0 0
      %302 = vmatpush.bf16.msra.mxu0 0
      %303 = vmatpush.bf16.msra.mxu0 0
      %304 = vmatpush.bf16.msra.mxu0 0
      %305 = vmatpush.bf16.msra.mxu0 %v296
      %306 = vmatmul.bf16.gmra.mxu0 %v293
      %v307 = vpop.f32.mrf.mxu0
      %v308 = vadd.f32 0.0, %v307
      %v309 = vpop.f32.mrf.mxu0
      %310 = vdwg.mxu0
      %v311 = vadd.f32 %v271, %v308
      %v312 = vsel %vm229, 65537, 0
      %v313 = vperm.slane %v312, 0
      %314 = vrot.lane.b32.xlu0 %v313, 4
      %v315 = vpop.permute.xlu0 %314
      %v316 = vunpack.c.l.b16 %v315
      %v317 = vunpack.c.h.b16 %v315
      %v318 = vunpack.c.l.b16 0
      %v319 = vunpack.c.h.b16 0
      %vm320 = vcmp.ne.s32.totalorder %v316, %v318
      %vm321 = vcmp.ne.s32.totalorder %v317, %v319
      %vm322 = vmpackc.low %vm321, %vm320
      %v323 = vsel %vm322, %v216, 0
      %325 = vrot.lane.b32.xlu0 %v323, 124
      %v326 = vpop.permute.xlu0 %325
      %v328 = vsel %vm234, %v221, 0
      %v331 = vsel %vm238, %v326, 0
      %333 = vmatpush.bf16.msra.mxu0 0
      %334 = vmatpush.bf16.msra.mxu0 0
      %335 = vmatpush.bf16.msra.mxu0 0
      %336 = vmatpush.bf16.msra.mxu0 0
      %337 = vmatpush.bf16.msra.mxu0 0
      %338 = vmatpush.bf16.msra.mxu0 0
      %339 = vmatpush.bf16.msra.mxu0 0
      %340 = vmatpush.bf16.msra.mxu0 %v331
      %341 = vmatmul.bf16.gmra.mxu0 %v328
      %v342 = vpop.f32.mrf.mxu0
      %v343 = vadd.f32 0.0, %v342
      %v344 = vpop.f32.mrf.mxu0
      %345 = vdwg.mxu0
      %v346 = vadd.f32 %v311, %v343
      %v348 = vsel %vm234, %v222, 0
      %v351 = vsel %vm238, %v205, 0
      %353 = vmatpush.bf16.msra.mxu0 0
      %354 = vmatpush.bf16.msra.mxu0 0
      %355 = vmatpush.bf16.msra.mxu0 0
      %356 = vmatpush.bf16.msra.mxu0 0
      %357 = vmatpush.bf16.msra.mxu0 0
      %358 = vmatpush.bf16.msra.mxu0 0
      %359 = vmatpush.bf16.msra.mxu0 0
      %360 = vmatpush.bf16.msra.mxu0 %v351
      %361 = vmatmul.bf16.gmra.mxu0 %v348
      %v362 = vpop.f32.mrf.mxu0
      %v363 = vadd.f32 0.0, %v362
      %v364 = vpop.f32.mrf.mxu0
      %365 = vdwg.mxu0
      %v366 = vadd.f32 %v346, %v363
      %367 = vrot.lane.b32.xlu0 %v278, 6
      %v368 = vpop.permute.xlu0 %367
      %v369 = vunpack.c.l.b16 %v368
      %v370 = vunpack.c.h.b16 %v368
      %v371 = vunpack.c.l.b16 0
      %v372 = vunpack.c.h.b16 0
      %vm373 = vcmp.ne.s32.totalorder %v369, %v371
      %vm374 = vcmp.ne.s32.totalorder %v370, %v372
      %vm375 = vmpackc.low %vm374, %vm373
      %v376 = vsel %vm375, %v216, 0
      %378 = vrot.lane.b32.xlu0 %v376, 122
      %v379 = vpop.permute.xlu0 %378
      %v381 = vsel %vm234, %v223, 0
      %v384 = vsel %vm238, %v379, 0
      %386 = vmatpush.bf16.msra.mxu0 0
      %387 = vmatpush.bf16.msra.mxu0 0
      %388 = vmatpush.bf16.msra.mxu0 0
      %389 = vmatpush.bf16.msra.mxu0 0
      %390 = vmatpush.bf16.msra.mxu0 0
      %391 = vmatpush.bf16.msra.mxu0 0
      %392 = vmatpush.bf16.msra.mxu0 0
      %393 = vmatpush.bf16.msra.mxu0 %v384
      %394 = vmatmul.bf16.gmra.mxu0 %v381
      %v395 = vpop.f32.mrf.mxu0
      %v396 = vadd.f32 0.0, %v395
      %v397 = vpop.f32.mrf.mxu0
      %398 = vdwg.mxu0
      %v399 = vadd.f32 %v366, %v396
      %400 = vrot.lane.b32.xlu0 %v313, 8
      %v401 = vpop.permute.xlu0 %400
      %v402 = vunpack.c.l.b16 %v401
      %v403 = vunpack.c.h.b16 %v401
      %v404 = vunpack.c.l.b16 0
      %v405 = vunpack.c.h.b16 0
      %vm406 = vcmp.ne.s32.totalorder %v402, %v404
      %vm407 = vcmp.ne.s32.totalorder %v403, %v405
      %vm408 = vmpackc.low %vm407, %vm406
      %v409 = vsel %vm408, %v216, 0
      %411 = vrot.lane.b32.xlu0 %v409, 120
      %v412 = vpop.permute.xlu0 %411
      %v414 = vsel %vm234, %v224, 0
      %v417 = vsel %vm238, %v412, 0
      %419 = vmatpush.bf16.msra.mxu0 0
      %420 = vmatpush.bf16.msra.mxu0 0
      %421 = vmatpush.bf16.msra.mxu0 0
      %422 = vmatpush.bf16.msra.mxu0 0
      %423 = vmatpush.bf16.msra.mxu0 0
      %424 = vmatpush.bf16.msra.mxu0 0
      %425 = vmatpush.bf16.msra.mxu0 0
      %426 = vmatpush.bf16.msra.mxu0 %v417
      %427 = vmatmul.bf16.gmra.mxu0 %v414
      %v428 = vpop.f32.mrf.mxu0
      %v429 = vadd.f32 0.0, %v428
      %v430 = vpop.f32.mrf.mxu0
      %431 = vdwg.mxu0
      %v432 = vadd.f32 %v399, %v429
      %433 = vrot.lane.b32.xlu0 %v216, 119
      %v434 = vpop.permute.xlu0 %433
      %v436 = vsel %vm234, %v225, 0
      %v439 = vsel %vm238, %v434, 0
      %441 = vmatpush.bf16.msra.mxu0 0
      %442 = vmatpush.bf16.msra.mxu0 0
      %443 = vmatpush.bf16.msra.mxu0 0
      %444 = vmatpush.bf16.msra.mxu0 0
      %445 = vmatpush.bf16.msra.mxu0 0
      %446 = vmatpush.bf16.msra.mxu0 0
      %447 = vmatpush.bf16.msra.mxu0 0
      %448 = vmatpush.bf16.msra.mxu0 %v439
      %449 = vmatmul.bf16.gmra.mxu0 %v436
      %v450 = vpop.f32.mrf.mxu0
      %v451 = vadd.f32 0.0, %v450
      %v452 = vpop.f32.mrf.mxu0
      %453 = vdwg.mxu0
      %v454 = vadd.f32 %v432, %v451
      %455 = vrot.lane.b32.xlu0 %v278, 10
      %v456 = vpop.permute.xlu0 %455
      %v457 = vunpack.c.l.b16 %v456
      %v458 = vunpack.c.h.b16 %v456
      %v459 = vunpack.c.l.b16 0
      %v460 = vunpack.c.h.b16 0
      %vm461 = vcmp.ne.s32.totalorder %v457, %v459
      %vm462 = vcmp.ne.s32.totalorder %v458, %v460
      %vm463 = vmpackc.low %vm462, %vm461
      %v464 = vsel %vm463, %v216, 0
      %466 = vrot.lane.b32.xlu0 %v464, 118
      %v467 = vpop.permute.xlu0 %466
      %v469 = vsel %vm234, %v226, 0
      %v472 = vsel %vm238, %v467, 0
      %474 = vmatpush.bf16.msra.mxu0 0
      %475 = vmatpush.bf16.msra.mxu0 0
      %476 = vmatpush.bf16.msra.mxu0 0
      %477 = vmatpush.bf16.msra.mxu0 0
      %478 = vmatpush.bf16.msra.mxu0 0
      %479 = vmatpush.bf16.msra.mxu0 0
      %480 = vmatpush.bf16.msra.mxu0 0
      %481 = vmatpush.bf16.msra.mxu0 %v472
      %482 = vmatmul.bf16.gmra.mxu0 %v469
      %v483 = vpop.f32.mrf.mxu0
      %v484 = vadd.f32 0.0, %v483
      %v485 = vpop.f32.mrf.mxu0
      %486 = vdwg.mxu0
      %v487 = vadd.f32 %v454, %v484
      %v488 = vld [vmem:[%s2] sm:$0xff]
      %490 = vset.pattern.permute.xlu0 0
      %491 = vperm.xlu0 %490, %v488
      %v492 = vpop.permute.xlu0 %491
      %v494 = vadd.f32 %v487, %v492
      %vm495 = vcmask 130048
      %v496 = vsel %vm495, %v494, 0.0
      %497 = vadd.xlane.f32.xlu0 %v496
      %v498 = vpop.xlane.xlu0 %497
      %v499 = vrcp.pop 16.0
      %v500 = vmul.f32 16.0, %v499
      %v501 = vsub.f32 1.0, %v500
      %v502 = vmul.f32 %v499, %v501
      %v503 = vadd.f32 %v499, %v502
      %vm504 = vweird.f32 %v499
      %v505 = vsel %vm504, %v499, %v503
      %v506 = vmul.f32 %v498, %v505
      %v507 = vsub.f32 %v494, %v506
      %v508 = vmul.f32 %v507, %v507
      %v509 = vsel %vm495, %v508, 0.0
      %510 = vadd.xlane.f32.xlu0 %v509
      %v511 = vpop.xlane.xlu0 %510
      %v512 = vmul.f32 %v511, %v505
      %v513 = vadd.f32 %v512, 1e-05
      %v514 = vrsqrt.pop %v513
      %v515 = vmul.f32 %v514, %v513
      %v516 = vmul.f32 %v515, %v514
      %v517 = vmul.f32 0.5, %v516
      %v518 = vsub.f32 1.5, %v517
      %v519 = vmul.f32 %v514, %v518
      %vm520 = vweird.f32 %v513
      %vm521 = vweird.f32 %v514
      %vm522 = vmor %vm520, %vm521
      %v523 = vsel %vm522, %v514, %v519
      %v524 = vmul.f32 %v507, %v523
      %525 = vset.pattern.permute.xlu0 1
      %526 = vperm.xlu0 %525, %v488
      %v527 = vpop.permute.xlu0 %526
      %v529 = vmul.f32 %v524, %v527
      %530 = vset.pattern.permute.xlu0 2
      %531 = vperm.xlu0 %530, %v488
      %v532 = vpop.permute.xlu0 %531
      %v534 = vadd.f32 %v529, %v532
      %v535 = vmax.f32 %v534, 0.0
      %v536 = vpack.c.bf16 %v535, %v535
      %vm537 = vcmask 125952
      %538 = vst.msk [vmem:[%s185] sm:$0xf] %vm537, %v536
      %p539 = scmp.lt.s32.totalorder %s14, 1
      %s540 = scalar_select %p539, %s14, 1
      %s541 = smul.addr %s540, 4
      %s542 = scalar_lea.vmem %s3, %s541
      // Predicated region
      $region33: #{forward.9} parent=31 // pred_check
        %p543 = pneg %p105
      $region34: #{forward.9} parent=31 // pred_check_branch
        %545 = sbr.rel (%p543) target = $region36
      $region35: #{forward.9} parent=31 // pred_region
        _
      $region36: #{forward.9} parent=31 // pred_fallthru
        _
    $region32: #{forward.9} parent=5 // pred_fallthru
      _
    %p546 = scmp.le.s32.totalorder 2, %s9
    // Predicated region
    $region37: #{forward.9} parent=5 // pred_check
      %p547 = pneg %p546
    $region38: #{forward.9} parent=5 // pred_check_branch
      %549 = sbr.rel (%p547) target = $region40
    $region39: #{forward.9} parent=5 // pred_region
      %s550 = ssub.s32 %s9, 2
      // Predicated region
      $region41: #{forward.9} parent=39 // pred_check
        %p551 = pneg %p111
      $region42: #{forward.9} parent=39 // pred_check_branch
        %553 = sbr.rel (%p551) target = $region44
      $region43: #{forward.9} parent=39 // pred_region
        %p554 = scmp.lt.s32.totalorder %s15, 1
        %s555 = scalar_select %p554, %s15, 1
        %s556 = smul.addr %s555, 4
        %s557 = scalar_lea.vmem %s3, %s556
      $region44: #{forward.9} parent=39 // pred_fallthru
        _
    $region40: #{forward.9} parent=5 // pred_fallthru
      _
  $region6: #{forward.9} parent=0 // loop_footer
    %s13 = sadd.s32 1, %s9
  $region7: #{forward.9} parent=0 // loop_footer_branch
    %8 = sbr.rel target = $region3
  $region8: #{forward.9} parent=0 // loop_exit
    _

// kernel: forward.10
$region0: #{forward.10}
  #allocation0 [shape = 'u32[]', space=smem, size = 0x4, offset = 0x4, fixed_abs, tag = 'smem constant byte address 0x4 - core index']
  #allocation1 [shape = 'u32[72,128]{1,0:T(1,128)}', space=vmem, size = 0x9000, scoped, tag = 'internal scratch']
  %s0 = inlined_call_operand.vmem [shape: bf16[2,8,64], index: 0, kind: input, shape index: {}]
  %s1 = inlined_call_operand.vmem [shape: bf16[2,9,8,8], index: 1, kind: input, shape index: {}]
  %s2 = inlined_call_operand.vmem [shape: f32[8,3], index: 2, kind: input, shape index: {}]
  %s3 = inlined_call_operand.vmem [shape: bf16[2,8,64], index: 3, kind: output, shape index: {}]
  %s4 = sld [smem:[#allocation0]]
  $region45: #{forward.10} parent=0
    _
  %s6 = ssub.s32 1, %s4
  %s7 = scalar_select 0, %s6, %s4
  loop: start=0, step=1, limit=4
  $region2: #{forward.10} parent=0 // loop_pre_header
    _
  $region3: #{forward.10} parent=0 // loop_header
    %s9 = sphi 0, %s13
    %p10 = scmp.ge.s32.totalorder %s9, 4
    %s19 = sphi 0, %s21
    %s22 = sphi 0, %s19
    %s23 = sphi 0, %s22
    %s39 = sphi 0, %s23
    %s45 = sphi 0, %s47
    %s48 = sphi 0, %s45
    %s49 = sphi 0, %s48
    %s65 = sphi 0, %s49
    %s69 = sphi 0, %s69
    %s71 = sphi 0, %s69
    %s72 = sphi 0, %s71
    %s86 = sphi 0, %s72
    %s92 = sphi 0, %s94
    %s95 = sphi 0, %s92
    %s96 = sphi 0, %s95
    %s112 = sphi 0, %s96
  $region4: #{forward.10} parent=0 // loop_header_branch
    %12 = sbr.rel (%p10) target = $region8
  $region5: #{forward.10} parent=0 // loop_body
    %s14 = ssub.s32 %s9, 1
    %s15 = ssub.s32 %s9, 2
    %s16 = sadd.s32 %s9, 1
    %s17 = ssub.s32 %s9, %s16
    %p18 = scmp.eq.s32.totalorder %s17, 0
    %s20 = sadd.s32 %s19, 1
    %s21 = scalar_select %p18, %s19, %s20
    %p24 = pneg %p18
    %p25 = scmp.eq.s32.totalorder %s9, 1
    %p26 = por %p24, %p25
    %p27 = scmp.ne.s32.totalorder %s19, %s22
    %p28 = scmp.eq.s32.totalorder %s9, 0
    %p29 = por %p27, %p28
    %p30 = scmp.ne.s32.totalorder %s19, %s22
    %p31 = scmp.eq.s32.totalorder %s14, 1
    %p32 = por %p30, %p31
    %p33 = scmp.ne.s32.totalorder %s22, %s23
    %p34 = scmp.eq.s32.totalorder %s14, 0
    %p35 = por %p33, %p34
    %p36 = scmp.ne.s32.totalorder %s22, %s23
    %p37 = scmp.eq.s32.totalorder %s15, 1
    %p38 = por %p36, %p37
    %p40 = scmp.ne.s32.totalorder %s23, %s39
    %p41 = scmp.eq.s32.totalorder %s15, 0
    %p42 = por %p40, %p41
    %s43 = ssub.s32 %s9, %s16
    %p44 = scmp.eq.s32.totalorder %s43, 0
    %s46 = sadd.s32 %s45, 1
    %s47 = scalar_select %p44, %s45, %s46
    %p50 = pneg %p44
    %p51 = scmp.eq.s32.totalorder %s9, 1
    %p52 = por %p50, %p51
    %p53 = scmp.ne.s32.totalorder %s45, %s48
    %p54 = scmp.eq.s32.totalorder %s9, 0
    %p55 = por %p53, %p54
    %p56 = scmp.ne.s32.totalorder %s45, %s48
    %p57 = scmp.eq.s32.totalorder %s14, 1
    %p58 = por %p56, %p57
    %p59 = scmp.ne.s32.totalorder %s48, %s49
    %p60 = scmp.eq.s32.totalorder %s14, 0
    %p61 = por %p59, %p60
    %p62 = scmp.ne.s32.totalorder %s48, %s49
    %p63 = scmp.eq.s32.totalorder %s15, 1
    %p64 = por %p62, %p63
    %p66 = scmp.ne.s32.totalorder %s49, %s65
    %p67 = scmp.eq.s32.totalorder %s15, 0
    %p68 = por %p66, %p67
    %s70 = sadd.s32 %s69, 1
    %p73 = scmp.eq.s32.totalorder %s9, 1
    %p74 = scmp.ne.s32.totalorder %s69, %s71
    %p75 = scmp.eq.s32.totalorder %s9, 0
    %p76 = por %p74, %p75
    %p77 = scmp.ne.s32.totalorder %s69, %s71
    %p78 = scmp.eq.s32.totalorder %s14, 1
    %p79 = por %p77, %p78
    %p80 = scmp.ne.s32.totalorder %s71, %s72
    %p81 = scmp.eq.s32.totalorder %s14, 0
    %p82 = por %p80, %p81
    %p83 = scmp.ne.s32.totalorder %s71, %s72
    %p84 = scmp.eq.s32.totalorder %s15, 1
    %p85 = por %p83, %p84
    %p87 = scmp.ne.s32.totalorder %s72, %s86
    %p88 = scmp.eq.s32.totalorder %s15, 0
    %p89 = por %p87, %p88
    %s90 = ssub.s32 %s9, %s16
    %p91 = scmp.eq.s32.totalorder %s90, 0
    %s93 = sadd.s32 %s92, 1
    %s94 = scalar_select %p91, %s92, %s93
    %p97 = pneg %p91
    %p98 = scmp.eq.s32.totalorder %s9, 1
    %p99 = por %p97, %p98
    %p100 = scmp.ne.s32.totalorder %s92, %s95
    %p101 = scmp.eq.s32.totalorder %s9, 0
    %p102 = por %p100, %p101
    %p103 = scmp.ne.s32.totalorder %s92, %s95
    %p104 = scmp.eq.s32.totalorder %s14, 1
    %p105 = por %p103, %p104
    %p106 = scmp.ne.s32.totalorder %s95, %s96
    %p107 = scmp.eq.s32.totalorder %s14, 0
    %p108 = por %p106, %p107
    %p109 = scmp.ne.s32.totalorder %s95, %s96
    %p110 = scmp.eq.s32.totalorder %s15, 1
    %p111 = por %p109, %p110
    %p113 = scmp.ne.s32.totalorder %s96, %s112
    %p114 = scmp.eq.s32.totalorder %s15, 0
    %p115 = por %p113, %p114
    %p116 = scmp.le.s32.totalorder 1, %s9
    %p117 = scmp.lt.s32.totalorder %s9, 3
    %p118 = pnand %p116, %p117
    %p119 = pneg %p118
    // Predicated region
    $region9: #{forward.10} parent=5 // pred_check
      _
    $region10: #{forward.10} parent=5 // pred_check_branch
      %121 = sbr.rel (%p118) target = $region12
    $region11: #{forward.10} parent=5 // pred_region
      %s122 = ssub.s32 %s9, 1
      // Predicated region
      $region13: #{forward.10} parent=11 // pred_check
        %p123 = pneg %p82
      $region14: #{forward.10} parent=11 // pred_check_branch
        %125 = sbr.rel (%p123) target = $region16
      $region15: #{forward.10} parent=11 // pred_region
        _
      $region16: #{forward.10} parent=11 // pred_fallthru
        _
    $region12: #{forward.10} parent=5 // pred_fallthru
      _
    %p126 = scmp.lt.s32.totalorder %s9, 2
    // Predicated region
    $region17: #{forward.10} parent=5 // pred_check
      %p127 = pneg %p126
    $region18: #{forward.10} parent=5 // pred_check_branch
      %129 = sbr.rel (%p127) target = $region20
    $region19: #{forward.10} parent=5 // pred_region
      // Predicated region
      $region21: #{forward.10} parent=19 // pred_check
        %p130 = pneg %p29
      $region22: #{forward.10} parent=19 // pred_check_branch
        %132 = sbr.rel (%p130) target = $region24
      $region23: #{forward.10} parent=19 // pred_region
        %p133 = scmp.lt.s32.totalorder %s9, 1
        %s134 = scalar_select %p133, %s9, 1
        %s135 = smul.addr %s134, 4
        %s136 = scalar_lea.vmem %s0, %s135
      $region24: #{forward.10} parent=19 // pred_fallthru
        _
      // Predicated region
      $region25: #{forward.10} parent=19 // pred_check
        %p137 = pneg %p55
      $region26: #{forward.10} parent=19 // pred_check_branch
        %139 = sbr.rel (%p137) target = $region28
      $region27: #{forward.10} parent=19 // pred_region
        %p140 = scmp.lt.s32.totalorder %s9, 1
        %s141 = scalar_select %p140, %s9, 1
        %s142 = smul.addr %s141, 9
        %s143 = smul.addr %s142, 4
        %s144 = scalar_lea.vmem %s1, %s143
      $region28: #{forward.10} parent=19 // pred_fallthru
        _
    $region20: #{forward.10} parent=5 // pred_fallthru
      _
    %p145 = scmp.le.s32.totalorder 1, %s9
    %p146 = scmp.lt.s32.totalorder %s9, 3
    %p147 = pnand %p145, %p146
    %p148 = pneg %p147
    // Predicated region
    $region29: #{forward.10} parent=5 // pred_check
      _
    $region30: #{forward.10} parent=5 // pred_check_branch
      %150 = sbr.rel (%p147) target = $region32
    $region31: #{forward.10} parent=5 // pred_region
      %s151 = ssub.s32 %s9, 1
      %p152 = scmp.lt.s32.totalorder %s14, 1
      %s153 = scalar_select %p152, %s14, 1
      %s154 = smul.addr %s153, 4
      %s155 = scalar_lea.vmem %s0, %s154
      %p156 = pneg %p35
      %p157 = pneg %p32
      %p158 = scmp.lt.s32.totalorder %s14, 1
      %s159 = scalar_select %p158, %s14, 1
      %s160 = smul.addr %s159, 9
      %s161 = smul.addr %s160, 4
      %s162 = scalar_lea.vmem %s1, %s161
      %p163 = pneg %p61
      %p164 = pneg %p58
      %p165 = pneg %p82
      %p166 = pneg %p79
      %p167 = pneg %p108
      %p168 = pneg %p105
      %p169 = scmp.lt.s32.totalorder %s14, 1
      %s170 = scalar_select %p169, %s14, 1
      %s171 = smul.addr %s170, 4
      %s172 = scalar_lea.vmem %s3, %s171
      %p173 = scmp.lt.s32.totalorder %s14, 1
      %s174 = scalar_select %p173, %s14, 1
      %s175 = smul.addr %s174, 4
      %s176 = scalar_lea.vmem %s0, %s175
      %p177 = scmp.lt.s32.totalorder %s14, 1
      %s178 = scalar_select %p177, %s14, 1
      %s179 = smul.addr %s178, 9
      %s180 = smul.addr %s179, 4
      %s181 = scalar_lea.vmem %s1, %s180
      %p182 = scmp.lt.s32.totalorder %s14, 1
      %s183 = scalar_select %p182, %s14, 1
      %s184 = smul.addr %s183, 4
      %s185 = scalar_lea.vmem %s3, %s184
      %v189 = vlaneseq
      %v190 = vand.u32 %v189, 127
      %vm191 = vcmp.lt.s32.totalorder %v190, 0
      %v192 = vsub.s32 0, %v190
      %v193 = vsel %vm191, %v192, %v190
      %v194 = vshrl.u32 %v193, 3
      %v195 = vand.u32 %v193, 7
      %v196 = vsub.s32 0, %v195
      %v197 = vsel %vm191, %v196, %v195
      %vm198 = vcmp.ne.s32.totalorder %v197, 0
      %vm199 = vcmp.lt.s32.totalorder %v197, 0
      %vm200 = vmand %vm199, %vm198
      %v201 = vadd.s32 %v197, 8
      %v202 = vsel %vm200, %v201, %v197
      %vm203 = vcmp.gt.s32.totalorder %v202, 0
      %vm204 = vcmp.lt.s32.totalorder %v202, 7
      %v205 = vld [vmem:[%s176] sm:$0xf]
      %v207 = vunpack.c.l.b16 %v205
      %v208 = vpack.c.b16 %v207, %v207
      %209 = vrot.lane.b32.xlu0 %v208, 9
      %v210 = vpop.permute.xlu0 %209
      %vm211 = vcmask 72704
      %v214 = vsel %vm211, 0, %v210
      %vm215 = vcmask 596992
      %v216 = vsel %vm215, %v214, 0
      %v218 = vld [vmem:[%s181] sm:$0xf]
      %v219 = vld [vmem:[%s181 + $0x4] sm:$0xf]
      %v220 = vld [vmem:[%s181 + $0x8] sm:$0xf]
      %v221 = vld [vmem:[%s181 + $0xc] sm:$0xf]
      %v222 = vld [vmem:[%s181 + $0x10] sm:$0xf]
      %v223 = vld [vmem:[%s181 + $0x14] sm:$0xf]
      %v224 = vld [vmem:[%s181 + $0x18] sm:$0xf]
      %v225 = vld [vmem:[%s181 + $0x1c] sm:$0xf]
      %v226 = vld [vmem:[%s181 + $0x20] sm:$0xf]
      %v227 = vsel %vm203, 1, 0
      %vm228 = vcmp.eq.s32.totalorder %v227, 1
      %vm229 = vmpackc.low %vm228, %vm228
      %v230 = vsel %vm229, %v216, 0
      %232 = vrot.lane.b32.xlu0 %v216, 127
      %v233 = vpop.permute.xlu0 %232
      %vm234 = vcmask 64512
      %v236 = vsel %vm234, %v219, 0
      %vm238 = vcmask 1043456
      %v240 = vsel %vm238, %v233, 0
      %242 = vmatpush.bf16.msra.mxu0 0
      %243 = vmatpush.bf16.msra.mxu0 0
      %244 = vmatpush.bf16.msra.mxu0 0
      %245 = vmatpush.bf16.msra.mxu0 0
      %246 = vmatpush.bf16.msra.mxu0 0
      %247 = vmatpush.bf16.msra.mxu0 0
      %248 = vmatpush.bf16.msra.mxu0 0
      %249 = vmatpush.bf16.msra.mxu0 %v240
      %250 = vmatmul.bf16.gmra.mxu0 %v236
      %v251 = vpop.f32.mrf.mxu0
      %v252 = vadd.f32 0.0, %v251
      %v253 = vpop.f32.mrf.mxu0
      %254 = vdwg.mxu0
      %v256 = vsel %vm234, %v218, 0
      %v259 = vsel %vm238, %v230, 0
      %261 = vmatpush.bf16.msra.mxu0 0
      %262 = vmatpush.bf16.msra.mxu0 0
      %263 = vmatpush.bf16.msra.mxu0 0
      %264 = vmatpush.bf16.msra.mxu0 0
      %265 = vmatpush.bf16.msra.mxu0 0
      %266 = vmatpush.bf16.msra.mxu0 0
      %267 = vmatpush.bf16.msra.mxu0 0
      %268 = vmatpush.bf16.msra.mxu0 %v259
      %269 = vmatmul.bf16.gmra.mxu0 %v256
      %v270 = vpop.f32.mrf.mxu0
      %v271 = vadd.f32 %v252, %v270
      %v272 = vpop.f32.mrf.mxu0
      %273 = vdwg.mxu0
      %v274 = vsel %vm204, 1, 0
      %vm275 = vcmp.eq.s32.totalorder %v274, 1
      %vm276 = vmpackc.low %vm275, %vm275
      %v277 = vsel %vm276, 65537, 0
      %v278 = vperm.slane %v277, 0
      %279 = vrot.lane.b32.xlu0 %v278, 2
      %v280 = vpop.permute.xlu0 %279
      %v281 = vunpack.c.l.b16 %v280
      %v282 = vunpack.c.h.b16 %v280
      %v283 = vunpack.c.l.b16 0
      %v284 = vunpack.c.h.b16 0
      %vm285 = vcmp.ne.s32.totalorder %v281, %v283
      %vm286 = vcmp.ne.s32.totalorder %v282, %v284
      %vm287 = vmpackc.low %vm286, %vm285
      %v288 = vsel %vm287, %v216, 0
      %290 = vrot.lane.b32.xlu0 %v288, 126
      %v291 = vpop.permute.xlu0 %290
      %v293 = vsel %vm234, %v220, 0
      %v296 = vsel %vm238, %v291, 0
      %298 = vmatpush.bf16.msra.mxu0 0
      %299 = vmatpush.bf16.msra.mxu0 0
      %300 = vmatpush.bf16.msra.mxu0 0
      %301 = vmatpush.bf16.msra.mxu0 0
      %302 = vmatpush.bf16.msra.mxu0 0
      %303 = vmatpush.bf16.msra.mxu0 0
      %304 = vmatpush.bf16.msra.mxu0 0
      %305 = vmatpush.bf16.msra.mxu0 %v296
      %306 = vmatmul.bf16.gmra.mxu0 %v293
      %v307 = vpop.f32.mrf.mxu0
      %v308 = vadd.f32 0.0, %v307
      %v309 = vpop.f32.mrf.mxu0
      %310 = vdwg.mxu0
      %v311 = vadd.f32 %v271, %v308
      %v312 = vsel %vm229, 65537, 0
      %v313 = vperm.slane %v312, 0
      %314 = vrot.lane.b32.xlu0 %v313, 8
      %v315 = vpop.permute.xlu0 %314
      %v316 = vunpack.c.l.b16 %v315
      %v317 = vunpack.c.h.b16 %v315
      %v318 = vunpack.c.l.b16 0
      %v319 = vunpack.c.h.b16 0
      %vm320 = vcmp.ne.s32.totalorder %v316, %v318
      %vm321 = vcmp.ne.s32.totalorder %v317, %v319
      %vm322 = vmpackc.low %vm321, %vm320
      %v323 = vsel %vm322, %v216, 0
      %325 = vrot.lane.b32.xlu0 %v323, 120
      %v326 = vpop.permute.xlu0 %325
      %v328 = vsel %vm234, %v221, 0
      %v331 = vsel %vm238, %v326, 0
      %333 = vmatpush.bf16.msra.mxu0 0
      %334 = vmatpush.bf16.msra.mxu0 0
      %335 = vmatpush.bf16.msra.mxu0 0
      %336 = vmatpush.bf16.msra.mxu0 0
      %337 = vmatpush.bf16.msra.mxu0 0
      %338 = vmatpush.bf16.msra.mxu0 0
      %339 = vmatpush.bf16.msra.mxu0 0
      %340 = vmatpush.bf16.msra.mxu0 %v331
      %341 = vmatmul.bf16.gmra.mxu0 %v328
      %v342 = vpop.f32.mrf.mxu0
      %v343 = vadd.f32 0.0, %v342
      %v344 = vpop.f32.mrf.mxu0
      %345 = vdwg.mxu0
      %v346 = vadd.f32 %v311, %v343
      %v348 = vsel %vm234, %v222, 0
      %v351 = vsel %vm238, %v205, 0
      %353 = vmatpush.bf16.msra.mxu0 0
      %354 = vmatpush.bf16.msra.mxu0 0
      %355 = vmatpush.bf16.msra.mxu0 0
      %356 = vmatpush.bf16.msra.mxu0 0
      %357 = vmatpush.bf16.msra.mxu0 0
      %358 = vmatpush.bf16.msra.mxu0 0
      %359 = vmatpush.bf16.msra.mxu0 0
      %360 = vmatpush.bf16.msra.mxu0 %v351
      %361 = vmatmul.bf16.gmra.mxu0 %v348
      %v362 = vpop.f32.mrf.mxu0
      %v363 = vadd.f32 0.0, %v362
      %v364 = vpop.f32.mrf.mxu0
      %365 = vdwg.mxu0
      %v366 = vadd.f32 %v346, %v363
      %367 = vrot.lane.b32.xlu0 %v278, 10
      %v368 = vpop.permute.xlu0 %367
      %v369 = vunpack.c.l.b16 %v368
      %v370 = vunpack.c.h.b16 %v368
      %v371 = vunpack.c.l.b16 0
      %v372 = vunpack.c.h.b16 0
      %vm373 = vcmp.ne.s32.totalorder %v369, %v371
      %vm374 = vcmp.ne.s32.totalorder %v370, %v372
      %vm375 = vmpackc.low %vm374, %vm373
      %v376 = vsel %vm375, %v216, 0
      %378 = vrot.lane.b32.xlu0 %v376, 118
      %v379 = vpop.permute.xlu0 %378
      %v381 = vsel %vm234, %v223, 0
      %v384 = vsel %vm238, %v379, 0
      %386 = vmatpush.bf16.msra.mxu0 0
      %387 = vmatpush.bf16.msra.mxu0 0
      %388 = vmatpush.bf16.msra.mxu0 0
      %389 = vmatpush.bf16.msra.mxu0 0
      %390 = vmatpush.bf16.msra.mxu0 0
      %391 = vmatpush.bf16.msra.mxu0 0
      %392 = vmatpush.bf16.msra.mxu0 0
      %393 = vmatpush.bf16.msra.mxu0 %v384
      %394 = vmatmul.bf16.gmra.mxu0 %v381
      %v395 = vpop.f32.mrf.mxu0
      %v396 = vadd.f32 0.0, %v395
      %v397 = vpop.f32.mrf.mxu0
      %398 = vdwg.mxu0
      %v399 = vadd.f32 %v366, %v396
      %400 = vrot.lane.b32.xlu0 %v313, 16
      %v401 = vpop.permute.xlu0 %400
      %v402 = vunpack.c.l.b16 %v401
      %v403 = vunpack.c.h.b16 %v401
      %v404 = vunpack.c.l.b16 0
      %v405 = vunpack.c.h.b16 0
      %vm406 = vcmp.ne.s32.totalorder %v402, %v404
      %vm407 = vcmp.ne.s32.totalorder %v403, %v405
      %vm408 = vmpackc.low %vm407, %vm406
      %v409 = vsel %vm408, %v216, 0
      %411 = vrot.lane.b32.xlu0 %v409, 112
      %v412 = vpop.permute.xlu0 %411
      %v414 = vsel %vm234, %v224, 0
      %v417 = vsel %vm238, %v412, 0
      %419 = vmatpush.bf16.msra.mxu0 0
      %420 = vmatpush.bf16.msra.mxu0 0
      %421 = vmatpush.bf16.msra.mxu0 0
      %422 = vmatpush.bf16.msra.mxu0 0
      %423 = vmatpush.bf16.msra.mxu0 0
      %424 = vmatpush.bf16.msra.mxu0 0
      %425 = vmatpush.bf16.msra.mxu0 0
      %426 = vmatpush.bf16.msra.mxu0 %v417
      %427 = vmatmul.bf16.gmra.mxu0 %v414
      %v428 = vpop.f32.mrf.mxu0
      %v429 = vadd.f32 0.0, %v428
      %v430 = vpop.f32.mrf.mxu0
      %431 = vdwg.mxu0
      %v432 = vadd.f32 %v399, %v429
      %433 = vrot.lane.b32.xlu0 %v216, 111
      %v434 = vpop.permute.xlu0 %433
      %v436 = vsel %vm234, %v225, 0
      %v439 = vsel %vm238, %v434, 0
      %441 = vmatpush.bf16.msra.mxu0 0
      %442 = vmatpush.bf16.msra.mxu0 0
      %443 = vmatpush.bf16.msra.mxu0 0
      %444 = vmatpush.bf16.msra.mxu0 0
      %445 = vmatpush.bf16.msra.mxu0 0
      %446 = vmatpush.bf16.msra.mxu0 0
      %447 = vmatpush.bf16.msra.mxu0 0
      %448 = vmatpush.bf16.msra.mxu0 %v439
      %449 = vmatmul.bf16.gmra.mxu0 %v436
      %v450 = vpop.f32.mrf.mxu0
      %v451 = vadd.f32 0.0, %v450
      %v452 = vpop.f32.mrf.mxu0
      %453 = vdwg.mxu0
      %v454 = vadd.f32 %v432, %v451
      %455 = vrot.lane.b32.xlu0 %v278, 18
      %v456 = vpop.permute.xlu0 %455
      %v457 = vunpack.c.l.b16 %v456
      %v458 = vunpack.c.h.b16 %v456
      %v459 = vunpack.c.l.b16 0
      %v460 = vunpack.c.h.b16 0
      %vm461 = vcmp.ne.s32.totalorder %v457, %v459
      %vm462 = vcmp.ne.s32.totalorder %v458, %v460
      %vm463 = vmpackc.low %vm462, %vm461
      %v464 = vsel %vm463, %v216, 0
      %466 = vrot.lane.b32.xlu0 %v464, 110
      %v467 = vpop.permute.xlu0 %466
      %v469 = vsel %vm234, %v226, 0
      %v472 = vsel %vm238, %v467, 0
      %474 = vmatpush.bf16.msra.mxu0 0
      %475 = vmatpush.bf16.msra.mxu0 0
      %476 = vmatpush.bf16.msra.mxu0 0
      %477 = vmatpush.bf16.msra.mxu0 0
      %478 = vmatpush.bf16.msra.mxu0 0
      %479 = vmatpush.bf16.msra.mxu0 0
      %480 = vmatpush.bf16.msra.mxu0 0
      %481 = vmatpush.bf16.msra.mxu0 %v472
      %482 = vmatmul.bf16.gmra.mxu0 %v469
      %v483 = vpop.f32.mrf.mxu0
      %v484 = vadd.f32 0.0, %v483
      %v485 = vpop.f32.mrf.mxu0
      %486 = vdwg.mxu0
      %v487 = vadd.f32 %v454, %v484
      %v488 = vld [vmem:[%s2] sm:$0xff]
      %490 = vset.pattern.permute.xlu0 0
      %491 = vperm.xlu0 %490, %v488
      %v492 = vpop.permute.xlu0 %491
      %v494 = vadd.f32 %v487, %v492
      %v495 = vpack.c.bf16 %v494, %v494
      %vm496 = vcmask 519168
      %497 = vst.msk [vmem:[%s185] sm:$0xf] %vm496, %v495
      %p498 = scmp.lt.s32.totalorder %s14, 1
      %s499 = scalar_select %p498, %s14, 1
      %s500 = smul.addr %s499, 4
      %s501 = scalar_lea.vmem %s3, %s500
      // Predicated region
      $region33: #{forward.10} parent=31 // pred_check
        %p502 = pneg %p105
      $region34: #{forward.10} parent=31 // pred_check_branch
        %504 = sbr.rel (%p502) target = $region36
      $region35: #{forward.10} parent=31 // pred_region
        _
      $region36: #{forward.10} parent=31 // pred_fallthru
        _
    $region32: #{forward.10} parent=5 // pred_fallthru
      _
    %p505 = scmp.le.s32.totalorder 2, %s9
    // Predicated region
    $region37: #{forward.10} parent=5 // pred_check
      %p506 = pneg %p505
    $region38: #{forward.10} parent=5 // pred_check_branch
      %508 = sbr.rel (%p506) target = $region40
    $region39: #{forward.10} parent=5 // pred_region
      %s509 = ssub.s32 %s9, 2
      // Predicated region
      $region41: #{forward.10} parent=39 // pred_check
        %p510 = pneg %p111
      $region42: #{forward.10} parent=39 // pred_check_branch
        %512 = sbr.rel (%p510) target = $region44
      $region43: #{forward.10} parent=39 // pred_region
        %p513 = scmp.lt.s32.totalorder %s15, 1
        %s514 = scalar_select %p513, %s15, 1
        %s515 = smul.addr %s514, 4
        %s516 = scalar_lea.vmem %s3, %s515
      $region44: #{forward.10} parent=39 // pred_fallthru
        _
    $region40: #{forward.10} parent=5 // pred_fallthru
      _
  $region6: #{forward.10} parent=0 // loop_footer
    %s13 = sadd.s32 1, %s9
  $region7: #{forward.10} parent=0 // loop_footer_branch
    %8 = sbr.rel target = $region3
  $region8: #{forward.10} parent=0 // loop_exit
    _

// kernel: forward.11
$region0: #{forward.11}
  #allocation0 [shape = 'u32[]', space=smem, size = 0x4, offset = 0x4, fixed_abs, tag = 'smem constant byte address 0x4 - core index']
  #allocation1 [shape = 'u32[72,128]{1,0:T(1,128)}', space=vmem, size = 0x9000, scoped, tag = 'internal scratch']
  %s0 = inlined_call_operand.vmem [shape: bf16[2,8,64], index: 0, kind: input, shape index: {}]
  %s1 = inlined_call_operand.vmem [shape: bf16[2,8,64], index: 1, kind: input, shape index: {}]
  %s2 = inlined_call_operand.vmem [shape: bf16[9,4,8], index: 2, kind: input, shape index: {}]
  %s3 = inlined_call_operand.vmem [shape: bf16[9,4,8], index: 3, kind: input, shape index: {}]
  %s4 = inlined_call_operand.vmem [shape: f32[4,3], index: 4, kind: input, shape index: {}]
  %s5 = inlined_call_operand.vmem [shape: bf16[2,4,64], index: 5, kind: output, shape index: {}]
  %s6 = sld [smem:[#allocation0]]
  $region53: #{forward.11} parent=0
    _
  %s8 = ssub.s32 1, %s6
  %s9 = scalar_select 0, %s8, %s6
  loop: start=0, step=1, limit=4
  $region2: #{forward.11} parent=0 // loop_pre_header
    _
  $region3: #{forward.11} parent=0 // loop_header
    %s11 = sphi 0, %s15
    %p12 = scmp.ge.s32.totalorder %s11, 4
    %s21 = sphi 0, %s23
    %s24 = sphi 0, %s21
    %s25 = sphi 0, %s24
    %s41 = sphi 0, %s25
    %s47 = sphi 0, %s49
    %s50 = sphi 0, %s47
    %s51 = sphi 0, %s50
    %s67 = sphi 0, %s51
    %s71 = sphi 0, %s71
    %s73 = sphi 0, %s71
    %s74 = sphi 0, %s73
    %s88 = sphi 0, %s74
    %s92 = sphi 0, %s92
    %s94 = sphi 0, %s92
    %s95 = sphi 0, %s94
    %s109 = sphi 0, %s95
    %s113 = sphi 0, %s113
    %s115 = sphi 0, %s113
    %s116 = sphi 0, %s115
    %s130 = sphi 0, %s116
    %s136 = sphi 0, %s138
    %s139 = sphi 0, %s136
    %s140 = sphi 0, %s139
    %s156 = sphi 0, %s140
  $region4: #{forward.11} parent=0 // loop_header_branch
    %14 = sbr.rel (%p12) target = $region8
  $region5: #{forward.11} parent=0 // loop_body
    %s16 = ssub.s32 %s11, 1
    %s17 = ssub.s32 %s11, 2
    %s18 = sadd.s32 %s11, 1
    %s19 = ssub.s32 %s11, %s18
    %p20 = scmp.eq.s32.totalorder %s19, 0
    %s22 = sadd.s32 %s21, 1
    %s23 = scalar_select %p20, %s21, %s22
    %p26 = pneg %p20
    %p27 = scmp.eq.s32.totalorder %s11, 1
    %p28 = por %p26, %p27
    %p29 = scmp.ne.s32.totalorder %s21, %s24
    %p30 = scmp.eq.s32.totalorder %s11, 0
    %p31 = por %p29, %p30
    %p32 = scmp.ne.s32.totalorder %s21, %s24
    %p33 = scmp.eq.s32.totalorder %s16, 1
    %p34 = por %p32, %p33
    %p35 = scmp.ne.s32.totalorder %s24, %s25
    %p36 = scmp.eq.s32.totalorder %s16, 0
    %p37 = por %p35, %p36
    %p38 = scmp.ne.s32.totalorder %s24, %s25
    %p39 = scmp.eq.s32.totalorder %s17, 1
    %p40 = por %p38, %p39
    %p42 = scmp.ne.s32.totalorder %s25, %s41
    %p43 = scmp.eq.s32.totalorder %s17, 0
    %p44 = por %p42, %p43
    %s45 = ssub.s32 %s11, %s18
    %p46 = scmp.eq.s32.totalorder %s45, 0
    %s48 = sadd.s32 %s47, 1
    %s49 = scalar_select %p46, %s47, %s48
    %p52 = pneg %p46
    %p53 = scmp.eq.s32.totalorder %s11, 1
    %p54 = por %p52, %p53
    %p55 = scmp.ne.s32.totalorder %s47, %s50
    %p56 = scmp.eq.s32.totalorder %s11, 0
    %p57 = por %p55, %p56
    %p58 = scmp.ne.s32.totalorder %s47, %s50
    %p59 = scmp.eq.s32.totalorder %s16, 1
    %p60 = por %p58, %p59
    %p61 = scmp.ne.s32.totalorder %s50, %s51
    %p62 = scmp.eq.s32.totalorder %s16, 0
    %p63 = por %p61, %p62
    %p64 = scmp.ne.s32.totalorder %s50, %s51
    %p65 = scmp.eq.s32.totalorder %s17, 1
    %p66 = por %p64, %p65
    %p68 = scmp.ne.s32.totalorder %s51, %s67
    %p69 = scmp.eq.s32.totalorder %s17, 0
    %p70 = por %p68, %p69
    %s72 = sadd.s32 %s71, 1
    %p75 = scmp.eq.s32.totalorder %s11, 1
    %p76 = scmp.ne.s32.totalorder %s71, %s73
    %p77 = scmp.eq.s32.totalorder %s11, 0
    %p78 = por %p76, %p77
    %p79 = scmp.ne.s32.totalorder %s71, %s73
    %p80 = scmp.eq.s32.totalorder %s16, 1
    %p81 = por %p79, %p80
    %p82 = scmp.ne.s32.totalorder %s73, %s74
    %p83 = scmp.eq.s32.totalorder %s16, 0
    %p84 = por %p82, %p83
    %p85 = scmp.ne.s32.totalorder %s73, %s74
    %p86 = scmp.eq.s32.totalorder %s17, 1
    %p87 = por %p85, %p86
    %p89 = scmp.ne.s32.totalorder %s74, %s88
    %p90 = scmp.eq.s32.totalorder %s17, 0
    %p91 = por %p89, %p90
    %s93 = sadd.s32 %s92, 1
    %p96 = scmp.eq.s32.totalorder %s11, 1
    %p97 = scmp.ne.s32.totalorder %s92, %s94
    %p98 = scmp.eq.s32.totalorder %s11, 0
    %p99 = por %p97, %p98
    %p100 = scmp.ne.s32.totalorder %s92, %s94
    %p101 = scmp.eq.s32.totalorder %s16, 1
    %p102 = por %p100, %p101
    %p103 = scmp.ne.s32.totalorder %s94, %s95
    %p104 = scmp.eq.s32.totalorder %s16, 0
    %p105 = por %p103, %p104
    %p106 = scmp.ne.s32.totalorder %s94, %s95
    %p107 = scmp.eq.s32.totalorder %s17, 1
    %p108 = por %p106, %p107
    %p110 = scmp.ne.s32.totalorder %s95, %s109
    %p111 = scmp.eq.s32.totalorder %s17, 0
    %p112 = por %p110, %p111
    %s114 = sadd.s32 %s113, 1
    %p117 = scmp.eq.s32.totalorder %s11, 1
    %p118 = scmp.ne.s32.totalorder %s113, %s115
    %p119 = scmp.eq.s32.totalorder %s11, 0
    %p120 = por %p118, %p119
    %p121 = scmp.ne.s32.totalorder %s113, %s115
    %p122 = scmp.eq.s32.totalorder %s16, 1
    %p123 = por %p121, %p122
    %p124 = scmp.ne.s32.totalorder %s115, %s116
    %p125 = scmp.eq.s32.totalorder %s16, 0
    %p126 = por %p124, %p125
    %p127 = scmp.ne.s32.totalorder %s115, %s116
    %p128 = scmp.eq.s32.totalorder %s17, 1
    %p129 = por %p127, %p128
    %p131 = scmp.ne.s32.totalorder %s116, %s130
    %p132 = scmp.eq.s32.totalorder %s17, 0
    %p133 = por %p131, %p132
    %s134 = ssub.s32 %s11, %s18
    %p135 = scmp.eq.s32.totalorder %s134, 0
    %s137 = sadd.s32 %s136, 1
    %s138 = scalar_select %p135, %s136, %s137
    %p141 = pneg %p135
    %p142 = scmp.eq.s32.totalorder %s11, 1
    %p143 = por %p141, %p142
    %p144 = scmp.ne.s32.totalorder %s136, %s139
    %p145 = scmp.eq.s32.totalorder %s11, 0
    %p146 = por %p144, %p145
    %p147 = scmp.ne.s32.totalorder %s136, %s139
    %p148 = scmp.eq.s32.totalorder %s16, 1
    %p149 = por %p147, %p148
    %p150 = scmp.ne.s32.totalorder %s139, %s140
    %p151 = scmp.eq.s32.totalorder %s16, 0
    %p152 = por %p150, %p151
    %p153 = scmp.ne.s32.totalorder %s139, %s140
    %p154 = scmp.eq.s32.totalorder %s17, 1
    %p155 = por %p153, %p154
    %p157 = scmp.ne.s32.totalorder %s140, %s156
    %p158 = scmp.eq.s32.totalorder %s17, 0
    %p159 = por %p157, %p158
    %p160 = scmp.le.s32.totalorder 1, %s11
    %p161 = scmp.lt.s32.totalorder %s11, 3
    %p162 = pnand %p160, %p161
    %p163 = pneg %p162
    // Predicated region
    $region9: #{forward.11} parent=5 // pred_check
      _
    $region10: #{forward.11} parent=5 // pred_check_branch
      %165 = sbr.rel (%p162) target = $region12
    $region11: #{forward.11} parent=5 // pred_region
      %s166 = ssub.s32 %s11, 1
      // Predicated region
      $region13: #{forward.11} parent=11 // pred_check
        %p167 = pneg %p84
      $region14: #{forward.11} parent=11 // pred_check_branch
        %169 = sbr.rel (%p167) target = $region16
      $region15: #{forward.11} parent=11 // pred_region
        _
      $region16: #{forward.11} parent=11 // pred_fallthru
        _
      // Predicated region
      $region17: #{forward.11} parent=11 // pred_check
        %p170 = pneg %p105
      $region18: #{forward.11} parent=11 // pred_check_branch
        %172 = sbr.rel (%p170) target = $region20
      $region19: #{forward.11} parent=11 // pred_region
        _
      $region20: #{forward.11} parent=11 // pred_fallthru
        _
      // Predicated region
      $region21: #{forward.11} parent=11 // pred_check
        %p173 = pneg %p126
      $region22: #{forward.11} parent=11 // pred_check_branch
        %175 = sbr.rel (%p173) target = $region24
      $region23: #{forward.11} parent=11 // pred_region
        _
      $region24: #{forward.11} parent=11 // pred_fallthru
        _
    $region12: #{forward.11} parent=5 // pred_fallthru
      _
    %p176 = scmp.lt.s32.totalorder %s11, 2
    // Predicated region
    $region25: #{forward.11} parent=5 // pred_check
      %p177 = pneg %p176
    $region26: #{forward.11} parent=5 // pred_check_branch
      %179 = sbr.rel (%p177) target = $region28
    $region27: #{forward.11} parent=5 // pred_region
      // Predicated region
      $region29: #{forward.11} parent=27 // pred_check
        %p180 = pneg %p31
      $region30: #{forward.11} parent=27 // pred_check_branch
        %182 = sbr.rel (%p180) target = $region32
      $region31: #{forward.11} parent=27 // pred_region
        %p183 = scmp.lt.s32.totalorder %s11, 1
        %s184 = scalar_select %p183, %s11, 1
        %s185 = smul.addr %s184, 4
        %s186 = scalar_lea.vmem %s0, %s185
      $region32: #{forward.11} parent=27 // pred_fallthru
        _
      // Predicated region
      $region33: #{forward.11} parent=27 // pred_check
        %p187 = pneg %p57
      $region34: #{forward.11} parent=27 // pred_check_branch
        %189 = sbr.rel (%p187) target = $region36
      $region35: #{forward.11} parent=27 // pred_region
        %p190 = scmp.lt.s32.totalorder %s11, 1
        %s191 = scalar_select %p190, %s11, 1
        %s192 = smul.addr %s191, 4
        %s193 = scalar_lea.vmem %s1, %s192
      $region36: #{forward.11} parent=27 // pred_fallthru
        _
    $region28: #{forward.11} parent=5 // pred_fallthru
      _
    %p194 = scmp.le.s32.totalorder 1, %s11
    %p195 = scmp.lt.s32.totalorder %s11, 3
    %p196 = pnand %p194, %p195
    %p197 = pneg %p196
    // Predicated region
    $region37: #{forward.11} parent=5 // pred_check
      _
    $region38: #{forward.11} parent=5 // pred_check_branch
      %199 = sbr.rel (%p196) target = $region40
    $region39: #{forward.11} parent=5 // pred_region
      %s200 = ssub.s32 %s11, 1
      %p201 = scmp.lt.s32.totalorder %s16, 1
      %s202 = scalar_select %p201, %s16, 1
      %s203 = smul.addr %s202, 4
      %s204 = scalar_lea.vmem %s0, %s203
      %p205 = pneg %p37
      %p206 = pneg %p34
      %p207 = scmp.lt.s32.totalorder %s16, 1
      %s208 = scalar_select %p207, %s16, 1
      %s209 = smul.addr %s208, 4
      %s210 = scalar_lea.vmem %s1, %s209
      %p211 = pneg %p63
      %p212 = pneg %p60
      %p213 = pneg %p84
      %p214 = pneg %p81
      %p215 = pneg %p105
      %p216 = pneg %p102
      %p217 = pneg %p126
      %p218 = pneg %p123
      %p219 = pneg %p152
      %p220 = pneg %p149
      %p221 = scmp.lt.s32.totalorder %s16, 1
      %s222 = scalar_select %p221, %s16, 1
      %s223 = smul.addr %s222, 2
      %s224 = scalar_lea.vmem %s5, %s223
      %p225 = scmp.lt.s32.totalorder %s16, 1
      %s226 = scalar_select %p225, %s16, 1
      %s227 = smul.addr %s226, 4
      %s228 = scalar_lea.vmem %s0, %s227
      %p229 = scmp.lt.s32.totalorder %s16, 1
      %s230 = scalar_select %p229, %s16, 1
      %s231 = smul.addr %s230, 4
      %s232 = scalar_lea.vmem %s1, %s231
      %p233 = scmp.lt.s32.totalorder %s16, 1
      %s234 = scalar_select %p233, %s16, 1
      %s235 = smul.addr %s234, 2
      %s236 = scalar_lea.vmem %s5, %s235
      %v240 = vlaneseq
      %v241 = vand.u32 %v240, 127
      %vm242 = vcmp.lt.s32.totalorder %v241, 0
      %v243 = vsub.s32 0, %v241
      %v244 = vsel %vm242, %v243, %v241
      %v245 = vshrl.u32 %v244, 3
      %v246 = vand.u32 %v244, 7
      %v247 = vsub.s32 0, %v246
      %v248 = vsel %vm242, %v247, %v246
      %vm249 = vcmp.ne.s32.totalorder %v248, 0
      %vm250 = vcmp.lt.s32.totalorder %v248, 0
      %vm251 = vmand %vm250, %vm249
      %v252 = vadd.s32 %v248, 8
      %v253 = vsel %vm251, %v252, %v248
      %vm254 = vcmp.gt.s32.totalorder %v253, 0
      %vm255 = vcmp.lt.s32.totalorder %v253, 7
      %v256 = vld [vmem:[%s228] sm:$0xf]
      %v258 = vunpack.c.l.b16 %v256
      %v259 = vpack.c.b16 %v258, %v258
      %260 = vrot.lane.b32.xlu0 %v259, 9
      %v261 = vpop.permute.xlu0 %260
      %vm262 = vcmask 72704
      %v265 = vsel %vm262, 0, %v261
      %vm266 = vcmask 596992
      %v267 = vsel %vm266, %v265, 0
      %v269 = vld [vmem:[%s2] sm:$0x3]
      %v270 = vld [vmem:[%s2 + $0x2] sm:$0x3]
      %v271 = vld [vmem:[%s2 + $0x4] sm:$0x3]
      %v272 = vld [vmem:[%s2 + $0x6] sm:$0x3]
      %v273 = vld [vmem:[%s2 + $0x8] sm:$0x3]
      %v274 = vld [vmem:[%s2 + $0xa] sm:$0x3]
      %v275 = vld [vmem:[%s2 + $0xc] sm:$0x3]
      %v276 = vld [vmem:[%s2 + $0xe] sm:$0x3]
      %v277 = vld [vmem:[%s2 + $0x10] sm:$0x3]
      %v278 = vsel %vm254, 1, 0
      %vm279 = vcmp.eq.s32.totalorder %v278, 1
      %vm280 = vmpackc.low %vm279, %vm279
      %v281 = vsel %vm280, %v267, 0
      %283 = vrot.lane.b32.xlu0 %v267, 127
      %v284 = vpop.permute.xlu0 %283
      %vm285 = vcmask 64512
      %v287 = vsel %vm285, %v270, 0
      %vm289 = vcmask 1043456
      %v291 = vsel %vm289, %v284, 0
      %293 = vmatpush.bf16.msra.mxu0 0
      %294 = vmatpush.bf16.msra.mxu0 0
      %295 = vmatpush.bf16.msra.mxu0 0
      %296 = vmatpush.bf16.msra.mxu0 0
      %297 = vmatpush.bf16.msra.mxu0 0
      %298 = vmatpush.bf16.msra.mxu0 0
      %299 = vmatpush.bf16.msra.mxu0 0
      %300 = vmatpush.bf16.msra.mxu0 %v291
      %301 = vmatmul.bf16.gmra.mxu0 %v287
      %v302 = vpop.f32.mrf.mxu0
      %v303 = vadd.f32 0.0, %v302
      %v304 = vpop.f32.mrf.mxu0
      %305 = vdwg.mxu0
      %v307 = vsel %vm285, %v269, 0
      %v310 = vsel %vm289, %v281, 0
      %312 = vmatpush.bf16.msra.mxu0 0
      %313 = vmatpush.bf16.msra.mxu0 0
      %314 = vmatpush.bf16.msra.mxu0 0
      %315 = vmatpush.bf16.msra.mxu0 0
      %316 = vmatpush.bf16.msra.mxu0 0
      %317 = vmatpush.bf16.msra.mxu0 0
      %318 = vmatpush.bf16.msra.mxu0 0
      %319 = vmatpush.bf16.msra.mxu0 %v310
      %320 = vmatmul.bf16.gmra.mxu0 %v307
      %v321 = vpop.f32.mrf.mxu0
      %v322 = vadd.f32 %v303, %v321
      %v323 = vpop.f32.mrf.mxu0
      %324 = vdwg.mxu0
      %v325 = vsel %vm255, 1, 0
      %vm326 = vcmp.eq.s32.totalorder %v325, 1
      %vm327 = vmpackc.low %vm326, %vm326
      %v328 = vsel %vm327, 65537, 0
      %v329 = vperm.slane %v328, 0
      %330 = vrot.lane.b32.xlu0 %v329, 2
      %v331 = vpop.permute.xlu0 %330
      %v332 = vunpack.c.l.b16 %v331
      %v333 = vunpack.c.h.b16 %v331
      %v334 = vunpack.c.l.b16 0
      %v335 = vunpack.c.h.b16 0
      %vm336 = vcmp.ne.s32.totalorder %v332, %v334
      %vm337 = vcmp.ne.s32.totalorder %v333, %v335
      %vm338 = vmpackc.low %vm337, %vm336
      %v339 = vsel %vm338, %v267, 0
      %341 = vrot.lane.b32.xlu0 %v339, 126
      %v342 = vpop.permute.xlu0 %341
      %v344 = vsel %vm285, %v271, 0
      %v347 = vsel %vm289, %v342, 0
      %349 = vmatpush.bf16.msra.mxu0 0
      %350 = vmatpush.bf16.msra.mxu0 0
      %351 = vmatpush.bf16.msra.mxu0 0
      %352 = vmatpush.bf16.msra.mxu0 0
      %353 = vmatpush.bf16.msra.mxu0 0
      %354 = vmatpush.bf16.msra.mxu0 0
      %355 = vmatpush.bf16.msra.mxu0 0
      %356 = vmatpush.bf16.msra.mxu0 %v347
      %357 = vmatmul.bf16.gmra.mxu0 %v344
      %v358 = vpop.f32.mrf.mxu0
      %v359 = vadd.f32 0.0, %v358
      %v360 = vpop.f32.mrf.mxu0
      %361 = vdwg.mxu0
      %v362 = vadd.f32 %v322, %v359
      %v363 = vsel %vm280, 65537, 0
      %v364 = vperm.slane %v363, 0
      %365 = vrot.lane.b32.xlu0 %v364, 8
      %v366 = vpop.permute.xlu0 %365
      %v367 = vunpack.c.l.b16 %v366
      %v368 = vunpack.c.h.b16 %v366
      %v369 = vunpack.c.l.b16 0
      %v370 = vunpack.c.h.b16 0
      %vm371 = vcmp.ne.s32.totalorder %v367, %v369
      %vm372 = vcmp.ne.s32.totalorder %v368, %v370
      %vm373 = vmpackc.low %vm372, %vm371
      %v374 = vsel %vm373, %v267, 0
      %376 = vrot.lane.b32.xlu0 %v374, 120
      %v377 = vpop.permute.xlu0 %376
      %v379 = vsel %vm285, %v272, 0
      %v382 = vsel %vm289, %v377, 0
      %384 = vmatpush.bf16.msra.mxu0 0
      %385 = vmatpush.bf16.msra.mxu0 0
      %386 = vmatpush.bf16.msra.mxu0 0
      %387 = vmatpush.bf16.msra.mxu0 0
      %388 = vmatpush.bf16.msra.mxu0 0
      %389 = vmatpush.bf16.msra.mxu0 0
      %390 = vmatpush.bf16.msra.mxu0 0
      %391 = vmatpush.bf16.msra.mxu0 %v382
      %392 = vmatmul.bf16.gmra.mxu0 %v379
      %v393 = vpop.f32.mrf.mxu0
      %v394 = vadd.f32 0.0, %v393
      %v395 = vpop.f32.mrf.mxu0
      %396 = vdwg.mxu0
      %v397 = vadd.f32 %v362, %v394
      %v399 = vsel %vm285, %v273, 0
      %v402 = vsel %vm289, %v256, 0
      %404 = vmatpush.bf16.msra.mxu0 0
      %405 = vmatpush.bf16.msra.mxu0 0
      %406 = vmatpush.bf16.msra.mxu0 0
      %407 = vmatpush.bf16.msra.mxu0 0
      %408 = vmatpush.bf16.msra.mxu0 0
      %409 = vmatpush.bf16.msra.mxu0 0
      %410 = vmatpush.bf16.msra.mxu0 0
      %411 = vmatpush.bf16.msra.mxu0 %v402
      %412 = vmatmul.bf16.gmra.mxu0 %v399
      %v413 = vpop.f32.mrf.mxu0
      %v414 = vadd.f32 0.0, %v413
      %v415 = vpop.f32.mrf.mxu0
      %416 = vdwg.mxu0
      %v417 = vadd.f32 %v397, %v414
      %418 = vrot.lane.b32.xlu0 %v329, 10
      %v419 = vpop.permute.xlu0 %418
      %v420 = vunpack.c.l.b16 %v419
      %v421 = vunpack.c.h.b16 %v419
      %v422 = vunpack.c.l.b16 0
      %v423 = vunpack.c.h.b16 0
      %vm424 = vcmp.ne.s32.totalorder %v420, %v422
      %vm425 = vcmp.ne.s32.totalorder %v421, %v423
      %vm426 = vmpackc.low %vm425, %vm424
      %v427 = vsel %vm426, %v267, 0
      %429 = vrot.lane.b32.xlu0 %v427, 118
      %v430 = vpop.permute.xlu0 %429
      %v432 = vsel %vm285, %v274, 0
      %v435 = vsel %vm289, %v430, 0
      %437 = vmatpush.bf16.msra.mxu0 0
      %438 = vmatpush.bf16.msra.mxu0 0
      %439 = vmatpush.bf16.msra.mxu0 0
      %440 = vmatpush.bf16.msra.mxu0 0
      %441 = vmatpush.bf16.msra.mxu0 0
      %442 = vmatpush.bf16.msra.mxu0 0
      %443 = vmatpush.bf16.msra.mxu0 0
      %444 = vmatpush.bf16.msra.mxu0 %v435
      %445 = vmatmul.bf16.gmra.mxu0 %v432
      %v446 = vpop.f32.mrf.mxu0
      %v447 = vadd.f32 0.0, %v446
      %v448 = vpop.f32.mrf.mxu0
      %449 = vdwg.mxu0
      %v450 = vadd.f32 %v417, %v447
      %451 = vrot.lane.b32.xlu0 %v364, 16
      %v452 = vpop.permute.xlu0 %451
      %v453 = vunpack.c.l.b16 %v452
      %v454 = vunpack.c.h.b16 %v452
      %v455 = vunpack.c.l.b16 0
      %v456 = vunpack.c.h.b16 0
      %vm457 = vcmp.ne.s32.totalorder %v453, %v455
      %vm458 = vcmp.ne.s32.totalorder %v454, %v456
      %vm459 = vmpackc.low %vm458, %vm457
      %v460 = vsel %vm459, %v267, 0
      %462 = vrot.lane.b32.xlu0 %v460, 112
      %v463 = vpop.permute.xlu0 %462
      %v465 = vsel %vm285, %v275, 0
      %v468 = vsel %vm289, %v463, 0
      %470 = vmatpush.bf16.msra.mxu0 0
      %471 = vmatpush.bf16.msra.mxu0 0
      %472 = vmatpush.bf16.msra.mxu0 0
      %473 = vmatpush.bf16.msra.mxu0 0
      %474 = vmatpush.bf16.msra.mxu0 0
      %475 = vmatpush.bf16.msra.mxu0 0
      %476 = vmatpush.bf16.msra.mxu0 0
      %477 = vmatpush.bf16.msra.mxu0 %v468
      %478 = vmatmul.bf16.gmra.mxu0 %v465
      %v479 = vpop.f32.mrf.mxu0
      %v480 = vadd.f32 0.0, %v479
      %v481 = vpop.f32.mrf.mxu0
      %482 = vdwg.mxu0
      %v483 = vadd.f32 %v450, %v480
      %484 = vrot.lane.b32.xlu0 %v267, 111
      %v485 = vpop.permute.xlu0 %484
      %v487 = vsel %vm285, %v276, 0
      %v490 = vsel %vm289, %v485, 0
      %492 = vmatpush.bf16.msra.mxu0 0
      %493 = vmatpush.bf16.msra.mxu0 0
      %494 = vmatpush.bf16.msra.mxu0 0
      %495 = vmatpush.bf16.msra.mxu0 0
      %496 = vmatpush.bf16.msra.mxu0 0
      %497 = vmatpush.bf16.msra.mxu0 0
      %498 = vmatpush.bf16.msra.mxu0 0
      %499 = vmatpush.bf16.msra.mxu0 %v490
      %500 = vmatmul.bf16.gmra.mxu0 %v487
      %v501 = vpop.f32.mrf.mxu0
      %v502 = vadd.f32 0.0, %v501
      %v503 = vpop.f32.mrf.mxu0
      %504 = vdwg.mxu0
      %v505 = vadd.f32 %v483, %v502
      %506 = vrot.lane.b32.xlu0 %v329, 18
      %v507 = vpop.permute.xlu0 %506
      %v508 = vunpack.c.l.b16 %v507
      %v509 = vunpack.c.h.b16 %v507
      %v510 = vunpack.c.l.b16 0
      %v511 = vunpack.c.h.b16 0
      %vm512 = vcmp.ne.s32.totalorder %v508, %v510
      %vm513 = vcmp.ne.s32.totalorder %v509, %v511
      %vm514 = vmpackc.low %vm513, %vm512
      %v515 = vsel %vm514, %v267, 0
      %517 = vrot.lane.b32.xlu0 %v515, 110
      %v518 = vpop.permute.xlu0 %517
      %v520 = vsel %vm285, %v277, 0
      %v523 = vsel %vm289, %v518, 0
      %525 = vmatpush.bf16.msra.mxu0 0
      %526 = vmatpush.bf16.msra.mxu0 0
      %527 = vmatpush.bf16.msra.mxu0 0
      %528 = vmatpush.bf16.msra.mxu0 0
      %529 = vmatpush.bf16.msra.mxu0 0
      %530 = vmatpush.bf16.msra.mxu0 0
      %531 = vmatpush.bf16.msra.mxu0 0
      %532 = vmatpush.bf16.msra.mxu0 %v523
      %533 = vmatmul.bf16.gmra.mxu0 %v520
      %v534 = vpop.f32.mrf.mxu0
      %v535 = vadd.f32 0.0, %v534
      %v536 = vpop.f32.mrf.mxu0
      %537 = vdwg.mxu0
      %v538 = vadd.f32 %v505, %v535
      %v539 = vld [vmem:[%s232] sm:$0xf]
      %v541 = vunpack.c.l.b16 %v539
      %v542 = vpack.c.b16 %v541, %v541
      %543 = vrot.lane.b32.xlu0 %v542, 9
      %v544 = vpop.permute.xlu0 %543
      %v546 = vsel %vm262, 0, %v544
      %v547 = vsel %vm266, %v546, 0
      %v549 = vld [vmem:[%s3] sm:$0x3]
      %v550 = vld [vmem:[%s3 + $0x2] sm:$0x3]
      %v551 = vld [vmem:[%s3 + $0x4] sm:$0x3]
      %v552 = vld [vmem:[%s3 + $0x6] sm:$0x3]
      %v553 = vld [vmem:[%s3 + $0x8] sm:$0x3]
      %v554 = vld [vmem:[%s3 + $0xa] sm:$0x3]
      %v555 = vld [vmem:[%s3 + $0xc] sm:$0x3]
      %v556 = vld [vmem:[%s3 + $0xe] sm:$0x3]
      %v557 = vld [vmem:[%s3 + $0x10] sm:$0x3]
      %v558 = vsel %vm280, %v547, 0
      %v560 = vsel %vm285, %v549, 0
      %v563 = vsel %vm289, %v558, 0
      %565 = vmatpush.bf16.msra.mxu0 0
      %566 = vmatpush.bf16.msra.mxu0 0
      %567 = vmatpush.bf16.msra.mxu0 0
      %568 = vmatpush.bf16.msra.mxu0 0
      %569 = vmatpush.bf16.msra.mxu0 0
      %570 = vmatpush.bf16.msra.mxu0 0
      %571 = vmatpush.bf16.msra.mxu0 0
      %572 = vmatpush.bf16.msra.mxu0 %v563
      %573 = vmatmul.bf16.gmra.mxu0 %v560
      %v574 = vpop.f32.mrf.mxu0
      %v575 = vadd.f32 0.0, %v574
      %v576 = vpop.f32.mrf.mxu0
      %577 = vdwg.mxu0
      %v578 = vadd.f32 %v538, %v575
      %580 = vrot.lane.b32.xlu0 %v547, 127
      %v581 = vpop.permute.xlu0 %580
      %v583 = vsel %vm285, %v550, 0
      %v586 = vsel %vm289, %v581, 0
      %588 = vmatpush.bf16.msra.mxu0 0
      %589 = vmatpush.bf16.msra.mxu0 0
      %590 = vmatpush.bf16.msra.mxu0 0
      %591 = vmatpush.bf16.msra.mxu0 0
      %592 = vmatpush.bf16.msra.mxu0 0
      %593 = vmatpush.bf16.msra.mxu0 0
      %594 = vmatpush.bf16.msra.mxu0 0
      %595 = vmatpush.bf16.msra.mxu0 %v586
      %596 = vmatmul.bf16.gmra.mxu0 %v583
      %v597 = vpop.f32.mrf.mxu0
      %v598 = vadd.f32 0.0, %v597
      %v599 = vpop.f32.mrf.mxu0
      %600 = vdwg.mxu0
      %v601 = vadd.f32 %v578, %v598
      %v602 = vsel %vm338, %v547, 0
      %604 = vrot.lane.b32.xlu0 %v602, 126
      %v605 = vpop.permute.xlu0 %604
      %v607 = vsel %vm285, %v551, 0
      %v610 = vsel %vm289, %v605, 0
      %612 = vmatpush.bf16.msra.mxu0 0
      %613 = vmatpush.bf16.msra.mxu0 0
      %614 = vmatpush.bf16.msra.mxu0 0
      %615 = vmatpush.bf16.msra.mxu0 0
      %616 = vmatpush.bf16.msra.mxu0 0
      %617 = vmatpush.bf16.msra.mxu0 0
      %618 = vmatpush.bf16.msra.mxu0 0
      %619 = vmatpush.bf16.msra.mxu0 %v610
      %620 = vmatmul.bf16.gmra.mxu0 %v607
      %v621 = vpop.f32.mrf.mxu0
      %v622 = vadd.f32 0.0, %v621
      %v623 = vpop.f32.mrf.mxu0
      %624 = vdwg.mxu0
      %v625 = vadd.f32 %v601, %v622
      %v626 = vsel %vm373, %v547, 0
      %628 = vrot.lane.b32.xlu0 %v626, 120
      %v629 = vpop.permute.xlu0 %628
      %v631 = vsel %vm285, %v552, 0
      %v634 = vsel %vm289, %v629, 0
      %636 = vmatpush.bf16.msra.mxu0 0
      %637 = vmatpush.bf16.msra.mxu0 0
      %638 = vmatpush.bf16.msra.mxu0 0
      %639 = vmatpush.bf16.msra.mxu0 0
      %640 = vmatpush.bf16.msra.mxu0 0
      %641 = vmatpush.bf16.msra.mxu0 0
      %642 = vmatpush.bf16.msra.mxu0 0
      %643 = vmatpush.bf16.msra.mxu0 %v634
      %644 = vmatmul.bf16.gmra.mxu0 %v631
      %v645 = vpop.f32.mrf.mxu0
      %v646 = vadd.f32 0.0, %v645
      %v647 = vpop.f32.mrf.mxu0
      %648 = vdwg.mxu0
      %v649 = vadd.f32 %v625, %v646
      %v651 = vsel %vm285, %v553, 0
      %v654 = vsel %vm289, %v539, 0
      %656 = vmatpush.bf16.msra.mxu0 0
      %657 = vmatpush.bf16.msra.mxu0 0
      %658 = vmatpush.bf16.msra.mxu0 0
      %659 = vmatpush.bf16.msra.mxu0 0
      %660 = vmatpush.bf16.msra.mxu0 0
      %661 = vmatpush.bf16.msra.mxu0 0
      %662 = vmatpush.bf16.msra.mxu0 0
      %663 = vmatpush.bf16.msra.mxu0 %v654
      %664 = vmatmul.bf16.gmra.mxu0 %v651
      %v665 = vpop.f32.mrf.mxu0
      %v666 = vadd.f32 0.0, %v665
      %v667 = vpop.f32.mrf.mxu0
      %668 = vdwg.mxu0
      %v669 = vadd.f32 %v649, %v666
      %v670 = vsel %vm426, %v547, 0
      %672 = vrot.lane.b32.xlu0 %v670, 118
      %v673 = vpop.permute.xlu0 %672
      %v675 = vsel %vm285, %v554, 0
      %v678 = vsel %vm289, %v673, 0
      %680 = vmatpush.bf16.msra.mxu0 0
      %681 = vmatpush.bf16.msra.mxu0 0
      %682 = vmatpush.bf16.msra.mxu0 0
      %683 = vmatpush.bf16.msra.mxu0 0
      %684 = vmatpush.bf16.msra.mxu0 0
      %685 = vmatpush.bf16.msra.mxu0 0
      %686 = vmatpush.bf16.msra.mxu0 0
      %687 = vmatpush.bf16.msra.mxu0 %v678
      %688 = vmatmul.bf16.gmra.mxu0 %v675
      %v689 = vpop.f32.mrf.mxu0
      %v690 = vadd.f32 0.0, %v689
      %v691 = vpop.f32.mrf.mxu0
      %692 = vdwg.mxu0
      %v693 = vadd.f32 %v669, %v690
      %v694 = vsel %vm459, %v547, 0
      %696 = vrot.lane.b32.xlu0 %v694, 112
      %v697 = vpop.permute.xlu0 %696
      %v699 = vsel %vm285, %v555, 0
      %v702 = vsel %vm289, %v697, 0
      %704 = vmatpush.bf16.msra.mxu0 0
      %705 = vmatpush.bf16.msra.mxu0 0
      %706 = vmatpush.bf16.msra.mxu0 0
      %707 = vmatpush.bf16.msra.mxu0 0
      %708 = vmatpush.bf16.msra.mxu0 0
      %709 = vmatpush.bf16.msra.mxu0 0
      %710 = vmatpush.bf16.msra.mxu0 0
      %711 = vmatpush.bf16.msra.mxu0 %v702
      %712 = vmatmul.bf16.gmra.mxu0 %v699
      %v713 = vpop.f32.mrf.mxu0
      %v714 = vadd.f32 0.0, %v713
      %v715 = vpop.f32.mrf.mxu0
      %716 = vdwg.mxu0
      %v717 = vadd.f32 %v693, %v714
      %718 = vrot.lane.b32.xlu0 %v547, 111
      %v719 = vpop.permute.xlu0 %718
      %v721 = vsel %vm285, %v556, 0
      %v724 = vsel %vm289, %v719, 0
      %726 = vmatpush.bf16.msra.mxu0 0
      %727 = vmatpush.bf16.msra.mxu0 0
      %728 = vmatpush.bf16.msra.mxu0 0
      %729 = vmatpush.bf16.msra.mxu0 0
      %730 = vmatpush.bf16.msra.mxu0 0
      %731 = vmatpush.bf16.msra.mxu0 0
      %732 = vmatpush.bf16.msra.mxu0 0
      %733 = vmatpush.bf16.msra.mxu0 %v724
      %734 = vmatmul.bf16.gmra.mxu0 %v721
      %v735 = vpop.f32.mrf.mxu0
      %v736 = vadd.f32 0.0, %v735
      %v737 = vpop.f32.mrf.mxu0
      %738 = vdwg.mxu0
      %v739 = vadd.f32 %v717, %v736
      %v740 = vsel %vm514, %v547, 0
      %742 = vrot.lane.b32.xlu0 %v740, 110
      %v743 = vpop.permute.xlu0 %742
      %v745 = vsel %vm285, %v557, 0
      %v748 = vsel %vm289, %v743, 0
      %750 = vmatpush.bf16.msra.mxu0 0
      %751 = vmatpush.bf16.msra.mxu0 0
      %752 = vmatpush.bf16.msra.mxu0 0
      %753 = vmatpush.bf16.msra.mxu0 0
      %754 = vmatpush.bf16.msra.mxu0 0
      %755 = vmatpush.bf16.msra.mxu0 0
      %756 = vmatpush.bf16.msra.mxu0 0
      %757 = vmatpush.bf16.msra.mxu0 %v748
      %758 = vmatmul.bf16.gmra.mxu0 %v745
      %v759 = vpop.f32.mrf.mxu0
      %v760 = vadd.f32 0.0, %v759
      %v761 = vpop.f32.mrf.mxu0
      %762 = vdwg.mxu0
      %v763 = vadd.f32 %v739, %v760
      %v764 = vld [vmem:[%s4] sm:$0xf]
      %766 = vset.pattern.permute.xlu0 0
      %767 = vperm.xlu0 %766, %v764
      %v768 = vpop.permute.xlu0 %767
      %v770 = vadd.f32 %v763, %v768
      %vm771 = vcmask 519168
      %v772 = vsel %vm771, %v770, 0.0
      %773 = vadd.xlane.f32.xlu0 %v772
      %v774 = vpop.xlane.xlu0 %773
      %v775 = vrcp.pop 64.0
      %v776 = vmul.f32 64.0, %v775
      %v777 = vsub.f32 1.0, %v776
      %v778 = vmul.f32 %v775, %v777
      %v779 = vadd.f32 %v775, %v778
      %vm780 = vweird.f32 %v775
      %v781 = vsel %vm780, %v775, %v779
      %v782 = vmul.f32 %v774, %v781
      %v783 = vsub.f32 %v770, %v782
      %v784 = vmul.f32 %v783, %v783
      %v785 = vsel %vm771, %v784, 0.0
      %786 = vadd.xlane.f32.xlu0 %v785
      %v787 = vpop.xlane.xlu0 %786
      %v788 = vmul.f32 %v787, %v781
      %v789 = vadd.f32 %v788, 1e-05
      %v790 = vrsqrt.pop %v789
      %v791 = vmul.f32 %v790, %v789
      %v792 = vmul.f32 %v791, %v790
      %v793 = vmul.f32 0.5, %v792
      %v794 = vsub.f32 1.5, %v793
      %v795 = vmul.f32 %v790, %v794
      %vm796 = vweird.f32 %v789
      %vm797 = vweird.f32 %v790
      %vm798 = vmor %vm796, %vm797
      %v799 = vsel %vm798, %v790, %v795
      %v800 = vmul.f32 %v783, %v799
      %801 = vset.pattern.permute.xlu0 1
      %802 = vperm.xlu0 %801, %v764
      %v803 = vpop.permute.xlu0 %802
      %v805 = vmul.f32 %v800, %v803
      %806 = vset.pattern.permute.xlu0 2
      %807 = vperm.xlu0 %806, %v764
      %v808 = vpop.permute.xlu0 %807
      %v810 = vadd.f32 %v805, %v808
      %v811 = vmax.f32 %v810, 0.0
      %v812 = vpack.c.bf16 %v811, %v811
      %vm813 = vcmask 517120
      %814 = vst.msk [vmem:[%s236] sm:$0x3] %vm813, %v812
      %p815 = scmp.lt.s32.totalorder %s16, 1
      %s816 = scalar_select %p815, %s16, 1
      %s817 = smul.addr %s816, 2
      %s818 = scalar_lea.vmem %s5, %s817
      // Predicated region
      $region41: #{forward.11} parent=39 // pred_check
        %p819 = pneg %p149
      $region42: #{forward.11} parent=39 // pred_check_branch
        %821 = sbr.rel (%p819) target = $region44
      $region43: #{forward.11} parent=39 // pred_region
        _
      $region44: #{forward.11} parent=39 // pred_fallthru
        _
    $region40: #{forward.11} parent=5 // pred_fallthru
      _
    %p822 = scmp.le.s32.totalorder 2, %s11
    // Predicated region
    $region45: #{forward.11} parent=5 // pred_check
      %p823 = pneg %p822
    $region46: #{forward.11} parent=5 // pred_check_branch
      %825 = sbr.rel (%p823) target = $region48
    $region47: #{forward.11} parent=5 // pred_region
      %s826 = ssub.s32 %s11, 2
      // Predicated region
      $region49: #{forward.11} parent=47 // pred_check
        %p827 = pneg %p155
      $region50: #{forward.11} parent=47 // pred_check_branch
        %829 = sbr.rel (%p827) target = $region52
      $region51: #{forward.11} parent=47 // pred_region
        %p830 = scmp.lt.s32.totalorder %s17, 1
        %s831 = scalar_select %p830, %s17, 1
        %s832 = smul.addr %s831, 2
        %s833 = scalar_lea.vmem %s5, %s832
      $region52: #{forward.11} parent=47 // pred_fallthru
        _
    $region48: #{forward.11} parent=5 // pred_fallthru
      _
  $region6: #{forward.11} parent=0 // loop_footer
    %s15 = sadd.s32 1, %s11
  $region7: #{forward.11} parent=0 // loop_footer_branch
    %10 = sbr.rel target = $region3
  $region8: #{forward.11} parent=0 // loop_exit
    _

// kernel: forward.12
$region0: #{forward.12}
  #allocation0 [shape = 'u32[]', space=smem, size = 0x4, offset = 0x4, fixed_abs, tag = 'smem constant byte address 0x4 - core index']
  #allocation1 [shape = 'u32[72,128]{1,0:T(1,128)}', space=vmem, size = 0x9000, scoped, tag = 'internal scratch']
  %s0 = inlined_call_operand.vmem [shape: bf16[2,4,256], index: 0, kind: input, shape index: {}]
  %s1 = inlined_call_operand.vmem [shape: bf16[2,9,4,4], index: 1, kind: input, shape index: {}]
  %s2 = inlined_call_operand.vmem [shape: f32[4,3], index: 2, kind: input, shape index: {}]
  %s3 = inlined_call_operand.vmem [shape: bf16[2,4,256], index: 3, kind: output, shape index: {}]
  %s4 = sld [smem:[#allocation0]]
  $region45: #{forward.12} parent=0
    _
  %s6 = ssub.s32 1, %s4
  %s7 = scalar_select 0, %s6, %s4
  loop: start=0, step=1, limit=4
  $region2: #{forward.12} parent=0 // loop_pre_header
    _
  $region3: #{forward.12} parent=0 // loop_header
    %s9 = sphi 0, %s13
    %p10 = scmp.ge.s32.totalorder %s9, 4
    %s19 = sphi 0, %s21
    %s22 = sphi 0, %s19
    %s23 = sphi 0, %s22
    %s39 = sphi 0, %s23
    %s45 = sphi 0, %s47
    %s48 = sphi 0, %s45
    %s49 = sphi 0, %s48
    %s65 = sphi 0, %s49
    %s69 = sphi 0, %s69
    %s71 = sphi 0, %s69
    %s72 = sphi 0, %s71
    %s86 = sphi 0, %s72
    %s92 = sphi 0, %s94
    %s95 = sphi 0, %s92
    %s96 = sphi 0, %s95
    %s112 = sphi 0, %s96
  $region4: #{forward.12} parent=0 // loop_header_branch
    %12 = sbr.rel (%p10) target = $region8
  $region5: #{forward.12} parent=0 // loop_body
    %s14 = ssub.s32 %s9, 1
    %s15 = ssub.s32 %s9, 2
    %s16 = sadd.s32 %s9, 1
    %s17 = ssub.s32 %s9, %s16
    %p18 = scmp.eq.s32.totalorder %s17, 0
    %s20 = sadd.s32 %s19, 1
    %s21 = scalar_select %p18, %s19, %s20
    %p24 = pneg %p18
    %p25 = scmp.eq.s32.totalorder %s9, 1
    %p26 = por %p24, %p25
    %p27 = scmp.ne.s32.totalorder %s19, %s22
    %p28 = scmp.eq.s32.totalorder %s9, 0
    %p29 = por %p27, %p28
    %p30 = scmp.ne.s32.totalorder %s19, %s22
    %p31 = scmp.eq.s32.totalorder %s14, 1
    %p32 = por %p30, %p31
    %p33 = scmp.ne.s32.totalorder %s22, %s23
    %p34 = scmp.eq.s32.totalorder %s14, 0
    %p35 = por %p33, %p34
    %p36 = scmp.ne.s32.totalorder %s22, %s23
    %p37 = scmp.eq.s32.totalorder %s15, 1
    %p38 = por %p36, %p37
    %p40 = scmp.ne.s32.totalorder %s23, %s39
    %p41 = scmp.eq.s32.totalorder %s15, 0
    %p42 = por %p40, %p41
    %s43 = ssub.s32 %s9, %s16
    %p44 = scmp.eq.s32.totalorder %s43, 0
    %s46 = sadd.s32 %s45, 1
    %s47 = scalar_select %p44, %s45, %s46
    %p50 = pneg %p44
    %p51 = scmp.eq.s32.totalorder %s9, 1
    %p52 = por %p50, %p51
    %p53 = scmp.ne.s32.totalorder %s45, %s48
    %p54 = scmp.eq.s32.totalorder %s9, 0
    %p55 = por %p53, %p54
    %p56 = scmp.ne.s32.totalorder %s45, %s48
    %p57 = scmp.eq.s32.totalorder %s14, 1
    %p58 = por %p56, %p57
    %p59 = scmp.ne.s32.totalorder %s48, %s49
    %p60 = scmp.eq.s32.totalorder %s14, 0
    %p61 = por %p59, %p60
    %p62 = scmp.ne.s32.totalorder %s48, %s49
    %p63 = scmp.eq.s32.totalorder %s15, 1
    %p64 = por %p62, %p63
    %p66 = scmp.ne.s32.totalorder %s49, %s65
    %p67 = scmp.eq.s32.totalorder %s15, 0
    %p68 = por %p66, %p67
    %s70 = sadd.s32 %s69, 1
    %p73 = scmp.eq.s32.totalorder %s9, 1
    %p74 = scmp.ne.s32.totalorder %s69, %s71
    %p75 = scmp.eq.s32.totalorder %s9, 0
    %p76 = por %p74, %p75
    %p77 = scmp.ne.s32.totalorder %s69, %s71
    %p78 = scmp.eq.s32.totalorder %s14, 1
    %p79 = por %p77, %p78
    %p80 = scmp.ne.s32.totalorder %s71, %s72
    %p81 = scmp.eq.s32.totalorder %s14, 0
    %p82 = por %p80, %p81
    %p83 = scmp.ne.s32.totalorder %s71, %s72
    %p84 = scmp.eq.s32.totalorder %s15, 1
    %p85 = por %p83, %p84
    %p87 = scmp.ne.s32.totalorder %s72, %s86
    %p88 = scmp.eq.s32.totalorder %s15, 0
    %p89 = por %p87, %p88
    %s90 = ssub.s32 %s9, %s16
    %p91 = scmp.eq.s32.totalorder %s90, 0
    %s93 = sadd.s32 %s92, 1
    %s94 = scalar_select %p91, %s92, %s93
    %p97 = pneg %p91
    %p98 = scmp.eq.s32.totalorder %s9, 1
    %p99 = por %p97, %p98
    %p100 = scmp.ne.s32.totalorder %s92, %s95
    %p101 = scmp.eq.s32.totalorder %s9, 0
    %p102 = por %p100, %p101
    %p103 = scmp.ne.s32.totalorder %s92, %s95
    %p104 = scmp.eq.s32.totalorder %s14, 1
    %p105 = por %p103, %p104
    %p106 = scmp.ne.s32.totalorder %s95, %s96
    %p107 = scmp.eq.s32.totalorder %s14, 0
    %p108 = por %p106, %p107
    %p109 = scmp.ne.s32.totalorder %s95, %s96
    %p110 = scmp.eq.s32.totalorder %s15, 1
    %p111 = por %p109, %p110
    %p113 = scmp.ne.s32.totalorder %s96, %s112
    %p114 = scmp.eq.s32.totalorder %s15, 0
    %p115 = por %p113, %p114
    %p116 = scmp.le.s32.totalorder 1, %s9
    %p117 = scmp.lt.s32.totalorder %s9, 3
    %p118 = pnand %p116, %p117
    %p119 = pneg %p118
    // Predicated region
    $region9: #{forward.12} parent=5 // pred_check
      _
    $region10: #{forward.12} parent=5 // pred_check_branch
      %121 = sbr.rel (%p118) target = $region12
    $region11: #{forward.12} parent=5 // pred_region
      %s122 = ssub.s32 %s9, 1
      // Predicated region
      $region13: #{forward.12} parent=11 // pred_check
        %p123 = pneg %p82
      $region14: #{forward.12} parent=11 // pred_check_branch
        %125 = sbr.rel (%p123) target = $region16
      $region15: #{forward.12} parent=11 // pred_region
        _
      $region16: #{forward.12} parent=11 // pred_fallthru
        _
    $region12: #{forward.12} parent=5 // pred_fallthru
      _
    %p126 = scmp.lt.s32.totalorder %s9, 2
    // Predicated region
    $region17: #{forward.12} parent=5 // pred_check
      %p127 = pneg %p126
    $region18: #{forward.12} parent=5 // pred_check_branch
      %129 = sbr.rel (%p127) target = $region20
    $region19: #{forward.12} parent=5 // pred_region
      // Predicated region
      $region21: #{forward.12} parent=19 // pred_check
        %p130 = pneg %p29
      $region22: #{forward.12} parent=19 // pred_check_branch
        %132 = sbr.rel (%p130) target = $region24
      $region23: #{forward.12} parent=19 // pred_region
        %p133 = scmp.lt.s32.totalorder %s9, 1
        %s134 = scalar_select %p133, %s9, 1
        %s135 = smul.addr %s134, 2
        %s136 = smul.addr %s135, 2
        %s137 = scalar_lea.vmem %s0, %s136
      $region24: #{forward.12} parent=19 // pred_fallthru
        _
      // Predicated region
      $region25: #{forward.12} parent=19 // pred_check
        %p138 = pneg %p55
      $region26: #{forward.12} parent=19 // pred_check_branch
        %140 = sbr.rel (%p138) target = $region28
      $region27: #{forward.12} parent=19 // pred_region
        %p141 = scmp.lt.s32.totalorder %s9, 1
        %s142 = scalar_select %p141, %s9, 1
        %s143 = smul.addr %s142, 9
        %s144 = smul.addr %s143, 2
        %s145 = scalar_lea.vmem %s1, %s144
      $region28: #{forward.12} parent=19 // pred_fallthru
        _
    $region20: #{forward.12} parent=5 // pred_fallthru
      _
    %p146 = scmp.le.s32.totalorder 1, %s9
    %p147 = scmp.lt.s32.totalorder %s9, 3
    %p148 = pnand %p146, %p147
    %p149 = pneg %p148
    // Predicated region
    $region29: #{forward.12} parent=5 // pred_check
      _
    $region30: #{forward.12} parent=5 // pred_check_branch
      %151 = sbr.rel (%p148) target = $region32
    $region31: #{forward.12} parent=5 // pred_region
      %s152 = ssub.s32 %s9, 1
      %p153 = scmp.lt.s32.totalorder %s14, 1
      %s154 = scalar_select %p153, %s14, 1
      %s155 = smul.addr %s154, 2
      %s156 = smul.addr %s155, 2
      %s157 = scalar_lea.vmem %s0, %s156
      %p158 = pneg %p35
      %p159 = pneg %p32
      %p160 = scmp.lt.s32.totalorder %s14, 1
      %s161 = scalar_select %p160, %s14, 1
      %s162 = smul.addr %s161, 9
      %s163 = smul.addr %s162, 2
      %s164 = scalar_lea.vmem %s1, %s163
      %p165 = pneg %p61
      %p166 = pneg %p58
      %p167 = pneg %p82
      %p168 = pneg %p79
      %p169 = pneg %p108
      %p170 = pneg %p105
      %p171 = scmp.lt.s32.totalorder %s14, 1
      %s172 = scalar_select %p171, %s14, 1
      %s173 = smul.addr %s172, 2
      %s174 = smul.addr %s173, 2
      %s175 = scalar_lea.vmem %s3, %s174
      %p176 = scmp.lt.s32.totalorder %s14, 1
      %s177 = scalar_select %p176, %s14, 1
      %s178 = smul.addr %s177, 2
      %s179 = smul.addr %s178, 2
      %s180 = scalar_lea.vmem %s0, %s179
      %p181 = scmp.lt.s32.totalorder %s14, 1
      %s182 = scalar_select %p181, %s14, 1
      %s183 = smul.addr %s182, 9
      %s184 = smul.addr %s183, 2
      %s185 = scalar_lea.vmem %s1, %s184
      %p186 = scmp.lt.s32.totalorder %s14, 1
      %s187 = scalar_select %p186, %s14, 1
      %s188 = smul.addr %s187, 2
      %s189 = smul.addr %s188, 2
      %s190 = scalar_lea.vmem %s3, %s189
      %v194 = vlaneseq
      %v195 = vand.u32 %v194, 127
      %v196 = vadd.s32 %v195, 128
      %vm197 = vcmp.lt.s32.totalorder %v195, 0
      %v198 = vsub.s32 0, %v195
      %v199 = vsel %vm197, %v198, %v195
      %v200 = vshrl.u32 %v199, 4
      %v201 = vand.u32 %v199, 15
      %v202 = vsub.s32 0, %v201
      %v203 = vsel %vm197, %v202, %v201
      %vm204 = vcmp.lt.s32.totalorder %v196, 0
      %v205 = vsub.s32 0, %v196
      %v206 = vsel %vm204, %v205, %v196
      %v207 = vshrl.u32 %v206, 4
      %v208 = vand.u32 %v206, 15
      %v209 = vsub.s32 0, %v208
      %v210 = vsel %vm204, %v209, %v208
      %vm211 = vcmp.ne.s32.totalorder %v203, 0
      %vm212 = vcmp.ne.s32.totalorder %v210, 0
      %vm213 = vcmp.lt.s32.totalorder %v203, 0
      %vm214 = vcmp.lt.s32.totalorder %v210, 0
      %vm215 = vmand %vm213, %vm211
      %vm216 = vmand %vm214, %vm212
      %v217 = vadd.s32 %v203, 16
      %v218 = vadd.s32 %v210, 16
      %v219 = vsel %vm215, %v217, %v203
      %v220 = vsel %vm216, %v218, %v210
      %vm221 = vcmp.gt.s32.totalorder %v219, 0
      %vm222 = vcmp.gt.s32.totalorder %v220, 0
      %vm223 = vcmp.lt.s32.totalorder %v219, 15
      %vm224 = vcmp.lt.s32.totalorder %v220, 15
      %v225 = vld [vmem:[%s180] sm:$0xf]
      %227 = vst [vmem:[#allocation1] ss:$4 sm:$0xff] %v225
      %v228 = vld.sshfl [vmem:[#allocation1] sm:$0xff pattern:$0x73625140]
      %v230 = vld.sshfl [vmem:[#allocation1 + $0x8] sm:$0xff pattern:$0x73625140]
      %232 = vrot.lane.b32.xlu0 %v228, 17
      %v233 = vpop.permute.xlu0 %232
      %234 = vrot.lane.b32.xlu0 %v230, 17
      %v235 = vpop.permute.xlu0 %234
      %vm236 = vcmask 138240
      %v237 = vsel %vm236, %v233, %v235
      %vm239 = vcmask 138240
      %v242 = vsel %vm239, 0, %v233
      %v245 = vsel %vm239, %v235, 0
      %v247 = vld [vmem:[%s185] sm:$0x3]
      %v248 = vld [vmem:[%s185 + $0x2] sm:$0x3]
      %v249 = vld [vmem:[%s185 + $0x4] sm:$0x3]
      %v250 = vld [vmem:[%s185 + $0x6] sm:$0x3]
      %v251 = vld [vmem:[%s185 + $0x8] sm:$0x3]
      %v252 = vld [vmem:[%s185 + $0xa] sm:$0x3]
      %v253 = vld [vmem:[%s185 + $0xc] sm:$0x3]
      %v254 = vld [vmem:[%s185 + $0xe] sm:$0x3]
      %v255 = vld [vmem:[%s185 + $0x10] sm:$0x3]
      %v256 = vsel %vm221, 1, 0
      %v257 = vsel %vm222, 1, 0
      %vm258 = vcmp.eq.s32.totalorder %v256, 1
      %vm259 = vcmp.eq.s32.totalorder %v257, 1
      %vm260 = vmpackc.low %vm259, %vm258
      %v261 = vsel %vm260, 65537, 0
      %v262 = vperm.slane %v261, 0
      %v263 = vperm.slane %v261, 4
      %v264 = vunpack.c.l.b16 %v262
      %v265 = vunpack.c.h.b16 %v262
      %v266 = vunpack.c.l.b16 0
      %v267 = vunpack.c.h.b16 0
      %vm268 = vcmp.ne.s32.totalorder %v264, %v266
      %vm269 = vcmp.ne.s32.totalorder %v265, %v267
      %vm270 = vmpackc.low %vm269, %vm268
      %v271 = vunpack.c.l.b16 %v263
      %v272 = vunpack.c.h.b16 %v263
      %v273 = vunpack.c.l.b16 0
      %v274 = vunpack.c.h.b16 0
      %vm275 = vcmp.ne.s32.totalorder %v271, %v273
      %vm276 = vcmp.ne.s32.totalorder %v272, %v274
      %vm277 = vmpackc.low %vm276, %vm275
      %v278 = vsel %vm270, %v242, 0
      %v279 = vsel %vm277, %v237, 0
      %282 = vrot.lane.b32.xlu0 %v242, 127
      %v283 = vpop.permute.xlu0 %282
      %284 = vrot.lane.b32.xlu0 %v237, 127
      %v285 = vpop.permute.xlu0 %284
      %286 = vrot.lane.b32.xlu0 %v245, 127
      %v287 = vpop.permute.xlu0 %286
      %vm288 = vcmask 1039360
      %v289 = vsel %vm288, %v283, %v285
      %v290 = vsel %vm288, %v285, %v287
      %vm291 = vcmask 31744
      %v293 = vsel %vm291, %v248, 0
      %vm295 = vcmask 1041408
      %v297 = vsel %vm295, %v289, 0
      %v300 = vsel %vm295, %v290, 0
      %302 = vmatpush.bf16.msra.mxu0 0
      %303 = vmatpush.bf16.msra.mxu0 0
      %304 = vmatpush.bf16.msra.mxu0 0
      %305 = vmatpush.bf16.msra.mxu0 0
      %306 = vmatpush.bf16.msra.mxu0 0
      %307 = vmatpush.bf16.msra.mxu0 0
      %308 = vmatpush.bf16.msra.mxu0 0
      %309 = vmatpush.bf16.msra.mxu0 %v297
      %310 = vmatmul.bf16.gmra.mxu0 %v293
      %v311 = vpop.f32.mrf.mxu0
      %v312 = vadd.f32 0.0, %v311
      %v313 = vpop.f32.mrf.mxu0
      %314 = vdwg.mxu0
      %315 = vmatpush.bf16.msra.mxu0 0
      %316 = vmatpush.bf16.msra.mxu0 0
      %317 = vmatpush.bf16.msra.mxu0 0
      %318 = vmatpush.bf16.msra.mxu0 0
      %319 = vmatpush.bf16.msra.mxu0 0
      %320 = vmatpush.bf16.msra.mxu0 0
      %321 = vmatpush.bf16.msra.mxu0 0
      %322 = vmatpush.bf16.msra.mxu0 %v300
      %323 = vmatmul.bf16.gmra.mxu0 %v293
      %v324 = vpop.f32.mrf.mxu0
      %v325 = vadd.f32 0.0, %v324
      %v326 = vpop.f32.mrf.mxu0
      %327 = vdwg.mxu0
      %v329 = vsel %vm291, %v247, 0
      %v332 = vsel %vm295, %v278, 0
      %v335 = vsel %vm295, %v279, 0
      %337 = vmatpush.bf16.msra.mxu0 0
      %338 = vmatpush.bf16.msra.mxu0 0
      %339 = vmatpush.bf16.msra.mxu0 0
      %340 = vmatpush.bf16.msra.mxu0 0
      %341 = vmatpush.bf16.msra.mxu0 0
      %342 = vmatpush.bf16.msra.mxu0 0
      %343 = vmatpush.bf16.msra.mxu0 0
      %344 = vmatpush.bf16.msra.mxu0 %v332
      %345 = vmatmul.bf16.gmra.mxu0 %v329
      %v346 = vpop.f32.mrf.mxu0
      %v347 = vadd.f32 %v312, %v346
      %v348 = vpop.f32.mrf.mxu0
      %349 = vdwg.mxu0
      %350 = vmatpush.bf16.msra.mxu0 0
      %351 = vmatpush.bf16.msra.mxu0 0
      %352 = vmatpush.bf16.msra.mxu0 0
      %353 = vmatpush.bf16.msra.mxu0 0
      %354 = vmatpush.bf16.msra.mxu0 0
      %355 = vmatpush.bf16.msra.mxu0 0
      %356 = vmatpush.bf16.msra.mxu0 0
      %357 = vmatpush.bf16.msra.mxu0 %v335
      %358 = vmatmul.bf16.gmra.mxu0 %v329
      %v359 = vpop.f32.mrf.mxu0
      %v360 = vadd.f32 %v325, %v359
      %v361 = vpop.f32.mrf.mxu0
      %362 = vdwg.mxu0
      %v363 = vsel %vm223, 1, 0
      %v364 = vsel %vm224, 1, 0
      %vm365 = vcmp.eq.s32.totalorder %v363, 1
      %vm366 = vcmp.eq.s32.totalorder %v364, 1
      %vm367 = vmpackc.low %vm366, %vm365
      %v368 = vsel %vm367, 65537, 0
      %v369 = vperm.slane %v368, 0
      %v370 = vperm.slane %v368, 4
      %371 = vrot.lane.b32.xlu0 %v369, 2
      %v372 = vpop.permute.xlu0 %371
      %373 = vrot.lane.b32.xlu0 %v370, 2
      %v374 = vpop.permute.xlu0 %373
      %vm375 = vcmask 15360
      %v376 = vsel %vm375, %v372, %v374
      %v377 = vunpack.c.l.b16 %v372
      %v378 = vunpack.c.h.b16 %v372
      %v379 = vunpack.c.l.b16 0
      %v380 = vunpack.c.h.b16 0
      %vm381 = vcmp.ne.s32.totalorder %v377, %v379
      %vm382 = vcmp.ne.s32.totalorder %v378, %v380
      %vm383 = vmpackc.low %vm382, %vm381
      %v384 = vunpack.c.l.b16 %v376
      %v385 = vunpack.c.h.b16 %v376
      %v386 = vunpack.c.l.b16 0
      %v387 = vunpack.c.h.b16 0
      %vm388 = vcmp.ne.s32.totalorder %v384, %v386
      %vm389 = vcmp.ne.s32.totalorder %v385, %v387
      %vm390 = vmpackc.low %vm389, %vm388
      %v391 = vunpack.c.l.b16 %v374
      %v392 = vunpack.c.h.b16 %v374
      %v393 = vunpack.c.l.b16 0
      %v394 = vunpack.c.h.b16 0
      %vm395 = vcmp.ne.s32.totalorder %v391, %v393
      %vm396 = vcmp.ne.s32.totalorder %v392, %v394
      %vm397 = vmpackc.low %vm396, %vm395
      %v398 = vsel %vm383, %v242, 0
      %v399 = vsel %vm390, %v237, 0
      %v400 = vsel %vm397, %v245, 0
      %404 = vrot.lane.b32.xlu0 %v398, 126
      %v405 = vpop.permute.xlu0 %404
      %406 = vrot.lane.b32.xlu0 %v399, 126
      %v407 = vpop.permute.xlu0 %406
      %408 = vrot.lane.b32.xlu0 %v400, 126
      %v409 = vpop.permute.xlu0 %408
      %vm410 = vcmask 1031168
      %v411 = vsel %vm410, %v405, %v407
      %v412 = vsel %vm410, %v407, %v409
      %v414 = vsel %vm291, %v249, 0
      %v417 = vsel %vm295, %v411, 0
      %v420 = vsel %vm295, %v412, 0
      %422 = vmatpush.bf16.msra.mxu0 0
      %423 = vmatpush.bf16.msra.mxu0 0
      %424 = vmatpush.bf16.msra.mxu0 0
      %425 = vmatpush.bf16.msra.mxu0 0
      %426 = vmatpush.bf16.msra.mxu0 0
      %427 = vmatpush.bf16.msra.mxu0 0
      %428 = vmatpush.bf16.msra.mxu0 0
      %429 = vmatpush.bf16.msra.mxu0 %v417
      %430 = vmatmul.bf16.gmra.mxu0 %v414
      %v431 = vpop.f32.mrf.mxu0
      %v432 = vadd.f32 0.0, %v431
      %v433 = vpop.f32.mrf.mxu0
      %434 = vdwg.mxu0
      %435 = vmatpush.bf16.msra.mxu0 0
      %436 = vmatpush.bf16.msra.mxu0 0
      %437 = vmatpush.bf16.msra.mxu0 0
      %438 = vmatpush.bf16.msra.mxu0 0
      %439 = vmatpush.bf16.msra.mxu0 0
      %440 = vmatpush.bf16.msra.mxu0 0
      %441 = vmatpush.bf16.msra.mxu0 0
      %442 = vmatpush.bf16.msra.mxu0 %v420
      %443 = vmatmul.bf16.gmra.mxu0 %v414
      %v444 = vpop.f32.mrf.mxu0
      %v445 = vadd.f32 0.0, %v444
      %v446 = vpop.f32.mrf.mxu0
      %447 = vdwg.mxu0
      %v448 = vadd.f32 %v347, %v432
      %v449 = vadd.f32 %v360, %v445
      %450 = vrot.lane.b32.xlu0 %v262, 16
      %v451 = vpop.permute.xlu0 %450
      %452 = vrot.lane.b32.xlu0 %v263, 16
      %v453 = vpop.permute.xlu0 %452
      %vm454 = vcmask 130048
      %v455 = vsel %vm454, %v451, %v453
      %v456 = vunpack.c.l.b16 %v451
      %v457 = vunpack.c.h.b16 %v451
      %v458 = vunpack.c.l.b16 0
      %v459 = vunpack.c.h.b16 0
      %vm460 = vcmp.ne.s32.totalorder %v456, %v458
      %vm461 = vcmp.ne.s32.totalorder %v457, %v459
      %vm462 = vmpackc.low %vm461, %vm460
      %v463 = vunpack.c.l.b16 %v455
      %v464 = vunpack.c.h.b16 %v455
      %v465 = vunpack.c.l.b16 0
      %v466 = vunpack.c.h.b16 0
      %vm467 = vcmp.ne.s32.totalorder %v463, %v465
      %vm468 = vcmp.ne.s32.totalorder %v464, %v466
      %vm469 = vmpackc.low %vm468, %vm467
      %v470 = vunpack.c.l.b16 %v453
      %v471 = vunpack.c.h.b16 %v453
      %v472 = vunpack.c.l.b16 0
      %v473 = vunpack.c.h.b16 0
      %vm474 = vcmp.ne.s32.totalorder %v470, %v472
      %vm475 = vcmp.ne.s32.totalorder %v471, %v473
      %vm476 = vmpackc.low %vm475, %vm474
      %v477 = vsel %vm462, %v242, 0
      %v478 = vsel %vm469, %v237, 0
      %v479 = vsel %vm476, %v245, 0
      %483 = vrot.lane.b32.xlu0 %v477, 112
      %v484 = vpop.permute.xlu0 %483
      %485 = vrot.lane.b32.xlu0 %v478, 112
      %v486 = vpop.permute.xlu0 %485
      %487 = vrot.lane.b32.xlu0 %v479, 112
      %v488 = vpop.permute.xlu0 %487
      %vm489 = vcmask 916480
      %v490 = vsel %vm489, %v484, %v486
      %v491 = vsel %vm489, %v486, %v488
      %v493 = vsel %vm291, %v250, 0
      %v496 = vsel %vm295, %v490, 0
      %v499 = vsel %vm295, %v491, 0
      %501 = vmatpush.bf16.msra.mxu0 0
      %502 = vmatpush.bf16.msra.mxu0 0
      %503 = vmatpush.bf16.msra.mxu0 0
      %504 = vmatpush.bf16.msra.mxu0 0
      %505 = vmatpush.bf16.msra.mxu0 0
      %506 = vmatpush.bf16.msra.mxu0 0
      %507 = vmatpush.bf16.msra.mxu0 0
      %508 = vmatpush.bf16.msra.mxu0 %v496
      %509 = vmatmul.bf16.gmra.mxu0 %v493
      %v510 = vpop.f32.mrf.mxu0
      %v511 = vadd.f32 0.0, %v510
      %v512 = vpop.f32.mrf.mxu0
      %513 = vdwg.mxu0
      %514 = vmatpush.bf16.msra.mxu0 0
      %515 = vmatpush.bf16.msra.mxu0 0
      %516 = vmatpush.bf16.msra.mxu0 0
      %517 = vmatpush.bf16.msra.mxu0 0
      %518 = vmatpush.bf16.msra.mxu0 0
      %519 = vmatpush.bf16.msra.mxu0 0
      %520 = vmatpush.bf16.msra.mxu0 0
      %521 = vmatpush.bf16.msra.mxu0 %v499
      %522 = vmatmul.bf16.gmra.mxu0 %v493
      %v523 = vpop.f32.mrf.mxu0
      %v524 = vadd.f32 0.0, %v523
      %v525 = vpop.f32.mrf.mxu0
      %526 = vdwg.mxu0
      %v527 = vadd.f32 %v448, %v511
      %v528 = vadd.f32 %v449, %v524
      %529 = vst [vmem:[#allocation1] ss:$4 sm:$0xff] %v225
      %v530 = vld.sshfl [vmem:[#allocation1] sm:$0xff pattern:$0x73625140]
      %v531 = vld.sshfl [vmem:[#allocation1 + $0x8] sm:$0xff pattern:$0x73625140]
      %v533 = vsel %vm291, %v251, 0
      %v535 = vsel %vm295, %v530, 0
      %v537 = vsel %vm295, %v531, 0
      %539 = vmatpush.bf16.msra.mxu0 0
      %540 = vmatpush.bf16.msra.mxu0 0
      %541 = vmatpush.bf16.msra.mxu0 0
      %542 = vmatpush.bf16.msra.mxu0 0
      %543 = vmatpush.bf16.msra.mxu0 0
      %544 = vmatpush.bf16.msra.mxu0 0
      %545 = vmatpush.bf16.msra.mxu0 0
      %546 = vmatpush.bf16.msra.mxu0 %v535
      %547 = vmatmul.bf16.gmra.mxu0 %v533
      %v548 = vpop.f32.mrf.mxu0
      %v549 = vadd.f32 0.0, %v548
      %v550 = vpop.f32.mrf.mxu0
      %551 = vdwg.mxu0
      %552 = vmatpush.bf16.msra.mxu0 0
      %553 = vmatpush.bf16.msra.mxu0 0
      %554 = vmatpush.bf16.msra.mxu0 0
      %555 = vmatpush.bf16.msra.mxu0 0
      %556 = vmatpush.bf16.msra.mxu0 0
      %557 = vmatpush.bf16.msra.mxu0 0
      %558 = vmatpush.bf16.msra.mxu0 0
      %559 = vmatpush.bf16.msra.mxu0 %v537
      %560 = vmatmul.bf16.gmra.mxu0 %v533
      %v561 = vpop.f32.mrf.mxu0
      %v562 = vadd.f32 0.0, %v561
      %v563 = vpop.f32.mrf.mxu0
      %564 = vdwg.mxu0
      %v565 = vadd.f32 %v527, %v549
      %v566 = vadd.f32 %v528, %v562
      %567 = vrot.lane.b32.xlu0 %v369, 18
      %v568 = vpop.permute.xlu0 %567
      %569 = vrot.lane.b32.xlu0 %v370, 18
      %v570 = vpop.permute.xlu0 %569
      %vm571 = vcmask 146432
      %v572 = vsel %vm571, %v568, %v570
      %v573 = vunpack.c.l.b16 %v568
      %v574 = vunpack.c.h.b16 %v568
      %v575 = vunpack.c.l.b16 0
      %v576 = vunpack.c.h.b16 0
      %vm577 = vcmp.ne.s32.totalorder %v573, %v575
      %vm578 = vcmp.ne.s32.totalorder %v574, %v576
      %vm579 = vmpackc.low %vm578, %vm577
      %v580 = vunpack.c.l.b16 %v572
      %v581 = vunpack.c.h.b16 %v572
      %v582 = vunpack.c.l.b16 0
      %v583 = vunpack.c.h.b16 0
      %vm584 = vcmp.ne.s32.totalorder %v580, %v582
      %vm585 = vcmp.ne.s32.totalorder %v581, %v583
      %vm586 = vmpackc.low %vm585, %vm584
      %v587 = vunpack.c.l.b16 %v570
      %v588 = vunpack.c.h.b16 %v570
      %v589 = vunpack.c.l.b16 0
      %v590 = vunpack.c.h.b16 0
      %vm591 = vcmp.ne.s32.totalorder %v587, %v589
      %vm592 = vcmp.ne.s32.totalorder %v588, %v590
      %vm593 = vmpackc.low %vm592, %vm591
      %v594 = vsel %vm579, %v242, 0
      %v595 = vsel %vm586, %v237, 0
      %v596 = vsel %vm593, %v245, 0
      %600 = vrot.lane.b32.xlu0 %v594, 110
      %v601 = vpop.permute.xlu0 %600
      %602 = vrot.lane.b32.xlu0 %v595, 110
      %v603 = vpop.permute.xlu0 %602
      %604 = vrot.lane.b32.xlu0 %v596, 110
      %v605 = vpop.permute.xlu0 %604
      %vm606 = vcmask 900096
      %v607 = vsel %vm606, %v601, %v603
      %v608 = vsel %vm606, %v603, %v605
      %v610 = vsel %vm291, %v252, 0
      %v613 = vsel %vm295, %v607, 0
      %v616 = vsel %vm295, %v608, 0
      %618 = vmatpush.bf16.msra.mxu0 0
      %619 = vmatpush.bf16.msra.mxu0 0
      %620 = vmatpush.bf16.msra.mxu0 0
      %621 = vmatpush.bf16.msra.mxu0 0
      %622 = vmatpush.bf16.msra.mxu0 0
      %623 = vmatpush.bf16.msra.mxu0 0
      %624 = vmatpush.bf16.msra.mxu0 0
      %625 = vmatpush.bf16.msra.mxu0 %v613
      %626 = vmatmul.bf16.gmra.mxu0 %v610
      %v627 = vpop.f32.mrf.mxu0
      %v628 = vadd.f32 0.0, %v627
      %v629 = vpop.f32.mrf.mxu0
      %630 = vdwg.mxu0
      %631 = vmatpush.bf16.msra.mxu0 0
      %632 = vmatpush.bf16.msra.mxu0 0
      %633 = vmatpush.bf16.msra.mxu0 0
      %634 = vmatpush.bf16.msra.mxu0 0
      %635 = vmatpush.bf16.msra.mxu0 0
      %636 = vmatpush.bf16.msra.mxu0 0
      %637 = vmatpush.bf16.msra.mxu0 0
      %638 = vmatpush.bf16.msra.mxu0 %v616
      %639 = vmatmul.bf16.gmra.mxu0 %v610
      %v640 = vpop.f32.mrf.mxu0
      %v641 = vadd.f32 0.0, %v640
      %v642 = vpop.f32.mrf.mxu0
      %643 = vdwg.mxu0
      %v644 = vadd.f32 %v565, %v628
      %v645 = vadd.f32 %v566, %v641
      %646 = vrot.lane.b32.xlu0 %v262, 32
      %v647 = vpop.permute.xlu0 %646
      %648 = vrot.lane.b32.xlu0 %v263, 32
      %v649 = vpop.permute.xlu0 %648
      %vm650 = vcmask 261120
      %v651 = vsel %vm650, %v647, %v649
      %v652 = vunpack.c.l.b16 %v647
      %v653 = vunpack.c.h.b16 %v647
      %v654 = vunpack.c.l.b16 0
      %v655 = vunpack.c.h.b16 0
      %vm656 = vcmp.ne.s32.totalorder %v652, %v654
      %vm657 = vcmp.ne.s32.totalorder %v653, %v655
      %vm658 = vmpackc.low %vm657, %vm656
      %v659 = vunpack.c.l.b16 %v651
      %v660 = vunpack.c.h.b16 %v651
      %v661 = vunpack.c.l.b16 0
      %v662 = vunpack.c.h.b16 0
      %vm663 = vcmp.ne.s32.totalorder %v659, %v661
      %vm664 = vcmp.ne.s32.totalorder %v660, %v662
      %vm665 = vmpackc.low %vm664, %vm663
      %v666 = vunpack.c.l.b16 %v649
      %v667 = vunpack.c.h.b16 %v649
      %v668 = vunpack.c.l.b16 0
      %v669 = vunpack.c.h.b16 0
      %vm670 = vcmp.ne.s32.totalorder %v666, %v668
      %vm671 = vcmp.ne.s32.totalorder %v667, %v669
      %vm672 = vmpackc.low %vm671, %vm670
      %v673 = vsel %vm658, %v242, 0
      %v674 = vsel %vm665, %v237, 0
      %v675 = vsel %vm672, %v245, 0
      %679 = vrot.lane.b32.xlu0 %v673, 96
      %v680 = vpop.permute.xlu0 %679
      %681 = vrot.lane.b32.xlu0 %v674, 96
      %v682 = vpop.permute.xlu0 %681
      %683 = vrot.lane.b32.xlu0 %v675, 96
      %v684 = vpop.permute.xlu0 %683
      %vm685 = vcmask 785408
      %v686 = vsel %vm685, %v680, %v682
      %v687 = vsel %vm685, %v682, %v684
      %v689 = vsel %vm291, %v253, 0
      %v692 = vsel %vm295, %v686, 0
      %v695 = vsel %vm295, %v687, 0
      %697 = vmatpush.bf16.msra.mxu0 0
      %698 = vmatpush.bf16.msra.mxu0 0
      %699 = vmatpush.bf16.msra.mxu0 0
      %700 = vmatpush.bf16.msra.mxu0 0
      %701 = vmatpush.bf16.msra.mxu0 0
      %702 = vmatpush.bf16.msra.mxu0 0
      %703 = vmatpush.bf16.msra.mxu0 0
      %704 = vmatpush.bf16.msra.mxu0 %v692
      %705 = vmatmul.bf16.gmra.mxu0 %v689
      %v706 = vpop.f32.mrf.mxu0
      %v707 = vadd.f32 0.0, %v706
      %v708 = vpop.f32.mrf.mxu0
      %709 = vdwg.mxu0
      %710 = vmatpush.bf16.msra.mxu0 0
      %711 = vmatpush.bf16.msra.mxu0 0
      %712 = vmatpush.bf16.msra.mxu0 0
      %713 = vmatpush.bf16.msra.mxu0 0
      %714 = vmatpush.bf16.msra.mxu0 0
      %715 = vmatpush.bf16.msra.mxu0 0
      %716 = vmatpush.bf16.msra.mxu0 0
      %717 = vmatpush.bf16.msra.mxu0 %v695
      %718 = vmatmul.bf16.gmra.mxu0 %v689
      %v719 = vpop.f32.mrf.mxu0
      %v720 = vadd.f32 0.0, %v719
      %v721 = vpop.f32.mrf.mxu0
      %722 = vdwg.mxu0
      %v723 = vadd.f32 %v644, %v707
      %v724 = vadd.f32 %v645, %v720
      %725 = vrot.lane.b32.xlu0 %v242, 95
      %v726 = vpop.permute.xlu0 %725
      %727 = vrot.lane.b32.xlu0 %v237, 95
      %v728 = vpop.permute.xlu0 %727
      %729 = vrot.lane.b32.xlu0 %v245, 95
      %v730 = vpop.permute.xlu0 %729
      %vm731 = vcmask 777216
      %v732 = vsel %vm731, %v726, %v728
      %v733 = vsel %vm731, %v728, %v730
      %v735 = vsel %vm291, %v254, 0
      %v738 = vsel %vm295, %v732, 0
      %v741 = vsel %vm295, %v733, 0
      %743 = vmatpush.bf16.msra.mxu0 0
      %744 = vmatpush.bf16.msra.mxu0 0
      %745 = vmatpush.bf16.msra.mxu0 0
      %746 = vmatpush.bf16.msra.mxu0 0
      %747 = vmatpush.bf16.msra.mxu0 0
      %748 = vmatpush.bf16.msra.mxu0 0
      %749 = vmatpush.bf16.msra.mxu0 0
      %750 = vmatpush.bf16.msra.mxu0 %v738
      %751 = vmatmul.bf16.gmra.mxu0 %v735
      %v752 = vpop.f32.mrf.mxu0
      %v753 = vadd.f32 0.0, %v752
      %v754 = vpop.f32.mrf.mxu0
      %755 = vdwg.mxu0
      %756 = vmatpush.bf16.msra.mxu0 0
      %757 = vmatpush.bf16.msra.mxu0 0
      %758 = vmatpush.bf16.msra.mxu0 0
      %759 = vmatpush.bf16.msra.mxu0 0
      %760 = vmatpush.bf16.msra.mxu0 0
      %761 = vmatpush.bf16.msra.mxu0 0
      %762 = vmatpush.bf16.msra.mxu0 0
      %763 = vmatpush.bf16.msra.mxu0 %v741
      %764 = vmatmul.bf16.gmra.mxu0 %v735
      %v765 = vpop.f32.mrf.mxu0
      %v766 = vadd.f32 0.0, %v765
      %v767 = vpop.f32.mrf.mxu0
      %768 = vdwg.mxu0
      %v769 = vadd.f32 %v723, %v753
      %v770 = vadd.f32 %v724, %v766
      %771 = vrot.lane.b32.xlu0 %v369, 34
      %v772 = vpop.permute.xlu0 %771
      %773 = vrot.lane.b32.xlu0 %v370, 34
      %v774 = vpop.permute.xlu0 %773
      %vm775 = vcmask 277504
      %v776 = vsel %vm775, %v772, %v774
      %v777 = vunpack.c.l.b16 %v772
      %v778 = vunpack.c.h.b16 %v772
      %v779 = vunpack.c.l.b16 0
      %v780 = vunpack.c.h.b16 0
      %vm781 = vcmp.ne.s32.totalorder %v777, %v779
      %vm782 = vcmp.ne.s32.totalorder %v778, %v780
      %vm783 = vmpackc.low %vm782, %vm781
      %v784 = vunpack.c.l.b16 %v776
      %v785 = vunpack.c.h.b16 %v776
      %v786 = vunpack.c.l.b16 0
      %v787 = vunpack.c.h.b16 0
      %vm788 = vcmp.ne.s32.totalorder %v784, %v786
      %vm789 = vcmp.ne.s32.totalorder %v785, %v787
      %vm790 = vmpackc.low %vm789, %vm788
      %v791 = vunpack.c.l.b16 %v774
      %v792 = vunpack.c.h.b16 %v774
      %v793 = vunpack.c.l.b16 0
      %v794 = vunpack.c.h.b16 0
      %vm795 = vcmp.ne.s32.totalorder %v791, %v793
      %vm796 = vcmp.ne.s32.totalorder %v792, %v794
      %vm797 = vmpackc.low %vm796, %vm795
      %v798 = vsel %vm783, %v242, 0
      %v799 = vsel %vm790, %v237, 0
      %v800 = vsel %vm797, %v245, 0
      %804 = vrot.lane.b32.xlu0 %v798, 94
      %v805 = vpop.permute.xlu0 %804
      %806 = vrot.lane.b32.xlu0 %v799, 94
      %v807 = vpop.permute.xlu0 %806
      %808 = vrot.lane.b32.xlu0 %v800, 94
      %v809 = vpop.permute.xlu0 %808
      %vm810 = vcmask 769024
      %v811 = vsel %vm810, %v805, %v807
      %v812 = vsel %vm810, %v807, %v809
      %v814 = vsel %vm291, %v255, 0
      %v817 = vsel %vm295, %v811, 0
      %v820 = vsel %vm295, %v812, 0
      %822 = vmatpush.bf16.msra.mxu0 0
      %823 = vmatpush.bf16.msra.mxu0 0
      %824 = vmatpush.bf16.msra.mxu0 0
      %825 = vmatpush.bf16.msra.mxu0 0
      %826 = vmatpush.bf16.msra.mxu0 0
      %827 = vmatpush.bf16.msra.mxu0 0
      %828 = vmatpush.bf16.msra.mxu0 0
      %829 = vmatpush.bf16.msra.mxu0 %v817
      %830 = vmatmul.bf16.gmra.mxu0 %v814
      %v831 = vpop.f32.mrf.mxu0
      %v832 = vadd.f32 0.0, %v831
      %v833 = vpop.f32.mrf.mxu0
      %834 = vdwg.mxu0
      %835 = vmatpush.bf16.msra.mxu0 0
      %836 = vmatpush.bf16.msra.mxu0 0
      %837 = vmatpush.bf16.msra.mxu0 0
      %838 = vmatpush.bf16.msra.mxu0 0
      %839 = vmatpush.bf16.msra.mxu0 0
      %840 = vmatpush.bf16.msra.mxu0 0
      %841 = vmatpush.bf16.msra.mxu0 0
      %842 = vmatpush.bf16.msra.mxu0 %v820
      %843 = vmatmul.bf16.gmra.mxu0 %v814
      %v844 = vpop.f32.mrf.mxu0
      %v845 = vadd.f32 0.0, %v844
      %v846 = vpop.f32.mrf.mxu0
      %847 = vdwg.mxu0
      %v848 = vadd.f32 %v769, %v832
      %v849 = vadd.f32 %v770, %v845
      %v850 = vld [vmem:[%s2] sm:$0xf]
      %852 = vset.pattern.permute.xlu0 0
      %853 = vperm.xlu0 %852, %v850
      %v854 = vpop.permute.xlu0 %853
      %v856 = vadd.f32 %v848, %v854
      %v857 = vadd.f32 %v849, %v854
      %v858 = vpack.c.bf16 %v857, %v856
      %v860 = vrot.slane %v858, 2
      %v863 = vsel %vm295, %v858, %v860
      %865 = vst [vmem:[%s190] sm:$0xf] %v863
      %p866 = scmp.lt.s32.totalorder %s14, 1
      %s867 = scalar_select %p866, %s14, 1
      %s868 = smul.addr %s867, 2
      %s869 = smul.addr %s868, 2
      %s870 = scalar_lea.vmem %s3, %s869
      // Predicated region
      $region33: #{forward.12} parent=31 // pred_check
        %p871 = pneg %p105
      $region34: #{forward.12} parent=31 // pred_check_branch
        %873 = sbr.rel (%p871) target = $region36
      $region35: #{forward.12} parent=31 // pred_region
        _
      $region36: #{forward.12} parent=31 // pred_fallthru
        _
    $region32: #{forward.12} parent=5 // pred_fallthru
      _
    %p874 = scmp.le.s32.totalorder 2, %s9
    // Predicated region
    $region37: #{forward.12} parent=5 // pred_check
      %p875 = pneg %p874
    $region38: #{forward.12} parent=5 // pred_check_branch
      %877 = sbr.rel (%p875) target = $region40
    $region39: #{forward.12} parent=5 // pred_region
      %s878 = ssub.s32 %s9, 2
      // Predicated region
      $region41: #{forward.12} parent=39 // pred_check
        %p879 = pneg %p111
      $region42: #{forward.12} parent=39 // pred_check_branch
        %881 = sbr.rel (%p879) target = $region44
      $region43: #{forward.12} parent=39 // pred_region
        %p882 = scmp.lt.s32.totalorder %s15, 1
        %s883 = scalar_select %p882, %s15, 1
        %s884 = smul.addr %s883, 2
        %s885 = smul.addr %s884, 2
        %s886 = scalar_lea.vmem %s3, %s885
      $region44: #{forward.12} parent=39 // pred_fallthru
        _
    $region40: #{forward.12} parent=5 // pred_fallthru
      _
  $region6: #{forward.12} parent=0 // loop_footer
    %s13 = sadd.s32 1, %s9
  $region7: #{forward.12} parent=0 // loop_footer_branch
    %8 = sbr.rel target = $region3
  $region8: #{forward.12} parent=0 // loop_exit
    _

// kernel: forward.13
$region0: #{forward.13}
  #allocation0 [shape = 'u32[]', space=smem, size = 0x4, offset = 0x4, fixed_abs, tag = 'smem constant byte address 0x4 - core index']
  #allocation1 [shape = 'u32[72,128]{1,0:T(1,128)}', space=vmem, size = 0x9000, scoped, tag = 'internal scratch']
  %s0 = inlined_call_operand.vmem [shape: bf16[2,4,256], index: 0, kind: input, shape index: {}]
  %s1 = inlined_call_operand.vmem [shape: bf16[2,4,256], index: 1, kind: input, shape index: {}]
  %s2 = inlined_call_operand.vmem [shape: bf16[9,4,4], index: 2, kind: input, shape index: {}]
  %s3 = inlined_call_operand.vmem [shape: bf16[9,4,4], index: 3, kind: input, shape index: {}]
  %s4 = inlined_call_operand.vmem [shape: f32[4,3], index: 4, kind: input, shape index: {}]
  %s5 = inlined_call_operand.vmem [shape: f32[2,4,256], index: 5, kind: output, shape index: {}]
  %s6 = sld [smem:[#allocation0]]
  $region53: #{forward.13} parent=0
    _
  %s8 = ssub.s32 1, %s6
  %s9 = scalar_select 0, %s8, %s6
  loop: start=0, step=1, limit=4
  $region2: #{forward.13} parent=0 // loop_pre_header
    _
  $region3: #{forward.13} parent=0 // loop_header
    %s11 = sphi 0, %s15
    %p12 = scmp.ge.s32.totalorder %s11, 4
    %s21 = sphi 0, %s23
    %s24 = sphi 0, %s21
    %s25 = sphi 0, %s24
    %s41 = sphi 0, %s25
    %s47 = sphi 0, %s49
    %s50 = sphi 0, %s47
    %s51 = sphi 0, %s50
    %s67 = sphi 0, %s51
    %s71 = sphi 0, %s71
    %s73 = sphi 0, %s71
    %s74 = sphi 0, %s73
    %s88 = sphi 0, %s74
    %s92 = sphi 0, %s92
    %s94 = sphi 0, %s92
    %s95 = sphi 0, %s94
    %s109 = sphi 0, %s95
    %s113 = sphi 0, %s113
    %s115 = sphi 0, %s113
    %s116 = sphi 0, %s115
    %s130 = sphi 0, %s116
    %s136 = sphi 0, %s138
    %s139 = sphi 0, %s136
    %s140 = sphi 0, %s139
    %s156 = sphi 0, %s140
  $region4: #{forward.13} parent=0 // loop_header_branch
    %14 = sbr.rel (%p12) target = $region8
  $region5: #{forward.13} parent=0 // loop_body
    %s16 = ssub.s32 %s11, 1
    %s17 = ssub.s32 %s11, 2
    %s18 = sadd.s32 %s11, 1
    %s19 = ssub.s32 %s11, %s18
    %p20 = scmp.eq.s32.totalorder %s19, 0
    %s22 = sadd.s32 %s21, 1
    %s23 = scalar_select %p20, %s21, %s22
    %p26 = pneg %p20
    %p27 = scmp.eq.s32.totalorder %s11, 1
    %p28 = por %p26, %p27
    %p29 = scmp.ne.s32.totalorder %s21, %s24
    %p30 = scmp.eq.s32.totalorder %s11, 0
    %p31 = por %p29, %p30
    %p32 = scmp.ne.s32.totalorder %s21, %s24
    %p33 = scmp.eq.s32.totalorder %s16, 1
    %p34 = por %p32, %p33
    %p35 = scmp.ne.s32.totalorder %s24, %s25
    %p36 = scmp.eq.s32.totalorder %s16, 0
    %p37 = por %p35, %p36
    %p38 = scmp.ne.s32.totalorder %s24, %s25
    %p39 = scmp.eq.s32.totalorder %s17, 1
    %p40 = por %p38, %p39
    %p42 = scmp.ne.s32.totalorder %s25, %s41
    %p43 = scmp.eq.s32.totalorder %s17, 0
    %p44 = por %p42, %p43
    %s45 = ssub.s32 %s11, %s18
    %p46 = scmp.eq.s32.totalorder %s45, 0
    %s48 = sadd.s32 %s47, 1
    %s49 = scalar_select %p46, %s47, %s48
    %p52 = pneg %p46
    %p53 = scmp.eq.s32.totalorder %s11, 1
    %p54 = por %p52, %p53
    %p55 = scmp.ne.s32.totalorder %s47, %s50
    %p56 = scmp.eq.s32.totalorder %s11, 0
    %p57 = por %p55, %p56
    %p58 = scmp.ne.s32.totalorder %s47, %s50
    %p59 = scmp.eq.s32.totalorder %s16, 1
    %p60 = por %p58, %p59
    %p61 = scmp.ne.s32.totalorder %s50, %s51
    %p62 = scmp.eq.s32.totalorder %s16, 0
    %p63 = por %p61, %p62
    %p64 = scmp.ne.s32.totalorder %s50, %s51
    %p65 = scmp.eq.s32.totalorder %s17, 1
    %p66 = por %p64, %p65
    %p68 = scmp.ne.s32.totalorder %s51, %s67
    %p69 = scmp.eq.s32.totalorder %s17, 0
    %p70 = por %p68, %p69
    %s72 = sadd.s32 %s71, 1
    %p75 = scmp.eq.s32.totalorder %s11, 1
    %p76 = scmp.ne.s32.totalorder %s71, %s73
    %p77 = scmp.eq.s32.totalorder %s11, 0
    %p78 = por %p76, %p77
    %p79 = scmp.ne.s32.totalorder %s71, %s73
    %p80 = scmp.eq.s32.totalorder %s16, 1
    %p81 = por %p79, %p80
    %p82 = scmp.ne.s32.totalorder %s73, %s74
    %p83 = scmp.eq.s32.totalorder %s16, 0
    %p84 = por %p82, %p83
    %p85 = scmp.ne.s32.totalorder %s73, %s74
    %p86 = scmp.eq.s32.totalorder %s17, 1
    %p87 = por %p85, %p86
    %p89 = scmp.ne.s32.totalorder %s74, %s88
    %p90 = scmp.eq.s32.totalorder %s17, 0
    %p91 = por %p89, %p90
    %s93 = sadd.s32 %s92, 1
    %p96 = scmp.eq.s32.totalorder %s11, 1
    %p97 = scmp.ne.s32.totalorder %s92, %s94
    %p98 = scmp.eq.s32.totalorder %s11, 0
    %p99 = por %p97, %p98
    %p100 = scmp.ne.s32.totalorder %s92, %s94
    %p101 = scmp.eq.s32.totalorder %s16, 1
    %p102 = por %p100, %p101
    %p103 = scmp.ne.s32.totalorder %s94, %s95
    %p104 = scmp.eq.s32.totalorder %s16, 0
    %p105 = por %p103, %p104
    %p106 = scmp.ne.s32.totalorder %s94, %s95
    %p107 = scmp.eq.s32.totalorder %s17, 1
    %p108 = por %p106, %p107
    %p110 = scmp.ne.s32.totalorder %s95, %s109
    %p111 = scmp.eq.s32.totalorder %s17, 0
    %p112 = por %p110, %p111
    %s114 = sadd.s32 %s113, 1
    %p117 = scmp.eq.s32.totalorder %s11, 1
    %p118 = scmp.ne.s32.totalorder %s113, %s115
    %p119 = scmp.eq.s32.totalorder %s11, 0
    %p120 = por %p118, %p119
    %p121 = scmp.ne.s32.totalorder %s113, %s115
    %p122 = scmp.eq.s32.totalorder %s16, 1
    %p123 = por %p121, %p122
    %p124 = scmp.ne.s32.totalorder %s115, %s116
    %p125 = scmp.eq.s32.totalorder %s16, 0
    %p126 = por %p124, %p125
    %p127 = scmp.ne.s32.totalorder %s115, %s116
    %p128 = scmp.eq.s32.totalorder %s17, 1
    %p129 = por %p127, %p128
    %p131 = scmp.ne.s32.totalorder %s116, %s130
    %p132 = scmp.eq.s32.totalorder %s17, 0
    %p133 = por %p131, %p132
    %s134 = ssub.s32 %s11, %s18
    %p135 = scmp.eq.s32.totalorder %s134, 0
    %s137 = sadd.s32 %s136, 1
    %s138 = scalar_select %p135, %s136, %s137
    %p141 = pneg %p135
    %p142 = scmp.eq.s32.totalorder %s11, 1
    %p143 = por %p141, %p142
    %p144 = scmp.ne.s32.totalorder %s136, %s139
    %p145 = scmp.eq.s32.totalorder %s11, 0
    %p146 = por %p144, %p145
    %p147 = scmp.ne.s32.totalorder %s136, %s139
    %p148 = scmp.eq.s32.totalorder %s16, 1
    %p149 = por %p147, %p148
    %p150 = scmp.ne.s32.totalorder %s139, %s140
    %p151 = scmp.eq.s32.totalorder %s16, 0
    %p152 = por %p150, %p151
    %p153 = scmp.ne.s32.totalorder %s139, %s140
    %p154 = scmp.eq.s32.totalorder %s17, 1
    %p155 = por %p153, %p154
    %p157 = scmp.ne.s32.totalorder %s140, %s156
    %p158 = scmp.eq.s32.totalorder %s17, 0
    %p159 = por %p157, %p158
    %p160 = scmp.le.s32.totalorder 1, %s11
    %p161 = scmp.lt.s32.totalorder %s11, 3
    %p162 = pnand %p160, %p161
    %p163 = pneg %p162
    // Predicated region
    $region9: #{forward.13} parent=5 // pred_check
      _
    $region10: #{forward.13} parent=5 // pred_check_branch
      %165 = sbr.rel (%p162) target = $region12
    $region11: #{forward.13} parent=5 // pred_region
      %s166 = ssub.s32 %s11, 1
      // Predicated region
      $region13: #{forward.13} parent=11 // pred_check
        %p167 = pneg %p84
      $region14: #{forward.13} parent=11 // pred_check_branch
        %169 = sbr.rel (%p167) target = $region16
      $region15: #{forward.13} parent=11 // pred_region
        _
      $region16: #{forward.13} parent=11 // pred_fallthru
        _
      // Predicated region
      $region17: #{forward.13} parent=11 // pred_check
        %p170 = pneg %p105
      $region18: #{forward.13} parent=11 // pred_check_branch
        %172 = sbr.rel (%p170) target = $region20
      $region19: #{forward.13} parent=11 // pred_region
        _
      $region20: #{forward.13} parent=11 // pred_fallthru
        _
      // Predicated region
      $region21: #{forward.13} parent=11 // pred_check
        %p173 = pneg %p126
      $region22: #{forward.13} parent=11 // pred_check_branch
        %175 = sbr.rel (%p173) target = $region24
      $region23: #{forward.13} parent=11 // pred_region
        _
      $region24: #{forward.13} parent=11 // pred_fallthru
        _
    $region12: #{forward.13} parent=5 // pred_fallthru
      _
    %p176 = scmp.lt.s32.totalorder %s11, 2
    // Predicated region
    $region25: #{forward.13} parent=5 // pred_check
      %p177 = pneg %p176
    $region26: #{forward.13} parent=5 // pred_check_branch
      %179 = sbr.rel (%p177) target = $region28
    $region27: #{forward.13} parent=5 // pred_region
      // Predicated region
      $region29: #{forward.13} parent=27 // pred_check
        %p180 = pneg %p31
      $region30: #{forward.13} parent=27 // pred_check_branch
        %182 = sbr.rel (%p180) target = $region32
      $region31: #{forward.13} parent=27 // pred_region
        %p183 = scmp.lt.s32.totalorder %s11, 1
        %s184 = scalar_select %p183, %s11, 1
        %s185 = smul.addr %s184, 2
        %s186 = smul.addr %s185, 2
        %s187 = scalar_lea.vmem %s0, %s186
      $region32: #{forward.13} parent=27 // pred_fallthru
        _
      // Predicated region
      $region33: #{forward.13} parent=27 // pred_check
        %p188 = pneg %p57
      $region34: #{forward.13} parent=27 // pred_check_branch
        %190 = sbr.rel (%p188) target = $region36
      $region35: #{forward.13} parent=27 // pred_region
        %p191 = scmp.lt.s32.totalorder %s11, 1
        %s192 = scalar_select %p191, %s11, 1
        %s193 = smul.addr %s192, 2
        %s194 = smul.addr %s193, 2
        %s195 = scalar_lea.vmem %s1, %s194
      $region36: #{forward.13} parent=27 // pred_fallthru
        _
    $region28: #{forward.13} parent=5 // pred_fallthru
      _
    %p196 = scmp.le.s32.totalorder 1, %s11
    %p197 = scmp.lt.s32.totalorder %s11, 3
    %p198 = pnand %p196, %p197
    %p199 = pneg %p198
    // Predicated region
    $region37: #{forward.13} parent=5 // pred_check
      _
    $region38: #{forward.13} parent=5 // pred_check_branch
      %201 = sbr.rel (%p198) target = $region40
    $region39: #{forward.13} parent=5 // pred_region
      %s202 = ssub.s32 %s11, 1
      %p203 = scmp.lt.s32.totalorder %s16, 1
      %s204 = scalar_select %p203, %s16, 1
      %s205 = smul.addr %s204, 2
      %s206 = smul.addr %s205, 2
      %s207 = scalar_lea.vmem %s0, %s206
      %p208 = pneg %p37
      %p209 = pneg %p34
      %p210 = scmp.lt.s32.totalorder %s16, 1
      %s211 = scalar_select %p210, %s16, 1
      %s212 = smul.addr %s211, 2
      %s213 = smul.addr %s212, 2
      %s214 = scalar_lea.vmem %s1, %s213
      %p215 = pneg %p63
      %p216 = pneg %p60
      %p217 = pneg %p84
      %p218 = pneg %p81
      %p219 = pneg %p105
      %p220 = pneg %p102
      %p221 = pneg %p126
      %p222 = pneg %p123
      %p223 = pneg %p152
      %p224 = pneg %p149
      %p225 = scmp.lt.s32.totalorder %s16, 1
      %s226 = scalar_select %p225, %s16, 1
      %s227 = smul.addr %s226, 2
      %s228 = smul.addr %s227, 4
      %s229 = scalar_lea.vmem %s5, %s228
      %p230 = scmp.lt.s32.totalorder %s16, 1
      %s231 = scalar_select %p230, %s16, 1
      %s232 = smul.addr %s231, 2
      %s233 = smul.addr %s232, 2
      %s234 = scalar_lea.vmem %s0, %s233
      %p235 = scmp.lt.s32.totalorder %s16, 1
      %s236 = scalar_select %p235, %s16, 1
      %s237 = smul.addr %s236, 2
      %s238 = smul.addr %s237, 2
      %s239 = scalar_lea.vmem %s1, %s238
      %p240 = scmp.lt.s32.totalorder %s16, 1
      %s241 = scalar_select %p240, %s16, 1
      %s242 = smul.addr %s241, 2
      %s243 = smul.addr %s242, 4
      %s244 = scalar_lea.vmem %s5, %s243
      %v248 = vlaneseq
      %v249 = vand.u32 %v248, 127
      %v250 = vadd.s32 %v249, 128
      %vm251 = vcmp.lt.s32.totalorder %v249, 0
      %v252 = vsub.s32 0, %v249
      %v253 = vsel %vm251, %v252, %v249
      %v254 = vshrl.u32 %v253, 4
      %v255 = vand.u32 %v253, 15
      %v256 = vsub.s32 0, %v255
      %v257 = vsel %vm251, %v256, %v255
      %vm258 = vcmp.lt.s32.totalorder %v250, 0
      %v259 = vsub.s32 0, %v250
      %v260 = vsel %vm258, %v259, %v250
      %v261 = vshrl.u32 %v260, 4
      %v262 = vand.u32 %v260, 15
      %v263 = vsub.s32 0, %v262
      %v264 = vsel %vm258, %v263, %v262
      %vm265 = vcmp.ne.s32.totalorder %v257, 0
      %vm266 = vcmp.ne.s32.totalorder %v264, 0
      %vm267 = vcmp.lt.s32.totalorder %v257, 0
      %vm268 = vcmp.lt.s32.totalorder %v264, 0
      %vm269 = vmand %vm267, %vm265
      %vm270 = vmand %vm268, %vm266
      %v271 = vadd.s32 %v257, 16
      %v272 = vadd.s32 %v264, 16
      %v273 = vsel %vm269, %v271, %v257
      %v274 = vsel %vm270, %v272, %v264
      %vm275 = vcmp.gt.s32.totalorder %v273, 0
      %vm276 = vcmp.gt.s32.totalorder %v274, 0
      %vm277 = vcmp.lt.s32.totalorder %v273, 15
      %vm278 = vcmp.lt.s32.totalorder %v274, 15
      %v279 = vld [vmem:[%s234] sm:$0xf]
      %281 = vst [vmem:[#allocation1] ss:$4 sm:$0xff] %v279
      %v282 = vld.sshfl [vmem:[#allocation1] sm:$0xff pattern:$0x73625140]
      %v284 = vld.sshfl [vmem:[#allocation1 + $0x8] sm:$0xff pattern:$0x73625140]
      %286 = vrot.lane.b32.xlu0 %v282, 17
      %v287 = vpop.permute.xlu0 %286
      %288 = vrot.lane.b32.xlu0 %v284, 17
      %v289 = vpop.permute.xlu0 %288
      %vm290 = vcmask 138240
      %v291 = vsel %vm290, %v287, %v289
      %vm293 = vcmask 138240
      %v296 = vsel %vm293, 0, %v287
      %v299 = vsel %vm293, %v289, 0
      %v301 = vld [vmem:[%s2] sm:$0x3]
      %v302 = vld [vmem:[%s2 + $0x2] sm:$0x3]
      %v303 = vld [vmem:[%s2 + $0x4] sm:$0x3]
      %v304 = vld [vmem:[%s2 + $0x6] sm:$0x3]
      %v305 = vld [vmem:[%s2 + $0x8] sm:$0x3]
      %v306 = vld [vmem:[%s2 + $0xa] sm:$0x3]
      %v307 = vld [vmem:[%s2 + $0xc] sm:$0x3]
      %v308 = vld [vmem:[%s2 + $0xe] sm:$0x3]
      %v309 = vld [vmem:[%s2 + $0x10] sm:$0x3]
      %v310 = vsel %vm275, 1, 0
      %v311 = vsel %vm276, 1, 0
      %vm312 = vcmp.eq.s32.totalorder %v310, 1
      %vm313 = vcmp.eq.s32.totalorder %v311, 1
      %vm314 = vmpackc.low %vm313, %vm312
      %v315 = vsel %vm314, 65537, 0
      %v316 = vperm.slane %v315, 0
      %v317 = vperm.slane %v315, 4
      %v318 = vunpack.c.l.b16 %v316
      %v319 = vunpack.c.h.b16 %v316
      %v320 = vunpack.c.l.b16 0
      %v321 = vunpack.c.h.b16 0
      %vm322 = vcmp.ne.s32.totalorder %v318, %v320
      %vm323 = vcmp.ne.s32.totalorder %v319, %v321
      %vm324 = vmpackc.low %vm323, %vm322
      %v325 = vunpack.c.l.b16 %v317
      %v326 = vunpack.c.h.b16 %v317
      %v327 = vunpack.c.l.b16 0
      %v328 = vunpack.c.h.b16 0
      %vm329 = vcmp.ne.s32.totalorder %v325, %v327
      %vm330 = vcmp.ne.s32.totalorder %v326, %v328
      %vm331 = vmpackc.low %vm330, %vm329
      %v332 = vsel %vm324, %v296, 0
      %v333 = vsel %vm331, %v291, 0
      %336 = vrot.lane.b32.xlu0 %v296, 127
      %v337 = vpop.permute.xlu0 %336
      %338 = vrot.lane.b32.xlu0 %v291, 127
      %v339 = vpop.permute.xlu0 %338
      %340 = vrot.lane.b32.xlu0 %v299, 127
      %v341 = vpop.permute.xlu0 %340
      %vm342 = vcmask 1039360
      %v343 = vsel %vm342, %v337, %v339
      %v344 = vsel %vm342, %v339, %v341
      %vm345 = vcmask 31744
      %v347 = vsel %vm345, %v302, 0
      %vm349 = vcmask 1041408
      %v351 = vsel %vm349, %v343, 0
      %v354 = vsel %vm349, %v344, 0
      %356 = vmatpush.bf16.msra.mxu0 0
      %357 = vmatpush.bf16.msra.mxu0 0
      %358 = vmatpush.bf16.msra.mxu0 0
      %359 = vmatpush.bf16.msra.mxu0 0
      %360 = vmatpush.bf16.msra.mxu0 0
      %361 = vmatpush.bf16.msra.mxu0 0
      %362 = vmatpush.bf16.msra.mxu0 0
      %363 = vmatpush.bf16.msra.mxu0 %v351
      %364 = vmatmul.bf16.gmra.mxu0 %v347
      %v365 = vpop.f32.mrf.mxu0
      %v366 = vadd.f32 0.0, %v365
      %v367 = vpop.f32.mrf.mxu0
      %368 = vdwg.mxu0
      %369 = vmatpush.bf16.msra.mxu0 0
      %370 = vmatpush.bf16.msra.mxu0 0
      %371 = vmatpush.bf16.msra.mxu0 0
      %372 = vmatpush.bf16.msra.mxu0 0
      %373 = vmatpush.bf16.msra.mxu0 0
      %374 = vmatpush.bf16.msra.mxu0 0
      %375 = vmatpush.bf16.msra.mxu0 0
      %376 = vmatpush.bf16.msra.mxu0 %v354
      %377 = vmatmul.bf16.gmra.mxu0 %v347
      %v378 = vpop.f32.mrf.mxu0
      %v379 = vadd.f32 0.0, %v378
      %v380 = vpop.f32.mrf.mxu0
      %381 = vdwg.mxu0
      %v383 = vsel %vm345, %v301, 0
      %v386 = vsel %vm349, %v332, 0
      %v389 = vsel %vm349, %v333, 0
      %391 = vmatpush.bf16.msra.mxu0 0
      %392 = vmatpush.bf16.msra.mxu0 0
      %393 = vmatpush.bf16.msra.mxu0 0
      %394 = vmatpush.bf16.msra.mxu0 0
      %395 = vmatpush.bf16.msra.mxu0 0
      %396 = vmatpush.bf16.msra.mxu0 0
      %397 = vmatpush.bf16.msra.mxu0 0
      %398 = vmatpush.bf16.msra.mxu0 %v386
      %399 = vmatmul.bf16.gmra.mxu0 %v383
      %v400 = vpop.f32.mrf.mxu0
      %v401 = vadd.f32 %v366, %v400
      %v402 = vpop.f32.mrf.mxu0
      %403 = vdwg.mxu0
      %404 = vmatpush.bf16.msra.mxu0 0
      %405 = vmatpush.bf16.msra.mxu0 0
      %406 = vmatpush.bf16.msra.mxu0 0
      %407 = vmatpush.bf16.msra.mxu0 0
      %408 = vmatpush.bf16.msra.mxu0 0
      %409 = vmatpush.bf16.msra.mxu0 0
      %410 = vmatpush.bf16.msra.mxu0 0
      %411 = vmatpush.bf16.msra.mxu0 %v389
      %412 = vmatmul.bf16.gmra.mxu0 %v383
      %v413 = vpop.f32.mrf.mxu0
      %v414 = vadd.f32 %v379, %v413
      %v415 = vpop.f32.mrf.mxu0
      %416 = vdwg.mxu0
      %v417 = vsel %vm277, 1, 0
      %v418 = vsel %vm278, 1, 0
      %vm419 = vcmp.eq.s32.totalorder %v417, 1
      %vm420 = vcmp.eq.s32.totalorder %v418, 1
      %vm421 = vmpackc.low %vm420, %vm419
      %v422 = vsel %vm421, 65537, 0
      %v423 = vperm.slane %v422, 0
      %v424 = vperm.slane %v422, 4
      %425 = vrot.lane.b32.xlu0 %v423, 2
      %v426 = vpop.permute.xlu0 %425
      %427 = vrot.lane.b32.xlu0 %v424, 2
      %v428 = vpop.permute.xlu0 %427
      %vm429 = vcmask 15360
      %v430 = vsel %vm429, %v426, %v428
      %v431 = vunpack.c.l.b16 %v426
      %v432 = vunpack.c.h.b16 %v426
      %v433 = vunpack.c.l.b16 0
      %v434 = vunpack.c.h.b16 0
      %vm435 = vcmp.ne.s32.totalorder %v431, %v433
      %vm436 = vcmp.ne.s32.totalorder %v432, %v434
      %vm437 = vmpackc.low %vm436, %vm435
      %v438 = vunpack.c.l.b16 %v430
      %v439 = vunpack.c.h.b16 %v430
      %v440 = vunpack.c.l.b16 0
      %v441 = vunpack.c.h.b16 0
      %vm442 = vcmp.ne.s32.totalorder %v438, %v440
      %vm443 = vcmp.ne.s32.totalorder %v439, %v441
      %vm444 = vmpackc.low %vm443, %vm442
      %v445 = vunpack.c.l.b16 %v428
      %v446 = vunpack.c.h.b16 %v428
      %v447 = vunpack.c.l.b16 0
      %v448 = vunpack.c.h.b16 0
      %vm449 = vcmp.ne.s32.totalorder %v445, %v447
      %vm450 = vcmp.ne.s32.totalorder %v446, %v448
      %vm451 = vmpackc.low %vm450, %vm449
      %v452 = vsel %vm437, %v296, 0
      %v453 = vsel %vm444, %v291, 0
      %v454 = vsel %vm451, %v299, 0
      %458 = vrot.lane.b32.xlu0 %v452, 126
      %v459 = vpop.permute.xlu0 %458
      %460 = vrot.lane.b32.xlu0 %v453, 126
      %v461 = vpop.permute.xlu0 %460
      %462 = vrot.lane.b32.xlu0 %v454, 126
      %v463 = vpop.permute.xlu0 %462
      %vm464 = vcmask 1031168
      %v465 = vsel %vm464, %v459, %v461
      %v466 = vsel %vm464, %v461, %v463
      %v468 = vsel %vm345, %v303, 0
      %v471 = vsel %vm349, %v465, 0
      %v474 = vsel %vm349, %v466, 0
      %476 = vmatpush.bf16.msra.mxu0 0
      %477 = vmatpush.bf16.msra.mxu0 0
      %478 = vmatpush.bf16.msra.mxu0 0
      %479 = vmatpush.bf16.msra.mxu0 0
      %480 = vmatpush.bf16.msra.mxu0 0
      %481 = vmatpush.bf16.msra.mxu0 0
      %482 = vmatpush.bf16.msra.mxu0 0
      %483 = vmatpush.bf16.msra.mxu0 %v471
      %484 = vmatmul.bf16.gmra.mxu0 %v468
      %v485 = vpop.f32.mrf.mxu0
      %v486 = vadd.f32 0.0, %v485
      %v487 = vpop.f32.mrf.mxu0
      %488 = vdwg.mxu0
      %489 = vmatpush.bf16.msra.mxu0 0
      %490 = vmatpush.bf16.msra.mxu0 0
      %491 = vmatpush.bf16.msra.mxu0 0
      %492 = vmatpush.bf16.msra.mxu0 0
      %493 = vmatpush.bf16.msra.mxu0 0
      %494 = vmatpush.bf16.msra.mxu0 0
      %495 = vmatpush.bf16.msra.mxu0 0
      %496 = vmatpush.bf16.msra.mxu0 %v474
      %497 = vmatmul.bf16.gmra.mxu0 %v468
      %v498 = vpop.f32.mrf.mxu0
      %v499 = vadd.f32 0.0, %v498
      %v500 = vpop.f32.mrf.mxu0
      %501 = vdwg.mxu0
      %v502 = vadd.f32 %v401, %v486
      %v503 = vadd.f32 %v414, %v499
      %504 = vrot.lane.b32.xlu0 %v316, 16
      %v505 = vpop.permute.xlu0 %504
      %506 = vrot.lane.b32.xlu0 %v317, 16
      %v507 = vpop.permute.xlu0 %506
      %vm508 = vcmask 130048
      %v509 = vsel %vm508, %v505, %v507
      %v510 = vunpack.c.l.b16 %v505
      %v511 = vunpack.c.h.b16 %v505
      %v512 = vunpack.c.l.b16 0
      %v513 = vunpack.c.h.b16 0
      %vm514 = vcmp.ne.s32.totalorder %v510, %v512
      %vm515 = vcmp.ne.s32.totalorder %v511, %v513
      %vm516 = vmpackc.low %vm515, %vm514
      %v517 = vunpack.c.l.b16 %v509
      %v518 = vunpack.c.h.b16 %v509
      %v519 = vunpack.c.l.b16 0
      %v520 = vunpack.c.h.b16 0
      %vm521 = vcmp.ne.s32.totalorder %v517, %v519
      %vm522 = vcmp.ne.s32.totalorder %v518, %v520
      %vm523 = vmpackc.low %vm522, %vm521
      %v524 = vunpack.c.l.b16 %v507
      %v525 = vunpack.c.h.b16 %v507
      %v526 = vunpack.c.l.b16 0
      %v527 = vunpack.c.h.b16 0
      %vm528 = vcmp.ne.s32.totalorder %v524, %v526
      %vm529 = vcmp.ne.s32.totalorder %v525, %v527
      %vm530 = vmpackc.low %vm529, %vm528
      %v531 = vsel %vm516, %v296, 0
      %v532 = vsel %vm523, %v291, 0
      %v533 = vsel %vm530, %v299, 0
      %537 = vrot.lane.b32.xlu0 %v531, 112
      %v538 = vpop.permute.xlu0 %537
      %539 = vrot.lane.b32.xlu0 %v532, 112
      %v540 = vpop.permute.xlu0 %539
      %541 = vrot.lane.b32.xlu0 %v533, 112
      %v542 = vpop.permute.xlu0 %541
      %vm543 = vcmask 916480
      %v544 = vsel %vm543, %v538, %v540
      %v545 = vsel %vm543, %v540, %v542
      %v547 = vsel %vm345, %v304, 0
      %v550 = vsel %vm349, %v544, 0
      %v553 = vsel %vm349, %v545, 0
      %555 = vmatpush.bf16.msra.mxu0 0
      %556 = vmatpush.bf16.msra.mxu0 0
      %557 = vmatpush.bf16.msra.mxu0 0
      %558 = vmatpush.bf16.msra.mxu0 0
      %559 = vmatpush.bf16.msra.mxu0 0
      %560 = vmatpush.bf16.msra.mxu0 0
      %561 = vmatpush.bf16.msra.mxu0 0
      %562 = vmatpush.bf16.msra.mxu0 %v550
      %563 = vmatmul.bf16.gmra.mxu0 %v547
      %v564 = vpop.f32.mrf.mxu0
      %v565 = vadd.f32 0.0, %v564
      %v566 = vpop.f32.mrf.mxu0
      %567 = vdwg.mxu0
      %568 = vmatpush.bf16.msra.mxu0 0
      %569 = vmatpush.bf16.msra.mxu0 0
      %570 = vmatpush.bf16.msra.mxu0 0
      %571 = vmatpush.bf16.msra.mxu0 0
      %572 = vmatpush.bf16.msra.mxu0 0
      %573 = vmatpush.bf16.msra.mxu0 0
      %574 = vmatpush.bf16.msra.mxu0 0
      %575 = vmatpush.bf16.msra.mxu0 %v553
      %576 = vmatmul.bf16.gmra.mxu0 %v547
      %v577 = vpop.f32.mrf.mxu0
      %v578 = vadd.f32 0.0, %v577
      %v579 = vpop.f32.mrf.mxu0
      %580 = vdwg.mxu0
      %v581 = vadd.f32 %v502, %v565
      %v582 = vadd.f32 %v503, %v578
      %583 = vst [vmem:[#allocation1] ss:$4 sm:$0xff] %v279
      %v584 = vld.sshfl [vmem:[#allocation1] sm:$0xff pattern:$0x73625140]
      %v585 = vld.sshfl [vmem:[#allocation1 + $0x8] sm:$0xff pattern:$0x73625140]
      %v587 = vsel %vm345, %v305, 0
      %v589 = vsel %vm349, %v584, 0
      %v591 = vsel %vm349, %v585, 0
      %593 = vmatpush.bf16.msra.mxu0 0
      %594 = vmatpush.bf16.msra.mxu0 0
      %595 = vmatpush.bf16.msra.mxu0 0
      %596 = vmatpush.bf16.msra.mxu0 0
      %597 = vmatpush.bf16.msra.mxu0 0
      %598 = vmatpush.bf16.msra.mxu0 0
      %599 = vmatpush.bf16.msra.mxu0 0
      %600 = vmatpush.bf16.msra.mxu0 %v589
      %601 = vmatmul.bf16.gmra.mxu0 %v587
      %v602 = vpop.f32.mrf.mxu0
      %v603 = vadd.f32 0.0, %v602
      %v604 = vpop.f32.mrf.mxu0
      %605 = vdwg.mxu0
      %606 = vmatpush.bf16.msra.mxu0 0
      %607 = vmatpush.bf16.msra.mxu0 0
      %608 = vmatpush.bf16.msra.mxu0 0
      %609 = vmatpush.bf16.msra.mxu0 0
      %610 = vmatpush.bf16.msra.mxu0 0
      %611 = vmatpush.bf16.msra.mxu0 0
      %612 = vmatpush.bf16.msra.mxu0 0
      %613 = vmatpush.bf16.msra.mxu0 %v591
      %614 = vmatmul.bf16.gmra.mxu0 %v587
      %v615 = vpop.f32.mrf.mxu0
      %v616 = vadd.f32 0.0, %v615
      %v617 = vpop.f32.mrf.mxu0
      %618 = vdwg.mxu0
      %v619 = vadd.f32 %v581, %v603
      %v620 = vadd.f32 %v582, %v616
      %621 = vrot.lane.b32.xlu0 %v423, 18
      %v622 = vpop.permute.xlu0 %621
      %623 = vrot.lane.b32.xlu0 %v424, 18
      %v624 = vpop.permute.xlu0 %623
      %vm625 = vcmask 146432
      %v626 = vsel %vm625, %v622, %v624
      %v627 = vunpack.c.l.b16 %v622
      %v628 = vunpack.c.h.b16 %v622
      %v629 = vunpack.c.l.b16 0
      %v630 = vunpack.c.h.b16 0
      %vm631 = vcmp.ne.s32.totalorder %v627, %v629
      %vm632 = vcmp.ne.s32.totalorder %v628, %v630
      %vm633 = vmpackc.low %vm632, %vm631
      %v634 = vunpack.c.l.b16 %v626
      %v635 = vunpack.c.h.b16 %v626
      %v636 = vunpack.c.l.b16 0
      %v637 = vunpack.c.h.b16 0
      %vm638 = vcmp.ne.s32.totalorder %v634, %v636
      %vm639 = vcmp.ne.s32.totalorder %v635, %v637
      %vm640 = vmpackc.low %vm639, %vm638
      %v641 = vunpack.c.l.b16 %v624
      %v642 = vunpack.c.h.b16 %v624
      %v643 = vunpack.c.l.b16 0
      %v644 = vunpack.c.h.b16 0
      %vm645 = vcmp.ne.s32.totalorder %v641, %v643
      %vm646 = vcmp.ne.s32.totalorder %v642, %v644
      %vm647 = vmpackc.low %vm646, %vm645
      %v648 = vsel %vm633, %v296, 0
      %v649 = vsel %vm640, %v291, 0
      %v650 = vsel %vm647, %v299, 0
      %654 = vrot.lane.b32.xlu0 %v648, 110
      %v655 = vpop.permute.xlu0 %654
      %656 = vrot.lane.b32.xlu0 %v649, 110
      %v657 = vpop.permute.xlu0 %656
      %658 = vrot.lane.b32.xlu0 %v650, 110
      %v659 = vpop.permute.xlu0 %658
      %vm660 = vcmask 900096
      %v661 = vsel %vm660, %v655, %v657
      %v662 = vsel %vm660, %v657, %v659
      %v664 = vsel %vm345, %v306, 0
      %v667 = vsel %vm349, %v661, 0
      %v670 = vsel %vm349, %v662, 0
      %672 = vmatpush.bf16.msra.mxu0 0
      %673 = vmatpush.bf16.msra.mxu0 0
      %674 = vmatpush.bf16.msra.mxu0 0
      %675 = vmatpush.bf16.msra.mxu0 0
      %676 = vmatpush.bf16.msra.mxu0 0
      %677 = vmatpush.bf16.msra.mxu0 0
      %678 = vmatpush.bf16.msra.mxu0 0
      %679 = vmatpush.bf16.msra.mxu0 %v667
      %680 = vmatmul.bf16.gmra.mxu0 %v664
      %v681 = vpop.f32.mrf.mxu0
      %v682 = vadd.f32 0.0, %v681
      %v683 = vpop.f32.mrf.mxu0
      %684 = vdwg.mxu0
      %685 = vmatpush.bf16.msra.mxu0 0
      %686 = vmatpush.bf16.msra.mxu0 0
      %687 = vmatpush.bf16.msra.mxu0 0
      %688 = vmatpush.bf16.msra.mxu0 0
      %689 = vmatpush.bf16.msra.mxu0 0
      %690 = vmatpush.bf16.msra.mxu0 0
      %691 = vmatpush.bf16.msra.mxu0 0
      %692 = vmatpush.bf16.msra.mxu0 %v670
      %693 = vmatmul.bf16.gmra.mxu0 %v664
      %v694 = vpop.f32.mrf.mxu0
      %v695 = vadd.f32 0.0, %v694
      %v696 = vpop.f32.mrf.mxu0
      %697 = vdwg.mxu0
      %v698 = vadd.f32 %v619, %v682
      %v699 = vadd.f32 %v620, %v695
      %700 = vrot.lane.b32.xlu0 %v316, 32
      %v701 = vpop.permute.xlu0 %700
      %702 = vrot.lane.b32.xlu0 %v317, 32
      %v703 = vpop.permute.xlu0 %702
      %vm704 = vcmask 261120
      %v705 = vsel %vm704, %v701, %v703
      %v706 = vunpack.c.l.b16 %v701
      %v707 = vunpack.c.h.b16 %v701
      %v708 = vunpack.c.l.b16 0
      %v709 = vunpack.c.h.b16 0
      %vm710 = vcmp.ne.s32.totalorder %v706, %v708
      %vm711 = vcmp.ne.s32.totalorder %v707, %v709
      %vm712 = vmpackc.low %vm711, %vm710
      %v713 = vunpack.c.l.b16 %v705
      %v714 = vunpack.c.h.b16 %v705
      %v715 = vunpack.c.l.b16 0
      %v716 = vunpack.c.h.b16 0
      %vm717 = vcmp.ne.s32.totalorder %v713, %v715
      %vm718 = vcmp.ne.s32.totalorder %v714, %v716
      %vm719 = vmpackc.low %vm718, %vm717
      %v720 = vunpack.c.l.b16 %v703
      %v721 = vunpack.c.h.b16 %v703
      %v722 = vunpack.c.l.b16 0
      %v723 = vunpack.c.h.b16 0
      %vm724 = vcmp.ne.s32.totalorder %v720, %v722
      %vm725 = vcmp.ne.s32.totalorder %v721, %v723
      %vm726 = vmpackc.low %vm725, %vm724
      %v727 = vsel %vm712, %v296, 0
      %v728 = vsel %vm719, %v291, 0
      %v729 = vsel %vm726, %v299, 0
      %733 = vrot.lane.b32.xlu0 %v727, 96
      %v734 = vpop.permute.xlu0 %733
      %735 = vrot.lane.b32.xlu0 %v728, 96
      %v736 = vpop.permute.xlu0 %735
      %737 = vrot.lane.b32.xlu0 %v729, 96
      %v738 = vpop.permute.xlu0 %737
      %vm739 = vcmask 785408
      %v740 = vsel %vm739, %v734, %v736
      %v741 = vsel %vm739, %v736, %v738
      %v743 = vsel %vm345, %v307, 0
      %v746 = vsel %vm349, %v740, 0
      %v749 = vsel %vm349, %v741, 0
      %751 = vmatpush.bf16.msra.mxu0 0
      %752 = vmatpush.bf16.msra.mxu0 0
      %753 = vmatpush.bf16.msra.mxu0 0
      %754 = vmatpush.bf16.msra.mxu0 0
      %755 = vmatpush.bf16.msra.mxu0 0
      %756 = vmatpush.bf16.msra.mxu0 0
      %757 = vmatpush.bf16.msra.mxu0 0
      %758 = vmatpush.bf16.msra.mxu0 %v746
      %759 = vmatmul.bf16.gmra.mxu0 %v743
      %v760 = vpop.f32.mrf.mxu0
      %v761 = vadd.f32 0.0, %v760
      %v762 = vpop.f32.mrf.mxu0
      %763 = vdwg.mxu0
      %764 = vmatpush.bf16.msra.mxu0 0
      %765 = vmatpush.bf16.msra.mxu0 0
      %766 = vmatpush.bf16.msra.mxu0 0
      %767 = vmatpush.bf16.msra.mxu0 0
      %768 = vmatpush.bf16.msra.mxu0 0
      %769 = vmatpush.bf16.msra.mxu0 0
      %770 = vmatpush.bf16.msra.mxu0 0
      %771 = vmatpush.bf16.msra.mxu0 %v749
      %772 = vmatmul.bf16.gmra.mxu0 %v743
      %v773 = vpop.f32.mrf.mxu0
      %v774 = vadd.f32 0.0, %v773
      %v775 = vpop.f32.mrf.mxu0
      %776 = vdwg.mxu0
      %v777 = vadd.f32 %v698, %v761
      %v778 = vadd.f32 %v699, %v774
      %779 = vrot.lane.b32.xlu0 %v296, 95
      %v780 = vpop.permute.xlu0 %779
      %781 = vrot.lane.b32.xlu0 %v291, 95
      %v782 = vpop.permute.xlu0 %781
      %783 = vrot.lane.b32.xlu0 %v299, 95
      %v784 = vpop.permute.xlu0 %783
      %vm785 = vcmask 777216
      %v786 = vsel %vm785, %v780, %v782
      %v787 = vsel %vm785, %v782, %v784
      %v789 = vsel %vm345, %v308, 0
      %v792 = vsel %vm349, %v786, 0
      %v795 = vsel %vm349, %v787, 0
      %797 = vmatpush.bf16.msra.mxu0 0
      %798 = vmatpush.bf16.msra.mxu0 0
      %799 = vmatpush.bf16.msra.mxu0 0
      %800 = vmatpush.bf16.msra.mxu0 0
      %801 = vmatpush.bf16.msra.mxu0 0
      %802 = vmatpush.bf16.msra.mxu0 0
      %803 = vmatpush.bf16.msra.mxu0 0
      %804 = vmatpush.bf16.msra.mxu0 %v792
      %805 = vmatmul.bf16.gmra.mxu0 %v789
      %v806 = vpop.f32.mrf.mxu0
      %v807 = vadd.f32 0.0, %v806
      %v808 = vpop.f32.mrf.mxu0
      %809 = vdwg.mxu0
      %810 = vmatpush.bf16.msra.mxu0 0
      %811 = vmatpush.bf16.msra.mxu0 0
      %812 = vmatpush.bf16.msra.mxu0 0
      %813 = vmatpush.bf16.msra.mxu0 0
      %814 = vmatpush.bf16.msra.mxu0 0
      %815 = vmatpush.bf16.msra.mxu0 0
      %816 = vmatpush.bf16.msra.mxu0 0
      %817 = vmatpush.bf16.msra.mxu0 %v795
      %818 = vmatmul.bf16.gmra.mxu0 %v789
      %v819 = vpop.f32.mrf.mxu0
      %v820 = vadd.f32 0.0, %v819
      %v821 = vpop.f32.mrf.mxu0
      %822 = vdwg.mxu0
      %v823 = vadd.f32 %v777, %v807
      %v824 = vadd.f32 %v778, %v820
      %825 = vrot.lane.b32.xlu0 %v423, 34
      %v826 = vpop.permute.xlu0 %825
      %827 = vrot.lane.b32.xlu0 %v424, 34
      %v828 = vpop.permute.xlu0 %827
      %vm829 = vcmask 277504
      %v830 = vsel %vm829, %v826, %v828
      %v831 = vunpack.c.l.b16 %v826
      %v832 = vunpack.c.h.b16 %v826
      %v833 = vunpack.c.l.b16 0
      %v834 = vunpack.c.h.b16 0
      %vm835 = vcmp.ne.s32.totalorder %v831, %v833
      %vm836 = vcmp.ne.s32.totalorder %v832, %v834
      %vm837 = vmpackc.low %vm836, %vm835
      %v838 = vunpack.c.l.b16 %v830
      %v839 = vunpack.c.h.b16 %v830
      %v840 = vunpack.c.l.b16 0
      %v841 = vunpack.c.h.b16 0
      %vm842 = vcmp.ne.s32.totalorder %v838, %v840
      %vm843 = vcmp.ne.s32.totalorder %v839, %v841
      %vm844 = vmpackc.low %vm843, %vm842
      %v845 = vunpack.c.l.b16 %v828
      %v846 = vunpack.c.h.b16 %v828
      %v847 = vunpack.c.l.b16 0
      %v848 = vunpack.c.h.b16 0
      %vm849 = vcmp.ne.s32.totalorder %v845, %v847
      %vm850 = vcmp.ne.s32.totalorder %v846, %v848
      %vm851 = vmpackc.low %vm850, %vm849
      %v852 = vsel %vm837, %v296, 0
      %v853 = vsel %vm844, %v291, 0
      %v854 = vsel %vm851, %v299, 0
      %858 = vrot.lane.b32.xlu0 %v852, 94
      %v859 = vpop.permute.xlu0 %858
      %860 = vrot.lane.b32.xlu0 %v853, 94
      %v861 = vpop.permute.xlu0 %860
      %862 = vrot.lane.b32.xlu0 %v854, 94
      %v863 = vpop.permute.xlu0 %862
      %vm864 = vcmask 769024
      %v865 = vsel %vm864, %v859, %v861
      %v866 = vsel %vm864, %v861, %v863
      %v868 = vsel %vm345, %v309, 0
      %v871 = vsel %vm349, %v865, 0
      %v874 = vsel %vm349, %v866, 0
      %876 = vmatpush.bf16.msra.mxu0 0
      %877 = vmatpush.bf16.msra.mxu0 0
      %878 = vmatpush.bf16.msra.mxu0 0
      %879 = vmatpush.bf16.msra.mxu0 0
      %880 = vmatpush.bf16.msra.mxu0 0
      %881 = vmatpush.bf16.msra.mxu0 0
      %882 = vmatpush.bf16.msra.mxu0 0
      %883 = vmatpush.bf16.msra.mxu0 %v871
      %884 = vmatmul.bf16.gmra.mxu0 %v868
      %v885 = vpop.f32.mrf.mxu0
      %v886 = vadd.f32 0.0, %v885
      %v887 = vpop.f32.mrf.mxu0
      %888 = vdwg.mxu0
      %889 = vmatpush.bf16.msra.mxu0 0
      %890 = vmatpush.bf16.msra.mxu0 0
      %891 = vmatpush.bf16.msra.mxu0 0
      %892 = vmatpush.bf16.msra.mxu0 0
      %893 = vmatpush.bf16.msra.mxu0 0
      %894 = vmatpush.bf16.msra.mxu0 0
      %895 = vmatpush.bf16.msra.mxu0 0
      %896 = vmatpush.bf16.msra.mxu0 %v874
      %897 = vmatmul.bf16.gmra.mxu0 %v868
      %v898 = vpop.f32.mrf.mxu0
      %v899 = vadd.f32 0.0, %v898
      %v900 = vpop.f32.mrf.mxu0
      %901 = vdwg.mxu0
      %v902 = vadd.f32 %v823, %v886
      %v903 = vadd.f32 %v824, %v899
      %v904 = vld [vmem:[%s239] sm:$0xf]
      %906 = vst [vmem:[#allocation1] ss:$4 sm:$0xff] %v904
      %v907 = vld.sshfl [vmem:[#allocation1] sm:$0xff pattern:$0x73625140]
      %v909 = vld.sshfl [vmem:[#allocation1 + $0x8] sm:$0xff pattern:$0x73625140]
      %911 = vrot.lane.b32.xlu0 %v907, 17
      %v912 = vpop.permute.xlu0 %911
      %913 = vrot.lane.b32.xlu0 %v909, 17
      %v914 = vpop.permute.xlu0 %913
      %v915 = vsel %vm290, %v912, %v914
      %v918 = vsel %vm293, 0, %v912
      %v921 = vsel %vm293, %v914, 0
      %v923 = vld [vmem:[%s3] sm:$0x3]
      %v924 = vld [vmem:[%s3 + $0x2] sm:$0x3]
      %v925 = vld [vmem:[%s3 + $0x4] sm:$0x3]
      %v926 = vld [vmem:[%s3 + $0x6] sm:$0x3]
      %v927 = vld [vmem:[%s3 + $0x8] sm:$0x3]
      %v928 = vld [vmem:[%s3 + $0xa] sm:$0x3]
      %v929 = vld [vmem:[%s3 + $0xc] sm:$0x3]
      %v930 = vld [vmem:[%s3 + $0xe] sm:$0x3]
      %v931 = vld [vmem:[%s3 + $0x10] sm:$0x3]
      %v932 = vsel %vm324, %v918, 0
      %v933 = vsel %vm331, %v915, 0
      %v935 = vsel %vm345, %v923, 0
      %v938 = vsel %vm349, %v932, 0
      %v941 = vsel %vm349, %v933, 0
      %943 = vmatpush.bf16.msra.mxu0 0
      %944 = vmatpush.bf16.msra.mxu0 0
      %945 = vmatpush.bf16.msra.mxu0 0
      %946 = vmatpush.bf16.msra.mxu0 0
      %947 = vmatpush.bf16.msra.mxu0 0
      %948 = vmatpush.bf16.msra.mxu0 0
      %949 = vmatpush.bf16.msra.mxu0 0
      %950 = vmatpush.bf16.msra.mxu0 %v938
      %951 = vmatmul.bf16.gmra.mxu0 %v935
      %v952 = vpop.f32.mrf.mxu0
      %v953 = vadd.f32 0.0, %v952
      %v954 = vpop.f32.mrf.mxu0
      %955 = vdwg.mxu0
      %956 = vmatpush.bf16.msra.mxu0 0
      %957 = vmatpush.bf16.msra.mxu0 0
      %958 = vmatpush.bf16.msra.mxu0 0
      %959 = vmatpush.bf16.msra.mxu0 0
      %960 = vmatpush.bf16.msra.mxu0 0
      %961 = vmatpush.bf16.msra.mxu0 0
      %962 = vmatpush.bf16.msra.mxu0 0
      %963 = vmatpush.bf16.msra.mxu0 %v941
      %964 = vmatmul.bf16.gmra.mxu0 %v935
      %v965 = vpop.f32.mrf.mxu0
      %v966 = vadd.f32 0.0, %v965
      %v967 = vpop.f32.mrf.mxu0
      %968 = vdwg.mxu0
      %v969 = vadd.f32 %v902, %v953
      %v970 = vadd.f32 %v903, %v966
      %973 = vrot.lane.b32.xlu0 %v918, 127
      %v974 = vpop.permute.xlu0 %973
      %975 = vrot.lane.b32.xlu0 %v915, 127
      %v976 = vpop.permute.xlu0 %975
      %977 = vrot.lane.b32.xlu0 %v921, 127
      %v978 = vpop.permute.xlu0 %977
      %v979 = vsel %vm342, %v974, %v976
      %v980 = vsel %vm342, %v976, %v978
      %v982 = vsel %vm345, %v924, 0
      %v985 = vsel %vm349, %v979, 0
      %v988 = vsel %vm349, %v980, 0
      %990 = vmatpush.bf16.msra.mxu0 0
      %991 = vmatpush.bf16.msra.mxu0 0
      %992 = vmatpush.bf16.msra.mxu0 0
      %993 = vmatpush.bf16.msra.mxu0 0
      %994 = vmatpush.bf16.msra.mxu0 0
      %995 = vmatpush.bf16.msra.mxu0 0
      %996 = vmatpush.bf16.msra.mxu0 0
      %997 = vmatpush.bf16.msra.mxu0 %v985
      %998 = vmatmul.bf16.gmra.mxu0 %v982
      %v999 = vpop.f32.mrf.mxu0
      %v1000 = vadd.f32 0.0, %v999
      %v1001 = vpop.f32.mrf.mxu0
      %1002 = vdwg.mxu0
      %1003 = vmatpush.bf16.msra.mxu0 0
      %1004 = vmatpush.bf16.msra.mxu0 0
      %1005 = vmatpush.bf16.msra.mxu0 0
      %1006 = vmatpush.bf16.msra.mxu0 0
      %1007 = vmatpush.bf16.msra.mxu0 0
      %1008 = vmatpush.bf16.msra.mxu0 0
      %1009 = vmatpush.bf16.msra.mxu0 0
      %1010 = vmatpush.bf16.msra.mxu0 %v988
      %1011 = vmatmul.bf16.gmra.mxu0 %v982
      %v1012 = vpop.f32.mrf.mxu0
      %v1013 = vadd.f32 0.0, %v1012
      %v1014 = vpop.f32.mrf.mxu0
      %1015 = vdwg.mxu0
      %v1016 = vadd.f32 %v969, %v1000
      %v1017 = vadd.f32 %v970, %v1013
      %v1018 = vsel %vm437, %v918, 0
      %v1019 = vsel %vm444, %v915, 0
      %v1020 = vsel %vm451, %v921, 0
      %1024 = vrot.lane.b32.xlu0 %v1018, 126
      %v1025 = vpop.permute.xlu0 %1024
      %1026 = vrot.lane.b32.xlu0 %v1019, 126
      %v1027 = vpop.permute.xlu0 %1026
      %1028 = vrot.lane.b32.xlu0 %v1020, 126
      %v1029 = vpop.permute.xlu0 %1028
      %v1030 = vsel %vm464, %v1025, %v1027
      %v1031 = vsel %vm464, %v1027, %v1029
      %v1033 = vsel %vm345, %v925, 0
      %v1036 = vsel %vm349, %v1030, 0
      %v1039 = vsel %vm349, %v1031, 0
      %1041 = vmatpush.bf16.msra.mxu0 0
      %1042 = vmatpush.bf16.msra.mxu0 0
      %1043 = vmatpush.bf16.msra.mxu0 0
      %1044 = vmatpush.bf16.msra.mxu0 0
      %1045 = vmatpush.bf16.msra.mxu0 0
      %1046 = vmatpush.bf16.msra.mxu0 0
      %1047 = vmatpush.bf16.msra.mxu0 0
      %1048 = vmatpush.bf16.msra.mxu0 %v1036
      %1049 = vmatmul.bf16.gmra.mxu0 %v1033
      %v1050 = vpop.f32.mrf.mxu0
      %v1051 = vadd.f32 0.0, %v1050
      %v1052 = vpop.f32.mrf.mxu0
      %1053 = vdwg.mxu0
      %1054 = vmatpush.bf16.msra.mxu0 0
      %1055 = vmatpush.bf16.msra.mxu0 0
      %1056 = vmatpush.bf16.msra.mxu0 0
      %1057 = vmatpush.bf16.msra.mxu0 0
      %1058 = vmatpush.bf16.msra.mxu0 0
      %1059 = vmatpush.bf16.msra.mxu0 0
      %1060 = vmatpush.bf16.msra.mxu0 0
      %1061 = vmatpush.bf16.msra.mxu0 %v1039
      %1062 = vmatmul.bf16.gmra.mxu0 %v1033
      %v1063 = vpop.f32.mrf.mxu0
      %v1064 = vadd.f32 0.0, %v1063
      %v1065 = vpop.f32.mrf.mxu0
      %1066 = vdwg.mxu0
      %v1067 = vadd.f32 %v1016, %v1051
      %v1068 = vadd.f32 %v1017, %v1064
      %v1069 = vsel %vm516, %v918, 0
      %v1070 = vsel %vm523, %v915, 0
      %v1071 = vsel %vm530, %v921, 0
      %1075 = vrot.lane.b32.xlu0 %v1069, 112
      %v1076 = vpop.permute.xlu0 %1075
      %1077 = vrot.lane.b32.xlu0 %v1070, 112
      %v1078 = vpop.permute.xlu0 %1077
      %1079 = vrot.lane.b32.xlu0 %v1071, 112
      %v1080 = vpop.permute.xlu0 %1079
      %v1081 = vsel %vm543, %v1076, %v1078
      %v1082 = vsel %vm543, %v1078, %v1080
      %v1084 = vsel %vm345, %v926, 0
      %v1087 = vsel %vm349, %v1081, 0
      %v1090 = vsel %vm349, %v1082, 0
      %1092 = vmatpush.bf16.msra.mxu0 0
      %1093 = vmatpush.bf16.msra.mxu0 0
      %1094 = vmatpush.bf16.msra.mxu0 0
      %1095 = vmatpush.bf16.msra.mxu0 0
      %1096 = vmatpush.bf16.msra.mxu0 0
      %1097 = vmatpush.bf16.msra.mxu0 0
      %1098 = vmatpush.bf16.msra.mxu0 0
      %1099 = vmatpush.bf16.msra.mxu0 %v1087
      %1100 = vmatmul.bf16.gmra.mxu0 %v1084
      %v1101 = vpop.f32.mrf.mxu0
      %v1102 = vadd.f32 0.0, %v1101
      %v1103 = vpop.f32.mrf.mxu0
      %1104 = vdwg.mxu0
      %1105 = vmatpush.bf16.msra.mxu0 0
      %1106 = vmatpush.bf16.msra.mxu0 0
      %1107 = vmatpush.bf16.msra.mxu0 0
      %1108 = vmatpush.bf16.msra.mxu0 0
      %1109 = vmatpush.bf16.msra.mxu0 0
      %1110 = vmatpush.bf16.msra.mxu0 0
      %1111 = vmatpush.bf16.msra.mxu0 0
      %1112 = vmatpush.bf16.msra.mxu0 %v1090
      %1113 = vmatmul.bf16.gmra.mxu0 %v1084
      %v1114 = vpop.f32.mrf.mxu0
      %v1115 = vadd.f32 0.0, %v1114
      %v1116 = vpop.f32.mrf.mxu0
      %1117 = vdwg.mxu0
      %v1118 = vadd.f32 %v1067, %v1102
      %v1119 = vadd.f32 %v1068, %v1115
      %1120 = vst [vmem:[#allocation1] ss:$4 sm:$0xff] %v904
      %v1121 = vld.sshfl [vmem:[#allocation1] sm:$0xff pattern:$0x73625140]
      %v1122 = vld.sshfl [vmem:[#allocation1 + $0x8] sm:$0xff pattern:$0x73625140]
      %v1124 = vsel %vm345, %v927, 0
      %v1126 = vsel %vm349, %v1121, 0
      %v1128 = vsel %vm349, %v1122, 0
      %1130 = vmatpush.bf16.msra.mxu0 0
      %1131 = vmatpush.bf16.msra.mxu0 0
      %1132 = vmatpush.bf16.msra.mxu0 0
      %1133 = vmatpush.bf16.msra.mxu0 0
      %1134 = vmatpush.bf16.msra.mxu0 0
      %1135 = vmatpush.bf16.msra.mxu0 0
      %1136 = vmatpush.bf16.msra.mxu0 0
      %1137 = vmatpush.bf16.msra.mxu0 %v1126
      %1138 = vmatmul.bf16.gmra.mxu0 %v1124
      %v1139 = vpop.f32.mrf.mxu0
      %v1140 = vadd.f32 0.0, %v1139
      %v1141 = vpop.f32.mrf.mxu0
      %1142 = vdwg.mxu0
      %1143 = vmatpush.bf16.msra.mxu0 0
      %1144 = vmatpush.bf16.msra.mxu0 0
      %1145 = vmatpush.bf16.msra.mxu0 0
      %1146 = vmatpush.bf16.msra.mxu0 0
      %1147 = vmatpush.bf16.msra.mxu0 0
      %1148 = vmatpush.bf16.msra.mxu0 0
      %1149 = vmatpush.bf16.msra.mxu0 0
      %1150 = vmatpush.bf16.msra.mxu0 %v1128
      %1151 = vmatmul.bf16.gmra.mxu0 %v1124
      %v1152 = vpop.f32.mrf.mxu0
      %v1153 = vadd.f32 0.0, %v1152
      %v1154 = vpop.f32.mrf.mxu0
      %1155 = vdwg.mxu0
      %v1156 = vadd.f32 %v1118, %v1140
      %v1157 = vadd.f32 %v1119, %v1153
      %v1158 = vsel %vm633, %v918, 0
      %v1159 = vsel %vm640, %v915, 0
      %v1160 = vsel %vm647, %v921, 0
      %1164 = vrot.lane.b32.xlu0 %v1158, 110
      %v1165 = vpop.permute.xlu0 %1164
      %1166 = vrot.lane.b32.xlu0 %v1159, 110
      %v1167 = vpop.permute.xlu0 %1166
      %1168 = vrot.lane.b32.xlu0 %v1160, 110
      %v1169 = vpop.permute.xlu0 %1168
      %v1170 = vsel %vm660, %v1165, %v1167
      %v1171 = vsel %vm660, %v1167, %v1169
      %v1173 = vsel %vm345, %v928, 0
      %v1176 = vsel %vm349, %v1170, 0
      %v1179 = vsel %vm349, %v1171, 0
      %1181 = vmatpush.bf16.msra.mxu0 0
      %1182 = vmatpush.bf16.msra.mxu0 0
      %1183 = vmatpush.bf16.msra.mxu0 0
      %1184 = vmatpush.bf16.msra.mxu0 0
      %1185 = vmatpush.bf16.msra.mxu0 0
      %1186 = vmatpush.bf16.msra.mxu0 0
      %1187 = vmatpush.bf16.msra.mxu0 0
      %1188 = vmatpush.bf16.msra.mxu0 %v1176
      %1189 = vmatmul.bf16.gmra.mxu0 %v1173
      %v1190 = vpop.f32.mrf.mxu0
      %v1191 = vadd.f32 0.0, %v1190
      %v1192 = vpop.f32.mrf.mxu0
      %1193 = vdwg.mxu0
      %1194 = vmatpush.bf16.msra.mxu0 0
      %1195 = vmatpush.bf16.msra.mxu0 0
      %1196 = vmatpush.bf16.msra.mxu0 0
      %1197 = vmatpush.bf16.msra.mxu0 0
      %1198 = vmatpush.bf16.msra.mxu0 0
      %1199 = vmatpush.bf16.msra.mxu0 0
      %1200 = vmatpush.bf16.msra.mxu0 0
      %1201 = vmatpush.bf16.msra.mxu0 %v1179
      %1202 = vmatmul.bf16.gmra.mxu0 %v1173
      %v1203 = vpop.f32.mrf.mxu0
      %v1204 = vadd.f32 0.0, %v1203
      %v1205 = vpop.f32.mrf.mxu0
      %1206 = vdwg.mxu0
      %v1207 = vadd.f32 %v1156, %v1191
      %v1208 = vadd.f32 %v1157, %v1204
      %v1209 = vsel %vm712, %v918, 0
      %v1210 = vsel %vm719, %v915, 0
      %v1211 = vsel %vm726, %v921, 0
      %1215 = vrot.lane.b32.xlu0 %v1209, 96
      %v1216 = vpop.permute.xlu0 %1215
      %1217 = vrot.lane.b32.xlu0 %v1210, 96
      %v1218 = vpop.permute.xlu0 %1217
      %1219 = vrot.lane.b32.xlu0 %v1211, 96
      %v1220 = vpop.permute.xlu0 %1219
      %v1221 = vsel %vm739, %v1216, %v1218
      %v1222 = vsel %vm739, %v1218, %v1220
      %v1224 = vsel %vm345, %v929, 0
      %v1227 = vsel %vm349, %v1221, 0
      %v1230 = vsel %vm349, %v1222, 0
      %1232 = vmatpush.bf16.msra.mxu0 0
      %1233 = vmatpush.bf16.msra.mxu0 0
      %1234 = vmatpush.bf16.msra.mxu0 0
      %1235 = vmatpush.bf16.msra.mxu0 0
      %1236 = vmatpush.bf16.msra.mxu0 0
      %1237 = vmatpush.bf16.msra.mxu0 0
      %1238 = vmatpush.bf16.msra.mxu0 0
      %1239 = vmatpush.bf16.msra.mxu0 %v1227
      %1240 = vmatmul.bf16.gmra.mxu0 %v1224
      %v1241 = vpop.f32.mrf.mxu0
      %v1242 = vadd.f32 0.0, %v1241
      %v1243 = vpop.f32.mrf.mxu0
      %1244 = vdwg.mxu0
      %1245 = vmatpush.bf16.msra.mxu0 0
      %1246 = vmatpush.bf16.msra.mxu0 0
      %1247 = vmatpush.bf16.msra.mxu0 0
      %1248 = vmatpush.bf16.msra.mxu0 0
      %1249 = vmatpush.bf16.msra.mxu0 0
      %1250 = vmatpush.bf16.msra.mxu0 0
      %1251 = vmatpush.bf16.msra.mxu0 0
      %1252 = vmatpush.bf16.msra.mxu0 %v1230
      %1253 = vmatmul.bf16.gmra.mxu0 %v1224
      %v1254 = vpop.f32.mrf.mxu0
      %v1255 = vadd.f32 0.0, %v1254
      %v1256 = vpop.f32.mrf.mxu0
      %1257 = vdwg.mxu0
      %v1258 = vadd.f32 %v1207, %v1242
      %v1259 = vadd.f32 %v1208, %v1255
      %1260 = vrot.lane.b32.xlu0 %v918, 95
      %v1261 = vpop.permute.xlu0 %1260
      %1262 = vrot.lane.b32.xlu0 %v915, 95
      %v1263 = vpop.permute.xlu0 %1262
      %1264 = vrot.lane.b32.xlu0 %v921, 95
      %v1265 = vpop.permute.xlu0 %1264
      %v1266 = vsel %vm785, %v1261, %v1263
      %v1267 = vsel %vm785, %v1263, %v1265
      %v1269 = vsel %vm345, %v930, 0
      %v1272 = vsel %vm349, %v1266, 0
      %v1275 = vsel %vm349, %v1267, 0
      %1277 = vmatpush.bf16.msra.mxu0 0
      %1278 = vmatpush.bf16.msra.mxu0 0
      %1279 = vmatpush.bf16.msra.mxu0 0
      %1280 = vmatpush.bf16.msra.mxu0 0
      %1281 = vmatpush.bf16.msra.mxu0 0
      %1282 = vmatpush.bf16.msra.mxu0 0
      %1283 = vmatpush.bf16.msra.mxu0 0
      %1284 = vmatpush.bf16.msra.mxu0 %v1272
      %1285 = vmatmul.bf16.gmra.mxu0 %v1269
      %v1286 = vpop.f32.mrf.mxu0
      %v1287 = vadd.f32 0.0, %v1286
      %v1288 = vpop.f32.mrf.mxu0
      %1289 = vdwg.mxu0
      %1290 = vmatpush.bf16.msra.mxu0 0
      %1291 = vmatpush.bf16.msra.mxu0 0
      %1292 = vmatpush.bf16.msra.mxu0 0
      %1293 = vmatpush.bf16.msra.mxu0 0
      %1294 = vmatpush.bf16.msra.mxu0 0
      %1295 = vmatpush.bf16.msra.mxu0 0
      %1296 = vmatpush.bf16.msra.mxu0 0
      %1297 = vmatpush.bf16.msra.mxu0 %v1275
      %1298 = vmatmul.bf16.gmra.mxu0 %v1269
      %v1299 = vpop.f32.mrf.mxu0
      %v1300 = vadd.f32 0.0, %v1299
      %v1301 = vpop.f32.mrf.mxu0
      %1302 = vdwg.mxu0
      %v1303 = vadd.f32 %v1258, %v1287
      %v1304 = vadd.f32 %v1259, %v1300
      %v1305 = vsel %vm837, %v918, 0
      %v1306 = vsel %vm844, %v915, 0
      %v1307 = vsel %vm851, %v921, 0
      %1311 = vrot.lane.b32.xlu0 %v1305, 94
      %v1312 = vpop.permute.xlu0 %1311
      %1313 = vrot.lane.b32.xlu0 %v1306, 94
      %v1314 = vpop.permute.xlu0 %1313
      %1315 = vrot.lane.b32.xlu0 %v1307, 94
      %v1316 = vpop.permute.xlu0 %1315
      %v1317 = vsel %vm864, %v1312, %v1314
      %v1318 = vsel %vm864, %v1314, %v1316
      %v1320 = vsel %vm345, %v931, 0
      %v1323 = vsel %vm349, %v1317, 0
      %v1326 = vsel %vm349, %v1318, 0
      %1328 = vmatpush.bf16.msra.mxu0 0
      %1329 = vmatpush.bf16.msra.mxu0 0
      %1330 = vmatpush.bf16.msra.mxu0 0
      %1331 = vmatpush.bf16.msra.mxu0 0
      %1332 = vmatpush.bf16.msra.mxu0 0
      %1333 = vmatpush.bf16.msra.mxu0 0
      %1334 = vmatpush.bf16.msra.mxu0 0
      %1335 = vmatpush.bf16.msra.mxu0 %v1323
      %1336 = vmatmul.bf16.gmra.mxu0 %v1320
      %v1337 = vpop.f32.mrf.mxu0
      %v1338 = vadd.f32 0.0, %v1337
      %v1339 = vpop.f32.mrf.mxu0
      %1340 = vdwg.mxu0
      %1341 = vmatpush.bf16.msra.mxu0 0
      %1342 = vmatpush.bf16.msra.mxu0 0
      %1343 = vmatpush.bf16.msra.mxu0 0
      %1344 = vmatpush.bf16.msra.mxu0 0
      %1345 = vmatpush.bf16.msra.mxu0 0
      %1346 = vmatpush.bf16.msra.mxu0 0
      %1347 = vmatpush.bf16.msra.mxu0 0
      %1348 = vmatpush.bf16.msra.mxu0 %v1326
      %1349 = vmatmul.bf16.gmra.mxu0 %v1320
      %v1350 = vpop.f32.mrf.mxu0
      %v1351 = vadd.f32 0.0, %v1350
      %v1352 = vpop.f32.mrf.mxu0
      %1353 = vdwg.mxu0
      %v1354 = vadd.f32 %v1303, %v1338
      %v1355 = vadd.f32 %v1304, %v1351
      %v1356 = vld [vmem:[%s4] sm:$0xf]
      %1358 = vset.pattern.permute.xlu0 0
      %1359 = vperm.xlu0 %1358, %v1356
      %v1360 = vpop.permute.xlu0 %1359
      %v1362 = vadd.f32 %v1354, %v1360
      %v1363 = vadd.f32 %v1355, %v1360
      %vm1364 = vcmask 1043456
      %v1365 = vsel %vm1364, %v1362, 0.0
      %v1366 = vsel %vm1364, %v1363, 0.0
      %v1367 = vadd.f32 %v1365, %v1366
      %1368 = vadd.xlane.f32.xlu0 %v1367
      %v1369 = vpop.xlane.xlu0 %1368
      %v1370 = vrcp.pop 256.0
      %v1371 = vmul.f32 256.0, %v1370
      %v1372 = vsub.f32 1.0, %v1371
      %v1373 = vmul.f32 %v1370, %v1372
      %v1374 = vadd.f32 %v1370, %v1373
      %vm1375 = vweird.f32 %v1370
      %v1376 = vsel %vm1375, %v1370, %v1374
      %v1377 = vmul.f32 %v1369, %v1376
      %v1378 = vsub.f32 %v1362, %v1377
      %v1379 = vsub.f32 %v1363, %v1377
      %v1380 = vmul.f32 %v1378, %v1378
      %v1381 = vmul.f32 %v1379, %v1379
      %v1382 = vsel %vm1364, %v1380, 0.0
      %v1383 = vsel %vm1364, %v1381, 0.0
      %v1384 = vadd.f32 %v1382, %v1383
      %1385 = vadd.xlane.f32.xlu0 %v1384
      %v1386 = vpop.xlane.xlu0 %1385
      %v1387 = vmul.f32 %v1386, %v1376
      %v1388 = vadd.f32 %v1387, 1e-05
      %v1389 = vrsqrt.pop %v1388
      %v1390 = vmul.f32 %v1389, %v1388
      %v1391 = vmul.f32 %v1390, %v1389
      %v1392 = vmul.f32 0.5, %v1391
      %v1393 = vsub.f32 1.5, %v1392
      %v1394 = vmul.f32 %v1389, %v1393
      %vm1395 = vweird.f32 %v1388
      %vm1396 = vweird.f32 %v1389
      %vm1397 = vmor %vm1395, %vm1396
      %v1398 = vsel %vm1397, %v1389, %v1394
      %v1399 = vmul.f32 %v1378, %v1398
      %v1400 = vmul.f32 %v1379, %v1398
      %1401 = vset.pattern.permute.xlu0 1
      %1402 = vperm.xlu0 %1401, %v1356
      %v1403 = vpop.permute.xlu0 %1402
      %v1405 = vmul.f32 %v1399, %v1403
      %v1406 = vmul.f32 %v1400, %v1403
      %1407 = vset.pattern.permute.xlu0 2
      %1408 = vperm.xlu0 %1407, %v1356
      %v1409 = vpop.permute.xlu0 %1408
      %v1411 = vadd.f32 %v1405, %v1409
      %v1412 = vadd.f32 %v1406, %v1409
      %v1413 = vmax.f32 %v1411, 0.0
      %v1414 = vmax.f32 %v1412, 0.0
      %v1417 = vrot.slane %v1414, 4
      %v1418 = vsel %vm1364, %v1413, %v1417
      %1420 = vst [vmem:[%s244] sm:$0xff] %v1418
      %p1421 = scmp.lt.s32.totalorder %s16, 1
      %s1422 = scalar_select %p1421, %s16, 1
      %s1423 = smul.addr %s1422, 2
      %s1424 = smul.addr %s1423, 4
      %s1425 = scalar_lea.vmem %s5, %s1424
      // Predicated region
      $region41: #{forward.13} parent=39 // pred_check
        %p1426 = pneg %p149
      $region42: #{forward.13} parent=39 // pred_check_branch
        %1428 = sbr.rel (%p1426) target = $region44
      $region43: #{forward.13} parent=39 // pred_region
        _
      $region44: #{forward.13} parent=39 // pred_fallthru
        _
    $region40: #{forward.13} parent=5 // pred_fallthru
      _
    %p1429 = scmp.le.s32.totalorder 2, %s11
    // Predicated region
    $region45: #{forward.13} parent=5 // pred_check
      %p1430 = pneg %p1429
    $region46: #{forward.13} parent=5 // pred_check_branch
      %1432 = sbr.rel (%p1430) target = $region48
    $region47: #{forward.13} parent=5 // pred_region
      %s1433 = ssub.s32 %s11, 2
      // Predicated region
      $region49: #{forward.13} parent=47 // pred_check
        %p1434 = pneg %p155
      $region50: #{forward.13} parent=47 // pred_check_branch
        %1436 = sbr.rel (%p1434) target = $region52
      $region51: #{forward.13} parent=47 // pred_region
        %p1437 = scmp.lt.s32.totalorder %s17, 1
        %s1438 = scalar_select %p1437, %s17, 1
        %s1439 = smul.addr %s1438, 2
        %s1440 = smul.addr %s1439, 4
        %s1441 = scalar_lea.vmem %s5, %s1440
      $region52: #{forward.13} parent=47 // pred_fallthru
        _
    $region48: #{forward.13} parent=5 // pred_fallthru
      _
  $region6: #{forward.13} parent=0 // loop_footer
    %s15 = sadd.s32 1, %s11
  $region7: #{forward.13} parent=0 // loop_footer_branch
    %10 = sbr.rel target = $region3
  $region8: #{forward.13} parent=0 // loop_exit
    _

</llo_original>
